<compile_context>
chip_gen: v6e
topology: v6e:2x2x1
jax: 0.10.0
libtpu: 0.0.40
codegen_flags: <defaults>
</compile_context>

<pallas_src>
import jax
import jax.numpy as jnp
from jax import lax
from jax.experimental import pallas as pl
from jax.experimental.pallas import tpu as pltpu

EPS = 1e-5
K_SIZE = 4          # all transposed convs use 4x4 kernels
NEG_SLOPE = 0.2     # LeakyReLU slope


# ----------------------------------------------------------------------------
# Pallas kernels (one fused kernel per layer type)
# ----------------------------------------------------------------------------
def _convT_bn_lrelu_kernel(w_ref, p_ref, g_ref, b_ref, o_ref):
    """Fused: conv-as-matmul + training-mode BatchNorm2d + LeakyReLU(0.2).

    w_ref : (Cout, K)  bf16   reshaped/flipped ConvTranspose2d weight
    p_ref : (K, M)     bf16   im2col'ed (transposed) patches, M = B*Ho*Wo
    g_ref : (Cout, 1)  f32    BN gamma
    b_ref : (Cout, 1)  f32    BN beta
    o_ref : (Cout, M)  bf16   lane-dense output (M on the 128-lane axis)
    """
    y = jnp.dot(w_ref[...], p_ref[...],
                preferred_element_type=jnp.float32)          # (Cout, M) f32
    m = y.shape[1]
    inv_m = 1.0 / m
    mean = jnp.sum(y, axis=1, keepdims=True) * inv_m          # (Cout, 1)
    var = jnp.sum(y * y, axis=1, keepdims=True) * inv_m - mean * mean
    var = jnp.maximum(var, 0.0)                               # cancellation guard
    a = g_ref[...] * lax.rsqrt(var + EPS)
    c = b_ref[...] - a * mean
    z = a * y + c
    o_ref[...] = jnp.where(z >= 0, z, NEG_SLOPE * z).astype(o_ref.dtype)


def _convT_bias_tanh_kernel(w_ref, p_ref, bias_ref, o_ref):
    """Fused: conv-as-matmul + bias + Tanh (final layer)."""
    y = jnp.dot(w_ref[...], p_ref[...],
                preferred_element_type=jnp.float32)           # (Cout, M) f32
    y = y + bias_ref[...]                                     # (Cout, 1) broadcast
    o_ref[...] = jnp.tanh(y)


_VMEM_SPEC = pl.BlockSpec(memory_space=pltpu.MemorySpace.VMEM)


def fused_convT_bn_lrelu(w_mat, patches_t, gamma, beta):
    cout = w_mat.shape[0]
    m = patches_t.shape[1]
    return pl.pallas_call(
        _convT_bn_lrelu_kernel,
        out_shape=jax.ShapeDtypeStruct((cout, m), jnp.bfloat16),
        in_specs=[_VMEM_SPEC, _VMEM_SPEC, _VMEM_SPEC, _VMEM_SPEC],
        out_specs=_VMEM_SPEC,
    )(w_mat, patches_t,
      gamma.reshape(cout, 1).astype(jnp.float32),
      beta.reshape(cout, 1).astype(jnp.float32))


def fused_convT_tanh(w_mat, patches_t, bias):
    cout = w_mat.shape[0]
    m = patches_t.shape[1]
    return pl.pallas_call(
        _convT_bias_tanh_kernel,
        out_shape=jax.ShapeDtypeStruct((cout, m), jnp.float32),
        in_specs=[_VMEM_SPEC, _VMEM_SPEC, _VMEM_SPEC],
        out_specs=_VMEM_SPEC,
    )(w_mat, patches_t, bias.reshape(cout, 1).astype(jnp.float32))


# ----------------------------------------------------------------------------
# Plain-JAX glue: channel-major im2col of the zero-upsampled input + weights
# ----------------------------------------------------------------------------
def _convT_patches_T(x_cm, stride, pad, k=K_SIZE):
    """x_cm: (Cin, B, H, W) channel-major activation.

    Returns patches^T of shape (Cin*k*k, B*Ho*Wo) in bf16, plus (Ho, Wo).
    ConvTranspose2d(x) == Conv2d(zero-upsample(x) padded by k-1-pad, flipped W).
    """
    cin, b, h, w = x_cm.shape
    p = k - 1 - pad
    zero = jnp.array(0, dtype=x_cm.dtype)
    # interior padding performs the zero-upsample, low/high the conv padding
    up = lax.pad(x_cm, zero,
                 ((0, 0, 0), (0, 0, 0),
                  (p, p, stride - 1), (p, p, stride - 1)))
    hp, wp = up.shape[2], up.shape[3]
    ho, wo = hp - k + 1, wp - k + 1
    slabs = [up[:, :, a:a + ho, c:c + wo] for a in range(k) for c in range(k)]
    pt = jnp.stack(slabs, axis=1)                     # (Cin, k*k, B, Ho, Wo)
    pt = pt.reshape(cin * k * k, b * ho * wo)         # (K, M)
    return pt.astype(jnp.bfloat16), ho, wo


def _convT_weight_matrix(wt):
    """PyTorch ConvTranspose2d weight (Cin, Cout, k, k) -> (Cout, Cin*k*k) bf16."""
    cin, cout, kh, kw = wt.shape
    wf = wt[:, :, ::-1, ::-1]                          # spatial flip
    return wf.transpose(1, 0, 2, 3).reshape(cout, cin * kh * kw).astype(jnp.bfloat16)


def _layer(x_cm, params, stride, pad, last):
    """One fused (ConvTranspose2d [+ BN + LeakyReLU] | + bias + Tanh) block."""
    wt, bias, gamma, beta = params
    cout = wt.shape[1]
    b = x_cm.shape[1]

    pt, ho, wo = _convT_patches_T(x_cm, stride, pad)
    w_mat = _convT_weight_matrix(wt)

    if last:
        y = fused_convT_tanh(w_mat, pt, bias)               # (Cout, M) f32
    else:
        # Conv bias is cancelled exactly by the training-mode BN mean
        # subtraction, so it is intentionally not applied here.
        y = fused_convT_bn_lrelu(w_mat, pt, gamma, beta)    # (Cout, M) bf16

    return y.reshape(cout, b, ho, wo)                       # stay channel-major


# ----------------------------------------------------------------------------
# GeneratorModel
# ----------------------------------------------------------------------------
def init_generator_params(key, n_z, n_fmps, n_c):
    """Mirror weights_init: conv W ~ N(0, 0.02); BN gamma ~ N(1, 0.02), beta = 0.
    Conv bias ~ N(0, 0.02) (synthetic; only the final layer actually uses it)."""
    channels = [(n_z, n_fmps * 8), (n_fmps * 8, n_fmps * 4),
                (n_fmps * 4, n_fmps * 2), (n_fmps * 2, n_fmps),
                (n_fmps, n_c)]
    params = []
    for cin, cout in channels:
        key, kw, kb, kg = jax.random.split(key, 4)
        wt = 0.02 * jax.random.normal(kw, (cin, cout, K_SIZE, K_SIZE), jnp.float32)
        bias = 0.02 * jax.random.normal(kb, (cout,), jnp.float32)
        gamma = 1.0 + 0.02 * jax.random.normal(kg, (cout,), jnp.float32)
        beta = jnp.zeros((cout,), jnp.float32)
        params.append((wt, bias, gamma, beta))
    return params


@jax.jit
def generator_forward(x, params):
    # layer configs: (stride, pad, is_last)
    cfgs = [(1, 0, False), (2, 1, False), (2, 1, False), (2, 1, False), (2, 1, True)]
    h = jnp.transpose(x, (1, 0, 2, 3))        # NCHW -> channel-major (C, B, H, W)
    for p, (s, pad, last) in zip(params, cfgs):
        h = _layer(h, p, s, pad, last)
    return jnp.transpose(h, (1, 0, 2, 3))     # channel-major -> NCHW


if __name__ == "__main__":
    n_z, n_fmps, n_c, batch = 16, 8, 3, 2

    key = jax.random.PRNGKey(0)
    key, kx = jax.random.split(key)
    params = init_generator_params(key, n_z, n_fmps, n_c)
    x = jax.random.normal(kx, (batch, n_z, 1, 1), jnp.float32)

    y = generator_forward(x, params)
    y = jax.block_until_ready(y)

    assert y.shape == (batch, n_c, 64, 64), y.shape
    assert bool(jnp.all(jnp.isfinite(y)))
    assert bool(jnp.all(jnp.abs(y) <= 1.0))   # tanh output range
    print("KERNEL_OK")
</pallas_src>

<mosaic_0001>
module attributes {stable_mosaic.version = 11 : i64} {
  func.func @_convT_bn_lrelu_kernel(%arg0: memref<64x256xbf16, #tpu.memory_space<vmem>>, %arg1: memref<256x32xbf16, #tpu.memory_space<vmem>>, %arg2: memref<64x1xf32, #tpu.memory_space<vmem>>, %arg3: memref<64x1xf32, #tpu.memory_space<vmem>>, %arg4: memref<64x32xbf16, #tpu.memory_space<vmem>>) attributes {dimension_semantics = [], scalar_prefetch = 0 : i64, scratch_operands = 0 : i64, tpu.core_type = #tpu.core_type<tc>} {
    %c0 = arith.constant 0 : index
    %c0_0 = arith.constant 0 : index
    %0 = vector.load %arg0[%c0, %c0_0] : memref<64x256xbf16, #tpu.memory_space<vmem>>, vector<64x256xbf16>
    %c0_1 = arith.constant 0 : index
    %c0_2 = arith.constant 0 : index
    %1 = vector.load %arg1[%c0_1, %c0_2] : memref<256x32xbf16, #tpu.memory_space<vmem>>, vector<256x32xbf16>
    %cst = arith.constant dense<0.000000e+00> : vector<64x32xf32>
    %2 = tpu.matmul %0, %1, %cst {dimension_numbers = #tpu.dot_dimension_numbers<[1], [0], [0], [1], [0, 0, 1, 1], [], []>} : vector<64x256xbf16>, vector<256x32xbf16>, vector<64x32xf32> -> vector<64x32xf32>
    %cst_3 = arith.constant dense<0.000000e+00> : vector<64xf32>
    %3 = vector.multi_reduction <add>, %2, %cst_3 [1] : vector<64x32xf32> to vector<64xf32>
    %4 = vector.shape_cast %3 : vector<64xf32> to vector<64x1xf32>
    %cst_4 = arith.constant 3.125000e-02 : f32
    %5 = vector.broadcast %cst_4 : f32 to vector<64x1xf32>
    %6 = arith.mulf %4, %5 : vector<64x1xf32>
    %7 = arith.mulf %2, %2 : vector<64x32xf32>
    %cst_5 = arith.constant dense<0.000000e+00> : vector<64xf32>
    %8 = vector.multi_reduction <add>, %7, %cst_5 [1] : vector<64x32xf32> to vector<64xf32>
    %9 = vector.shape_cast %8 : vector<64xf32> to vector<64x1xf32>
    %cst_6 = arith.constant 3.125000e-02 : f32
    %10 = vector.broadcast %cst_6 : f32 to vector<64x1xf32>
    %11 = arith.mulf %9, %10 : vector<64x1xf32>
    %12 = arith.mulf %6, %6 : vector<64x1xf32>
    %13 = arith.subf %11, %12 : vector<64x1xf32>
    %cst_7 = arith.constant 0.000000e+00 : f32
    %14 = vector.broadcast %cst_7 : f32 to vector<64x1xf32>
    %15 = arith.maximumf %13, %14 : vector<64x1xf32>
    %c0_8 = arith.constant 0 : index
    %c0_9 = arith.constant 0 : index
    %16 = vector.load %arg2[%c0_8, %c0_9] : memref<64x1xf32, #tpu.memory_space<vmem>>, vector<64x1xf32>
    %cst_10 = arith.constant 9.99999974E-6 : f32
    %17 = vector.broadcast %cst_10 : f32 to vector<64x1xf32>
    %18 = arith.addf %15, %17 : vector<64x1xf32>
    %19 = math.rsqrt %18 : vector<64x1xf32>
    %20 = arith.mulf %16, %19 : vector<64x1xf32>
    %c0_11 = arith.constant 0 : index
    %c0_12 = arith.constant 0 : index
    %21 = vector.load %arg3[%c0_11, %c0_12] : memref<64x1xf32, #tpu.memory_space<vmem>>, vector<64x1xf32>
    %22 = arith.mulf %20, %6 : vector<64x1xf32>
    %23 = arith.subf %21, %22 : vector<64x1xf32>
    %24 = vector.broadcast %20 : vector<64x1xf32> to vector<64x32xf32>
    %25 = arith.mulf %24, %2 : vector<64x32xf32>
    %26 = vector.broadcast %23 : vector<64x1xf32> to vector<64x32xf32>
    %27 = arith.addf %25, %26 : vector<64x32xf32>
    %cst_13 = arith.constant 0.000000e+00 : f32
    %28 = vector.broadcast %cst_13 : f32 to vector<64x32xf32>
    %29 = arith.cmpf oge, %27, %28 : vector<64x32xf32>
    %cst_14 = arith.constant 2.000000e-01 : f32
    %30 = vector.broadcast %cst_14 : f32 to vector<64x32xf32>
    %31 = arith.mulf %30, %27 : vector<64x32xf32>
    %32 = arith.select %29, %27, %31 : vector<64x32xi1>, vector<64x32xf32>
    %33 = arith.truncf %32 : vector<64x32xf32> to vector<64x32xbf16>
    %c0_15 = arith.constant 0 : index
    %c0_16 = arith.constant 0 : index
    %34 = vector.load %arg4[%c0_15, %c0_16] : memref<64x32xbf16, #tpu.memory_space<vmem>>, vector<64x32xbf16>
    tpu.vector_store %arg4[%c0_15, %c0_16], %33 {strides = array<i32>} : memref<64x32xbf16, #tpu.memory_space<vmem>>, vector<64x32xbf16>,
    return
  }
}

module attributes {stable_mosaic.version = 11 : i64} {
  func.func @_convT_bn_lrelu_kernel(%arg0: memref<32x1024xbf16, #tpu.memory_space<vmem>>, %arg1: memref<1024x128xbf16, #tpu.memory_space<vmem>>, %arg2: memref<32x1xf32, #tpu.memory_space<vmem>>, %arg3: memref<32x1xf32, #tpu.memory_space<vmem>>, %arg4: memref<32x128xbf16, #tpu.memory_space<vmem>>) attributes {dimension_semantics = [], scalar_prefetch = 0 : i64, scratch_operands = 0 : i64, tpu.core_type = #tpu.core_type<tc>} {
    %c0 = arith.constant 0 : index
    %c0_0 = arith.constant 0 : index
    %0 = vector.load %arg0[%c0, %c0_0] : memref<32x1024xbf16, #tpu.memory_space<vmem>>, vector<32x1024xbf16>
    %c0_1 = arith.constant 0 : index
    %c0_2 = arith.constant 0 : index
    %1 = vector.load %arg1[%c0_1, %c0_2] : memref<1024x128xbf16, #tpu.memory_space<vmem>>, vector<1024x128xbf16>
    %cst = arith.constant dense<0.000000e+00> : vector<32x128xf32>
    %2 = tpu.matmul %0, %1, %cst {dimension_numbers = #tpu.dot_dimension_numbers<[1], [0], [0], [1], [0, 0, 1, 1], [], []>} : vector<32x1024xbf16>, vector<1024x128xbf16>, vector<32x128xf32> -> vector<32x128xf32>
    %cst_3 = arith.constant dense<0.000000e+00> : vector<32xf32>
    %3 = vector.multi_reduction <add>, %2, %cst_3 [1] : vector<32x128xf32> to vector<32xf32>
    %4 = vector.shape_cast %3 : vector<32xf32> to vector<32x1xf32>
    %cst_4 = arith.constant 7.812500e-03 : f32
    %5 = vector.broadcast %cst_4 : f32 to vector<32x1xf32>
    %6 = arith.mulf %4, %5 : vector<32x1xf32>
    %7 = arith.mulf %2, %2 : vector<32x128xf32>
    %cst_5 = arith.constant dense<0.000000e+00> : vector<32xf32>
    %8 = vector.multi_reduction <add>, %7, %cst_5 [1] : vector<32x128xf32> to vector<32xf32>
    %9 = vector.shape_cast %8 : vector<32xf32> to vector<32x1xf32>
    %cst_6 = arith.constant 7.812500e-03 : f32
    %10 = vector.broadcast %cst_6 : f32 to vector<32x1xf32>
    %11 = arith.mulf %9, %10 : vector<32x1xf32>
    %12 = arith.mulf %6, %6 : vector<32x1xf32>
    %13 = arith.subf %11, %12 : vector<32x1xf32>
    %cst_7 = arith.constant 0.000000e+00 : f32
    %14 = vector.broadcast %cst_7 : f32 to vector<32x1xf32>
    %15 = arith.maximumf %13, %14 : vector<32x1xf32>
    %c0_8 = arith.constant 0 : index
    %c0_9 = arith.constant 0 : index
    %16 = vector.load %arg2[%c0_8, %c0_9] : memref<32x1xf32, #tpu.memory_space<vmem>>, vector<32x1xf32>
    %cst_10 = arith.constant 9.99999974E-6 : f32
    %17 = vector.broadcast %cst_10 : f32 to vector<32x1xf32>
    %18 = arith.addf %15, %17 : vector<32x1xf32>
    %19 = math.rsqrt %18 : vector<32x1xf32>
    %20 = arith.mulf %16, %19 : vector<32x1xf32>
    %c0_11 = arith.constant 0 : index
    %c0_12 = arith.constant 0 : index
    %21 = vector.load %arg3[%c0_11, %c0_12] : memref<32x1xf32, #tpu.memory_space<vmem>>, vector<32x1xf32>
    %22 = arith.mulf %20, %6 : vector<32x1xf32>
    %23 = arith.subf %21, %22 : vector<32x1xf32>
    %24 = vector.broadcast %20 : vector<32x1xf32> to vector<32x128xf32>
    %25 = arith.mulf %24, %2 : vector<32x128xf32>
    %26 = vector.broadcast %23 : vector<32x1xf32> to vector<32x128xf32>
    %27 = arith.addf %25, %26 : vector<32x128xf32>
    %cst_13 = arith.constant 0.000000e+00 : f32
    %28 = vector.broadcast %cst_13 : f32 to vector<32x128xf32>
    %29 = arith.cmpf oge, %27, %28 : vector<32x128xf32>
    %cst_14 = arith.constant 2.000000e-01 : f32
    %30 = vector.broadcast %cst_14 : f32 to vector<32x128xf32>
    %31 = arith.mulf %30, %27 : vector<32x128xf32>
    %32 = arith.select %29, %27, %31 : vector<32x128xi1>, vector<32x128xf32>
    %33 = arith.truncf %32 : vector<32x128xf32> to vector<32x128xbf16>
    %c0_15 = arith.constant 0 : index
    %c0_16 = arith.constant 0 : index
    %34 = vector.load %arg4[%c0_15, %c0_16] : memref<32x128xbf16, #tpu.memory_space<vmem>>, vector<32x128xbf16>
    tpu.vector_store %arg4[%c0_15, %c0_16], %33 {strides = array<i32>} : memref<32x128xbf16, #tpu.memory_space<vmem>>, vector<32x128xbf16>,
    return
  }
}

module attributes {stable_mosaic.version = 11 : i64} {
  func.func @_convT_bn_lrelu_kernel(%arg0: memref<16x512xbf16, #tpu.memory_space<vmem>>, %arg1: memref<512x512xbf16, #tpu.memory_space<vmem>>, %arg2: memref<16x1xf32, #tpu.memory_space<vmem>>, %arg3: memref<16x1xf32, #tpu.memory_space<vmem>>, %arg4: memref<16x512xbf16, #tpu.memory_space<vmem>>) attributes {dimension_semantics = [], scalar_prefetch = 0 : i64, scratch_operands = 0 : i64, tpu.core_type = #tpu.core_type<tc>} {
    %c0 = arith.constant 0 : index
    %c0_0 = arith.constant 0 : index
    %0 = vector.load %arg0[%c0, %c0_0] : memref<16x512xbf16, #tpu.memory_space<vmem>>, vector<16x512xbf16>
    %c0_1 = arith.constant 0 : index
    %c0_2 = arith.constant 0 : index
    %1 = vector.load %arg1[%c0_1, %c0_2] : memref<512x512xbf16, #tpu.memory_space<vmem>>, vector<512x512xbf16>
    %cst = arith.constant dense<0.000000e+00> : vector<16x512xf32>
    %2 = tpu.matmul %0, %1, %cst {dimension_numbers = #tpu.dot_dimension_numbers<[1], [0], [0], [1], [0, 0, 1, 1], [], []>} : vector<16x512xbf16>, vector<512x512xbf16>, vector<16x512xf32> -> vector<16x512xf32>
    %cst_3 = arith.constant dense<0.000000e+00> : vector<16xf32>
    %3 = vector.multi_reduction <add>, %2, %cst_3 [1] : vector<16x512xf32> to vector<16xf32>
    %4 = vector.shape_cast %3 : vector<16xf32> to vector<16x1xf32>
    %cst_4 = arith.constant 0.001953125 : f32
    %5 = vector.broadcast %cst_4 : f32 to vector<16x1xf32>
    %6 = arith.mulf %4, %5 : vector<16x1xf32>
    %7 = arith.mulf %2, %2 : vector<16x512xf32>
    %cst_5 = arith.constant dense<0.000000e+00> : vector<16xf32>
    %8 = vector.multi_reduction <add>, %7, %cst_5 [1] : vector<16x512xf32> to vector<16xf32>
    %9 = vector.shape_cast %8 : vector<16xf32> to vector<16x1xf32>
    %cst_6 = arith.constant 0.001953125 : f32
    %10 = vector.broadcast %cst_6 : f32 to vector<16x1xf32>
    %11 = arith.mulf %9, %10 : vector<16x1xf32>
    %12 = arith.mulf %6, %6 : vector<16x1xf32>
    %13 = arith.subf %11, %12 : vector<16x1xf32>
    %cst_7 = arith.constant 0.000000e+00 : f32
    %14 = vector.broadcast %cst_7 : f32 to vector<16x1xf32>
    %15 = arith.maximumf %13, %14 : vector<16x1xf32>
    %c0_8 = arith.constant 0 : index
    %c0_9 = arith.constant 0 : index
    %16 = vector.load %arg2[%c0_8, %c0_9] : memref<16x1xf32, #tpu.memory_space<vmem>>, vector<16x1xf32>
    %cst_10 = arith.constant 9.99999974E-6 : f32
    %17 = vector.broadcast %cst_10 : f32 to vector<16x1xf32>
    %18 = arith.addf %15, %17 : vector<16x1xf32>
    %19 = math.rsqrt %18 : vector<16x1xf32>
    %20 = arith.mulf %16, %19 : vector<16x1xf32>
    %c0_11 = arith.constant 0 : index
    %c0_12 = arith.constant 0 : index
    %21 = vector.load %arg3[%c0_11, %c0_12] : memref<16x1xf32, #tpu.memory_space<vmem>>, vector<16x1xf32>
    %22 = arith.mulf %20, %6 : vector<16x1xf32>
    %23 = arith.subf %21, %22 : vector<16x1xf32>
    %24 = vector.broadcast %20 : vector<16x1xf32> to vector<16x512xf32>
    %25 = arith.mulf %24, %2 : vector<16x512xf32>
    %26 = vector.broadcast %23 : vector<16x1xf32> to vector<16x512xf32>
    %27 = arith.addf %25, %26 : vector<16x512xf32>
    %cst_13 = arith.constant 0.000000e+00 : f32
    %28 = vector.broadcast %cst_13 : f32 to vector<16x512xf32>
    %29 = arith.cmpf oge, %27, %28 : vector<16x512xf32>
    %cst_14 = arith.constant 2.000000e-01 : f32
    %30 = vector.broadcast %cst_14 : f32 to vector<16x512xf32>
    %31 = arith.mulf %30, %27 : vector<16x512xf32>
    %32 = arith.select %29, %27, %31 : vector<16x512xi1>, vector<16x512xf32>
    %33 = arith.truncf %32 : vector<16x512xf32> to vector<16x512xbf16>
    %c0_15 = arith.constant 0 : index
    %c0_16 = arith.constant 0 : index
    %34 = vector.load %arg4[%c0_15, %c0_16] : memref<16x512xbf16, #tpu.memory_space<vmem>>, vector<16x512xbf16>
    tpu.vector_store %arg4[%c0_15, %c0_16], %33 {strides = array<i32>} : memref<16x512xbf16, #tpu.memory_space<vmem>>, vector<16x512xbf16>,
    return
  }
}

module attributes {stable_mosaic.version = 11 : i64} {
  func.func @_convT_bn_lrelu_kernel(%arg0: memref<8x256xbf16, #tpu.memory_space<vmem>>, %arg1: memref<256x2048xbf16, #tpu.memory_space<vmem>>, %arg2: memref<8x1xf32, #tpu.memory_space<vmem>>, %arg3: memref<8x1xf32, #tpu.memory_space<vmem>>, %arg4: memref<8x2048xbf16, #tpu.memory_space<vmem>>) attributes {dimension_semantics = [], scalar_prefetch = 0 : i64, scratch_operands = 0 : i64, tpu.core_type = #tpu.core_type<tc>} {
    %c0 = arith.constant 0 : index
    %c0_0 = arith.constant 0 : index
    %0 = vector.load %arg0[%c0, %c0_0] : memref<8x256xbf16, #tpu.memory_space<vmem>>, vector<8x256xbf16>
    %c0_1 = arith.constant 0 : index
    %c0_2 = arith.constant 0 : index
    %1 = vector.load %arg1[%c0_1, %c0_2] : memref<256x2048xbf16, #tpu.memory_space<vmem>>, vector<256x2048xbf16>
    %cst = arith.constant dense<0.000000e+00> : vector<8x2048xf32>
    %2 = tpu.matmul %0, %1, %cst {dimension_numbers = #tpu.dot_dimension_numbers<[1], [0], [0], [1], [0, 0, 1, 1], [], []>} : vector<8x256xbf16>, vector<256x2048xbf16>, vector<8x2048xf32> -> vector<8x2048xf32>
    %cst_3 = arith.constant dense<0.000000e+00> : vector<8xf32>
    %3 = vector.multi_reduction <add>, %2, %cst_3 [1] : vector<8x2048xf32> to vector<8xf32>
    %4 = vector.shape_cast %3 : vector<8xf32> to vector<8x1xf32>
    %cst_4 = arith.constant 4.8828125E-4 : f32
    %5 = vector.broadcast %cst_4 : f32 to vector<8x1xf32>
    %6 = arith.mulf %4, %5 : vector<8x1xf32>
    %7 = arith.mulf %2, %2 : vector<8x2048xf32>
    %cst_5 = arith.constant dense<0.000000e+00> : vector<8xf32>
    %8 = vector.multi_reduction <add>, %7, %cst_5 [1] : vector<8x2048xf32> to vector<8xf32>
    %9 = vector.shape_cast %8 : vector<8xf32> to vector<8x1xf32>
    %cst_6 = arith.constant 4.8828125E-4 : f32
    %10 = vector.broadcast %cst_6 : f32 to vector<8x1xf32>
    %11 = arith.mulf %9, %10 : vector<8x1xf32>
    %12 = arith.mulf %6, %6 : vector<8x1xf32>
    %13 = arith.subf %11, %12 : vector<8x1xf32>
    %cst_7 = arith.constant 0.000000e+00 : f32
    %14 = vector.broadcast %cst_7 : f32 to vector<8x1xf32>
    %15 = arith.maximumf %13, %14 : vector<8x1xf32>
    %c0_8 = arith.constant 0 : index
    %c0_9 = arith.constant 0 : index
    %16 = vector.load %arg2[%c0_8, %c0_9] : memref<8x1xf32, #tpu.memory_space<vmem>>, vector<8x1xf32>
    %cst_10 = arith.constant 9.99999974E-6 : f32
    %17 = vector.broadcast %cst_10 : f32 to vector<8x1xf32>
    %18 = arith.addf %15, %17 : vector<8x1xf32>
    %19 = math.rsqrt %18 : vector<8x1xf32>
    %20 = arith.mulf %16, %19 : vector<8x1xf32>
    %c0_11 = arith.constant 0 : index
    %c0_12 = arith.constant 0 : index
    %21 = vector.load %arg3[%c0_11, %c0_12] : memref<8x1xf32, #tpu.memory_space<vmem>>, vector<8x1xf32>
    %22 = arith.mulf %20, %6 : vector<8x1xf32>
    %23 = arith.subf %21, %22 : vector<8x1xf32>
    %24 = vector.broadcast %20 : vector<8x1xf32> to vector<8x2048xf32>
    %25 = arith.mulf %24, %2 : vector<8x2048xf32>
    %26 = vector.broadcast %23 : vector<8x1xf32> to vector<8x2048xf32>
    %27 = arith.addf %25, %26 : vector<8x2048xf32>
    %cst_13 = arith.constant 0.000000e+00 : f32
    %28 = vector.broadcast %cst_13 : f32 to vector<8x2048xf32>
    %29 = arith.cmpf oge, %27, %28 : vector<8x2048xf32>
    %cst_14 = arith.constant 2.000000e-01 : f32
    %30 = vector.broadcast %cst_14 : f32 to vector<8x2048xf32>
    %31 = arith.mulf %30, %27 : vector<8x2048xf32>
    %32 = arith.select %29, %27, %31 : vector<8x2048xi1>, vector<8x2048xf32>
    %33 = arith.truncf %32 : vector<8x2048xf32> to vector<8x2048xbf16>
    %c0_15 = arith.constant 0 : index
    %c0_16 = arith.constant 0 : index
    %34 = vector.load %arg4[%c0_15, %c0_16] : memref<8x2048xbf16, #tpu.memory_space<vmem>>, vector<8x2048xbf16>
    tpu.vector_store %arg4[%c0_15, %c0_16], %33 {strides = array<i32>} : memref<8x2048xbf16, #tpu.memory_space<vmem>>, vector<8x2048xbf16>,
    return
  }
}

module attributes {stable_mosaic.version = 11 : i64} {
  func.func @_convT_bias_tanh_kernel(%arg0: memref<3x128xbf16, #tpu.memory_space<vmem>>, %arg1: memref<128x8192xbf16, #tpu.memory_space<vmem>>, %arg2: memref<3x1xf32, #tpu.memory_space<vmem>>, %arg3: memref<3x8192xf32, #tpu.memory_space<vmem>>) attributes {dimension_semantics = [], scalar_prefetch = 0 : i64, scratch_operands = 0 : i64, tpu.core_type = #tpu.core_type<tc>} {
    %c0 = arith.constant 0 : index
    %c0_0 = arith.constant 0 : index
    %0 = vector.load %arg0[%c0, %c0_0] : memref<3x128xbf16, #tpu.memory_space<vmem>>, vector<3x128xbf16>
    %c0_1 = arith.constant 0 : index
    %c0_2 = arith.constant 0 : index
    %1 = vector.load %arg1[%c0_1, %c0_2] : memref<128x8192xbf16, #tpu.memory_space<vmem>>, vector<128x8192xbf16>
    %cst = arith.constant dense<0.000000e+00> : vector<3x8192xf32>
    %2 = tpu.matmul %0, %1, %cst {dimension_numbers = #tpu.dot_dimension_numbers<[1], [0], [0], [1], [0, 0, 1, 1], [], []>} : vector<3x128xbf16>, vector<128x8192xbf16>, vector<3x8192xf32> -> vector<3x8192xf32>
    %c0_3 = arith.constant 0 : index
    %c0_4 = arith.constant 0 : index
    %3 = vector.load %arg2[%c0_3, %c0_4] : memref<3x1xf32, #tpu.memory_space<vmem>>, vector<3x1xf32>
    %4 = vector.broadcast %3 : vector<3x1xf32> to vector<3x8192xf32>
    %5 = arith.addf %2, %4 : vector<3x8192xf32>
    %6 = math.tanh %5 : vector<3x8192xf32>
    %c0_5 = arith.constant 0 : index
    %c0_6 = arith.constant 0 : index
    %7 = vector.load %arg3[%c0_5, %c0_6] : memref<3x8192xf32, #tpu.memory_space<vmem>>, vector<3x8192xf32>
    tpu.vector_store %arg3[%c0_5, %c0_6], %6 {strides = array<i32>} : memref<3x8192xf32, #tpu.memory_space<vmem>>, vector<3x8192xf32>,
    return
  }
}

</mosaic_0001>

<llo_original>
// kernel: generator_forward.5
$region0: #{generator_forward.5}
  #allocation0 [shape = 'u32[]', space=smem, size = 0x4, offset = 0x4, fixed_abs, tag = 'smem constant byte address 0x4 - core index']
  #allocation1 [shape = 'u32[144,128]{1,0:T(1,128)}', space=vmem, size = 0x12000, scoped, tag = 'internal scratch']
  %s0 = inlined_call_operand.vmem [shape: bf16[64,256], index: 0, kind: input, shape index: {}]
  %s1 = inlined_call_operand.vmem [shape: bf16[256,32], index: 1, kind: input, shape index: {}]
  %s2 = inlined_call_operand.vmem [shape: f32[64,1], index: 2, kind: input, shape index: {}]
  %s3 = inlined_call_operand.vmem [shape: f32[64,1], index: 3, kind: input, shape index: {}]
  %s4 = inlined_call_operand.vmem [shape: bf16[64,32], index: 4, kind: output, shape index: {}]
  %s5 = sld [smem:[#allocation0]]
  $region26: #{generator_forward.5} parent=0
    _
  %s7 = ssub.s32 1, %s5
  %s8 = scalar_select 0, %s7, %s5
  // Predicated region
  $region2: #{generator_forward.5} parent=0 // pred_check
    _
  $region3: #{generator_forward.5} parent=0 // pred_check_branch
    %10 = sbr.rel (0) target = $region5
  $region4: #{generator_forward.5} parent=0 // pred_region
    _
  $region5: #{generator_forward.5} parent=0 // pred_fallthru
    _
  // Predicated region
  $region6: #{generator_forward.5} parent=0 // pred_check
    _
  $region7: #{generator_forward.5} parent=0 // pred_check_branch
    %12 = sbr.rel (0) target = $region9
  $region8: #{generator_forward.5} parent=0 // pred_region
    _
  $region9: #{generator_forward.5} parent=0 // pred_fallthru
    _
  // Predicated region
  $region10: #{generator_forward.5} parent=0 // pred_check
    _
  $region11: #{generator_forward.5} parent=0 // pred_check_branch
    %14 = sbr.rel (0) target = $region13
  $region12: #{generator_forward.5} parent=0 // pred_region
    _
  $region13: #{generator_forward.5} parent=0 // pred_fallthru
    _
  // Predicated region
  $region14: #{generator_forward.5} parent=0 // pred_check
    _
  $region15: #{generator_forward.5} parent=0 // pred_check_branch
    %16 = sbr.rel (0) target = $region17
  $region16: #{generator_forward.5} parent=0 // pred_region
    _
  $region17: #{generator_forward.5} parent=0 // pred_fallthru
    _
  %v18 = vld [vmem:[%s0] sm:$0xff]
  %v19 = vld [vmem:[%s0 + $0x8] sm:$0xff]
  %v20 = vld [vmem:[%s0 + $0x10] sm:$0xff]
  %v21 = vld [vmem:[%s0 + $0x18] sm:$0xff]
  %v22 = vld [vmem:[%s0 + $0x20] sm:$0xff]
  %v23 = vld [vmem:[%s0 + $0x28] sm:$0xff]
  %v24 = vld [vmem:[%s0 + $0x30] sm:$0xff]
  %v25 = vld [vmem:[%s0 + $0x38] sm:$0xff]
  %v26 = vld [vmem:[%s1] sm:$0xf]
  %v27 = vld [vmem:[%s1 + $0x4] sm:$0xf]
  %v28 = vld [vmem:[%s1 + $0x8] sm:$0xf]
  %v29 = vld [vmem:[%s1 + $0xc] sm:$0xf]
  %v30 = vld [vmem:[%s1 + $0x10] sm:$0xf]
  %v31 = vld [vmem:[%s1 + $0x14] sm:$0xf]
  %v32 = vld [vmem:[%s1 + $0x18] sm:$0xf]
  %v33 = vld [vmem:[%s1 + $0x1c] sm:$0xf]
  %v34 = vld [vmem:[%s1 + $0x20] sm:$0xf]
  %v35 = vld [vmem:[%s1 + $0x24] sm:$0xf]
  %v36 = vld [vmem:[%s1 + $0x28] sm:$0xf]
  %v37 = vld [vmem:[%s1 + $0x2c] sm:$0xf]
  %v38 = vld [vmem:[%s1 + $0x30] sm:$0xf]
  %v39 = vld [vmem:[%s1 + $0x34] sm:$0xf]
  %v40 = vld [vmem:[%s1 + $0x38] sm:$0xf]
  %v41 = vld [vmem:[%s1 + $0x3c] sm:$0xf]
  %v42 = vld [vmem:[%s1 + $0x40] sm:$0xf]
  %v43 = vld [vmem:[%s1 + $0x44] sm:$0xf]
  %v44 = vld [vmem:[%s1 + $0x48] sm:$0xf]
  %v45 = vld [vmem:[%s1 + $0x4c] sm:$0xf]
  %v46 = vld [vmem:[%s1 + $0x50] sm:$0xf]
  %v47 = vld [vmem:[%s1 + $0x54] sm:$0xf]
  %v48 = vld [vmem:[%s1 + $0x58] sm:$0xf]
  %v49 = vld [vmem:[%s1 + $0x5c] sm:$0xf]
  %v50 = vld [vmem:[%s1 + $0x60] sm:$0xf]
  %v51 = vld [vmem:[%s1 + $0x64] sm:$0xf]
  %v52 = vld [vmem:[%s1 + $0x68] sm:$0xf]
  %v53 = vld [vmem:[%s1 + $0x6c] sm:$0xf]
  %v54 = vld [vmem:[%s1 + $0x70] sm:$0xf]
  %v55 = vld [vmem:[%s1 + $0x74] sm:$0xf]
  %v56 = vld [vmem:[%s1 + $0x78] sm:$0xf]
  %v57 = vld [vmem:[%s1 + $0x7c] sm:$0xf]
  %v66 = vunpack.c.l.b16 %v18
  %v67 = vunpack.c.h.b16 %v18
  %v68 = vunpack.c.l.b16 %v19
  %v69 = vunpack.c.h.b16 %v19
  %v70 = vunpack.c.l.b16 %v20
  %v71 = vunpack.c.h.b16 %v20
  %v72 = vunpack.c.l.b16 %v21
  %v73 = vunpack.c.h.b16 %v21
  %v74 = vunpack.c.l.b16 %v22
  %v75 = vunpack.c.h.b16 %v22
  %v76 = vunpack.c.l.b16 %v23
  %v77 = vunpack.c.h.b16 %v23
  %v78 = vunpack.c.l.b16 %v24
  %v79 = vunpack.c.h.b16 %v24
  %v80 = vunpack.c.l.b16 %v25
  %v81 = vunpack.c.h.b16 %v25
  %v82 = vpack.c.b16 %v68, %v66
  %v83 = vpack.c.b16 %v69, %v67
  %v84 = vpack.c.b16 %v72, %v70
  %v85 = vpack.c.b16 %v73, %v71
  %v86 = vpack.c.b16 %v76, %v74
  %v87 = vpack.c.b16 %v77, %v75
  %v88 = vpack.c.b16 %v80, %v78
  %v89 = vpack.c.b16 %v81, %v79
  %v130 = vunpack.c.l.b16 %v26
  %v131 = vunpack.c.l.b16 %v27
  %v132 = vunpack.c.l.b16 %v28
  %v133 = vunpack.c.l.b16 %v29
  %v134 = vunpack.c.l.b16 %v30
  %v135 = vunpack.c.l.b16 %v31
  %v136 = vunpack.c.l.b16 %v32
  %v137 = vunpack.c.l.b16 %v33
  %v138 = vunpack.c.l.b16 %v34
  %v139 = vunpack.c.l.b16 %v35
  %v140 = vunpack.c.l.b16 %v36
  %v141 = vunpack.c.l.b16 %v37
  %v142 = vunpack.c.l.b16 %v38
  %v143 = vunpack.c.l.b16 %v39
  %v144 = vunpack.c.l.b16 %v40
  %v145 = vunpack.c.l.b16 %v41
  %v146 = vunpack.c.l.b16 %v42
  %v147 = vunpack.c.l.b16 %v43
  %v148 = vunpack.c.l.b16 %v44
  %v149 = vunpack.c.l.b16 %v45
  %v150 = vunpack.c.l.b16 %v46
  %v151 = vunpack.c.l.b16 %v47
  %v152 = vunpack.c.l.b16 %v48
  %v153 = vunpack.c.l.b16 %v49
  %v154 = vunpack.c.l.b16 %v50
  %v155 = vunpack.c.l.b16 %v51
  %v156 = vunpack.c.l.b16 %v52
  %v157 = vunpack.c.l.b16 %v53
  %v158 = vunpack.c.l.b16 %v54
  %v159 = vunpack.c.l.b16 %v55
  %v160 = vunpack.c.l.b16 %v56
  %v161 = vunpack.c.l.b16 %v57
  %v162 = vpack.c.b16 %v131, %v130
  %v163 = vpack.c.b16 %v133, %v132
  %v164 = vpack.c.b16 %v135, %v134
  %v165 = vpack.c.b16 %v137, %v136
  %v166 = vpack.c.b16 %v139, %v138
  %v167 = vpack.c.b16 %v141, %v140
  %v168 = vpack.c.b16 %v143, %v142
  %v169 = vpack.c.b16 %v145, %v144
  %v170 = vpack.c.b16 %v147, %v146
  %v171 = vpack.c.b16 %v149, %v148
  %v172 = vpack.c.b16 %v151, %v150
  %v173 = vpack.c.b16 %v153, %v152
  %v174 = vpack.c.b16 %v155, %v154
  %v175 = vpack.c.b16 %v157, %v156
  %v176 = vpack.c.b16 %v159, %v158
  %v177 = vpack.c.b16 %v161, %v160
  %194 = vmatprep.subr.bf16.mxu0 0
  %195 = vmatpush1.bf16.msra.mxu0 %v169
  %196 = vmatprep.subr.bf16.mxu0 0
  %197 = vmatpush1.bf16.msra.mxu0 %v168
  %198 = vmatprep.subr.bf16.mxu0 0
  %199 = vmatpush1.bf16.msra.mxu0 %v167
  %200 = vmatprep.subr.bf16.mxu0 0
  %201 = vmatpush1.bf16.msra.mxu0 %v166
  %202 = vmatprep.subr.bf16.mxu0 0
  %203 = vmatpush1.bf16.msra.mxu0 %v165
  %204 = vmatprep.subr.bf16.mxu0 0
  %205 = vmatpush1.bf16.msra.mxu0 %v164
  %206 = vmatprep.subr.bf16.mxu0 0
  %207 = vmatpush1.bf16.msra.mxu0 %v163
  %208 = vmatprep.subr.bf16.mxu0 0
  %209 = vmatpush1.bf16.msra.mxu0 %v162
  %210 = vmatprep.subr.bf16.mxu0 0
  %211 = vmatpush2.bf16.msra.mxu0 %v177
  %212 = vmatprep.subr.bf16.mxu0 0
  %213 = vmatpush2.bf16.msra.mxu0 %v176
  %214 = vmatprep.subr.bf16.mxu0 0
  %215 = vmatpush2.bf16.msra.mxu0 %v175
  %216 = vmatprep.subr.bf16.mxu0 0
  %217 = vmatpush2.bf16.msra.mxu0 %v174
  %218 = vmatprep.subr.bf16.mxu0 0
  %219 = vmatpush2.bf16.msra.mxu0 %v173
  %220 = vmatprep.subr.bf16.mxu0 0
  %221 = vmatpush2.bf16.msra.mxu0 %v172
  %222 = vmatprep.subr.bf16.mxu0 0
  %223 = vmatpush2.bf16.msra.mxu0 %v171
  %224 = vmatprep.subr.bf16.mxu0 0
  %225 = vmatpush2.bf16.msra.mxu0 %v170
  %226 = vmatprep.mubr.bf16.mxu0 %v83
  %227 = vmatmul.mubr.bf16.gmra.mxu0 %v82
  %v228 = vpop.f32.mrf.mxu0
  %v229 = vadd.f32 0.0, %v228
  %v230 = vpop.f32.mrf.mxu0
  %v231 = vpop.f32.mrf.mxu0
  %v232 = vadd.f32 0.0, %v231
  %v233 = vpop.f32.mrf.mxu0
  %234 = vmatprep.mubr.bf16.mxu0 %v85
  %235 = vmatmul.mubr.bf16.gmra.mxu0 %v84
  %v236 = vpop.f32.mrf.mxu0
  %v237 = vadd.f32 0.0, %v236
  %v238 = vpop.f32.mrf.mxu0
  %v239 = vpop.f32.mrf.mxu0
  %v240 = vadd.f32 0.0, %v239
  %v241 = vpop.f32.mrf.mxu0
  %242 = vmatprep.mubr.bf16.mxu0 %v87
  %243 = vmatmul.mubr.bf16.gmra.mxu0 %v86
  %v244 = vpop.f32.mrf.mxu0
  %v245 = vadd.f32 0.0, %v244
  %v246 = vpop.f32.mrf.mxu0
  %v247 = vpop.f32.mrf.mxu0
  %v248 = vadd.f32 0.0, %v247
  %v249 = vpop.f32.mrf.mxu0
  %250 = vmatprep.mubr.bf16.mxu0 %v89
  %251 = vmatmul.mubr.bf16.gmra.mxu0 %v88
  %v252 = vpop.f32.mrf.mxu0
  %v253 = vadd.f32 0.0, %v252
  %v254 = vpop.f32.mrf.mxu0
  %v255 = vpop.f32.mrf.mxu0
  %v256 = vadd.f32 0.0, %v255
  %v257 = vpop.f32.mrf.mxu0
  %258 = vdwg.mxu0
  %vm259 = vcmask 261120
  %v260 = vsel %vm259, %v229, 0.0
  %261 = vadd.xlane.f32.xlu0 %v260
  %v262 = vpop.xlane.xlu0 %261
  %v263 = vsel %vm259, %v232, 0.0
  %264 = vadd.xlane.f32.xlu0 %v263
  %v265 = vpop.xlane.xlu0 %264
  %v266 = vsel %vm259, %v237, 0.0
  %267 = vadd.xlane.f32.xlu0 %v266
  %v268 = vpop.xlane.xlu0 %267
  %v269 = vsel %vm259, %v240, 0.0
  %270 = vadd.xlane.f32.xlu0 %v269
  %v271 = vpop.xlane.xlu0 %270
  %v272 = vsel %vm259, %v245, 0.0
  %273 = vadd.xlane.f32.xlu0 %v272
  %v274 = vpop.xlane.xlu0 %273
  %v275 = vsel %vm259, %v248, 0.0
  %276 = vadd.xlane.f32.xlu0 %v275
  %v277 = vpop.xlane.xlu0 %276
  %v278 = vsel %vm259, %v253, 0.0
  %279 = vadd.xlane.f32.xlu0 %v278
  %v280 = vpop.xlane.xlu0 %279
  %v281 = vsel %vm259, %v256, 0.0
  %282 = vadd.xlane.f32.xlu0 %v281
  %v283 = vpop.xlane.xlu0 %282
  %v284 = vmul.f32 %v262, 0.03125
  %v285 = vmul.f32 %v265, 0.03125
  %v286 = vmul.f32 %v268, 0.03125
  %v287 = vmul.f32 %v271, 0.03125
  %v288 = vmul.f32 %v274, 0.03125
  %v289 = vmul.f32 %v277, 0.03125
  %v290 = vmul.f32 %v280, 0.03125
  %v291 = vmul.f32 %v283, 0.03125
  %v292 = vmul.f32 %v229, %v229
  %v293 = vmul.f32 %v232, %v232
  %v294 = vmul.f32 %v237, %v237
  %v295 = vmul.f32 %v240, %v240
  %v296 = vmul.f32 %v245, %v245
  %v297 = vmul.f32 %v248, %v248
  %v298 = vmul.f32 %v253, %v253
  %v299 = vmul.f32 %v256, %v256
  %v300 = vsel %vm259, %v292, 0.0
  %301 = vadd.xlane.f32.xlu0 %v300
  %v302 = vpop.xlane.xlu0 %301
  %v303 = vsel %vm259, %v293, 0.0
  %304 = vadd.xlane.f32.xlu0 %v303
  %v305 = vpop.xlane.xlu0 %304
  %v306 = vsel %vm259, %v294, 0.0
  %307 = vadd.xlane.f32.xlu0 %v306
  %v308 = vpop.xlane.xlu0 %307
  %v309 = vsel %vm259, %v295, 0.0
  %310 = vadd.xlane.f32.xlu0 %v309
  %v311 = vpop.xlane.xlu0 %310
  %v312 = vsel %vm259, %v296, 0.0
  %313 = vadd.xlane.f32.xlu0 %v312
  %v314 = vpop.xlane.xlu0 %313
  %v315 = vsel %vm259, %v297, 0.0
  %316 = vadd.xlane.f32.xlu0 %v315
  %v317 = vpop.xlane.xlu0 %316
  %v318 = vsel %vm259, %v298, 0.0
  %319 = vadd.xlane.f32.xlu0 %v318
  %v320 = vpop.xlane.xlu0 %319
  %v321 = vsel %vm259, %v299, 0.0
  %322 = vadd.xlane.f32.xlu0 %v321
  %v323 = vpop.xlane.xlu0 %322
  %v324 = vmul.f32 %v302, 0.03125
  %v325 = vmul.f32 %v305, 0.03125
  %v326 = vmul.f32 %v308, 0.03125
  %v327 = vmul.f32 %v311, 0.03125
  %v328 = vmul.f32 %v314, 0.03125
  %v329 = vmul.f32 %v317, 0.03125
  %v330 = vmul.f32 %v320, 0.03125
  %v331 = vmul.f32 %v323, 0.03125
  %v332 = vmul.f32 %v284, %v284
  %v333 = vmul.f32 %v285, %v285
  %v334 = vmul.f32 %v286, %v286
  %v335 = vmul.f32 %v287, %v287
  %v336 = vmul.f32 %v288, %v288
  %v337 = vmul.f32 %v289, %v289
  %v338 = vmul.f32 %v290, %v290
  %v339 = vmul.f32 %v291, %v291
  %v340 = vsub.f32 %v324, %v332
  %v341 = vsub.f32 %v325, %v333
  %v342 = vsub.f32 %v326, %v334
  %v343 = vsub.f32 %v327, %v335
  %v344 = vsub.f32 %v328, %v336
  %v345 = vsub.f32 %v329, %v337
  %v346 = vsub.f32 %v330, %v338
  %v347 = vsub.f32 %v331, %v339
  %v348 = vmax.f32 %v340, 0.0
  %v349 = vmax.f32 %v341, 0.0
  %v350 = vmax.f32 %v342, 0.0
  %v351 = vmax.f32 %v343, 0.0
  %v352 = vmax.f32 %v344, 0.0
  %v353 = vmax.f32 %v345, 0.0
  %v354 = vmax.f32 %v346, 0.0
  %v355 = vmax.f32 %v347, 0.0
  %v356 = vld [vmem:[%s2] sm:$0xff]
  %v357 = vld [vmem:[%s2 + $0x8] sm:$0xff]
  %v358 = vld [vmem:[%s2 + $0x10] sm:$0xff]
  %v359 = vld [vmem:[%s2 + $0x18] sm:$0xff]
  %v360 = vld [vmem:[%s2 + $0x20] sm:$0xff]
  %v361 = vld [vmem:[%s2 + $0x28] sm:$0xff]
  %v362 = vld [vmem:[%s2 + $0x30] sm:$0xff]
  %v363 = vld [vmem:[%s2 + $0x38] sm:$0xff]
  %v364 = vadd.f32 %v348, 1e-05
  %v365 = vadd.f32 %v349, 1e-05
  %v366 = vadd.f32 %v350, 1e-05
  %v367 = vadd.f32 %v351, 1e-05
  %v368 = vadd.f32 %v352, 1e-05
  %v369 = vadd.f32 %v353, 1e-05
  %v370 = vadd.f32 %v354, 1e-05
  %v371 = vadd.f32 %v355, 1e-05
  %v372 = vrsqrt.pop %v364
  %v373 = vrsqrt.pop %v365
  %v374 = vrsqrt.pop %v366
  %v375 = vrsqrt.pop %v367
  %v376 = vrsqrt.pop %v368
  %v377 = vrsqrt.pop %v369
  %v378 = vrsqrt.pop %v370
  %v379 = vrsqrt.pop %v371
  %v380 = vmul.f32 %v356, %v372
  %v381 = vmul.f32 %v357, %v373
  %v382 = vmul.f32 %v358, %v374
  %v383 = vmul.f32 %v359, %v375
  %v384 = vmul.f32 %v360, %v376
  %v385 = vmul.f32 %v361, %v377
  %v386 = vmul.f32 %v362, %v378
  %v387 = vmul.f32 %v363, %v379
  %v388 = vld [vmem:[%s3] sm:$0xff]
  %v389 = vld [vmem:[%s3 + $0x8] sm:$0xff]
  %v390 = vld [vmem:[%s3 + $0x10] sm:$0xff]
  %v391 = vld [vmem:[%s3 + $0x18] sm:$0xff]
  %v392 = vld [vmem:[%s3 + $0x20] sm:$0xff]
  %v393 = vld [vmem:[%s3 + $0x28] sm:$0xff]
  %v394 = vld [vmem:[%s3 + $0x30] sm:$0xff]
  %v395 = vld [vmem:[%s3 + $0x38] sm:$0xff]
  %v396 = vmul.f32 %v380, %v284
  %v397 = vmul.f32 %v381, %v285
  %v398 = vmul.f32 %v382, %v286
  %v399 = vmul.f32 %v383, %v287
  %v400 = vmul.f32 %v384, %v288
  %v401 = vmul.f32 %v385, %v289
  %v402 = vmul.f32 %v386, %v290
  %v403 = vmul.f32 %v387, %v291
  %v404 = vsub.f32 %v388, %v396
  %v405 = vsub.f32 %v389, %v397
  %v406 = vsub.f32 %v390, %v398
  %v407 = vsub.f32 %v391, %v399
  %v408 = vsub.f32 %v392, %v400
  %v409 = vsub.f32 %v393, %v401
  %v410 = vsub.f32 %v394, %v402
  %v411 = vsub.f32 %v395, %v403
  %413 = vset.pattern.permute.xlu0 0
  %414 = vperm.xlu0 %413, %v380
  %v415 = vpop.permute.xlu0 %414
  %418 = vset.pattern.permute.xlu0 0
  %419 = vperm.xlu0 %418, %v381
  %v420 = vpop.permute.xlu0 %419
  %423 = vset.pattern.permute.xlu0 0
  %424 = vperm.xlu0 %423, %v382
  %v425 = vpop.permute.xlu0 %424
  %428 = vset.pattern.permute.xlu0 0
  %429 = vperm.xlu0 %428, %v383
  %v430 = vpop.permute.xlu0 %429
  %433 = vset.pattern.permute.xlu0 0
  %434 = vperm.xlu0 %433, %v384
  %v435 = vpop.permute.xlu0 %434
  %438 = vset.pattern.permute.xlu0 0
  %439 = vperm.xlu0 %438, %v385
  %v440 = vpop.permute.xlu0 %439
  %443 = vset.pattern.permute.xlu0 0
  %444 = vperm.xlu0 %443, %v386
  %v445 = vpop.permute.xlu0 %444
  %448 = vset.pattern.permute.xlu0 0
  %449 = vperm.xlu0 %448, %v387
  %v450 = vpop.permute.xlu0 %449
  %v452 = vmul.f32 %v415, %v229
  %v453 = vmul.f32 %v420, %v232
  %v454 = vmul.f32 %v425, %v237
  %v455 = vmul.f32 %v430, %v240
  %v456 = vmul.f32 %v435, %v245
  %v457 = vmul.f32 %v440, %v248
  %v458 = vmul.f32 %v445, %v253
  %v459 = vmul.f32 %v450, %v256
  %461 = vset.pattern.permute.xlu0 0
  %462 = vperm.xlu0 %461, %v404
  %v463 = vpop.permute.xlu0 %462
  %466 = vset.pattern.permute.xlu0 0
  %467 = vperm.xlu0 %466, %v405
  %v468 = vpop.permute.xlu0 %467
  %471 = vset.pattern.permute.xlu0 0
  %472 = vperm.xlu0 %471, %v406
  %v473 = vpop.permute.xlu0 %472
  %476 = vset.pattern.permute.xlu0 0
  %477 = vperm.xlu0 %476, %v407
  %v478 = vpop.permute.xlu0 %477
  %481 = vset.pattern.permute.xlu0 0
  %482 = vperm.xlu0 %481, %v408
  %v483 = vpop.permute.xlu0 %482
  %486 = vset.pattern.permute.xlu0 0
  %487 = vperm.xlu0 %486, %v409
  %v488 = vpop.permute.xlu0 %487
  %491 = vset.pattern.permute.xlu0 0
  %492 = vperm.xlu0 %491, %v410
  %v493 = vpop.permute.xlu0 %492
  %496 = vset.pattern.permute.xlu0 0
  %497 = vperm.xlu0 %496, %v411
  %v498 = vpop.permute.xlu0 %497
  %v500 = vadd.f32 %v452, %v463
  %v501 = vadd.f32 %v453, %v468
  %v502 = vadd.f32 %v454, %v473
  %v503 = vadd.f32 %v455, %v478
  %v504 = vadd.f32 %v456, %v483
  %v505 = vadd.f32 %v457, %v488
  %v506 = vadd.f32 %v458, %v493
  %v507 = vadd.f32 %v459, %v498
  %vm508 = vcmp.ge.f32.partialorder %v500, 0.0
  %vm509 = vcmp.ge.f32.partialorder %v501, 0.0
  %vm510 = vcmp.ge.f32.partialorder %v502, 0.0
  %vm511 = vcmp.ge.f32.partialorder %v503, 0.0
  %vm512 = vcmp.ge.f32.partialorder %v504, 0.0
  %vm513 = vcmp.ge.f32.partialorder %v505, 0.0
  %vm514 = vcmp.ge.f32.partialorder %v506, 0.0
  %vm515 = vcmp.ge.f32.partialorder %v507, 0.0
  %v516 = vmul.f32 %v500, 0.2
  %v517 = vmul.f32 %v501, 0.2
  %v518 = vmul.f32 %v502, 0.2
  %v519 = vmul.f32 %v503, 0.2
  %v520 = vmul.f32 %v504, 0.2
  %v521 = vmul.f32 %v505, 0.2
  %v522 = vmul.f32 %v506, 0.2
  %v523 = vmul.f32 %v507, 0.2
  %v524 = vsel %vm508, %v500, %v516
  %v525 = vsel %vm509, %v501, %v517
  %v526 = vsel %vm510, %v502, %v518
  %v527 = vsel %vm511, %v503, %v519
  %v528 = vsel %vm512, %v504, %v520
  %v529 = vsel %vm513, %v505, %v521
  %v530 = vsel %vm514, %v506, %v522
  %v531 = vsel %vm515, %v507, %v523
  %v532 = vpack.c.bf16 %v525, %v524
  %v533 = vpack.c.bf16 %v527, %v526
  %v534 = vpack.c.bf16 %v529, %v528
  %v535 = vpack.c.bf16 %v531, %v530
  %v540 = vunpack.c.l.b16 %v532
  %v541 = vunpack.c.h.b16 %v532
  %v542 = vunpack.c.l.b16 %v533
  %v543 = vunpack.c.h.b16 %v533
  %v544 = vunpack.c.l.b16 %v534
  %v545 = vunpack.c.h.b16 %v534
  %v546 = vunpack.c.l.b16 %v535
  %v547 = vunpack.c.h.b16 %v535
  %v548 = vpack.c.b16 %v540, %v540
  %v549 = vpack.c.b16 %v541, %v541
  %v550 = vpack.c.b16 %v542, %v542
  %v551 = vpack.c.b16 %v543, %v543
  %v552 = vpack.c.b16 %v544, %v544
  %v553 = vpack.c.b16 %v545, %v545
  %v554 = vpack.c.b16 %v546, %v546
  %v555 = vpack.c.b16 %v547, %v547
  %vm564 = vcmask 257024
  %565 = vst.msk [vmem:[%s4] sm:$0xf] %vm564, %v548
  %566 = vst.msk [vmem:[%s4 + $0x4] sm:$0xf] %vm564, %v549
  %567 = vst.msk [vmem:[%s4 + $0x8] sm:$0xf] %vm564, %v550
  %568 = vst.msk [vmem:[%s4 + $0xc] sm:$0xf] %vm564, %v551
  %569 = vst.msk [vmem:[%s4 + $0x10] sm:$0xf] %vm564, %v552
  %570 = vst.msk [vmem:[%s4 + $0x14] sm:$0xf] %vm564, %v553
  %571 = vst.msk [vmem:[%s4 + $0x18] sm:$0xf] %vm564, %v554
  %572 = vst.msk [vmem:[%s4 + $0x1c] sm:$0xf] %vm564, %v555
  // Predicated region
  $region18: #{generator_forward.5} parent=0 // pred_check
    _
  $region19: #{generator_forward.5} parent=0 // pred_check_branch
    %574 = sbr.rel (0) target = $region21
  $region20: #{generator_forward.5} parent=0 // pred_region
    _
  $region21: #{generator_forward.5} parent=0 // pred_fallthru
    _
  // Predicated region
  $region22: #{generator_forward.5} parent=0 // pred_check
    _
  $region23: #{generator_forward.5} parent=0 // pred_check_branch
    %576 = sbr.rel (0) target = $region25
  $region24: #{generator_forward.5} parent=0 // pred_region
    _
  $region25: #{generator_forward.5} parent=0 // pred_fallthru
    _

// kernel: generator_forward.6
$region0: #{generator_forward.6}
  #allocation0 [shape = 'u32[]', space=smem, size = 0x4, offset = 0x4, fixed_abs, tag = 'smem constant byte address 0x4 - core index']
  #allocation1 [shape = 'u32[144,128]{1,0:T(1,128)}', space=vmem, size = 0x12000, scoped, tag = 'internal scratch']
  %s0 = inlined_call_operand.vmem [shape: bf16[32,1024], index: 0, kind: input, shape index: {}]
  %s1 = inlined_call_operand.vmem [shape: bf16[1024,128], index: 1, kind: input, shape index: {}]
  %s2 = inlined_call_operand.vmem [shape: f32[32,1], index: 2, kind: input, shape index: {}]
  %s3 = inlined_call_operand.vmem [shape: f32[32,1], index: 3, kind: input, shape index: {}]
  %s4 = inlined_call_operand.vmem [shape: bf16[32,128], index: 4, kind: output, shape index: {}]
  %s5 = sld [smem:[#allocation0]]
  $region26: #{generator_forward.6} parent=0
    _
  %s7 = ssub.s32 1, %s5
  %s8 = scalar_select 0, %s7, %s5
  // Predicated region
  $region2: #{generator_forward.6} parent=0 // pred_check
    _
  $region3: #{generator_forward.6} parent=0 // pred_check_branch
    %10 = sbr.rel (0) target = $region5
  $region4: #{generator_forward.6} parent=0 // pred_region
    _
  $region5: #{generator_forward.6} parent=0 // pred_fallthru
    _
  // Predicated region
  $region6: #{generator_forward.6} parent=0 // pred_check
    _
  $region7: #{generator_forward.6} parent=0 // pred_check_branch
    %12 = sbr.rel (0) target = $region9
  $region8: #{generator_forward.6} parent=0 // pred_region
    _
  $region9: #{generator_forward.6} parent=0 // pred_fallthru
    _
  // Predicated region
  $region10: #{generator_forward.6} parent=0 // pred_check
    _
  $region11: #{generator_forward.6} parent=0 // pred_check_branch
    %14 = sbr.rel (0) target = $region13
  $region12: #{generator_forward.6} parent=0 // pred_region
    _
  $region13: #{generator_forward.6} parent=0 // pred_fallthru
    _
  // Predicated region
  $region14: #{generator_forward.6} parent=0 // pred_check
    _
  $region15: #{generator_forward.6} parent=0 // pred_check_branch
    %16 = sbr.rel (0) target = $region17
  $region16: #{generator_forward.6} parent=0 // pred_region
    _
  $region17: #{generator_forward.6} parent=0 // pred_fallthru
    _
  %v18 = vld [vmem:[%s0] sm:$0xff]
  %v19 = vld [vmem:[%s0 + $0x8] sm:$0xff]
  %v20 = vld [vmem:[%s0 + $0x10] sm:$0xff]
  %v21 = vld [vmem:[%s0 + $0x18] sm:$0xff]
  %v22 = vld [vmem:[%s0 + $0x20] sm:$0xff]
  %v23 = vld [vmem:[%s0 + $0x28] sm:$0xff]
  %v24 = vld [vmem:[%s0 + $0x30] sm:$0xff]
  %v25 = vld [vmem:[%s0 + $0x38] sm:$0xff]
  %v26 = vld [vmem:[%s0 + $0x40] sm:$0xff]
  %v27 = vld [vmem:[%s0 + $0x48] sm:$0xff]
  %v28 = vld [vmem:[%s0 + $0x50] sm:$0xff]
  %v29 = vld [vmem:[%s0 + $0x58] sm:$0xff]
  %v30 = vld [vmem:[%s0 + $0x60] sm:$0xff]
  %v31 = vld [vmem:[%s0 + $0x68] sm:$0xff]
  %v32 = vld [vmem:[%s0 + $0x70] sm:$0xff]
  %v33 = vld [vmem:[%s0 + $0x78] sm:$0xff]
  %v34 = vld [vmem:[%s1] sm:$0xf]
  %v35 = vld [vmem:[%s1 + $0x4] sm:$0xf]
  %v36 = vld [vmem:[%s1 + $0x8] sm:$0xf]
  %v37 = vld [vmem:[%s1 + $0xc] sm:$0xf]
  %v38 = vld [vmem:[%s1 + $0x10] sm:$0xf]
  %v39 = vld [vmem:[%s1 + $0x14] sm:$0xf]
  %v40 = vld [vmem:[%s1 + $0x18] sm:$0xf]
  %v41 = vld [vmem:[%s1 + $0x1c] sm:$0xf]
  %v42 = vld [vmem:[%s1 + $0x20] sm:$0xf]
  %v43 = vld [vmem:[%s1 + $0x24] sm:$0xf]
  %v44 = vld [vmem:[%s1 + $0x28] sm:$0xf]
  %v45 = vld [vmem:[%s1 + $0x2c] sm:$0xf]
  %v46 = vld [vmem:[%s1 + $0x30] sm:$0xf]
  %v47 = vld [vmem:[%s1 + $0x34] sm:$0xf]
  %v48 = vld [vmem:[%s1 + $0x38] sm:$0xf]
  %v49 = vld [vmem:[%s1 + $0x3c] sm:$0xf]
  %v50 = vld [vmem:[%s1 + $0x40] sm:$0xf]
  %v51 = vld [vmem:[%s1 + $0x44] sm:$0xf]
  %v52 = vld [vmem:[%s1 + $0x48] sm:$0xf]
  %v53 = vld [vmem:[%s1 + $0x4c] sm:$0xf]
  %v54 = vld [vmem:[%s1 + $0x50] sm:$0xf]
  %v55 = vld [vmem:[%s1 + $0x54] sm:$0xf]
  %v56 = vld [vmem:[%s1 + $0x58] sm:$0xf]
  %v57 = vld [vmem:[%s1 + $0x5c] sm:$0xf]
  %v58 = vld [vmem:[%s1 + $0x60] sm:$0xf]
  %v59 = vld [vmem:[%s1 + $0x64] sm:$0xf]
  %v60 = vld [vmem:[%s1 + $0x68] sm:$0xf]
  %v61 = vld [vmem:[%s1 + $0x6c] sm:$0xf]
  %v62 = vld [vmem:[%s1 + $0x70] sm:$0xf]
  %v63 = vld [vmem:[%s1 + $0x74] sm:$0xf]
  %v64 = vld [vmem:[%s1 + $0x78] sm:$0xf]
  %v65 = vld [vmem:[%s1 + $0x7c] sm:$0xf]
  %v66 = vld [vmem:[%s1 + $0x80] sm:$0xf]
  %v67 = vld [vmem:[%s1 + $0x84] sm:$0xf]
  %v68 = vld [vmem:[%s1 + $0x88] sm:$0xf]
  %v69 = vld [vmem:[%s1 + $0x8c] sm:$0xf]
  %v70 = vld [vmem:[%s1 + $0x90] sm:$0xf]
  %v71 = vld [vmem:[%s1 + $0x94] sm:$0xf]
  %v72 = vld [vmem:[%s1 + $0x98] sm:$0xf]
  %v73 = vld [vmem:[%s1 + $0x9c] sm:$0xf]
  %v74 = vld [vmem:[%s1 + $0xa0] sm:$0xf]
  %v75 = vld [vmem:[%s1 + $0xa4] sm:$0xf]
  %v76 = vld [vmem:[%s1 + $0xa8] sm:$0xf]
  %v77 = vld [vmem:[%s1 + $0xac] sm:$0xf]
  %v78 = vld [vmem:[%s1 + $0xb0] sm:$0xf]
  %v79 = vld [vmem:[%s1 + $0xb4] sm:$0xf]
  %v80 = vld [vmem:[%s1 + $0xb8] sm:$0xf]
  %v81 = vld [vmem:[%s1 + $0xbc] sm:$0xf]
  %v82 = vld [vmem:[%s1 + $0xc0] sm:$0xf]
  %v83 = vld [vmem:[%s1 + $0xc4] sm:$0xf]
  %v84 = vld [vmem:[%s1 + $0xc8] sm:$0xf]
  %v85 = vld [vmem:[%s1 + $0xcc] sm:$0xf]
  %v86 = vld [vmem:[%s1 + $0xd0] sm:$0xf]
  %v87 = vld [vmem:[%s1 + $0xd4] sm:$0xf]
  %v88 = vld [vmem:[%s1 + $0xd8] sm:$0xf]
  %v89 = vld [vmem:[%s1 + $0xdc] sm:$0xf]
  %v90 = vld [vmem:[%s1 + $0xe0] sm:$0xf]
  %v91 = vld [vmem:[%s1 + $0xe4] sm:$0xf]
  %v92 = vld [vmem:[%s1 + $0xe8] sm:$0xf]
  %v93 = vld [vmem:[%s1 + $0xec] sm:$0xf]
  %v94 = vld [vmem:[%s1 + $0xf0] sm:$0xf]
  %v95 = vld [vmem:[%s1 + $0xf4] sm:$0xf]
  %v96 = vld [vmem:[%s1 + $0xf8] sm:$0xf]
  %v97 = vld [vmem:[%s1 + $0xfc] sm:$0xf]
  %v98 = vld [vmem:[%s1 + $0x100] sm:$0xf]
  %v99 = vld [vmem:[%s1 + $0x104] sm:$0xf]
  %v100 = vld [vmem:[%s1 + $0x108] sm:$0xf]
  %v101 = vld [vmem:[%s1 + $0x10c] sm:$0xf]
  %v102 = vld [vmem:[%s1 + $0x110] sm:$0xf]
  %v103 = vld [vmem:[%s1 + $0x114] sm:$0xf]
  %v104 = vld [vmem:[%s1 + $0x118] sm:$0xf]
  %v105 = vld [vmem:[%s1 + $0x11c] sm:$0xf]
  %v106 = vld [vmem:[%s1 + $0x120] sm:$0xf]
  %v107 = vld [vmem:[%s1 + $0x124] sm:$0xf]
  %v108 = vld [vmem:[%s1 + $0x128] sm:$0xf]
  %v109 = vld [vmem:[%s1 + $0x12c] sm:$0xf]
  %v110 = vld [vmem:[%s1 + $0x130] sm:$0xf]
  %v111 = vld [vmem:[%s1 + $0x134] sm:$0xf]
  %v112 = vld [vmem:[%s1 + $0x138] sm:$0xf]
  %v113 = vld [vmem:[%s1 + $0x13c] sm:$0xf]
  %v114 = vld [vmem:[%s1 + $0x140] sm:$0xf]
  %v115 = vld [vmem:[%s1 + $0x144] sm:$0xf]
  %v116 = vld [vmem:[%s1 + $0x148] sm:$0xf]
  %v117 = vld [vmem:[%s1 + $0x14c] sm:$0xf]
  %v118 = vld [vmem:[%s1 + $0x150] sm:$0xf]
  %v119 = vld [vmem:[%s1 + $0x154] sm:$0xf]
  %v120 = vld [vmem:[%s1 + $0x158] sm:$0xf]
  %v121 = vld [vmem:[%s1 + $0x15c] sm:$0xf]
  %v122 = vld [vmem:[%s1 + $0x160] sm:$0xf]
  %v123 = vld [vmem:[%s1 + $0x164] sm:$0xf]
  %v124 = vld [vmem:[%s1 + $0x168] sm:$0xf]
  %v125 = vld [vmem:[%s1 + $0x16c] sm:$0xf]
  %v126 = vld [vmem:[%s1 + $0x170] sm:$0xf]
  %v127 = vld [vmem:[%s1 + $0x174] sm:$0xf]
  %v128 = vld [vmem:[%s1 + $0x178] sm:$0xf]
  %v129 = vld [vmem:[%s1 + $0x17c] sm:$0xf]
  %v130 = vld [vmem:[%s1 + $0x180] sm:$0xf]
  %v131 = vld [vmem:[%s1 + $0x184] sm:$0xf]
  %v132 = vld [vmem:[%s1 + $0x188] sm:$0xf]
  %v133 = vld [vmem:[%s1 + $0x18c] sm:$0xf]
  %v134 = vld [vmem:[%s1 + $0x190] sm:$0xf]
  %v135 = vld [vmem:[%s1 + $0x194] sm:$0xf]
  %v136 = vld [vmem:[%s1 + $0x198] sm:$0xf]
  %v137 = vld [vmem:[%s1 + $0x19c] sm:$0xf]
  %v138 = vld [vmem:[%s1 + $0x1a0] sm:$0xf]
  %v139 = vld [vmem:[%s1 + $0x1a4] sm:$0xf]
  %v140 = vld [vmem:[%s1 + $0x1a8] sm:$0xf]
  %v141 = vld [vmem:[%s1 + $0x1ac] sm:$0xf]
  %v142 = vld [vmem:[%s1 + $0x1b0] sm:$0xf]
  %v143 = vld [vmem:[%s1 + $0x1b4] sm:$0xf]
  %v144 = vld [vmem:[%s1 + $0x1b8] sm:$0xf]
  %v145 = vld [vmem:[%s1 + $0x1bc] sm:$0xf]
  %v146 = vld [vmem:[%s1 + $0x1c0] sm:$0xf]
  %v147 = vld [vmem:[%s1 + $0x1c4] sm:$0xf]
  %v148 = vld [vmem:[%s1 + $0x1c8] sm:$0xf]
  %v149 = vld [vmem:[%s1 + $0x1cc] sm:$0xf]
  %v150 = vld [vmem:[%s1 + $0x1d0] sm:$0xf]
  %v151 = vld [vmem:[%s1 + $0x1d4] sm:$0xf]
  %v152 = vld [vmem:[%s1 + $0x1d8] sm:$0xf]
  %v153 = vld [vmem:[%s1 + $0x1dc] sm:$0xf]
  %v154 = vld [vmem:[%s1 + $0x1e0] sm:$0xf]
  %v155 = vld [vmem:[%s1 + $0x1e4] sm:$0xf]
  %v156 = vld [vmem:[%s1 + $0x1e8] sm:$0xf]
  %v157 = vld [vmem:[%s1 + $0x1ec] sm:$0xf]
  %v158 = vld [vmem:[%s1 + $0x1f0] sm:$0xf]
  %v159 = vld [vmem:[%s1 + $0x1f4] sm:$0xf]
  %v160 = vld [vmem:[%s1 + $0x1f8] sm:$0xf]
  %v161 = vld [vmem:[%s1 + $0x1fc] sm:$0xf]
  %v178 = vunpack.c.l.b16 %v18
  %v179 = vunpack.c.h.b16 %v18
  %v180 = vunpack.c.l.b16 %v19
  %v181 = vunpack.c.h.b16 %v19
  %v182 = vunpack.c.l.b16 %v20
  %v183 = vunpack.c.h.b16 %v20
  %v184 = vunpack.c.l.b16 %v21
  %v185 = vunpack.c.h.b16 %v21
  %v186 = vunpack.c.l.b16 %v22
  %v187 = vunpack.c.h.b16 %v22
  %v188 = vunpack.c.l.b16 %v23
  %v189 = vunpack.c.h.b16 %v23
  %v190 = vunpack.c.l.b16 %v24
  %v191 = vunpack.c.h.b16 %v24
  %v192 = vunpack.c.l.b16 %v25
  %v193 = vunpack.c.h.b16 %v25
  %v194 = vunpack.c.l.b16 %v26
  %v195 = vunpack.c.h.b16 %v26
  %v196 = vunpack.c.l.b16 %v27
  %v197 = vunpack.c.h.b16 %v27
  %v198 = vunpack.c.l.b16 %v28
  %v199 = vunpack.c.h.b16 %v28
  %v200 = vunpack.c.l.b16 %v29
  %v201 = vunpack.c.h.b16 %v29
  %v202 = vunpack.c.l.b16 %v30
  %v203 = vunpack.c.h.b16 %v30
  %v204 = vunpack.c.l.b16 %v31
  %v205 = vunpack.c.h.b16 %v31
  %v206 = vunpack.c.l.b16 %v32
  %v207 = vunpack.c.h.b16 %v32
  %v208 = vunpack.c.l.b16 %v33
  %v209 = vunpack.c.h.b16 %v33
  %v210 = vpack.c.b16 %v186, %v178
  %v211 = vpack.c.b16 %v187, %v179
  %v212 = vpack.c.b16 %v188, %v180
  %v213 = vpack.c.b16 %v189, %v181
  %v214 = vpack.c.b16 %v190, %v182
  %v215 = vpack.c.b16 %v191, %v183
  %v216 = vpack.c.b16 %v192, %v184
  %v217 = vpack.c.b16 %v193, %v185
  %v218 = vpack.c.b16 %v202, %v194
  %v219 = vpack.c.b16 %v203, %v195
  %v220 = vpack.c.b16 %v204, %v196
  %v221 = vpack.c.b16 %v205, %v197
  %v222 = vpack.c.b16 %v206, %v198
  %v223 = vpack.c.b16 %v207, %v199
  %v224 = vpack.c.b16 %v208, %v200
  %v225 = vpack.c.b16 %v209, %v201
  %v370 = vunpack.c.l.b16 %v34
  %v371 = vunpack.c.l.b16 %v35
  %v372 = vunpack.c.l.b16 %v36
  %v373 = vunpack.c.l.b16 %v37
  %v374 = vunpack.c.l.b16 %v38
  %v375 = vunpack.c.l.b16 %v39
  %v376 = vunpack.c.l.b16 %v40
  %v377 = vunpack.c.l.b16 %v41
  %v378 = vunpack.c.l.b16 %v42
  %v379 = vunpack.c.l.b16 %v43
  %v380 = vunpack.c.l.b16 %v44
  %v381 = vunpack.c.l.b16 %v45
  %v382 = vunpack.c.l.b16 %v46
  %v383 = vunpack.c.l.b16 %v47
  %v384 = vunpack.c.l.b16 %v48
  %v385 = vunpack.c.l.b16 %v49
  %v386 = vunpack.c.l.b16 %v50
  %v387 = vunpack.c.l.b16 %v51
  %v388 = vunpack.c.l.b16 %v52
  %v389 = vunpack.c.l.b16 %v53
  %v390 = vunpack.c.l.b16 %v54
  %v391 = vunpack.c.l.b16 %v55
  %v392 = vunpack.c.l.b16 %v56
  %v393 = vunpack.c.l.b16 %v57
  %v394 = vunpack.c.l.b16 %v58
  %v395 = vunpack.c.l.b16 %v59
  %v396 = vunpack.c.l.b16 %v60
  %v397 = vunpack.c.l.b16 %v61
  %v398 = vunpack.c.l.b16 %v62
  %v399 = vunpack.c.l.b16 %v63
  %v400 = vunpack.c.l.b16 %v64
  %v401 = vunpack.c.l.b16 %v65
  %v402 = vunpack.c.l.b16 %v66
  %v403 = vunpack.c.l.b16 %v67
  %v404 = vunpack.c.l.b16 %v68
  %v405 = vunpack.c.l.b16 %v69
  %v406 = vunpack.c.l.b16 %v70
  %v407 = vunpack.c.l.b16 %v71
  %v408 = vunpack.c.l.b16 %v72
  %v409 = vunpack.c.l.b16 %v73
  %v410 = vunpack.c.l.b16 %v74
  %v411 = vunpack.c.l.b16 %v75
  %v412 = vunpack.c.l.b16 %v76
  %v413 = vunpack.c.l.b16 %v77
  %v414 = vunpack.c.l.b16 %v78
  %v415 = vunpack.c.l.b16 %v79
  %v416 = vunpack.c.l.b16 %v80
  %v417 = vunpack.c.l.b16 %v81
  %v418 = vunpack.c.l.b16 %v82
  %v419 = vunpack.c.l.b16 %v83
  %v420 = vunpack.c.l.b16 %v84
  %v421 = vunpack.c.l.b16 %v85
  %v422 = vunpack.c.l.b16 %v86
  %v423 = vunpack.c.l.b16 %v87
  %v424 = vunpack.c.l.b16 %v88
  %v425 = vunpack.c.l.b16 %v89
  %v426 = vunpack.c.l.b16 %v90
  %v427 = vunpack.c.l.b16 %v91
  %v428 = vunpack.c.l.b16 %v92
  %v429 = vunpack.c.l.b16 %v93
  %v430 = vunpack.c.l.b16 %v94
  %v431 = vunpack.c.l.b16 %v95
  %v432 = vunpack.c.l.b16 %v96
  %v433 = vunpack.c.l.b16 %v97
  %v434 = vunpack.c.l.b16 %v98
  %v435 = vunpack.c.l.b16 %v99
  %v436 = vunpack.c.l.b16 %v100
  %v437 = vunpack.c.l.b16 %v101
  %v438 = vunpack.c.l.b16 %v102
  %v439 = vunpack.c.l.b16 %v103
  %v440 = vunpack.c.l.b16 %v104
  %v441 = vunpack.c.l.b16 %v105
  %v442 = vunpack.c.l.b16 %v106
  %v443 = vunpack.c.l.b16 %v107
  %v444 = vunpack.c.l.b16 %v108
  %v445 = vunpack.c.l.b16 %v109
  %v446 = vunpack.c.l.b16 %v110
  %v447 = vunpack.c.l.b16 %v111
  %v448 = vunpack.c.l.b16 %v112
  %v449 = vunpack.c.l.b16 %v113
  %v450 = vunpack.c.l.b16 %v114
  %v451 = vunpack.c.l.b16 %v115
  %v452 = vunpack.c.l.b16 %v116
  %v453 = vunpack.c.l.b16 %v117
  %v454 = vunpack.c.l.b16 %v118
  %v455 = vunpack.c.l.b16 %v119
  %v456 = vunpack.c.l.b16 %v120
  %v457 = vunpack.c.l.b16 %v121
  %v458 = vunpack.c.l.b16 %v122
  %v459 = vunpack.c.l.b16 %v123
  %v460 = vunpack.c.l.b16 %v124
  %v461 = vunpack.c.l.b16 %v125
  %v462 = vunpack.c.l.b16 %v126
  %v463 = vunpack.c.l.b16 %v127
  %v464 = vunpack.c.l.b16 %v128
  %v465 = vunpack.c.l.b16 %v129
  %v466 = vunpack.c.l.b16 %v130
  %v467 = vunpack.c.l.b16 %v131
  %v468 = vunpack.c.l.b16 %v132
  %v469 = vunpack.c.l.b16 %v133
  %v470 = vunpack.c.l.b16 %v134
  %v471 = vunpack.c.l.b16 %v135
  %v472 = vunpack.c.l.b16 %v136
  %v473 = vunpack.c.l.b16 %v137
  %v474 = vunpack.c.l.b16 %v138
  %v475 = vunpack.c.l.b16 %v139
  %v476 = vunpack.c.l.b16 %v140
  %v477 = vunpack.c.l.b16 %v141
  %v478 = vunpack.c.l.b16 %v142
  %v479 = vunpack.c.l.b16 %v143
  %v480 = vunpack.c.l.b16 %v144
  %v481 = vunpack.c.l.b16 %v145
  %v482 = vunpack.c.l.b16 %v146
  %v483 = vunpack.c.l.b16 %v147
  %v484 = vunpack.c.l.b16 %v148
  %v485 = vunpack.c.l.b16 %v149
  %v486 = vunpack.c.l.b16 %v150
  %v487 = vunpack.c.l.b16 %v151
  %v488 = vunpack.c.l.b16 %v152
  %v489 = vunpack.c.l.b16 %v153
  %v490 = vunpack.c.l.b16 %v154
  %v491 = vunpack.c.l.b16 %v155
  %v492 = vunpack.c.l.b16 %v156
  %v493 = vunpack.c.l.b16 %v157
  %v494 = vunpack.c.l.b16 %v158
  %v495 = vunpack.c.l.b16 %v159
  %v496 = vunpack.c.l.b16 %v160
  %v497 = vunpack.c.l.b16 %v161
  %v498 = vpack.c.b16 %v371, %v370
  %v499 = vpack.c.b16 %v373, %v372
  %v500 = vpack.c.b16 %v375, %v374
  %v501 = vpack.c.b16 %v377, %v376
  %v502 = vpack.c.b16 %v379, %v378
  %v503 = vpack.c.b16 %v381, %v380
  %v504 = vpack.c.b16 %v383, %v382
  %v505 = vpack.c.b16 %v385, %v384
  %v506 = vpack.c.b16 %v387, %v386
  %v507 = vpack.c.b16 %v389, %v388
  %v508 = vpack.c.b16 %v391, %v390
  %v509 = vpack.c.b16 %v393, %v392
  %v510 = vpack.c.b16 %v395, %v394
  %v511 = vpack.c.b16 %v397, %v396
  %v512 = vpack.c.b16 %v399, %v398
  %v513 = vpack.c.b16 %v401, %v400
  %v514 = vpack.c.b16 %v403, %v402
  %v515 = vpack.c.b16 %v405, %v404
  %v516 = vpack.c.b16 %v407, %v406
  %v517 = vpack.c.b16 %v409, %v408
  %v518 = vpack.c.b16 %v411, %v410
  %v519 = vpack.c.b16 %v413, %v412
  %v520 = vpack.c.b16 %v415, %v414
  %v521 = vpack.c.b16 %v417, %v416
  %v522 = vpack.c.b16 %v419, %v418
  %v523 = vpack.c.b16 %v421, %v420
  %v524 = vpack.c.b16 %v423, %v422
  %v525 = vpack.c.b16 %v425, %v424
  %v526 = vpack.c.b16 %v427, %v426
  %v527 = vpack.c.b16 %v429, %v428
  %v528 = vpack.c.b16 %v431, %v430
  %v529 = vpack.c.b16 %v433, %v432
  %v530 = vpack.c.b16 %v435, %v434
  %v531 = vpack.c.b16 %v437, %v436
  %v532 = vpack.c.b16 %v439, %v438
  %v533 = vpack.c.b16 %v441, %v440
  %v534 = vpack.c.b16 %v443, %v442
  %v535 = vpack.c.b16 %v445, %v444
  %v536 = vpack.c.b16 %v447, %v446
  %v537 = vpack.c.b16 %v449, %v448
  %v538 = vpack.c.b16 %v451, %v450
  %v539 = vpack.c.b16 %v453, %v452
  %v540 = vpack.c.b16 %v455, %v454
  %v541 = vpack.c.b16 %v457, %v456
  %v542 = vpack.c.b16 %v459, %v458
  %v543 = vpack.c.b16 %v461, %v460
  %v544 = vpack.c.b16 %v463, %v462
  %v545 = vpack.c.b16 %v465, %v464
  %v546 = vpack.c.b16 %v467, %v466
  %v547 = vpack.c.b16 %v469, %v468
  %v548 = vpack.c.b16 %v471, %v470
  %v549 = vpack.c.b16 %v473, %v472
  %v550 = vpack.c.b16 %v475, %v474
  %v551 = vpack.c.b16 %v477, %v476
  %v552 = vpack.c.b16 %v479, %v478
  %v553 = vpack.c.b16 %v481, %v480
  %v554 = vpack.c.b16 %v483, %v482
  %v555 = vpack.c.b16 %v485, %v484
  %v556 = vpack.c.b16 %v487, %v486
  %v557 = vpack.c.b16 %v489, %v488
  %v558 = vpack.c.b16 %v491, %v490
  %v559 = vpack.c.b16 %v493, %v492
  %v560 = vpack.c.b16 %v495, %v494
  %v561 = vpack.c.b16 %v497, %v496
  %626 = vmatprep.subr.bf16.mxu0 0
  %627 = vmatpush1.bf16.msra.mxu0 %v505
  %628 = vmatprep.subr.bf16.mxu0 0
  %629 = vmatpush1.bf16.msra.mxu0 %v504
  %630 = vmatprep.subr.bf16.mxu0 0
  %631 = vmatpush1.bf16.msra.mxu0 %v503
  %632 = vmatprep.subr.bf16.mxu0 0
  %633 = vmatpush1.bf16.msra.mxu0 %v502
  %634 = vmatprep.subr.bf16.mxu0 0
  %635 = vmatpush1.bf16.msra.mxu0 %v501
  %636 = vmatprep.subr.bf16.mxu0 0
  %637 = vmatpush1.bf16.msra.mxu0 %v500
  %638 = vmatprep.subr.bf16.mxu0 0
  %639 = vmatpush1.bf16.msra.mxu0 %v499
  %640 = vmatprep.subr.bf16.mxu0 0
  %641 = vmatpush1.bf16.msra.mxu0 %v498
  %642 = vmatprep.subr.bf16.mxu0 0
  %643 = vmatpush2.bf16.msra.mxu0 %v513
  %644 = vmatprep.subr.bf16.mxu0 0
  %645 = vmatpush2.bf16.msra.mxu0 %v512
  %646 = vmatprep.subr.bf16.mxu0 0
  %647 = vmatpush2.bf16.msra.mxu0 %v511
  %648 = vmatprep.subr.bf16.mxu0 0
  %649 = vmatpush2.bf16.msra.mxu0 %v510
  %650 = vmatprep.subr.bf16.mxu0 0
  %651 = vmatpush2.bf16.msra.mxu0 %v509
  %652 = vmatprep.subr.bf16.mxu0 0
  %653 = vmatpush2.bf16.msra.mxu0 %v508
  %654 = vmatprep.subr.bf16.mxu0 0
  %655 = vmatpush2.bf16.msra.mxu0 %v507
  %656 = vmatprep.subr.bf16.mxu0 0
  %657 = vmatpush2.bf16.msra.mxu0 %v506
  %658 = vmatprep.mubr.bf16.mxu0 %v211
  %659 = vmatmul.mubr.bf16.gmra.mxu0 %v210
  %v660 = vpop.f32.mrf.mxu0
  %v661 = vadd.f32 0.0, %v660
  %v662 = vpop.f32.mrf.mxu0
  %v663 = vpop.f32.mrf.mxu0
  %v664 = vadd.f32 0.0, %v663
  %v665 = vpop.f32.mrf.mxu0
  %666 = vmatprep.mubr.bf16.mxu0 %v219
  %667 = vmatmul.mubr.bf16.gmra.mxu0 %v218
  %v668 = vpop.f32.mrf.mxu0
  %v669 = vadd.f32 0.0, %v668
  %v670 = vpop.f32.mrf.mxu0
  %v671 = vpop.f32.mrf.mxu0
  %v672 = vadd.f32 0.0, %v671
  %v673 = vpop.f32.mrf.mxu0
  %674 = vdwg.mxu0
  %675 = vmatprep.subr.bf16.mxu0 0
  %676 = vmatpush1.bf16.msra.mxu0 %v521
  %677 = vmatprep.subr.bf16.mxu0 0
  %678 = vmatpush1.bf16.msra.mxu0 %v520
  %679 = vmatprep.subr.bf16.mxu0 0
  %680 = vmatpush1.bf16.msra.mxu0 %v519
  %681 = vmatprep.subr.bf16.mxu0 0
  %682 = vmatpush1.bf16.msra.mxu0 %v518
  %683 = vmatprep.subr.bf16.mxu0 0
  %684 = vmatpush1.bf16.msra.mxu0 %v517
  %685 = vmatprep.subr.bf16.mxu0 0
  %686 = vmatpush1.bf16.msra.mxu0 %v516
  %687 = vmatprep.subr.bf16.mxu0 0
  %688 = vmatpush1.bf16.msra.mxu0 %v515
  %689 = vmatprep.subr.bf16.mxu0 0
  %690 = vmatpush1.bf16.msra.mxu0 %v514
  %691 = vmatprep.subr.bf16.mxu0 0
  %692 = vmatpush2.bf16.msra.mxu0 %v529
  %693 = vmatprep.subr.bf16.mxu0 0
  %694 = vmatpush2.bf16.msra.mxu0 %v528
  %695 = vmatprep.subr.bf16.mxu0 0
  %696 = vmatpush2.bf16.msra.mxu0 %v527
  %697 = vmatprep.subr.bf16.mxu0 0
  %698 = vmatpush2.bf16.msra.mxu0 %v526
  %699 = vmatprep.subr.bf16.mxu0 0
  %700 = vmatpush2.bf16.msra.mxu0 %v525
  %701 = vmatprep.subr.bf16.mxu0 0
  %702 = vmatpush2.bf16.msra.mxu0 %v524
  %703 = vmatprep.subr.bf16.mxu0 0
  %704 = vmatpush2.bf16.msra.mxu0 %v523
  %705 = vmatprep.subr.bf16.mxu0 0
  %706 = vmatpush2.bf16.msra.mxu0 %v522
  %707 = vmatprep.mubr.bf16.mxu0 %v213
  %708 = vmatmul.mubr.bf16.gmra.mxu0 %v212
  %v709 = vpop.f32.mrf.mxu0
  %v710 = vadd.f32 %v661, %v709
  %v711 = vpop.f32.mrf.mxu0
  %v712 = vpop.f32.mrf.mxu0
  %v713 = vadd.f32 %v664, %v712
  %v714 = vpop.f32.mrf.mxu0
  %715 = vmatprep.mubr.bf16.mxu0 %v221
  %716 = vmatmul.mubr.bf16.gmra.mxu0 %v220
  %v717 = vpop.f32.mrf.mxu0
  %v718 = vadd.f32 %v669, %v717
  %v719 = vpop.f32.mrf.mxu0
  %v720 = vpop.f32.mrf.mxu0
  %v721 = vadd.f32 %v672, %v720
  %v722 = vpop.f32.mrf.mxu0
  %723 = vdwg.mxu0
  %724 = vmatprep.subr.bf16.mxu0 0
  %725 = vmatpush1.bf16.msra.mxu0 %v537
  %726 = vmatprep.subr.bf16.mxu0 0
  %727 = vmatpush1.bf16.msra.mxu0 %v536
  %728 = vmatprep.subr.bf16.mxu0 0
  %729 = vmatpush1.bf16.msra.mxu0 %v535
  %730 = vmatprep.subr.bf16.mxu0 0
  %731 = vmatpush1.bf16.msra.mxu0 %v534
  %732 = vmatprep.subr.bf16.mxu0 0
  %733 = vmatpush1.bf16.msra.mxu0 %v533
  %734 = vmatprep.subr.bf16.mxu0 0
  %735 = vmatpush1.bf16.msra.mxu0 %v532
  %736 = vmatprep.subr.bf16.mxu0 0
  %737 = vmatpush1.bf16.msra.mxu0 %v531
  %738 = vmatprep.subr.bf16.mxu0 0
  %739 = vmatpush1.bf16.msra.mxu0 %v530
  %740 = vmatprep.subr.bf16.mxu0 0
  %741 = vmatpush2.bf16.msra.mxu0 %v545
  %742 = vmatprep.subr.bf16.mxu0 0
  %743 = vmatpush2.bf16.msra.mxu0 %v544
  %744 = vmatprep.subr.bf16.mxu0 0
  %745 = vmatpush2.bf16.msra.mxu0 %v543
  %746 = vmatprep.subr.bf16.mxu0 0
  %747 = vmatpush2.bf16.msra.mxu0 %v542
  %748 = vmatprep.subr.bf16.mxu0 0
  %749 = vmatpush2.bf16.msra.mxu0 %v541
  %750 = vmatprep.subr.bf16.mxu0 0
  %751 = vmatpush2.bf16.msra.mxu0 %v540
  %752 = vmatprep.subr.bf16.mxu0 0
  %753 = vmatpush2.bf16.msra.mxu0 %v539
  %754 = vmatprep.subr.bf16.mxu0 0
  %755 = vmatpush2.bf16.msra.mxu0 %v538
  %756 = vmatprep.mubr.bf16.mxu0 %v215
  %757 = vmatmul.mubr.bf16.gmra.mxu0 %v214
  %v758 = vpop.f32.mrf.mxu0
  %v759 = vadd.f32 %v710, %v758
  %v760 = vpop.f32.mrf.mxu0
  %v761 = vpop.f32.mrf.mxu0
  %v762 = vadd.f32 %v713, %v761
  %v763 = vpop.f32.mrf.mxu0
  %764 = vmatprep.mubr.bf16.mxu0 %v223
  %765 = vmatmul.mubr.bf16.gmra.mxu0 %v222
  %v766 = vpop.f32.mrf.mxu0
  %v767 = vadd.f32 %v718, %v766
  %v768 = vpop.f32.mrf.mxu0
  %v769 = vpop.f32.mrf.mxu0
  %v770 = vadd.f32 %v721, %v769
  %v771 = vpop.f32.mrf.mxu0
  %772 = vdwg.mxu0
  %773 = vmatprep.subr.bf16.mxu0 0
  %774 = vmatpush1.bf16.msra.mxu0 %v553
  %775 = vmatprep.subr.bf16.mxu0 0
  %776 = vmatpush1.bf16.msra.mxu0 %v552
  %777 = vmatprep.subr.bf16.mxu0 0
  %778 = vmatpush1.bf16.msra.mxu0 %v551
  %779 = vmatprep.subr.bf16.mxu0 0
  %780 = vmatpush1.bf16.msra.mxu0 %v550
  %781 = vmatprep.subr.bf16.mxu0 0
  %782 = vmatpush1.bf16.msra.mxu0 %v549
  %783 = vmatprep.subr.bf16.mxu0 0
  %784 = vmatpush1.bf16.msra.mxu0 %v548
  %785 = vmatprep.subr.bf16.mxu0 0
  %786 = vmatpush1.bf16.msra.mxu0 %v547
  %787 = vmatprep.subr.bf16.mxu0 0
  %788 = vmatpush1.bf16.msra.mxu0 %v546
  %789 = vmatprep.subr.bf16.mxu0 0
  %790 = vmatpush2.bf16.msra.mxu0 %v561
  %791 = vmatprep.subr.bf16.mxu0 0
  %792 = vmatpush2.bf16.msra.mxu0 %v560
  %793 = vmatprep.subr.bf16.mxu0 0
  %794 = vmatpush2.bf16.msra.mxu0 %v559
  %795 = vmatprep.subr.bf16.mxu0 0
  %796 = vmatpush2.bf16.msra.mxu0 %v558
  %797 = vmatprep.subr.bf16.mxu0 0
  %798 = vmatpush2.bf16.msra.mxu0 %v557
  %799 = vmatprep.subr.bf16.mxu0 0
  %800 = vmatpush2.bf16.msra.mxu0 %v556
  %801 = vmatprep.subr.bf16.mxu0 0
  %802 = vmatpush2.bf16.msra.mxu0 %v555
  %803 = vmatprep.subr.bf16.mxu0 0
  %804 = vmatpush2.bf16.msra.mxu0 %v554
  %805 = vmatprep.mubr.bf16.mxu0 %v217
  %806 = vmatmul.mubr.bf16.gmra.mxu0 %v216
  %v807 = vpop.f32.mrf.mxu0
  %v808 = vadd.f32 %v759, %v807
  %v809 = vpop.f32.mrf.mxu0
  %v810 = vpop.f32.mrf.mxu0
  %v811 = vadd.f32 %v762, %v810
  %v812 = vpop.f32.mrf.mxu0
  %813 = vmatprep.mubr.bf16.mxu0 %v225
  %814 = vmatmul.mubr.bf16.gmra.mxu0 %v224
  %v815 = vpop.f32.mrf.mxu0
  %v816 = vadd.f32 %v767, %v815
  %v817 = vpop.f32.mrf.mxu0
  %v818 = vpop.f32.mrf.mxu0
  %v819 = vadd.f32 %v770, %v818
  %v820 = vpop.f32.mrf.mxu0
  %821 = vdwg.mxu0
  %822 = vadd.xlane.f32.xlu0 %v808
  %v823 = vpop.xlane.xlu0 %822
  %824 = vadd.xlane.f32.xlu0 %v811
  %v825 = vpop.xlane.xlu0 %824
  %826 = vadd.xlane.f32.xlu0 %v816
  %v827 = vpop.xlane.xlu0 %826
  %828 = vadd.xlane.f32.xlu0 %v819
  %v829 = vpop.xlane.xlu0 %828
  %v830 = vmul.f32 %v823, 0.0078125
  %v831 = vmul.f32 %v825, 0.0078125
  %v832 = vmul.f32 %v827, 0.0078125
  %v833 = vmul.f32 %v829, 0.0078125
  %v834 = vmul.f32 %v808, %v808
  %v835 = vmul.f32 %v811, %v811
  %v836 = vmul.f32 %v816, %v816
  %v837 = vmul.f32 %v819, %v819
  %838 = vadd.xlane.f32.xlu0 %v834
  %v839 = vpop.xlane.xlu0 %838
  %840 = vadd.xlane.f32.xlu0 %v835
  %v841 = vpop.xlane.xlu0 %840
  %842 = vadd.xlane.f32.xlu0 %v836
  %v843 = vpop.xlane.xlu0 %842
  %844 = vadd.xlane.f32.xlu0 %v837
  %v845 = vpop.xlane.xlu0 %844
  %v846 = vmul.f32 %v839, 0.0078125
  %v847 = vmul.f32 %v841, 0.0078125
  %v848 = vmul.f32 %v843, 0.0078125
  %v849 = vmul.f32 %v845, 0.0078125
  %v850 = vmul.f32 %v830, %v830
  %v851 = vmul.f32 %v831, %v831
  %v852 = vmul.f32 %v832, %v832
  %v853 = vmul.f32 %v833, %v833
  %v854 = vsub.f32 %v846, %v850
  %v855 = vsub.f32 %v847, %v851
  %v856 = vsub.f32 %v848, %v852
  %v857 = vsub.f32 %v849, %v853
  %v858 = vmax.f32 %v854, 0.0
  %v859 = vmax.f32 %v855, 0.0
  %v860 = vmax.f32 %v856, 0.0
  %v861 = vmax.f32 %v857, 0.0
  %v862 = vld [vmem:[%s2] sm:$0xff]
  %v863 = vld [vmem:[%s2 + $0x8] sm:$0xff]
  %v864 = vld [vmem:[%s2 + $0x10] sm:$0xff]
  %v865 = vld [vmem:[%s2 + $0x18] sm:$0xff]
  %v866 = vadd.f32 %v858, 1e-05
  %v867 = vadd.f32 %v859, 1e-05
  %v868 = vadd.f32 %v860, 1e-05
  %v869 = vadd.f32 %v861, 1e-05
  %v870 = vrsqrt.pop %v866
  %v871 = vrsqrt.pop %v867
  %v872 = vrsqrt.pop %v868
  %v873 = vrsqrt.pop %v869
  %v874 = vmul.f32 %v862, %v870
  %v875 = vmul.f32 %v863, %v871
  %v876 = vmul.f32 %v864, %v872
  %v877 = vmul.f32 %v865, %v873
  %v878 = vld [vmem:[%s3] sm:$0xff]
  %v879 = vld [vmem:[%s3 + $0x8] sm:$0xff]
  %v880 = vld [vmem:[%s3 + $0x10] sm:$0xff]
  %v881 = vld [vmem:[%s3 + $0x18] sm:$0xff]
  %v882 = vmul.f32 %v874, %v830
  %v883 = vmul.f32 %v875, %v831
  %v884 = vmul.f32 %v876, %v832
  %v885 = vmul.f32 %v877, %v833
  %v886 = vsub.f32 %v878, %v882
  %v887 = vsub.f32 %v879, %v883
  %v888 = vsub.f32 %v880, %v884
  %v889 = vsub.f32 %v881, %v885
  %891 = vset.pattern.permute.xlu0 0
  %892 = vperm.xlu0 %891, %v874
  %v893 = vpop.permute.xlu0 %892
  %896 = vset.pattern.permute.xlu0 0
  %897 = vperm.xlu0 %896, %v875
  %v898 = vpop.permute.xlu0 %897
  %901 = vset.pattern.permute.xlu0 0
  %902 = vperm.xlu0 %901, %v876
  %v903 = vpop.permute.xlu0 %902
  %906 = vset.pattern.permute.xlu0 0
  %907 = vperm.xlu0 %906, %v877
  %v908 = vpop.permute.xlu0 %907
  %v910 = vmul.f32 %v893, %v808
  %v911 = vmul.f32 %v898, %v811
  %v912 = vmul.f32 %v903, %v816
  %v913 = vmul.f32 %v908, %v819
  %915 = vset.pattern.permute.xlu0 0
  %916 = vperm.xlu0 %915, %v886
  %v917 = vpop.permute.xlu0 %916
  %920 = vset.pattern.permute.xlu0 0
  %921 = vperm.xlu0 %920, %v887
  %v922 = vpop.permute.xlu0 %921
  %925 = vset.pattern.permute.xlu0 0
  %926 = vperm.xlu0 %925, %v888
  %v927 = vpop.permute.xlu0 %926
  %930 = vset.pattern.permute.xlu0 0
  %931 = vperm.xlu0 %930, %v889
  %v932 = vpop.permute.xlu0 %931
  %v934 = vadd.f32 %v910, %v917
  %v935 = vadd.f32 %v911, %v922
  %v936 = vadd.f32 %v912, %v927
  %v937 = vadd.f32 %v913, %v932
  %vm938 = vcmp.ge.f32.partialorder %v934, 0.0
  %vm939 = vcmp.ge.f32.partialorder %v935, 0.0
  %vm940 = vcmp.ge.f32.partialorder %v936, 0.0
  %vm941 = vcmp.ge.f32.partialorder %v937, 0.0
  %v942 = vmul.f32 %v934, 0.2
  %v943 = vmul.f32 %v935, 0.2
  %v944 = vmul.f32 %v936, 0.2
  %v945 = vmul.f32 %v937, 0.2
  %v946 = vsel %vm938, %v934, %v942
  %v947 = vsel %vm939, %v935, %v943
  %v948 = vsel %vm940, %v936, %v944
  %v949 = vsel %vm941, %v937, %v945
  %v950 = vpack.c.bf16 %v947, %v946
  %v951 = vpack.c.bf16 %v949, %v948
  %v954 = vunpack.c.l.b16 %v950
  %v955 = vunpack.c.h.b16 %v950
  %v956 = vunpack.c.l.b16 %v951
  %v957 = vunpack.c.h.b16 %v951
  %v958 = vpack.c.b16 %v954, %v954
  %v959 = vpack.c.b16 %v955, %v955
  %v960 = vpack.c.b16 %v956, %v956
  %v961 = vpack.c.b16 %v957, %v957
  %966 = vst [vmem:[%s4] sm:$0xf] %v958
  %967 = vst [vmem:[%s4 + $0x4] sm:$0xf] %v959
  %968 = vst [vmem:[%s4 + $0x8] sm:$0xf] %v960
  %969 = vst [vmem:[%s4 + $0xc] sm:$0xf] %v961
  // Predicated region
  $region18: #{generator_forward.6} parent=0 // pred_check
    _
  $region19: #{generator_forward.6} parent=0 // pred_check_branch
    %971 = sbr.rel (0) target = $region21
  $region20: #{generator_forward.6} parent=0 // pred_region
    _
  $region21: #{generator_forward.6} parent=0 // pred_fallthru
    _
  // Predicated region
  $region22: #{generator_forward.6} parent=0 // pred_check
    _
  $region23: #{generator_forward.6} parent=0 // pred_check_branch
    %973 = sbr.rel (0) target = $region25
  $region24: #{generator_forward.6} parent=0 // pred_region
    _
  $region25: #{generator_forward.6} parent=0 // pred_fallthru
    _

// kernel: generator_forward.7
$region0: #{generator_forward.7}
  #allocation0 [shape = 'u32[]', space=smem, size = 0x4, offset = 0x4, fixed_abs, tag = 'smem constant byte address 0x4 - core index']
  #allocation1 [shape = 'u32[144,128]{1,0:T(1,128)}', space=vmem, size = 0x12000, scoped, tag = 'internal scratch']
  %s0 = inlined_call_operand.vmem [shape: bf16[16,512], index: 0, kind: input, shape index: {}]
  %s1 = inlined_call_operand.vmem [shape: bf16[512,512], index: 1, kind: input, shape index: {}]
  %s2 = inlined_call_operand.vmem [shape: f32[16,1], index: 2, kind: input, shape index: {}]
  %s3 = inlined_call_operand.vmem [shape: f32[16,1], index: 3, kind: input, shape index: {}]
  %s4 = inlined_call_operand.vmem [shape: bf16[16,512], index: 4, kind: output, shape index: {}]
  %s5 = sld [smem:[#allocation0]]
  $region26: #{generator_forward.7} parent=0
    _
  %s7 = ssub.s32 1, %s5
  %s8 = scalar_select 0, %s7, %s5
  // Predicated region
  $region2: #{generator_forward.7} parent=0 // pred_check
    _
  $region3: #{generator_forward.7} parent=0 // pred_check_branch
    %10 = sbr.rel (0) target = $region5
  $region4: #{generator_forward.7} parent=0 // pred_region
    _
  $region5: #{generator_forward.7} parent=0 // pred_fallthru
    _
  // Predicated region
  $region6: #{generator_forward.7} parent=0 // pred_check
    _
  $region7: #{generator_forward.7} parent=0 // pred_check_branch
    %12 = sbr.rel (0) target = $region9
  $region8: #{generator_forward.7} parent=0 // pred_region
    _
  $region9: #{generator_forward.7} parent=0 // pred_fallthru
    _
  // Predicated region
  $region10: #{generator_forward.7} parent=0 // pred_check
    _
  $region11: #{generator_forward.7} parent=0 // pred_check_branch
    %14 = sbr.rel (0) target = $region13
  $region12: #{generator_forward.7} parent=0 // pred_region
    _
  $region13: #{generator_forward.7} parent=0 // pred_fallthru
    _
  // Predicated region
  $region14: #{generator_forward.7} parent=0 // pred_check
    _
  $region15: #{generator_forward.7} parent=0 // pred_check_branch
    %16 = sbr.rel (0) target = $region17
  $region16: #{generator_forward.7} parent=0 // pred_region
    _
  $region17: #{generator_forward.7} parent=0 // pred_fallthru
    _
  %v17 = vld [vmem:[%s0] sm:$0xff]
  %v18 = vld [vmem:[%s0 + $0x8] sm:$0xff]
  %v19 = vld [vmem:[%s0 + $0x10] sm:$0xff]
  %v20 = vld [vmem:[%s0 + $0x18] sm:$0xff]
  %v21 = vld [vmem:[%s1] sm:$0xff]
  %v22 = vld [vmem:[%s1 + $0x8] sm:$0xff]
  %v23 = vld [vmem:[%s1 + $0x10] sm:$0xff]
  %v24 = vld [vmem:[%s1 + $0x18] sm:$0xff]
  %v25 = vld [vmem:[%s1 + $0x20] sm:$0xff]
  %v26 = vld [vmem:[%s1 + $0x28] sm:$0xff]
  %v27 = vld [vmem:[%s1 + $0x30] sm:$0xff]
  %v28 = vld [vmem:[%s1 + $0x38] sm:$0xff]
  %v29 = vld [vmem:[%s1 + $0x40] sm:$0xff]
  %v30 = vld [vmem:[%s1 + $0x48] sm:$0xff]
  %v31 = vld [vmem:[%s1 + $0x50] sm:$0xff]
  %v32 = vld [vmem:[%s1 + $0x58] sm:$0xff]
  %v33 = vld [vmem:[%s1 + $0x60] sm:$0xff]
  %v34 = vld [vmem:[%s1 + $0x68] sm:$0xff]
  %v35 = vld [vmem:[%s1 + $0x70] sm:$0xff]
  %v36 = vld [vmem:[%s1 + $0x78] sm:$0xff]
  %v37 = vld [vmem:[%s1 + $0x80] sm:$0xff]
  %v38 = vld [vmem:[%s1 + $0x88] sm:$0xff]
  %v39 = vld [vmem:[%s1 + $0x90] sm:$0xff]
  %v40 = vld [vmem:[%s1 + $0x98] sm:$0xff]
  %v41 = vld [vmem:[%s1 + $0xa0] sm:$0xff]
  %v42 = vld [vmem:[%s1 + $0xa8] sm:$0xff]
  %v43 = vld [vmem:[%s1 + $0xb0] sm:$0xff]
  %v44 = vld [vmem:[%s1 + $0xb8] sm:$0xff]
  %v45 = vld [vmem:[%s1 + $0xc0] sm:$0xff]
  %v46 = vld [vmem:[%s1 + $0xc8] sm:$0xff]
  %v47 = vld [vmem:[%s1 + $0xd0] sm:$0xff]
  %v48 = vld [vmem:[%s1 + $0xd8] sm:$0xff]
  %v49 = vld [vmem:[%s1 + $0xe0] sm:$0xff]
  %v50 = vld [vmem:[%s1 + $0xe8] sm:$0xff]
  %v51 = vld [vmem:[%s1 + $0xf0] sm:$0xff]
  %v52 = vld [vmem:[%s1 + $0xf8] sm:$0xff]
  %v53 = vld [vmem:[%s1 + $0x100] sm:$0xff]
  %v54 = vld [vmem:[%s1 + $0x108] sm:$0xff]
  %v55 = vld [vmem:[%s1 + $0x110] sm:$0xff]
  %v56 = vld [vmem:[%s1 + $0x118] sm:$0xff]
  %v57 = vld [vmem:[%s1 + $0x120] sm:$0xff]
  %v58 = vld [vmem:[%s1 + $0x128] sm:$0xff]
  %v59 = vld [vmem:[%s1 + $0x130] sm:$0xff]
  %v60 = vld [vmem:[%s1 + $0x138] sm:$0xff]
  %v61 = vld [vmem:[%s1 + $0x140] sm:$0xff]
  %v62 = vld [vmem:[%s1 + $0x148] sm:$0xff]
  %v63 = vld [vmem:[%s1 + $0x150] sm:$0xff]
  %v64 = vld [vmem:[%s1 + $0x158] sm:$0xff]
  %v65 = vld [vmem:[%s1 + $0x160] sm:$0xff]
  %v66 = vld [vmem:[%s1 + $0x168] sm:$0xff]
  %v67 = vld [vmem:[%s1 + $0x170] sm:$0xff]
  %v68 = vld [vmem:[%s1 + $0x178] sm:$0xff]
  %v69 = vld [vmem:[%s1 + $0x180] sm:$0xff]
  %v70 = vld [vmem:[%s1 + $0x188] sm:$0xff]
  %v71 = vld [vmem:[%s1 + $0x190] sm:$0xff]
  %v72 = vld [vmem:[%s1 + $0x198] sm:$0xff]
  %v73 = vld [vmem:[%s1 + $0x1a0] sm:$0xff]
  %v74 = vld [vmem:[%s1 + $0x1a8] sm:$0xff]
  %v75 = vld [vmem:[%s1 + $0x1b0] sm:$0xff]
  %v76 = vld [vmem:[%s1 + $0x1b8] sm:$0xff]
  %v77 = vld [vmem:[%s1 + $0x1c0] sm:$0xff]
  %v78 = vld [vmem:[%s1 + $0x1c8] sm:$0xff]
  %v79 = vld [vmem:[%s1 + $0x1d0] sm:$0xff]
  %v80 = vld [vmem:[%s1 + $0x1d8] sm:$0xff]
  %v81 = vld [vmem:[%s1 + $0x1e0] sm:$0xff]
  %v82 = vld [vmem:[%s1 + $0x1e8] sm:$0xff]
  %v83 = vld [vmem:[%s1 + $0x1f0] sm:$0xff]
  %v84 = vld [vmem:[%s1 + $0x1f8] sm:$0xff]
  %v85 = vld [vmem:[%s1 + $0x200] sm:$0xff]
  %v86 = vld [vmem:[%s1 + $0x208] sm:$0xff]
  %v87 = vld [vmem:[%s1 + $0x210] sm:$0xff]
  %v88 = vld [vmem:[%s1 + $0x218] sm:$0xff]
  %v89 = vld [vmem:[%s1 + $0x220] sm:$0xff]
  %v90 = vld [vmem:[%s1 + $0x228] sm:$0xff]
  %v91 = vld [vmem:[%s1 + $0x230] sm:$0xff]
  %v92 = vld [vmem:[%s1 + $0x238] sm:$0xff]
  %v93 = vld [vmem:[%s1 + $0x240] sm:$0xff]
  %v94 = vld [vmem:[%s1 + $0x248] sm:$0xff]
  %v95 = vld [vmem:[%s1 + $0x250] sm:$0xff]
  %v96 = vld [vmem:[%s1 + $0x258] sm:$0xff]
  %v97 = vld [vmem:[%s1 + $0x260] sm:$0xff]
  %v98 = vld [vmem:[%s1 + $0x268] sm:$0xff]
  %v99 = vld [vmem:[%s1 + $0x270] sm:$0xff]
  %v100 = vld [vmem:[%s1 + $0x278] sm:$0xff]
  %v101 = vld [vmem:[%s1 + $0x280] sm:$0xff]
  %v102 = vld [vmem:[%s1 + $0x288] sm:$0xff]
  %v103 = vld [vmem:[%s1 + $0x290] sm:$0xff]
  %v104 = vld [vmem:[%s1 + $0x298] sm:$0xff]
  %v105 = vld [vmem:[%s1 + $0x2a0] sm:$0xff]
  %v106 = vld [vmem:[%s1 + $0x2a8] sm:$0xff]
  %v107 = vld [vmem:[%s1 + $0x2b0] sm:$0xff]
  %v108 = vld [vmem:[%s1 + $0x2b8] sm:$0xff]
  %v109 = vld [vmem:[%s1 + $0x2c0] sm:$0xff]
  %v110 = vld [vmem:[%s1 + $0x2c8] sm:$0xff]
  %v111 = vld [vmem:[%s1 + $0x2d0] sm:$0xff]
  %v112 = vld [vmem:[%s1 + $0x2d8] sm:$0xff]
  %v113 = vld [vmem:[%s1 + $0x2e0] sm:$0xff]
  %v114 = vld [vmem:[%s1 + $0x2e8] sm:$0xff]
  %v115 = vld [vmem:[%s1 + $0x2f0] sm:$0xff]
  %v116 = vld [vmem:[%s1 + $0x2f8] sm:$0xff]
  %v117 = vld [vmem:[%s1 + $0x300] sm:$0xff]
  %v118 = vld [vmem:[%s1 + $0x308] sm:$0xff]
  %v119 = vld [vmem:[%s1 + $0x310] sm:$0xff]
  %v120 = vld [vmem:[%s1 + $0x318] sm:$0xff]
  %v121 = vld [vmem:[%s1 + $0x320] sm:$0xff]
  %v122 = vld [vmem:[%s1 + $0x328] sm:$0xff]
  %v123 = vld [vmem:[%s1 + $0x330] sm:$0xff]
  %v124 = vld [vmem:[%s1 + $0x338] sm:$0xff]
  %v125 = vld [vmem:[%s1 + $0x340] sm:$0xff]
  %v126 = vld [vmem:[%s1 + $0x348] sm:$0xff]
  %v127 = vld [vmem:[%s1 + $0x350] sm:$0xff]
  %v128 = vld [vmem:[%s1 + $0x358] sm:$0xff]
  %v129 = vld [vmem:[%s1 + $0x360] sm:$0xff]
  %v130 = vld [vmem:[%s1 + $0x368] sm:$0xff]
  %v131 = vld [vmem:[%s1 + $0x370] sm:$0xff]
  %v132 = vld [vmem:[%s1 + $0x378] sm:$0xff]
  %v133 = vld [vmem:[%s1 + $0x380] sm:$0xff]
  %v134 = vld [vmem:[%s1 + $0x388] sm:$0xff]
  %v135 = vld [vmem:[%s1 + $0x390] sm:$0xff]
  %v136 = vld [vmem:[%s1 + $0x398] sm:$0xff]
  %v137 = vld [vmem:[%s1 + $0x3a0] sm:$0xff]
  %v138 = vld [vmem:[%s1 + $0x3a8] sm:$0xff]
  %v139 = vld [vmem:[%s1 + $0x3b0] sm:$0xff]
  %v140 = vld [vmem:[%s1 + $0x3b8] sm:$0xff]
  %v141 = vld [vmem:[%s1 + $0x3c0] sm:$0xff]
  %v142 = vld [vmem:[%s1 + $0x3c8] sm:$0xff]
  %v143 = vld [vmem:[%s1 + $0x3d0] sm:$0xff]
  %v144 = vld [vmem:[%s1 + $0x3d8] sm:$0xff]
  %v145 = vld [vmem:[%s1 + $0x3e0] sm:$0xff]
  %v146 = vld [vmem:[%s1 + $0x3e8] sm:$0xff]
  %v147 = vld [vmem:[%s1 + $0x3f0] sm:$0xff]
  %v148 = vld [vmem:[%s1 + $0x3f8] sm:$0xff]
  %v153 = vunpack.c.l.b16 %v17
  %v154 = vunpack.c.h.b16 %v17
  %v155 = vunpack.c.l.b16 %v18
  %v156 = vunpack.c.h.b16 %v18
  %v157 = vunpack.c.l.b16 %v19
  %v158 = vunpack.c.h.b16 %v19
  %v159 = vunpack.c.l.b16 %v20
  %v160 = vunpack.c.h.b16 %v20
  %v161 = vpack.c.b16 %v157, %v153
  %v162 = vpack.c.b16 %v158, %v154
  %v163 = vpack.c.b16 %v159, %v155
  %v164 = vpack.c.b16 %v160, %v156
  %v297 = vunpack.c.l.b16 %v21
  %v298 = vunpack.c.h.b16 %v21
  %v299 = vunpack.c.l.b16 %v22
  %v300 = vunpack.c.h.b16 %v22
  %v301 = vunpack.c.l.b16 %v23
  %v302 = vunpack.c.h.b16 %v23
  %v303 = vunpack.c.l.b16 %v24
  %v304 = vunpack.c.h.b16 %v24
  %v305 = vunpack.c.l.b16 %v25
  %v306 = vunpack.c.h.b16 %v25
  %v307 = vunpack.c.l.b16 %v26
  %v308 = vunpack.c.h.b16 %v26
  %v309 = vunpack.c.l.b16 %v27
  %v310 = vunpack.c.h.b16 %v27
  %v311 = vunpack.c.l.b16 %v28
  %v312 = vunpack.c.h.b16 %v28
  %v313 = vunpack.c.l.b16 %v29
  %v314 = vunpack.c.h.b16 %v29
  %v315 = vunpack.c.l.b16 %v30
  %v316 = vunpack.c.h.b16 %v30
  %v317 = vunpack.c.l.b16 %v31
  %v318 = vunpack.c.h.b16 %v31
  %v319 = vunpack.c.l.b16 %v32
  %v320 = vunpack.c.h.b16 %v32
  %v321 = vunpack.c.l.b16 %v33
  %v322 = vunpack.c.h.b16 %v33
  %v323 = vunpack.c.l.b16 %v34
  %v324 = vunpack.c.h.b16 %v34
  %v325 = vunpack.c.l.b16 %v35
  %v326 = vunpack.c.h.b16 %v35
  %v327 = vunpack.c.l.b16 %v36
  %v328 = vunpack.c.h.b16 %v36
  %v329 = vunpack.c.l.b16 %v37
  %v330 = vunpack.c.h.b16 %v37
  %v331 = vunpack.c.l.b16 %v38
  %v332 = vunpack.c.h.b16 %v38
  %v333 = vunpack.c.l.b16 %v39
  %v334 = vunpack.c.h.b16 %v39
  %v335 = vunpack.c.l.b16 %v40
  %v336 = vunpack.c.h.b16 %v40
  %v337 = vunpack.c.l.b16 %v41
  %v338 = vunpack.c.h.b16 %v41
  %v339 = vunpack.c.l.b16 %v42
  %v340 = vunpack.c.h.b16 %v42
  %v341 = vunpack.c.l.b16 %v43
  %v342 = vunpack.c.h.b16 %v43
  %v343 = vunpack.c.l.b16 %v44
  %v344 = vunpack.c.h.b16 %v44
  %v345 = vunpack.c.l.b16 %v45
  %v346 = vunpack.c.h.b16 %v45
  %v347 = vunpack.c.l.b16 %v46
  %v348 = vunpack.c.h.b16 %v46
  %v349 = vunpack.c.l.b16 %v47
  %v350 = vunpack.c.h.b16 %v47
  %v351 = vunpack.c.l.b16 %v48
  %v352 = vunpack.c.h.b16 %v48
  %v353 = vunpack.c.l.b16 %v49
  %v354 = vunpack.c.h.b16 %v49
  %v355 = vunpack.c.l.b16 %v50
  %v356 = vunpack.c.h.b16 %v50
  %v357 = vunpack.c.l.b16 %v51
  %v358 = vunpack.c.h.b16 %v51
  %v359 = vunpack.c.l.b16 %v52
  %v360 = vunpack.c.h.b16 %v52
  %v361 = vunpack.c.l.b16 %v53
  %v362 = vunpack.c.h.b16 %v53
  %v363 = vunpack.c.l.b16 %v54
  %v364 = vunpack.c.h.b16 %v54
  %v365 = vunpack.c.l.b16 %v55
  %v366 = vunpack.c.h.b16 %v55
  %v367 = vunpack.c.l.b16 %v56
  %v368 = vunpack.c.h.b16 %v56
  %v369 = vunpack.c.l.b16 %v57
  %v370 = vunpack.c.h.b16 %v57
  %v371 = vunpack.c.l.b16 %v58
  %v372 = vunpack.c.h.b16 %v58
  %v373 = vunpack.c.l.b16 %v59
  %v374 = vunpack.c.h.b16 %v59
  %v375 = vunpack.c.l.b16 %v60
  %v376 = vunpack.c.h.b16 %v60
  %v377 = vunpack.c.l.b16 %v61
  %v378 = vunpack.c.h.b16 %v61
  %v379 = vunpack.c.l.b16 %v62
  %v380 = vunpack.c.h.b16 %v62
  %v381 = vunpack.c.l.b16 %v63
  %v382 = vunpack.c.h.b16 %v63
  %v383 = vunpack.c.l.b16 %v64
  %v384 = vunpack.c.h.b16 %v64
  %v385 = vunpack.c.l.b16 %v65
  %v386 = vunpack.c.h.b16 %v65
  %v387 = vunpack.c.l.b16 %v66
  %v388 = vunpack.c.h.b16 %v66
  %v389 = vunpack.c.l.b16 %v67
  %v390 = vunpack.c.h.b16 %v67
  %v391 = vunpack.c.l.b16 %v68
  %v392 = vunpack.c.h.b16 %v68
  %v393 = vunpack.c.l.b16 %v69
  %v394 = vunpack.c.h.b16 %v69
  %v395 = vunpack.c.l.b16 %v70
  %v396 = vunpack.c.h.b16 %v70
  %v397 = vunpack.c.l.b16 %v71
  %v398 = vunpack.c.h.b16 %v71
  %v399 = vunpack.c.l.b16 %v72
  %v400 = vunpack.c.h.b16 %v72
  %v401 = vunpack.c.l.b16 %v73
  %v402 = vunpack.c.h.b16 %v73
  %v403 = vunpack.c.l.b16 %v74
  %v404 = vunpack.c.h.b16 %v74
  %v405 = vunpack.c.l.b16 %v75
  %v406 = vunpack.c.h.b16 %v75
  %v407 = vunpack.c.l.b16 %v76
  %v408 = vunpack.c.h.b16 %v76
  %v409 = vunpack.c.l.b16 %v77
  %v410 = vunpack.c.h.b16 %v77
  %v411 = vunpack.c.l.b16 %v78
  %v412 = vunpack.c.h.b16 %v78
  %v413 = vunpack.c.l.b16 %v79
  %v414 = vunpack.c.h.b16 %v79
  %v415 = vunpack.c.l.b16 %v80
  %v416 = vunpack.c.h.b16 %v80
  %v417 = vunpack.c.l.b16 %v81
  %v418 = vunpack.c.h.b16 %v81
  %v419 = vunpack.c.l.b16 %v82
  %v420 = vunpack.c.h.b16 %v82
  %v421 = vunpack.c.l.b16 %v83
  %v422 = vunpack.c.h.b16 %v83
  %v423 = vunpack.c.l.b16 %v84
  %v424 = vunpack.c.h.b16 %v84
  %v425 = vunpack.c.l.b16 %v85
  %v426 = vunpack.c.h.b16 %v85
  %v427 = vunpack.c.l.b16 %v86
  %v428 = vunpack.c.h.b16 %v86
  %v429 = vunpack.c.l.b16 %v87
  %v430 = vunpack.c.h.b16 %v87
  %v431 = vunpack.c.l.b16 %v88
  %v432 = vunpack.c.h.b16 %v88
  %v433 = vunpack.c.l.b16 %v89
  %v434 = vunpack.c.h.b16 %v89
  %v435 = vunpack.c.l.b16 %v90
  %v436 = vunpack.c.h.b16 %v90
  %v437 = vunpack.c.l.b16 %v91
  %v438 = vunpack.c.h.b16 %v91
  %v439 = vunpack.c.l.b16 %v92
  %v440 = vunpack.c.h.b16 %v92
  %v441 = vunpack.c.l.b16 %v93
  %v442 = vunpack.c.h.b16 %v93
  %v443 = vunpack.c.l.b16 %v94
  %v444 = vunpack.c.h.b16 %v94
  %v445 = vunpack.c.l.b16 %v95
  %v446 = vunpack.c.h.b16 %v95
  %v447 = vunpack.c.l.b16 %v96
  %v448 = vunpack.c.h.b16 %v96
  %v449 = vunpack.c.l.b16 %v97
  %v450 = vunpack.c.h.b16 %v97
  %v451 = vunpack.c.l.b16 %v98
  %v452 = vunpack.c.h.b16 %v98
  %v453 = vunpack.c.l.b16 %v99
  %v454 = vunpack.c.h.b16 %v99
  %v455 = vunpack.c.l.b16 %v100
  %v456 = vunpack.c.h.b16 %v100
  %v457 = vunpack.c.l.b16 %v101
  %v458 = vunpack.c.h.b16 %v101
  %v459 = vunpack.c.l.b16 %v102
  %v460 = vunpack.c.h.b16 %v102
  %v461 = vunpack.c.l.b16 %v103
  %v462 = vunpack.c.h.b16 %v103
  %v463 = vunpack.c.l.b16 %v104
  %v464 = vunpack.c.h.b16 %v104
  %v465 = vunpack.c.l.b16 %v105
  %v466 = vunpack.c.h.b16 %v105
  %v467 = vunpack.c.l.b16 %v106
  %v468 = vunpack.c.h.b16 %v106
  %v469 = vunpack.c.l.b16 %v107
  %v470 = vunpack.c.h.b16 %v107
  %v471 = vunpack.c.l.b16 %v108
  %v472 = vunpack.c.h.b16 %v108
  %v473 = vunpack.c.l.b16 %v109
  %v474 = vunpack.c.h.b16 %v109
  %v475 = vunpack.c.l.b16 %v110
  %v476 = vunpack.c.h.b16 %v110
  %v477 = vunpack.c.l.b16 %v111
  %v478 = vunpack.c.h.b16 %v111
  %v479 = vunpack.c.l.b16 %v112
  %v480 = vunpack.c.h.b16 %v112
  %v481 = vunpack.c.l.b16 %v113
  %v482 = vunpack.c.h.b16 %v113
  %v483 = vunpack.c.l.b16 %v114
  %v484 = vunpack.c.h.b16 %v114
  %v485 = vunpack.c.l.b16 %v115
  %v486 = vunpack.c.h.b16 %v115
  %v487 = vunpack.c.l.b16 %v116
  %v488 = vunpack.c.h.b16 %v116
  %v489 = vunpack.c.l.b16 %v117
  %v490 = vunpack.c.h.b16 %v117
  %v491 = vunpack.c.l.b16 %v118
  %v492 = vunpack.c.h.b16 %v118
  %v493 = vunpack.c.l.b16 %v119
  %v494 = vunpack.c.h.b16 %v119
  %v495 = vunpack.c.l.b16 %v120
  %v496 = vunpack.c.h.b16 %v120
  %v497 = vunpack.c.l.b16 %v121
  %v498 = vunpack.c.h.b16 %v121
  %v499 = vunpack.c.l.b16 %v122
  %v500 = vunpack.c.h.b16 %v122
  %v501 = vunpack.c.l.b16 %v123
  %v502 = vunpack.c.h.b16 %v123
  %v503 = vunpack.c.l.b16 %v124
  %v504 = vunpack.c.h.b16 %v124
  %v505 = vunpack.c.l.b16 %v125
  %v506 = vunpack.c.h.b16 %v125
  %v507 = vunpack.c.l.b16 %v126
  %v508 = vunpack.c.h.b16 %v126
  %v509 = vunpack.c.l.b16 %v127
  %v510 = vunpack.c.h.b16 %v127
  %v511 = vunpack.c.l.b16 %v128
  %v512 = vunpack.c.h.b16 %v128
  %v513 = vunpack.c.l.b16 %v129
  %v514 = vunpack.c.h.b16 %v129
  %v515 = vunpack.c.l.b16 %v130
  %v516 = vunpack.c.h.b16 %v130
  %v517 = vunpack.c.l.b16 %v131
  %v518 = vunpack.c.h.b16 %v131
  %v519 = vunpack.c.l.b16 %v132
  %v520 = vunpack.c.h.b16 %v132
  %v521 = vunpack.c.l.b16 %v133
  %v522 = vunpack.c.h.b16 %v133
  %v523 = vunpack.c.l.b16 %v134
  %v524 = vunpack.c.h.b16 %v134
  %v525 = vunpack.c.l.b16 %v135
  %v526 = vunpack.c.h.b16 %v135
  %v527 = vunpack.c.l.b16 %v136
  %v528 = vunpack.c.h.b16 %v136
  %v529 = vunpack.c.l.b16 %v137
  %v530 = vunpack.c.h.b16 %v137
  %v531 = vunpack.c.l.b16 %v138
  %v532 = vunpack.c.h.b16 %v138
  %v533 = vunpack.c.l.b16 %v139
  %v534 = vunpack.c.h.b16 %v139
  %v535 = vunpack.c.l.b16 %v140
  %v536 = vunpack.c.h.b16 %v140
  %v537 = vunpack.c.l.b16 %v141
  %v538 = vunpack.c.h.b16 %v141
  %v539 = vunpack.c.l.b16 %v142
  %v540 = vunpack.c.h.b16 %v142
  %v541 = vunpack.c.l.b16 %v143
  %v542 = vunpack.c.h.b16 %v143
  %v543 = vunpack.c.l.b16 %v144
  %v544 = vunpack.c.h.b16 %v144
  %v545 = vunpack.c.l.b16 %v145
  %v546 = vunpack.c.h.b16 %v145
  %v547 = vunpack.c.l.b16 %v146
  %v548 = vunpack.c.h.b16 %v146
  %v549 = vunpack.c.l.b16 %v147
  %v550 = vunpack.c.h.b16 %v147
  %v551 = vunpack.c.l.b16 %v148
  %v552 = vunpack.c.h.b16 %v148
  %v553 = vpack.c.b16 %v301, %v297
  %v554 = vpack.c.b16 %v302, %v298
  %v555 = vpack.c.b16 %v303, %v299
  %v556 = vpack.c.b16 %v304, %v300
  %v557 = vpack.c.b16 %v309, %v305
  %v558 = vpack.c.b16 %v310, %v306
  %v559 = vpack.c.b16 %v311, %v307
  %v560 = vpack.c.b16 %v312, %v308
  %v561 = vpack.c.b16 %v317, %v313
  %v562 = vpack.c.b16 %v318, %v314
  %v563 = vpack.c.b16 %v319, %v315
  %v564 = vpack.c.b16 %v320, %v316
  %v565 = vpack.c.b16 %v325, %v321
  %v566 = vpack.c.b16 %v326, %v322
  %v567 = vpack.c.b16 %v327, %v323
  %v568 = vpack.c.b16 %v328, %v324
  %v569 = vpack.c.b16 %v333, %v329
  %v570 = vpack.c.b16 %v334, %v330
  %v571 = vpack.c.b16 %v335, %v331
  %v572 = vpack.c.b16 %v336, %v332
  %v573 = vpack.c.b16 %v341, %v337
  %v574 = vpack.c.b16 %v342, %v338
  %v575 = vpack.c.b16 %v343, %v339
  %v576 = vpack.c.b16 %v344, %v340
  %v577 = vpack.c.b16 %v349, %v345
  %v578 = vpack.c.b16 %v350, %v346
  %v579 = vpack.c.b16 %v351, %v347
  %v580 = vpack.c.b16 %v352, %v348
  %v581 = vpack.c.b16 %v357, %v353
  %v582 = vpack.c.b16 %v358, %v354
  %v583 = vpack.c.b16 %v359, %v355
  %v584 = vpack.c.b16 %v360, %v356
  %v585 = vpack.c.b16 %v365, %v361
  %v586 = vpack.c.b16 %v366, %v362
  %v587 = vpack.c.b16 %v367, %v363
  %v588 = vpack.c.b16 %v368, %v364
  %v589 = vpack.c.b16 %v373, %v369
  %v590 = vpack.c.b16 %v374, %v370
  %v591 = vpack.c.b16 %v375, %v371
  %v592 = vpack.c.b16 %v376, %v372
  %v593 = vpack.c.b16 %v381, %v377
  %v594 = vpack.c.b16 %v382, %v378
  %v595 = vpack.c.b16 %v383, %v379
  %v596 = vpack.c.b16 %v384, %v380
  %v597 = vpack.c.b16 %v389, %v385
  %v598 = vpack.c.b16 %v390, %v386
  %v599 = vpack.c.b16 %v391, %v387
  %v600 = vpack.c.b16 %v392, %v388
  %v601 = vpack.c.b16 %v397, %v393
  %v602 = vpack.c.b16 %v398, %v394
  %v603 = vpack.c.b16 %v399, %v395
  %v604 = vpack.c.b16 %v400, %v396
  %v605 = vpack.c.b16 %v405, %v401
  %v606 = vpack.c.b16 %v406, %v402
  %v607 = vpack.c.b16 %v407, %v403
  %v608 = vpack.c.b16 %v408, %v404
  %v609 = vpack.c.b16 %v413, %v409
  %v610 = vpack.c.b16 %v414, %v410
  %v611 = vpack.c.b16 %v415, %v411
  %v612 = vpack.c.b16 %v416, %v412
  %v613 = vpack.c.b16 %v421, %v417
  %v614 = vpack.c.b16 %v422, %v418
  %v615 = vpack.c.b16 %v423, %v419
  %v616 = vpack.c.b16 %v424, %v420
  %v617 = vpack.c.b16 %v429, %v425
  %v618 = vpack.c.b16 %v430, %v426
  %v619 = vpack.c.b16 %v431, %v427
  %v620 = vpack.c.b16 %v432, %v428
  %v621 = vpack.c.b16 %v437, %v433
  %v622 = vpack.c.b16 %v438, %v434
  %v623 = vpack.c.b16 %v439, %v435
  %v624 = vpack.c.b16 %v440, %v436
  %v625 = vpack.c.b16 %v445, %v441
  %v626 = vpack.c.b16 %v446, %v442
  %v627 = vpack.c.b16 %v447, %v443
  %v628 = vpack.c.b16 %v448, %v444
  %v629 = vpack.c.b16 %v453, %v449
  %v630 = vpack.c.b16 %v454, %v450
  %v631 = vpack.c.b16 %v455, %v451
  %v632 = vpack.c.b16 %v456, %v452
  %v633 = vpack.c.b16 %v461, %v457
  %v634 = vpack.c.b16 %v462, %v458
  %v635 = vpack.c.b16 %v463, %v459
  %v636 = vpack.c.b16 %v464, %v460
  %v637 = vpack.c.b16 %v469, %v465
  %v638 = vpack.c.b16 %v470, %v466
  %v639 = vpack.c.b16 %v471, %v467
  %v640 = vpack.c.b16 %v472, %v468
  %v641 = vpack.c.b16 %v477, %v473
  %v642 = vpack.c.b16 %v478, %v474
  %v643 = vpack.c.b16 %v479, %v475
  %v644 = vpack.c.b16 %v480, %v476
  %v645 = vpack.c.b16 %v485, %v481
  %v646 = vpack.c.b16 %v486, %v482
  %v647 = vpack.c.b16 %v487, %v483
  %v648 = vpack.c.b16 %v488, %v484
  %v649 = vpack.c.b16 %v493, %v489
  %v650 = vpack.c.b16 %v494, %v490
  %v651 = vpack.c.b16 %v495, %v491
  %v652 = vpack.c.b16 %v496, %v492
  %v653 = vpack.c.b16 %v501, %v497
  %v654 = vpack.c.b16 %v502, %v498
  %v655 = vpack.c.b16 %v503, %v499
  %v656 = vpack.c.b16 %v504, %v500
  %v657 = vpack.c.b16 %v509, %v505
  %v658 = vpack.c.b16 %v510, %v506
  %v659 = vpack.c.b16 %v511, %v507
  %v660 = vpack.c.b16 %v512, %v508
  %v661 = vpack.c.b16 %v517, %v513
  %v662 = vpack.c.b16 %v518, %v514
  %v663 = vpack.c.b16 %v519, %v515
  %v664 = vpack.c.b16 %v520, %v516
  %v665 = vpack.c.b16 %v525, %v521
  %v666 = vpack.c.b16 %v526, %v522
  %v667 = vpack.c.b16 %v527, %v523
  %v668 = vpack.c.b16 %v528, %v524
  %v669 = vpack.c.b16 %v533, %v529
  %v670 = vpack.c.b16 %v534, %v530
  %v671 = vpack.c.b16 %v535, %v531
  %v672 = vpack.c.b16 %v536, %v532
  %v673 = vpack.c.b16 %v541, %v537
  %v674 = vpack.c.b16 %v542, %v538
  %v675 = vpack.c.b16 %v543, %v539
  %v676 = vpack.c.b16 %v544, %v540
  %v677 = vpack.c.b16 %v549, %v545
  %v678 = vpack.c.b16 %v550, %v546
  %v679 = vpack.c.b16 %v551, %v547
  %v680 = vpack.c.b16 %v552, %v548
  %809 = vmatprep.subr.bf16.mxu0 %v582
  %810 = vmatpush1.bf16.msra.mxu0 %v581
  %811 = vmatprep.subr.bf16.mxu0 %v578
  %812 = vmatpush1.bf16.msra.mxu0 %v577
  %813 = vmatprep.subr.bf16.mxu0 %v574
  %814 = vmatpush1.bf16.msra.mxu0 %v573
  %815 = vmatprep.subr.bf16.mxu0 %v570
  %816 = vmatpush1.bf16.msra.mxu0 %v569
  %817 = vmatprep.subr.bf16.mxu0 %v566
  %818 = vmatpush1.bf16.msra.mxu0 %v565
  %819 = vmatprep.subr.bf16.mxu0 %v562
  %820 = vmatpush1.bf16.msra.mxu0 %v561
  %821 = vmatprep.subr.bf16.mxu0 %v558
  %822 = vmatpush1.bf16.msra.mxu0 %v557
  %823 = vmatprep.subr.bf16.mxu0 %v554
  %824 = vmatpush1.bf16.msra.mxu0 %v553
  %825 = vmatprep.subr.bf16.mxu0 %v614
  %826 = vmatpush2.bf16.msra.mxu0 %v613
  %827 = vmatprep.subr.bf16.mxu0 %v610
  %828 = vmatpush2.bf16.msra.mxu0 %v609
  %829 = vmatprep.subr.bf16.mxu0 %v606
  %830 = vmatpush2.bf16.msra.mxu0 %v605
  %831 = vmatprep.subr.bf16.mxu0 %v602
  %832 = vmatpush2.bf16.msra.mxu0 %v601
  %833 = vmatprep.subr.bf16.mxu0 %v598
  %834 = vmatpush2.bf16.msra.mxu0 %v597
  %835 = vmatprep.subr.bf16.mxu0 %v594
  %836 = vmatpush2.bf16.msra.mxu0 %v593
  %837 = vmatprep.subr.bf16.mxu0 %v590
  %838 = vmatpush2.bf16.msra.mxu0 %v589
  %839 = vmatprep.subr.bf16.mxu0 %v586
  %840 = vmatpush2.bf16.msra.mxu0 %v585
  %841 = vmatprep.mubr.bf16.mxu0 %v162
  %842 = vmatmul.mubr.bf16.gmra.mxu0 %v161
  %v843 = vpop.f32.mrf.mxu0
  %v844 = vadd.f32 0.0, %v843
  %v845 = vpop.f32.mrf.mxu0
  %v846 = vadd.f32 0.0, %v845
  %v847 = vpop.f32.mrf.mxu0
  %v848 = vadd.f32 0.0, %v847
  %v849 = vpop.f32.mrf.mxu0
  %v850 = vadd.f32 0.0, %v849
  %851 = vdwg.mxu0
  %852 = vmatprep.subr.bf16.mxu0 %v646
  %853 = vmatpush1.bf16.msra.mxu0 %v645
  %854 = vmatprep.subr.bf16.mxu0 %v642
  %855 = vmatpush1.bf16.msra.mxu0 %v641
  %856 = vmatprep.subr.bf16.mxu0 %v638
  %857 = vmatpush1.bf16.msra.mxu0 %v637
  %858 = vmatprep.subr.bf16.mxu0 %v634
  %859 = vmatpush1.bf16.msra.mxu0 %v633
  %860 = vmatprep.subr.bf16.mxu0 %v630
  %861 = vmatpush1.bf16.msra.mxu0 %v629
  %862 = vmatprep.subr.bf16.mxu0 %v626
  %863 = vmatpush1.bf16.msra.mxu0 %v625
  %864 = vmatprep.subr.bf16.mxu0 %v622
  %865 = vmatpush1.bf16.msra.mxu0 %v621
  %866 = vmatprep.subr.bf16.mxu0 %v618
  %867 = vmatpush1.bf16.msra.mxu0 %v617
  %868 = vmatprep.subr.bf16.mxu0 %v678
  %869 = vmatpush2.bf16.msra.mxu0 %v677
  %870 = vmatprep.subr.bf16.mxu0 %v674
  %871 = vmatpush2.bf16.msra.mxu0 %v673
  %872 = vmatprep.subr.bf16.mxu0 %v670
  %873 = vmatpush2.bf16.msra.mxu0 %v669
  %874 = vmatprep.subr.bf16.mxu0 %v666
  %875 = vmatpush2.bf16.msra.mxu0 %v665
  %876 = vmatprep.subr.bf16.mxu0 %v662
  %877 = vmatpush2.bf16.msra.mxu0 %v661
  %878 = vmatprep.subr.bf16.mxu0 %v658
  %879 = vmatpush2.bf16.msra.mxu0 %v657
  %880 = vmatprep.subr.bf16.mxu0 %v654
  %881 = vmatpush2.bf16.msra.mxu0 %v653
  %882 = vmatprep.subr.bf16.mxu0 %v650
  %883 = vmatpush2.bf16.msra.mxu0 %v649
  %884 = vmatprep.mubr.bf16.mxu0 %v164
  %885 = vmatmul.mubr.bf16.gmra.mxu0 %v163
  %v886 = vpop.f32.mrf.mxu0
  %v887 = vadd.f32 %v844, %v886
  %v888 = vpop.f32.mrf.mxu0
  %v889 = vadd.f32 %v846, %v888
  %v890 = vpop.f32.mrf.mxu0
  %v891 = vadd.f32 %v848, %v890
  %v892 = vpop.f32.mrf.mxu0
  %v893 = vadd.f32 %v850, %v892
  %894 = vdwg.mxu0
  %895 = vmatprep.subr.bf16.mxu0 %v584
  %896 = vmatpush1.bf16.msra.mxu0 %v583
  %897 = vmatprep.subr.bf16.mxu0 %v580
  %898 = vmatpush1.bf16.msra.mxu0 %v579
  %899 = vmatprep.subr.bf16.mxu0 %v576
  %900 = vmatpush1.bf16.msra.mxu0 %v575
  %901 = vmatprep.subr.bf16.mxu0 %v572
  %902 = vmatpush1.bf16.msra.mxu0 %v571
  %903 = vmatprep.subr.bf16.mxu0 %v568
  %904 = vmatpush1.bf16.msra.mxu0 %v567
  %905 = vmatprep.subr.bf16.mxu0 %v564
  %906 = vmatpush1.bf16.msra.mxu0 %v563
  %907 = vmatprep.subr.bf16.mxu0 %v560
  %908 = vmatpush1.bf16.msra.mxu0 %v559
  %909 = vmatprep.subr.bf16.mxu0 %v556
  %910 = vmatpush1.bf16.msra.mxu0 %v555
  %911 = vmatprep.subr.bf16.mxu0 %v616
  %912 = vmatpush2.bf16.msra.mxu0 %v615
  %913 = vmatprep.subr.bf16.mxu0 %v612
  %914 = vmatpush2.bf16.msra.mxu0 %v611
  %915 = vmatprep.subr.bf16.mxu0 %v608
  %916 = vmatpush2.bf16.msra.mxu0 %v607
  %917 = vmatprep.subr.bf16.mxu0 %v604
  %918 = vmatpush2.bf16.msra.mxu0 %v603
  %919 = vmatprep.subr.bf16.mxu0 %v600
  %920 = vmatpush2.bf16.msra.mxu0 %v599
  %921 = vmatprep.subr.bf16.mxu0 %v596
  %922 = vmatpush2.bf16.msra.mxu0 %v595
  %923 = vmatprep.subr.bf16.mxu0 %v592
  %924 = vmatpush2.bf16.msra.mxu0 %v591
  %925 = vmatprep.subr.bf16.mxu0 %v588
  %926 = vmatpush2.bf16.msra.mxu0 %v587
  %927 = vmatprep.mubr.bf16.mxu0 %v162
  %928 = vmatmul.mubr.bf16.gmra.mxu0 %v161
  %v929 = vpop.f32.mrf.mxu0
  %v930 = vadd.f32 0.0, %v929
  %v931 = vpop.f32.mrf.mxu0
  %v932 = vadd.f32 0.0, %v931
  %v933 = vpop.f32.mrf.mxu0
  %v934 = vadd.f32 0.0, %v933
  %v935 = vpop.f32.mrf.mxu0
  %v936 = vadd.f32 0.0, %v935
  %937 = vdwg.mxu0
  %938 = vmatprep.subr.bf16.mxu0 %v648
  %939 = vmatpush1.bf16.msra.mxu0 %v647
  %940 = vmatprep.subr.bf16.mxu0 %v644
  %941 = vmatpush1.bf16.msra.mxu0 %v643
  %942 = vmatprep.subr.bf16.mxu0 %v640
  %943 = vmatpush1.bf16.msra.mxu0 %v639
  %944 = vmatprep.subr.bf16.mxu0 %v636
  %945 = vmatpush1.bf16.msra.mxu0 %v635
  %946 = vmatprep.subr.bf16.mxu0 %v632
  %947 = vmatpush1.bf16.msra.mxu0 %v631
  %948 = vmatprep.subr.bf16.mxu0 %v628
  %949 = vmatpush1.bf16.msra.mxu0 %v627
  %950 = vmatprep.subr.bf16.mxu0 %v624
  %951 = vmatpush1.bf16.msra.mxu0 %v623
  %952 = vmatprep.subr.bf16.mxu0 %v620
  %953 = vmatpush1.bf16.msra.mxu0 %v619
  %954 = vmatprep.subr.bf16.mxu0 %v680
  %955 = vmatpush2.bf16.msra.mxu0 %v679
  %956 = vmatprep.subr.bf16.mxu0 %v676
  %957 = vmatpush2.bf16.msra.mxu0 %v675
  %958 = vmatprep.subr.bf16.mxu0 %v672
  %959 = vmatpush2.bf16.msra.mxu0 %v671
  %960 = vmatprep.subr.bf16.mxu0 %v668
  %961 = vmatpush2.bf16.msra.mxu0 %v667
  %962 = vmatprep.subr.bf16.mxu0 %v664
  %963 = vmatpush2.bf16.msra.mxu0 %v663
  %964 = vmatprep.subr.bf16.mxu0 %v660
  %965 = vmatpush2.bf16.msra.mxu0 %v659
  %966 = vmatprep.subr.bf16.mxu0 %v656
  %967 = vmatpush2.bf16.msra.mxu0 %v655
  %968 = vmatprep.subr.bf16.mxu0 %v652
  %969 = vmatpush2.bf16.msra.mxu0 %v651
  %970 = vmatprep.mubr.bf16.mxu0 %v164
  %971 = vmatmul.mubr.bf16.gmra.mxu0 %v163
  %v972 = vpop.f32.mrf.mxu0
  %v973 = vadd.f32 %v930, %v972
  %v974 = vpop.f32.mrf.mxu0
  %v975 = vadd.f32 %v932, %v974
  %v976 = vpop.f32.mrf.mxu0
  %v977 = vadd.f32 %v934, %v976
  %v978 = vpop.f32.mrf.mxu0
  %v979 = vadd.f32 %v936, %v978
  %980 = vdwg.mxu0
  %v981 = vadd.f32 %v887, %v889
  %v982 = vadd.f32 %v981, %v973
  %v983 = vadd.f32 %v982, %v975
  %984 = vadd.xlane.f32.xlu0 %v983
  %v985 = vpop.xlane.xlu0 %984
  %v986 = vadd.f32 %v891, %v893
  %v987 = vadd.f32 %v986, %v977
  %v988 = vadd.f32 %v987, %v979
  %989 = vadd.xlane.f32.xlu0 %v988
  %v990 = vpop.xlane.xlu0 %989
  %v991 = vmul.f32 %v985, 0.001953125
  %v992 = vmul.f32 %v990, 0.001953125
  %v993 = vmul.f32 %v887, %v887
  %v994 = vmul.f32 %v889, %v889
  %v995 = vmul.f32 %v973, %v973
  %v996 = vmul.f32 %v975, %v975
  %v997 = vmul.f32 %v891, %v891
  %v998 = vmul.f32 %v893, %v893
  %v999 = vmul.f32 %v977, %v977
  %v1000 = vmul.f32 %v979, %v979
  %v1001 = vadd.f32 %v993, %v994
  %v1002 = vadd.f32 %v1001, %v995
  %v1003 = vadd.f32 %v1002, %v996
  %1004 = vadd.xlane.f32.xlu0 %v1003
  %v1005 = vpop.xlane.xlu0 %1004
  %v1006 = vadd.f32 %v997, %v998
  %v1007 = vadd.f32 %v1006, %v999
  %v1008 = vadd.f32 %v1007, %v1000
  %1009 = vadd.xlane.f32.xlu0 %v1008
  %v1010 = vpop.xlane.xlu0 %1009
  %v1011 = vmul.f32 %v1005, 0.001953125
  %v1012 = vmul.f32 %v1010, 0.001953125
  %v1013 = vmul.f32 %v991, %v991
  %v1014 = vmul.f32 %v992, %v992
  %v1015 = vsub.f32 %v1011, %v1013
  %v1016 = vsub.f32 %v1012, %v1014
  %v1017 = vmax.f32 %v1015, 0.0
  %v1018 = vmax.f32 %v1016, 0.0
  %v1019 = vld [vmem:[%s2] sm:$0xff]
  %v1020 = vld [vmem:[%s2 + $0x8] sm:$0xff]
  %v1021 = vadd.f32 %v1017, 1e-05
  %v1022 = vadd.f32 %v1018, 1e-05
  %v1023 = vrsqrt.pop %v1021
  %v1024 = vrsqrt.pop %v1022
  %v1025 = vmul.f32 %v1019, %v1023
  %v1026 = vmul.f32 %v1020, %v1024
  %v1027 = vld [vmem:[%s3] sm:$0xff]
  %v1028 = vld [vmem:[%s3 + $0x8] sm:$0xff]
  %v1029 = vmul.f32 %v1025, %v991
  %v1030 = vmul.f32 %v1026, %v992
  %v1031 = vsub.f32 %v1027, %v1029
  %v1032 = vsub.f32 %v1028, %v1030
  %1034 = vset.pattern.permute.xlu0 0
  %1035 = vperm.xlu0 %1034, %v1025
  %v1036 = vpop.permute.xlu0 %1035
  %1039 = vset.pattern.permute.xlu0 0
  %1040 = vperm.xlu0 %1039, %v1026
  %v1041 = vpop.permute.xlu0 %1040
  %v1043 = vmul.f32 %v1036, %v887
  %v1044 = vmul.f32 %v1036, %v889
  %v1045 = vmul.f32 %v1036, %v973
  %v1046 = vmul.f32 %v1036, %v975
  %v1047 = vmul.f32 %v1041, %v891
  %v1048 = vmul.f32 %v1041, %v893
  %v1049 = vmul.f32 %v1041, %v977
  %v1050 = vmul.f32 %v1041, %v979
  %1052 = vset.pattern.permute.xlu0 0
  %1053 = vperm.xlu0 %1052, %v1031
  %v1054 = vpop.permute.xlu0 %1053
  %1057 = vset.pattern.permute.xlu0 0
  %1058 = vperm.xlu0 %1057, %v1032
  %v1059 = vpop.permute.xlu0 %1058
  %v1061 = vadd.f32 %v1043, %v1054
  %v1062 = vadd.f32 %v1044, %v1054
  %v1063 = vadd.f32 %v1045, %v1054
  %v1064 = vadd.f32 %v1046, %v1054
  %v1065 = vadd.f32 %v1047, %v1059
  %v1066 = vadd.f32 %v1048, %v1059
  %v1067 = vadd.f32 %v1049, %v1059
  %v1068 = vadd.f32 %v1050, %v1059
  %vm1069 = vcmp.ge.f32.partialorder %v1061, 0.0
  %vm1070 = vcmp.ge.f32.partialorder %v1062, 0.0
  %vm1071 = vcmp.ge.f32.partialorder %v1063, 0.0
  %vm1072 = vcmp.ge.f32.partialorder %v1064, 0.0
  %vm1073 = vcmp.ge.f32.partialorder %v1065, 0.0
  %vm1074 = vcmp.ge.f32.partialorder %v1066, 0.0
  %vm1075 = vcmp.ge.f32.partialorder %v1067, 0.0
  %vm1076 = vcmp.ge.f32.partialorder %v1068, 0.0
  %v1077 = vmul.f32 %v1061, 0.2
  %v1078 = vmul.f32 %v1062, 0.2
  %v1079 = vmul.f32 %v1063, 0.2
  %v1080 = vmul.f32 %v1064, 0.2
  %v1081 = vmul.f32 %v1065, 0.2
  %v1082 = vmul.f32 %v1066, 0.2
  %v1083 = vmul.f32 %v1067, 0.2
  %v1084 = vmul.f32 %v1068, 0.2
  %v1085 = vsel %vm1069, %v1061, %v1077
  %v1086 = vsel %vm1070, %v1062, %v1078
  %v1087 = vsel %vm1071, %v1063, %v1079
  %v1088 = vsel %vm1072, %v1064, %v1080
  %v1089 = vsel %vm1073, %v1065, %v1081
  %v1090 = vsel %vm1074, %v1066, %v1082
  %v1091 = vsel %vm1075, %v1067, %v1083
  %v1092 = vsel %vm1076, %v1068, %v1084
  %v1093 = vpack.c.bf16 %v1089, %v1085
  %v1094 = vpack.c.bf16 %v1090, %v1086
  %v1095 = vpack.c.bf16 %v1091, %v1087
  %v1096 = vpack.c.bf16 %v1092, %v1088
  %v1101 = vunpack.c.l.b16 %v1093
  %v1102 = vunpack.c.l.b16 %v1094
  %v1103 = vunpack.c.l.b16 %v1095
  %v1104 = vunpack.c.l.b16 %v1096
  %v1105 = vunpack.c.h.b16 %v1093
  %v1106 = vunpack.c.h.b16 %v1094
  %v1107 = vunpack.c.h.b16 %v1095
  %v1108 = vunpack.c.h.b16 %v1096
  %v1109 = vpack.c.b16 %v1102, %v1101
  %v1110 = vpack.c.b16 %v1104, %v1103
  %v1111 = vpack.c.b16 %v1106, %v1105
  %v1112 = vpack.c.b16 %v1108, %v1107
  %1117 = vst [vmem:[%s4] sm:$0xff] %v1109
  %1118 = vst [vmem:[%s4 + $0x8] sm:$0xff] %v1110
  %1119 = vst [vmem:[%s4 + $0x10] sm:$0xff] %v1111
  %1120 = vst [vmem:[%s4 + $0x18] sm:$0xff] %v1112
  // Predicated region
  $region18: #{generator_forward.7} parent=0 // pred_check
    _
  $region19: #{generator_forward.7} parent=0 // pred_check_branch
    %1122 = sbr.rel (0) target = $region21
  $region20: #{generator_forward.7} parent=0 // pred_region
    _
  $region21: #{generator_forward.7} parent=0 // pred_fallthru
    _
  // Predicated region
  $region22: #{generator_forward.7} parent=0 // pred_check
    _
  $region23: #{generator_forward.7} parent=0 // pred_check_branch
    %1124 = sbr.rel (0) target = $region25
  $region24: #{generator_forward.7} parent=0 // pred_region
    _
  $region25: #{generator_forward.7} parent=0 // pred_fallthru
    _

// kernel: generator_forward.8
$region0: #{generator_forward.8}
  #allocation0 [shape = 'u32[]', space=smem, size = 0x4, offset = 0x4, fixed_abs, tag = 'smem constant byte address 0x4 - core index']
  #allocation1 [shape = 'u32[144,128]{1,0:T(1,128)}', space=vmem, size = 0x12000, scoped, tag = 'internal scratch']
  %s0 = inlined_call_operand.vmem [shape: bf16[8,256], index: 0, kind: input, shape index: {}]
  %s1 = inlined_call_operand.vmem [shape: bf16[256,2048], index: 1, kind: input, shape index: {}]
  %s2 = inlined_call_operand.vmem [shape: f32[8,1], index: 2, kind: input, shape index: {}]
  %s3 = inlined_call_operand.vmem [shape: f32[8,1], index: 3, kind: input, shape index: {}]
  %s4 = inlined_call_operand.vmem [shape: bf16[8,2048], index: 4, kind: output, shape index: {}]
  %s5 = sld [smem:[#allocation0]]
  $region26: #{generator_forward.8} parent=0
    _
  %s7 = ssub.s32 1, %s5
  %s8 = scalar_select 0, %s7, %s5
  // Predicated region
  $region2: #{generator_forward.8} parent=0 // pred_check
    _
  $region3: #{generator_forward.8} parent=0 // pred_check_branch
    %10 = sbr.rel (0) target = $region5
  $region4: #{generator_forward.8} parent=0 // pred_region
    _
  $region5: #{generator_forward.8} parent=0 // pred_fallthru
    _
  // Predicated region
  $region6: #{generator_forward.8} parent=0 // pred_check
    _
  $region7: #{generator_forward.8} parent=0 // pred_check_branch
    %12 = sbr.rel (0) target = $region9
  $region8: #{generator_forward.8} parent=0 // pred_region
    _
  $region9: #{generator_forward.8} parent=0 // pred_fallthru
    _
  // Predicated region
  $region10: #{generator_forward.8} parent=0 // pred_check
    _
  $region11: #{generator_forward.8} parent=0 // pred_check_branch
    %14 = sbr.rel (0) target = $region13
  $region12: #{generator_forward.8} parent=0 // pred_region
    _
  $region13: #{generator_forward.8} parent=0 // pred_fallthru
    _
  // Predicated region
  $region14: #{generator_forward.8} parent=0 // pred_check
    _
  $region15: #{generator_forward.8} parent=0 // pred_check_branch
    %16 = sbr.rel (0) target = $region17
  $region16: #{generator_forward.8} parent=0 // pred_region
    _
  $region17: #{generator_forward.8} parent=0 // pred_fallthru
    _
  %v17 = vld [vmem:[%s0] sm:$0xff]
  %v18 = vld [vmem:[%s1] sm:$0xff]
  %v19 = vld [vmem:[%s1 + $0x8] sm:$0xff]
  %v20 = vld [vmem:[%s1 + $0x10] sm:$0xff]
  %v21 = vld [vmem:[%s1 + $0x18] sm:$0xff]
  %v22 = vld [vmem:[%s1 + $0x20] sm:$0xff]
  %v23 = vld [vmem:[%s1 + $0x28] sm:$0xff]
  %v24 = vld [vmem:[%s1 + $0x30] sm:$0xff]
  %v25 = vld [vmem:[%s1 + $0x38] sm:$0xff]
  %v26 = vld [vmem:[%s1 + $0x40] sm:$0xff]
  %v27 = vld [vmem:[%s1 + $0x48] sm:$0xff]
  %v28 = vld [vmem:[%s1 + $0x50] sm:$0xff]
  %v29 = vld [vmem:[%s1 + $0x58] sm:$0xff]
  %v30 = vld [vmem:[%s1 + $0x60] sm:$0xff]
  %v31 = vld [vmem:[%s1 + $0x68] sm:$0xff]
  %v32 = vld [vmem:[%s1 + $0x70] sm:$0xff]
  %v33 = vld [vmem:[%s1 + $0x78] sm:$0xff]
  %v34 = vld [vmem:[%s1 + $0x80] sm:$0xff]
  %v35 = vld [vmem:[%s1 + $0x88] sm:$0xff]
  %v36 = vld [vmem:[%s1 + $0x90] sm:$0xff]
  %v37 = vld [vmem:[%s1 + $0x98] sm:$0xff]
  %v38 = vld [vmem:[%s1 + $0xa0] sm:$0xff]
  %v39 = vld [vmem:[%s1 + $0xa8] sm:$0xff]
  %v40 = vld [vmem:[%s1 + $0xb0] sm:$0xff]
  %v41 = vld [vmem:[%s1 + $0xb8] sm:$0xff]
  %v42 = vld [vmem:[%s1 + $0xc0] sm:$0xff]
  %v43 = vld [vmem:[%s1 + $0xc8] sm:$0xff]
  %v44 = vld [vmem:[%s1 + $0xd0] sm:$0xff]
  %v45 = vld [vmem:[%s1 + $0xd8] sm:$0xff]
  %v46 = vld [vmem:[%s1 + $0xe0] sm:$0xff]
  %v47 = vld [vmem:[%s1 + $0xe8] sm:$0xff]
  %v48 = vld [vmem:[%s1 + $0xf0] sm:$0xff]
  %v49 = vld [vmem:[%s1 + $0xf8] sm:$0xff]
  %v50 = vld [vmem:[%s1 + $0x100] sm:$0xff]
  %v51 = vld [vmem:[%s1 + $0x108] sm:$0xff]
  %v52 = vld [vmem:[%s1 + $0x110] sm:$0xff]
  %v53 = vld [vmem:[%s1 + $0x118] sm:$0xff]
  %v54 = vld [vmem:[%s1 + $0x120] sm:$0xff]
  %v55 = vld [vmem:[%s1 + $0x128] sm:$0xff]
  %v56 = vld [vmem:[%s1 + $0x130] sm:$0xff]
  %v57 = vld [vmem:[%s1 + $0x138] sm:$0xff]
  %v58 = vld [vmem:[%s1 + $0x140] sm:$0xff]
  %v59 = vld [vmem:[%s1 + $0x148] sm:$0xff]
  %v60 = vld [vmem:[%s1 + $0x150] sm:$0xff]
  %v61 = vld [vmem:[%s1 + $0x158] sm:$0xff]
  %v62 = vld [vmem:[%s1 + $0x160] sm:$0xff]
  %v63 = vld [vmem:[%s1 + $0x168] sm:$0xff]
  %v64 = vld [vmem:[%s1 + $0x170] sm:$0xff]
  %v65 = vld [vmem:[%s1 + $0x178] sm:$0xff]
  %v66 = vld [vmem:[%s1 + $0x180] sm:$0xff]
  %v67 = vld [vmem:[%s1 + $0x188] sm:$0xff]
  %v68 = vld [vmem:[%s1 + $0x190] sm:$0xff]
  %v69 = vld [vmem:[%s1 + $0x198] sm:$0xff]
  %v70 = vld [vmem:[%s1 + $0x1a0] sm:$0xff]
  %v71 = vld [vmem:[%s1 + $0x1a8] sm:$0xff]
  %v72 = vld [vmem:[%s1 + $0x1b0] sm:$0xff]
  %v73 = vld [vmem:[%s1 + $0x1b8] sm:$0xff]
  %v74 = vld [vmem:[%s1 + $0x1c0] sm:$0xff]
  %v75 = vld [vmem:[%s1 + $0x1c8] sm:$0xff]
  %v76 = vld [vmem:[%s1 + $0x1d0] sm:$0xff]
  %v77 = vld [vmem:[%s1 + $0x1d8] sm:$0xff]
  %v78 = vld [vmem:[%s1 + $0x1e0] sm:$0xff]
  %v79 = vld [vmem:[%s1 + $0x1e8] sm:$0xff]
  %v80 = vld [vmem:[%s1 + $0x1f0] sm:$0xff]
  %v81 = vld [vmem:[%s1 + $0x1f8] sm:$0xff]
  %v82 = vld [vmem:[%s1 + $0x200] sm:$0xff]
  %v83 = vld [vmem:[%s1 + $0x208] sm:$0xff]
  %v84 = vld [vmem:[%s1 + $0x210] sm:$0xff]
  %v85 = vld [vmem:[%s1 + $0x218] sm:$0xff]
  %v86 = vld [vmem:[%s1 + $0x220] sm:$0xff]
  %v87 = vld [vmem:[%s1 + $0x228] sm:$0xff]
  %v88 = vld [vmem:[%s1 + $0x230] sm:$0xff]
  %v89 = vld [vmem:[%s1 + $0x238] sm:$0xff]
  %v90 = vld [vmem:[%s1 + $0x240] sm:$0xff]
  %v91 = vld [vmem:[%s1 + $0x248] sm:$0xff]
  %v92 = vld [vmem:[%s1 + $0x250] sm:$0xff]
  %v93 = vld [vmem:[%s1 + $0x258] sm:$0xff]
  %v94 = vld [vmem:[%s1 + $0x260] sm:$0xff]
  %v95 = vld [vmem:[%s1 + $0x268] sm:$0xff]
  %v96 = vld [vmem:[%s1 + $0x270] sm:$0xff]
  %v97 = vld [vmem:[%s1 + $0x278] sm:$0xff]
  %v98 = vld [vmem:[%s1 + $0x280] sm:$0xff]
  %v99 = vld [vmem:[%s1 + $0x288] sm:$0xff]
  %v100 = vld [vmem:[%s1 + $0x290] sm:$0xff]
  %v101 = vld [vmem:[%s1 + $0x298] sm:$0xff]
  %v102 = vld [vmem:[%s1 + $0x2a0] sm:$0xff]
  %v103 = vld [vmem:[%s1 + $0x2a8] sm:$0xff]
  %v104 = vld [vmem:[%s1 + $0x2b0] sm:$0xff]
  %v105 = vld [vmem:[%s1 + $0x2b8] sm:$0xff]
  %v106 = vld [vmem:[%s1 + $0x2c0] sm:$0xff]
  %v107 = vld [vmem:[%s1 + $0x2c8] sm:$0xff]
  %v108 = vld [vmem:[%s1 + $0x2d0] sm:$0xff]
  %v109 = vld [vmem:[%s1 + $0x2d8] sm:$0xff]
  %v110 = vld [vmem:[%s1 + $0x2e0] sm:$0xff]
  %v111 = vld [vmem:[%s1 + $0x2e8] sm:$0xff]
  %v112 = vld [vmem:[%s1 + $0x2f0] sm:$0xff]
  %v113 = vld [vmem:[%s1 + $0x2f8] sm:$0xff]
  %v114 = vld [vmem:[%s1 + $0x300] sm:$0xff]
  %v115 = vld [vmem:[%s1 + $0x308] sm:$0xff]
  %v116 = vld [vmem:[%s1 + $0x310] sm:$0xff]
  %v117 = vld [vmem:[%s1 + $0x318] sm:$0xff]
  %v118 = vld [vmem:[%s1 + $0x320] sm:$0xff]
  %v119 = vld [vmem:[%s1 + $0x328] sm:$0xff]
  %v120 = vld [vmem:[%s1 + $0x330] sm:$0xff]
  %v121 = vld [vmem:[%s1 + $0x338] sm:$0xff]
  %v122 = vld [vmem:[%s1 + $0x340] sm:$0xff]
  %v123 = vld [vmem:[%s1 + $0x348] sm:$0xff]
  %v124 = vld [vmem:[%s1 + $0x350] sm:$0xff]
  %v125 = vld [vmem:[%s1 + $0x358] sm:$0xff]
  %v126 = vld [vmem:[%s1 + $0x360] sm:$0xff]
  %v127 = vld [vmem:[%s1 + $0x368] sm:$0xff]
  %v128 = vld [vmem:[%s1 + $0x370] sm:$0xff]
  %v129 = vld [vmem:[%s1 + $0x378] sm:$0xff]
  %v130 = vld [vmem:[%s1 + $0x380] sm:$0xff]
  %v131 = vld [vmem:[%s1 + $0x388] sm:$0xff]
  %v132 = vld [vmem:[%s1 + $0x390] sm:$0xff]
  %v133 = vld [vmem:[%s1 + $0x398] sm:$0xff]
  %v134 = vld [vmem:[%s1 + $0x3a0] sm:$0xff]
  %v135 = vld [vmem:[%s1 + $0x3a8] sm:$0xff]
  %v136 = vld [vmem:[%s1 + $0x3b0] sm:$0xff]
  %v137 = vld [vmem:[%s1 + $0x3b8] sm:$0xff]
  %v138 = vld [vmem:[%s1 + $0x3c0] sm:$0xff]
  %v139 = vld [vmem:[%s1 + $0x3c8] sm:$0xff]
  %v140 = vld [vmem:[%s1 + $0x3d0] sm:$0xff]
  %v141 = vld [vmem:[%s1 + $0x3d8] sm:$0xff]
  %v142 = vld [vmem:[%s1 + $0x3e0] sm:$0xff]
  %v143 = vld [vmem:[%s1 + $0x3e8] sm:$0xff]
  %v144 = vld [vmem:[%s1 + $0x3f0] sm:$0xff]
  %v145 = vld [vmem:[%s1 + $0x3f8] sm:$0xff]
  %v146 = vld [vmem:[%s1 + $0x400] sm:$0xff]
  %v147 = vld [vmem:[%s1 + $0x408] sm:$0xff]
  %v148 = vld [vmem:[%s1 + $0x410] sm:$0xff]
  %v149 = vld [vmem:[%s1 + $0x418] sm:$0xff]
  %v150 = vld [vmem:[%s1 + $0x420] sm:$0xff]
  %v151 = vld [vmem:[%s1 + $0x428] sm:$0xff]
  %v152 = vld [vmem:[%s1 + $0x430] sm:$0xff]
  %v153 = vld [vmem:[%s1 + $0x438] sm:$0xff]
  %v154 = vld [vmem:[%s1 + $0x440] sm:$0xff]
  %v155 = vld [vmem:[%s1 + $0x448] sm:$0xff]
  %v156 = vld [vmem:[%s1 + $0x450] sm:$0xff]
  %v157 = vld [vmem:[%s1 + $0x458] sm:$0xff]
  %v158 = vld [vmem:[%s1 + $0x460] sm:$0xff]
  %v159 = vld [vmem:[%s1 + $0x468] sm:$0xff]
  %v160 = vld [vmem:[%s1 + $0x470] sm:$0xff]
  %v161 = vld [vmem:[%s1 + $0x478] sm:$0xff]
  %v162 = vld [vmem:[%s1 + $0x480] sm:$0xff]
  %v163 = vld [vmem:[%s1 + $0x488] sm:$0xff]
  %v164 = vld [vmem:[%s1 + $0x490] sm:$0xff]
  %v165 = vld [vmem:[%s1 + $0x498] sm:$0xff]
  %v166 = vld [vmem:[%s1 + $0x4a0] sm:$0xff]
  %v167 = vld [vmem:[%s1 + $0x4a8] sm:$0xff]
  %v168 = vld [vmem:[%s1 + $0x4b0] sm:$0xff]
  %v169 = vld [vmem:[%s1 + $0x4b8] sm:$0xff]
  %v170 = vld [vmem:[%s1 + $0x4c0] sm:$0xff]
  %v171 = vld [vmem:[%s1 + $0x4c8] sm:$0xff]
  %v172 = vld [vmem:[%s1 + $0x4d0] sm:$0xff]
  %v173 = vld [vmem:[%s1 + $0x4d8] sm:$0xff]
  %v174 = vld [vmem:[%s1 + $0x4e0] sm:$0xff]
  %v175 = vld [vmem:[%s1 + $0x4e8] sm:$0xff]
  %v176 = vld [vmem:[%s1 + $0x4f0] sm:$0xff]
  %v177 = vld [vmem:[%s1 + $0x4f8] sm:$0xff]
  %v178 = vld [vmem:[%s1 + $0x500] sm:$0xff]
  %v179 = vld [vmem:[%s1 + $0x508] sm:$0xff]
  %v180 = vld [vmem:[%s1 + $0x510] sm:$0xff]
  %v181 = vld [vmem:[%s1 + $0x518] sm:$0xff]
  %v182 = vld [vmem:[%s1 + $0x520] sm:$0xff]
  %v183 = vld [vmem:[%s1 + $0x528] sm:$0xff]
  %v184 = vld [vmem:[%s1 + $0x530] sm:$0xff]
  %v185 = vld [vmem:[%s1 + $0x538] sm:$0xff]
  %v186 = vld [vmem:[%s1 + $0x540] sm:$0xff]
  %v187 = vld [vmem:[%s1 + $0x548] sm:$0xff]
  %v188 = vld [vmem:[%s1 + $0x550] sm:$0xff]
  %v189 = vld [vmem:[%s1 + $0x558] sm:$0xff]
  %v190 = vld [vmem:[%s1 + $0x560] sm:$0xff]
  %v191 = vld [vmem:[%s1 + $0x568] sm:$0xff]
  %v192 = vld [vmem:[%s1 + $0x570] sm:$0xff]
  %v193 = vld [vmem:[%s1 + $0x578] sm:$0xff]
  %v194 = vld [vmem:[%s1 + $0x580] sm:$0xff]
  %v195 = vld [vmem:[%s1 + $0x588] sm:$0xff]
  %v196 = vld [vmem:[%s1 + $0x590] sm:$0xff]
  %v197 = vld [vmem:[%s1 + $0x598] sm:$0xff]
  %v198 = vld [vmem:[%s1 + $0x5a0] sm:$0xff]
  %v199 = vld [vmem:[%s1 + $0x5a8] sm:$0xff]
  %v200 = vld [vmem:[%s1 + $0x5b0] sm:$0xff]
  %v201 = vld [vmem:[%s1 + $0x5b8] sm:$0xff]
  %v202 = vld [vmem:[%s1 + $0x5c0] sm:$0xff]
  %v203 = vld [vmem:[%s1 + $0x5c8] sm:$0xff]
  %v204 = vld [vmem:[%s1 + $0x5d0] sm:$0xff]
  %v205 = vld [vmem:[%s1 + $0x5d8] sm:$0xff]
  %v206 = vld [vmem:[%s1 + $0x5e0] sm:$0xff]
  %v207 = vld [vmem:[%s1 + $0x5e8] sm:$0xff]
  %v208 = vld [vmem:[%s1 + $0x5f0] sm:$0xff]
  %v209 = vld [vmem:[%s1 + $0x5f8] sm:$0xff]
  %v210 = vld [vmem:[%s1 + $0x600] sm:$0xff]
  %v211 = vld [vmem:[%s1 + $0x608] sm:$0xff]
  %v212 = vld [vmem:[%s1 + $0x610] sm:$0xff]
  %v213 = vld [vmem:[%s1 + $0x618] sm:$0xff]
  %v214 = vld [vmem:[%s1 + $0x620] sm:$0xff]
  %v215 = vld [vmem:[%s1 + $0x628] sm:$0xff]
  %v216 = vld [vmem:[%s1 + $0x630] sm:$0xff]
  %v217 = vld [vmem:[%s1 + $0x638] sm:$0xff]
  %v218 = vld [vmem:[%s1 + $0x640] sm:$0xff]
  %v219 = vld [vmem:[%s1 + $0x648] sm:$0xff]
  %v220 = vld [vmem:[%s1 + $0x650] sm:$0xff]
  %v221 = vld [vmem:[%s1 + $0x658] sm:$0xff]
  %v222 = vld [vmem:[%s1 + $0x660] sm:$0xff]
  %v223 = vld [vmem:[%s1 + $0x668] sm:$0xff]
  %v224 = vld [vmem:[%s1 + $0x670] sm:$0xff]
  %v225 = vld [vmem:[%s1 + $0x678] sm:$0xff]
  %v226 = vld [vmem:[%s1 + $0x680] sm:$0xff]
  %v227 = vld [vmem:[%s1 + $0x688] sm:$0xff]
  %v228 = vld [vmem:[%s1 + $0x690] sm:$0xff]
  %v229 = vld [vmem:[%s1 + $0x698] sm:$0xff]
  %v230 = vld [vmem:[%s1 + $0x6a0] sm:$0xff]
  %v231 = vld [vmem:[%s1 + $0x6a8] sm:$0xff]
  %v232 = vld [vmem:[%s1 + $0x6b0] sm:$0xff]
  %v233 = vld [vmem:[%s1 + $0x6b8] sm:$0xff]
  %v234 = vld [vmem:[%s1 + $0x6c0] sm:$0xff]
  %v235 = vld [vmem:[%s1 + $0x6c8] sm:$0xff]
  %v236 = vld [vmem:[%s1 + $0x6d0] sm:$0xff]
  %v237 = vld [vmem:[%s1 + $0x6d8] sm:$0xff]
  %v238 = vld [vmem:[%s1 + $0x6e0] sm:$0xff]
  %v239 = vld [vmem:[%s1 + $0x6e8] sm:$0xff]
  %v240 = vld [vmem:[%s1 + $0x6f0] sm:$0xff]
  %v241 = vld [vmem:[%s1 + $0x6f8] sm:$0xff]
  %v242 = vld [vmem:[%s1 + $0x700] sm:$0xff]
  %v243 = vld [vmem:[%s1 + $0x708] sm:$0xff]
  %v244 = vld [vmem:[%s1 + $0x710] sm:$0xff]
  %v245 = vld [vmem:[%s1 + $0x718] sm:$0xff]
  %v246 = vld [vmem:[%s1 + $0x720] sm:$0xff]
  %v247 = vld [vmem:[%s1 + $0x728] sm:$0xff]
  %v248 = vld [vmem:[%s1 + $0x730] sm:$0xff]
  %v249 = vld [vmem:[%s1 + $0x738] sm:$0xff]
  %v250 = vld [vmem:[%s1 + $0x740] sm:$0xff]
  %v251 = vld [vmem:[%s1 + $0x748] sm:$0xff]
  %v252 = vld [vmem:[%s1 + $0x750] sm:$0xff]
  %v253 = vld [vmem:[%s1 + $0x758] sm:$0xff]
  %v254 = vld [vmem:[%s1 + $0x760] sm:$0xff]
  %v255 = vld [vmem:[%s1 + $0x768] sm:$0xff]
  %v256 = vld [vmem:[%s1 + $0x770] sm:$0xff]
  %v257 = vld [vmem:[%s1 + $0x778] sm:$0xff]
  %v258 = vld [vmem:[%s1 + $0x780] sm:$0xff]
  %v259 = vld [vmem:[%s1 + $0x788] sm:$0xff]
  %v260 = vld [vmem:[%s1 + $0x790] sm:$0xff]
  %v261 = vld [vmem:[%s1 + $0x798] sm:$0xff]
  %v262 = vld [vmem:[%s1 + $0x7a0] sm:$0xff]
  %v263 = vld [vmem:[%s1 + $0x7a8] sm:$0xff]
  %v264 = vld [vmem:[%s1 + $0x7b0] sm:$0xff]
  %v265 = vld [vmem:[%s1 + $0x7b8] sm:$0xff]
  %v266 = vld [vmem:[%s1 + $0x7c0] sm:$0xff]
  %v267 = vld [vmem:[%s1 + $0x7c8] sm:$0xff]
  %v268 = vld [vmem:[%s1 + $0x7d0] sm:$0xff]
  %v269 = vld [vmem:[%s1 + $0x7d8] sm:$0xff]
  %v270 = vld [vmem:[%s1 + $0x7e0] sm:$0xff]
  %v271 = vld [vmem:[%s1 + $0x7e8] sm:$0xff]
  %v272 = vld [vmem:[%s1 + $0x7f0] sm:$0xff]
  %v273 = vld [vmem:[%s1 + $0x7f8] sm:$0xff]
  %v275 = vunpack.c.l.b16 %v17
  %v276 = vunpack.c.h.b16 %v17
  %v277 = vpack.c.b16 %v275, %v275
  %v278 = vpack.c.b16 %v276, %v276
  %v537 = vunpack.c.l.b16 %v18
  %v538 = vunpack.c.h.b16 %v18
  %v539 = vunpack.c.l.b16 %v19
  %v540 = vunpack.c.h.b16 %v19
  %v541 = vunpack.c.l.b16 %v20
  %v542 = vunpack.c.h.b16 %v20
  %v543 = vunpack.c.l.b16 %v21
  %v544 = vunpack.c.h.b16 %v21
  %v545 = vunpack.c.l.b16 %v22
  %v546 = vunpack.c.h.b16 %v22
  %v547 = vunpack.c.l.b16 %v23
  %v548 = vunpack.c.h.b16 %v23
  %v549 = vunpack.c.l.b16 %v24
  %v550 = vunpack.c.h.b16 %v24
  %v551 = vunpack.c.l.b16 %v25
  %v552 = vunpack.c.h.b16 %v25
  %v553 = vunpack.c.l.b16 %v26
  %v554 = vunpack.c.h.b16 %v26
  %v555 = vunpack.c.l.b16 %v27
  %v556 = vunpack.c.h.b16 %v27
  %v557 = vunpack.c.l.b16 %v28
  %v558 = vunpack.c.h.b16 %v28
  %v559 = vunpack.c.l.b16 %v29
  %v560 = vunpack.c.h.b16 %v29
  %v561 = vunpack.c.l.b16 %v30
  %v562 = vunpack.c.h.b16 %v30
  %v563 = vunpack.c.l.b16 %v31
  %v564 = vunpack.c.h.b16 %v31
  %v565 = vunpack.c.l.b16 %v32
  %v566 = vunpack.c.h.b16 %v32
  %v567 = vunpack.c.l.b16 %v33
  %v568 = vunpack.c.h.b16 %v33
  %v569 = vunpack.c.l.b16 %v34
  %v570 = vunpack.c.h.b16 %v34
  %v571 = vunpack.c.l.b16 %v35
  %v572 = vunpack.c.h.b16 %v35
  %v573 = vunpack.c.l.b16 %v36
  %v574 = vunpack.c.h.b16 %v36
  %v575 = vunpack.c.l.b16 %v37
  %v576 = vunpack.c.h.b16 %v37
  %v577 = vunpack.c.l.b16 %v38
  %v578 = vunpack.c.h.b16 %v38
  %v579 = vunpack.c.l.b16 %v39
  %v580 = vunpack.c.h.b16 %v39
  %v581 = vunpack.c.l.b16 %v40
  %v582 = vunpack.c.h.b16 %v40
  %v583 = vunpack.c.l.b16 %v41
  %v584 = vunpack.c.h.b16 %v41
  %v585 = vunpack.c.l.b16 %v42
  %v586 = vunpack.c.h.b16 %v42
  %v587 = vunpack.c.l.b16 %v43
  %v588 = vunpack.c.h.b16 %v43
  %v589 = vunpack.c.l.b16 %v44
  %v590 = vunpack.c.h.b16 %v44
  %v591 = vunpack.c.l.b16 %v45
  %v592 = vunpack.c.h.b16 %v45
  %v593 = vunpack.c.l.b16 %v46
  %v594 = vunpack.c.h.b16 %v46
  %v595 = vunpack.c.l.b16 %v47
  %v596 = vunpack.c.h.b16 %v47
  %v597 = vunpack.c.l.b16 %v48
  %v598 = vunpack.c.h.b16 %v48
  %v599 = vunpack.c.l.b16 %v49
  %v600 = vunpack.c.h.b16 %v49
  %v601 = vunpack.c.l.b16 %v50
  %v602 = vunpack.c.h.b16 %v50
  %v603 = vunpack.c.l.b16 %v51
  %v604 = vunpack.c.h.b16 %v51
  %v605 = vunpack.c.l.b16 %v52
  %v606 = vunpack.c.h.b16 %v52
  %v607 = vunpack.c.l.b16 %v53
  %v608 = vunpack.c.h.b16 %v53
  %v609 = vunpack.c.l.b16 %v54
  %v610 = vunpack.c.h.b16 %v54
  %v611 = vunpack.c.l.b16 %v55
  %v612 = vunpack.c.h.b16 %v55
  %v613 = vunpack.c.l.b16 %v56
  %v614 = vunpack.c.h.b16 %v56
  %v615 = vunpack.c.l.b16 %v57
  %v616 = vunpack.c.h.b16 %v57
  %v617 = vunpack.c.l.b16 %v58
  %v618 = vunpack.c.h.b16 %v58
  %v619 = vunpack.c.l.b16 %v59
  %v620 = vunpack.c.h.b16 %v59
  %v621 = vunpack.c.l.b16 %v60
  %v622 = vunpack.c.h.b16 %v60
  %v623 = vunpack.c.l.b16 %v61
  %v624 = vunpack.c.h.b16 %v61
  %v625 = vunpack.c.l.b16 %v62
  %v626 = vunpack.c.h.b16 %v62
  %v627 = vunpack.c.l.b16 %v63
  %v628 = vunpack.c.h.b16 %v63
  %v629 = vunpack.c.l.b16 %v64
  %v630 = vunpack.c.h.b16 %v64
  %v631 = vunpack.c.l.b16 %v65
  %v632 = vunpack.c.h.b16 %v65
  %v633 = vunpack.c.l.b16 %v66
  %v634 = vunpack.c.h.b16 %v66
  %v635 = vunpack.c.l.b16 %v67
  %v636 = vunpack.c.h.b16 %v67
  %v637 = vunpack.c.l.b16 %v68
  %v638 = vunpack.c.h.b16 %v68
  %v639 = vunpack.c.l.b16 %v69
  %v640 = vunpack.c.h.b16 %v69
  %v641 = vunpack.c.l.b16 %v70
  %v642 = vunpack.c.h.b16 %v70
  %v643 = vunpack.c.l.b16 %v71
  %v644 = vunpack.c.h.b16 %v71
  %v645 = vunpack.c.l.b16 %v72
  %v646 = vunpack.c.h.b16 %v72
  %v647 = vunpack.c.l.b16 %v73
  %v648 = vunpack.c.h.b16 %v73
  %v649 = vunpack.c.l.b16 %v74
  %v650 = vunpack.c.h.b16 %v74
  %v651 = vunpack.c.l.b16 %v75
  %v652 = vunpack.c.h.b16 %v75
  %v653 = vunpack.c.l.b16 %v76
  %v654 = vunpack.c.h.b16 %v76
  %v655 = vunpack.c.l.b16 %v77
  %v656 = vunpack.c.h.b16 %v77
  %v657 = vunpack.c.l.b16 %v78
  %v658 = vunpack.c.h.b16 %v78
  %v659 = vunpack.c.l.b16 %v79
  %v660 = vunpack.c.h.b16 %v79
  %v661 = vunpack.c.l.b16 %v80
  %v662 = vunpack.c.h.b16 %v80
  %v663 = vunpack.c.l.b16 %v81
  %v664 = vunpack.c.h.b16 %v81
  %v665 = vunpack.c.l.b16 %v82
  %v666 = vunpack.c.h.b16 %v82
  %v667 = vunpack.c.l.b16 %v83
  %v668 = vunpack.c.h.b16 %v83
  %v669 = vunpack.c.l.b16 %v84
  %v670 = vunpack.c.h.b16 %v84
  %v671 = vunpack.c.l.b16 %v85
  %v672 = vunpack.c.h.b16 %v85
  %v673 = vunpack.c.l.b16 %v86
  %v674 = vunpack.c.h.b16 %v86
  %v675 = vunpack.c.l.b16 %v87
  %v676 = vunpack.c.h.b16 %v87
  %v677 = vunpack.c.l.b16 %v88
  %v678 = vunpack.c.h.b16 %v88
  %v679 = vunpack.c.l.b16 %v89
  %v680 = vunpack.c.h.b16 %v89
  %v681 = vunpack.c.l.b16 %v90
  %v682 = vunpack.c.h.b16 %v90
  %v683 = vunpack.c.l.b16 %v91
  %v684 = vunpack.c.h.b16 %v91
  %v685 = vunpack.c.l.b16 %v92
  %v686 = vunpack.c.h.b16 %v92
  %v687 = vunpack.c.l.b16 %v93
  %v688 = vunpack.c.h.b16 %v93
  %v689 = vunpack.c.l.b16 %v94
  %v690 = vunpack.c.h.b16 %v94
  %v691 = vunpack.c.l.b16 %v95
  %v692 = vunpack.c.h.b16 %v95
  %v693 = vunpack.c.l.b16 %v96
  %v694 = vunpack.c.h.b16 %v96
  %v695 = vunpack.c.l.b16 %v97
  %v696 = vunpack.c.h.b16 %v97
  %v697 = vunpack.c.l.b16 %v98
  %v698 = vunpack.c.h.b16 %v98
  %v699 = vunpack.c.l.b16 %v99
  %v700 = vunpack.c.h.b16 %v99
  %v701 = vunpack.c.l.b16 %v100
  %v702 = vunpack.c.h.b16 %v100
  %v703 = vunpack.c.l.b16 %v101
  %v704 = vunpack.c.h.b16 %v101
  %v705 = vunpack.c.l.b16 %v102
  %v706 = vunpack.c.h.b16 %v102
  %v707 = vunpack.c.l.b16 %v103
  %v708 = vunpack.c.h.b16 %v103
  %v709 = vunpack.c.l.b16 %v104
  %v710 = vunpack.c.h.b16 %v104
  %v711 = vunpack.c.l.b16 %v105
  %v712 = vunpack.c.h.b16 %v105
  %v713 = vunpack.c.l.b16 %v106
  %v714 = vunpack.c.h.b16 %v106
  %v715 = vunpack.c.l.b16 %v107
  %v716 = vunpack.c.h.b16 %v107
  %v717 = vunpack.c.l.b16 %v108
  %v718 = vunpack.c.h.b16 %v108
  %v719 = vunpack.c.l.b16 %v109
  %v720 = vunpack.c.h.b16 %v109
  %v721 = vunpack.c.l.b16 %v110
  %v722 = vunpack.c.h.b16 %v110
  %v723 = vunpack.c.l.b16 %v111
  %v724 = vunpack.c.h.b16 %v111
  %v725 = vunpack.c.l.b16 %v112
  %v726 = vunpack.c.h.b16 %v112
  %v727 = vunpack.c.l.b16 %v113
  %v728 = vunpack.c.h.b16 %v113
  %v729 = vunpack.c.l.b16 %v114
  %v730 = vunpack.c.h.b16 %v114
  %v731 = vunpack.c.l.b16 %v115
  %v732 = vunpack.c.h.b16 %v115
  %v733 = vunpack.c.l.b16 %v116
  %v734 = vunpack.c.h.b16 %v116
  %v735 = vunpack.c.l.b16 %v117
  %v736 = vunpack.c.h.b16 %v117
  %v737 = vunpack.c.l.b16 %v118
  %v738 = vunpack.c.h.b16 %v118
  %v739 = vunpack.c.l.b16 %v119
  %v740 = vunpack.c.h.b16 %v119
  %v741 = vunpack.c.l.b16 %v120
  %v742 = vunpack.c.h.b16 %v120
  %v743 = vunpack.c.l.b16 %v121
  %v744 = vunpack.c.h.b16 %v121
  %v745 = vunpack.c.l.b16 %v122
  %v746 = vunpack.c.h.b16 %v122
  %v747 = vunpack.c.l.b16 %v123
  %v748 = vunpack.c.h.b16 %v123
  %v749 = vunpack.c.l.b16 %v124
  %v750 = vunpack.c.h.b16 %v124
  %v751 = vunpack.c.l.b16 %v125
  %v752 = vunpack.c.h.b16 %v125
  %v753 = vunpack.c.l.b16 %v126
  %v754 = vunpack.c.h.b16 %v126
  %v755 = vunpack.c.l.b16 %v127
  %v756 = vunpack.c.h.b16 %v127
  %v757 = vunpack.c.l.b16 %v128
  %v758 = vunpack.c.h.b16 %v128
  %v759 = vunpack.c.l.b16 %v129
  %v760 = vunpack.c.h.b16 %v129
  %v761 = vunpack.c.l.b16 %v130
  %v762 = vunpack.c.h.b16 %v130
  %v763 = vunpack.c.l.b16 %v131
  %v764 = vunpack.c.h.b16 %v131
  %v765 = vunpack.c.l.b16 %v132
  %v766 = vunpack.c.h.b16 %v132
  %v767 = vunpack.c.l.b16 %v133
  %v768 = vunpack.c.h.b16 %v133
  %v769 = vunpack.c.l.b16 %v134
  %v770 = vunpack.c.h.b16 %v134
  %v771 = vunpack.c.l.b16 %v135
  %v772 = vunpack.c.h.b16 %v135
  %v773 = vunpack.c.l.b16 %v136
  %v774 = vunpack.c.h.b16 %v136
  %v775 = vunpack.c.l.b16 %v137
  %v776 = vunpack.c.h.b16 %v137
  %v777 = vunpack.c.l.b16 %v138
  %v778 = vunpack.c.h.b16 %v138
  %v779 = vunpack.c.l.b16 %v139
  %v780 = vunpack.c.h.b16 %v139
  %v781 = vunpack.c.l.b16 %v140
  %v782 = vunpack.c.h.b16 %v140
  %v783 = vunpack.c.l.b16 %v141
  %v784 = vunpack.c.h.b16 %v141
  %v785 = vunpack.c.l.b16 %v142
  %v786 = vunpack.c.h.b16 %v142
  %v787 = vunpack.c.l.b16 %v143
  %v788 = vunpack.c.h.b16 %v143
  %v789 = vunpack.c.l.b16 %v144
  %v790 = vunpack.c.h.b16 %v144
  %v791 = vunpack.c.l.b16 %v145
  %v792 = vunpack.c.h.b16 %v145
  %v793 = vunpack.c.l.b16 %v146
  %v794 = vunpack.c.h.b16 %v146
  %v795 = vunpack.c.l.b16 %v147
  %v796 = vunpack.c.h.b16 %v147
  %v797 = vunpack.c.l.b16 %v148
  %v798 = vunpack.c.h.b16 %v148
  %v799 = vunpack.c.l.b16 %v149
  %v800 = vunpack.c.h.b16 %v149
  %v801 = vunpack.c.l.b16 %v150
  %v802 = vunpack.c.h.b16 %v150
  %v803 = vunpack.c.l.b16 %v151
  %v804 = vunpack.c.h.b16 %v151
  %v805 = vunpack.c.l.b16 %v152
  %v806 = vunpack.c.h.b16 %v152
  %v807 = vunpack.c.l.b16 %v153
  %v808 = vunpack.c.h.b16 %v153
  %v809 = vunpack.c.l.b16 %v154
  %v810 = vunpack.c.h.b16 %v154
  %v811 = vunpack.c.l.b16 %v155
  %v812 = vunpack.c.h.b16 %v155
  %v813 = vunpack.c.l.b16 %v156
  %v814 = vunpack.c.h.b16 %v156
  %v815 = vunpack.c.l.b16 %v157
  %v816 = vunpack.c.h.b16 %v157
  %v817 = vunpack.c.l.b16 %v158
  %v818 = vunpack.c.h.b16 %v158
  %v819 = vunpack.c.l.b16 %v159
  %v820 = vunpack.c.h.b16 %v159
  %v821 = vunpack.c.l.b16 %v160
  %v822 = vunpack.c.h.b16 %v160
  %v823 = vunpack.c.l.b16 %v161
  %v824 = vunpack.c.h.b16 %v161
  %v825 = vunpack.c.l.b16 %v162
  %v826 = vunpack.c.h.b16 %v162
  %v827 = vunpack.c.l.b16 %v163
  %v828 = vunpack.c.h.b16 %v163
  %v829 = vunpack.c.l.b16 %v164
  %v830 = vunpack.c.h.b16 %v164
  %v831 = vunpack.c.l.b16 %v165
  %v832 = vunpack.c.h.b16 %v165
  %v833 = vunpack.c.l.b16 %v166
  %v834 = vunpack.c.h.b16 %v166
  %v835 = vunpack.c.l.b16 %v167
  %v836 = vunpack.c.h.b16 %v167
  %v837 = vunpack.c.l.b16 %v168
  %v838 = vunpack.c.h.b16 %v168
  %v839 = vunpack.c.l.b16 %v169
  %v840 = vunpack.c.h.b16 %v169
  %v841 = vunpack.c.l.b16 %v170
  %v842 = vunpack.c.h.b16 %v170
  %v843 = vunpack.c.l.b16 %v171
  %v844 = vunpack.c.h.b16 %v171
  %v845 = vunpack.c.l.b16 %v172
  %v846 = vunpack.c.h.b16 %v172
  %v847 = vunpack.c.l.b16 %v173
  %v848 = vunpack.c.h.b16 %v173
  %v849 = vunpack.c.l.b16 %v174
  %v850 = vunpack.c.h.b16 %v174
  %v851 = vunpack.c.l.b16 %v175
  %v852 = vunpack.c.h.b16 %v175
  %v853 = vunpack.c.l.b16 %v176
  %v854 = vunpack.c.h.b16 %v176
  %v855 = vunpack.c.l.b16 %v177
  %v856 = vunpack.c.h.b16 %v177
  %v857 = vunpack.c.l.b16 %v178
  %v858 = vunpack.c.h.b16 %v178
  %v859 = vunpack.c.l.b16 %v179
  %v860 = vunpack.c.h.b16 %v179
  %v861 = vunpack.c.l.b16 %v180
  %v862 = vunpack.c.h.b16 %v180
  %v863 = vunpack.c.l.b16 %v181
  %v864 = vunpack.c.h.b16 %v181
  %v865 = vunpack.c.l.b16 %v182
  %v866 = vunpack.c.h.b16 %v182
  %v867 = vunpack.c.l.b16 %v183
  %v868 = vunpack.c.h.b16 %v183
  %v869 = vunpack.c.l.b16 %v184
  %v870 = vunpack.c.h.b16 %v184
  %v871 = vunpack.c.l.b16 %v185
  %v872 = vunpack.c.h.b16 %v185
  %v873 = vunpack.c.l.b16 %v186
  %v874 = vunpack.c.h.b16 %v186
  %v875 = vunpack.c.l.b16 %v187
  %v876 = vunpack.c.h.b16 %v187
  %v877 = vunpack.c.l.b16 %v188
  %v878 = vunpack.c.h.b16 %v188
  %v879 = vunpack.c.l.b16 %v189
  %v880 = vunpack.c.h.b16 %v189
  %v881 = vunpack.c.l.b16 %v190
  %v882 = vunpack.c.h.b16 %v190
  %v883 = vunpack.c.l.b16 %v191
  %v884 = vunpack.c.h.b16 %v191
  %v885 = vunpack.c.l.b16 %v192
  %v886 = vunpack.c.h.b16 %v192
  %v887 = vunpack.c.l.b16 %v193
  %v888 = vunpack.c.h.b16 %v193
  %v889 = vunpack.c.l.b16 %v194
  %v890 = vunpack.c.h.b16 %v194
  %v891 = vunpack.c.l.b16 %v195
  %v892 = vunpack.c.h.b16 %v195
  %v893 = vunpack.c.l.b16 %v196
  %v894 = vunpack.c.h.b16 %v196
  %v895 = vunpack.c.l.b16 %v197
  %v896 = vunpack.c.h.b16 %v197
  %v897 = vunpack.c.l.b16 %v198
  %v898 = vunpack.c.h.b16 %v198
  %v899 = vunpack.c.l.b16 %v199
  %v900 = vunpack.c.h.b16 %v199
  %v901 = vunpack.c.l.b16 %v200
  %v902 = vunpack.c.h.b16 %v200
  %v903 = vunpack.c.l.b16 %v201
  %v904 = vunpack.c.h.b16 %v201
  %v905 = vunpack.c.l.b16 %v202
  %v906 = vunpack.c.h.b16 %v202
  %v907 = vunpack.c.l.b16 %v203
  %v908 = vunpack.c.h.b16 %v203
  %v909 = vunpack.c.l.b16 %v204
  %v910 = vunpack.c.h.b16 %v204
  %v911 = vunpack.c.l.b16 %v205
  %v912 = vunpack.c.h.b16 %v205
  %v913 = vunpack.c.l.b16 %v206
  %v914 = vunpack.c.h.b16 %v206
  %v915 = vunpack.c.l.b16 %v207
  %v916 = vunpack.c.h.b16 %v207
  %v917 = vunpack.c.l.b16 %v208
  %v918 = vunpack.c.h.b16 %v208
  %v919 = vunpack.c.l.b16 %v209
  %v920 = vunpack.c.h.b16 %v209
  %v921 = vunpack.c.l.b16 %v210
  %v922 = vunpack.c.h.b16 %v210
  %v923 = vunpack.c.l.b16 %v211
  %v924 = vunpack.c.h.b16 %v211
  %v925 = vunpack.c.l.b16 %v212
  %v926 = vunpack.c.h.b16 %v212
  %v927 = vunpack.c.l.b16 %v213
  %v928 = vunpack.c.h.b16 %v213
  %v929 = vunpack.c.l.b16 %v214
  %v930 = vunpack.c.h.b16 %v214
  %v931 = vunpack.c.l.b16 %v215
  %v932 = vunpack.c.h.b16 %v215
  %v933 = vunpack.c.l.b16 %v216
  %v934 = vunpack.c.h.b16 %v216
  %v935 = vunpack.c.l.b16 %v217
  %v936 = vunpack.c.h.b16 %v217
  %v937 = vunpack.c.l.b16 %v218
  %v938 = vunpack.c.h.b16 %v218
  %v939 = vunpack.c.l.b16 %v219
  %v940 = vunpack.c.h.b16 %v219
  %v941 = vunpack.c.l.b16 %v220
  %v942 = vunpack.c.h.b16 %v220
  %v943 = vunpack.c.l.b16 %v221
  %v944 = vunpack.c.h.b16 %v221
  %v945 = vunpack.c.l.b16 %v222
  %v946 = vunpack.c.h.b16 %v222
  %v947 = vunpack.c.l.b16 %v223
  %v948 = vunpack.c.h.b16 %v223
  %v949 = vunpack.c.l.b16 %v224
  %v950 = vunpack.c.h.b16 %v224
  %v951 = vunpack.c.l.b16 %v225
  %v952 = vunpack.c.h.b16 %v225
  %v953 = vunpack.c.l.b16 %v226
  %v954 = vunpack.c.h.b16 %v226
  %v955 = vunpack.c.l.b16 %v227
  %v956 = vunpack.c.h.b16 %v227
  %v957 = vunpack.c.l.b16 %v228
  %v958 = vunpack.c.h.b16 %v228
  %v959 = vunpack.c.l.b16 %v229
  %v960 = vunpack.c.h.b16 %v229
  %v961 = vunpack.c.l.b16 %v230
  %v962 = vunpack.c.h.b16 %v230
  %v963 = vunpack.c.l.b16 %v231
  %v964 = vunpack.c.h.b16 %v231
  %v965 = vunpack.c.l.b16 %v232
  %v966 = vunpack.c.h.b16 %v232
  %v967 = vunpack.c.l.b16 %v233
  %v968 = vunpack.c.h.b16 %v233
  %v969 = vunpack.c.l.b16 %v234
  %v970 = vunpack.c.h.b16 %v234
  %v971 = vunpack.c.l.b16 %v235
  %v972 = vunpack.c.h.b16 %v235
  %v973 = vunpack.c.l.b16 %v236
  %v974 = vunpack.c.h.b16 %v236
  %v975 = vunpack.c.l.b16 %v237
  %v976 = vunpack.c.h.b16 %v237
  %v977 = vunpack.c.l.b16 %v238
  %v978 = vunpack.c.h.b16 %v238
  %v979 = vunpack.c.l.b16 %v239
  %v980 = vunpack.c.h.b16 %v239
  %v981 = vunpack.c.l.b16 %v240
  %v982 = vunpack.c.h.b16 %v240
  %v983 = vunpack.c.l.b16 %v241
  %v984 = vunpack.c.h.b16 %v241
  %v985 = vunpack.c.l.b16 %v242
  %v986 = vunpack.c.h.b16 %v242
  %v987 = vunpack.c.l.b16 %v243
  %v988 = vunpack.c.h.b16 %v243
  %v989 = vunpack.c.l.b16 %v244
  %v990 = vunpack.c.h.b16 %v244
  %v991 = vunpack.c.l.b16 %v245
  %v992 = vunpack.c.h.b16 %v245
  %v993 = vunpack.c.l.b16 %v246
  %v994 = vunpack.c.h.b16 %v246
  %v995 = vunpack.c.l.b16 %v247
  %v996 = vunpack.c.h.b16 %v247
  %v997 = vunpack.c.l.b16 %v248
  %v998 = vunpack.c.h.b16 %v248
  %v999 = vunpack.c.l.b16 %v249
  %v1000 = vunpack.c.h.b16 %v249
  %v1001 = vunpack.c.l.b16 %v250
  %v1002 = vunpack.c.h.b16 %v250
  %v1003 = vunpack.c.l.b16 %v251
  %v1004 = vunpack.c.h.b16 %v251
  %v1005 = vunpack.c.l.b16 %v252
  %v1006 = vunpack.c.h.b16 %v252
  %v1007 = vunpack.c.l.b16 %v253
  %v1008 = vunpack.c.h.b16 %v253
  %v1009 = vunpack.c.l.b16 %v254
  %v1010 = vunpack.c.h.b16 %v254
  %v1011 = vunpack.c.l.b16 %v255
  %v1012 = vunpack.c.h.b16 %v255
  %v1013 = vunpack.c.l.b16 %v256
  %v1014 = vunpack.c.h.b16 %v256
  %v1015 = vunpack.c.l.b16 %v257
  %v1016 = vunpack.c.h.b16 %v257
  %v1017 = vunpack.c.l.b16 %v258
  %v1018 = vunpack.c.h.b16 %v258
  %v1019 = vunpack.c.l.b16 %v259
  %v1020 = vunpack.c.h.b16 %v259
  %v1021 = vunpack.c.l.b16 %v260
  %v1022 = vunpack.c.h.b16 %v260
  %v1023 = vunpack.c.l.b16 %v261
  %v1024 = vunpack.c.h.b16 %v261
  %v1025 = vunpack.c.l.b16 %v262
  %v1026 = vunpack.c.h.b16 %v262
  %v1027 = vunpack.c.l.b16 %v263
  %v1028 = vunpack.c.h.b16 %v263
  %v1029 = vunpack.c.l.b16 %v264
  %v1030 = vunpack.c.h.b16 %v264
  %v1031 = vunpack.c.l.b16 %v265
  %v1032 = vunpack.c.h.b16 %v265
  %v1033 = vunpack.c.l.b16 %v266
  %v1034 = vunpack.c.h.b16 %v266
  %v1035 = vunpack.c.l.b16 %v267
  %v1036 = vunpack.c.h.b16 %v267
  %v1037 = vunpack.c.l.b16 %v268
  %v1038 = vunpack.c.h.b16 %v268
  %v1039 = vunpack.c.l.b16 %v269
  %v1040 = vunpack.c.h.b16 %v269
  %v1041 = vunpack.c.l.b16 %v270
  %v1042 = vunpack.c.h.b16 %v270
  %v1043 = vunpack.c.l.b16 %v271
  %v1044 = vunpack.c.h.b16 %v271
  %v1045 = vunpack.c.l.b16 %v272
  %v1046 = vunpack.c.h.b16 %v272
  %v1047 = vunpack.c.l.b16 %v273
  %v1048 = vunpack.c.h.b16 %v273
  %v1049 = vpack.c.b16 %v553, %v537
  %v1050 = vpack.c.b16 %v554, %v538
  %v1051 = vpack.c.b16 %v555, %v539
  %v1052 = vpack.c.b16 %v556, %v540
  %v1053 = vpack.c.b16 %v557, %v541
  %v1054 = vpack.c.b16 %v558, %v542
  %v1055 = vpack.c.b16 %v559, %v543
  %v1056 = vpack.c.b16 %v560, %v544
  %v1057 = vpack.c.b16 %v561, %v545
  %v1058 = vpack.c.b16 %v562, %v546
  %v1059 = vpack.c.b16 %v563, %v547
  %v1060 = vpack.c.b16 %v564, %v548
  %v1061 = vpack.c.b16 %v565, %v549
  %v1062 = vpack.c.b16 %v566, %v550
  %v1063 = vpack.c.b16 %v567, %v551
  %v1064 = vpack.c.b16 %v568, %v552
  %v1065 = vpack.c.b16 %v585, %v569
  %v1066 = vpack.c.b16 %v586, %v570
  %v1067 = vpack.c.b16 %v587, %v571
  %v1068 = vpack.c.b16 %v588, %v572
  %v1069 = vpack.c.b16 %v589, %v573
  %v1070 = vpack.c.b16 %v590, %v574
  %v1071 = vpack.c.b16 %v591, %v575
  %v1072 = vpack.c.b16 %v592, %v576
  %v1073 = vpack.c.b16 %v593, %v577
  %v1074 = vpack.c.b16 %v594, %v578
  %v1075 = vpack.c.b16 %v595, %v579
  %v1076 = vpack.c.b16 %v596, %v580
  %v1077 = vpack.c.b16 %v597, %v581
  %v1078 = vpack.c.b16 %v598, %v582
  %v1079 = vpack.c.b16 %v599, %v583
  %v1080 = vpack.c.b16 %v600, %v584
  %v1081 = vpack.c.b16 %v617, %v601
  %v1082 = vpack.c.b16 %v618, %v602
  %v1083 = vpack.c.b16 %v619, %v603
  %v1084 = vpack.c.b16 %v620, %v604
  %v1085 = vpack.c.b16 %v621, %v605
  %v1086 = vpack.c.b16 %v622, %v606
  %v1087 = vpack.c.b16 %v623, %v607
  %v1088 = vpack.c.b16 %v624, %v608
  %v1089 = vpack.c.b16 %v625, %v609
  %v1090 = vpack.c.b16 %v626, %v610
  %v1091 = vpack.c.b16 %v627, %v611
  %v1092 = vpack.c.b16 %v628, %v612
  %v1093 = vpack.c.b16 %v629, %v613
  %v1094 = vpack.c.b16 %v630, %v614
  %v1095 = vpack.c.b16 %v631, %v615
  %v1096 = vpack.c.b16 %v632, %v616
  %v1097 = vpack.c.b16 %v649, %v633
  %v1098 = vpack.c.b16 %v650, %v634
  %v1099 = vpack.c.b16 %v651, %v635
  %v1100 = vpack.c.b16 %v652, %v636
  %v1101 = vpack.c.b16 %v653, %v637
  %v1102 = vpack.c.b16 %v654, %v638
  %v1103 = vpack.c.b16 %v655, %v639
  %v1104 = vpack.c.b16 %v656, %v640
  %v1105 = vpack.c.b16 %v657, %v641
  %v1106 = vpack.c.b16 %v658, %v642
  %v1107 = vpack.c.b16 %v659, %v643
  %v1108 = vpack.c.b16 %v660, %v644
  %v1109 = vpack.c.b16 %v661, %v645
  %v1110 = vpack.c.b16 %v662, %v646
  %v1111 = vpack.c.b16 %v663, %v647
  %v1112 = vpack.c.b16 %v664, %v648
  %v1113 = vpack.c.b16 %v681, %v665
  %v1114 = vpack.c.b16 %v682, %v666
  %v1115 = vpack.c.b16 %v683, %v667
  %v1116 = vpack.c.b16 %v684, %v668
  %v1117 = vpack.c.b16 %v685, %v669
  %v1118 = vpack.c.b16 %v686, %v670
  %v1119 = vpack.c.b16 %v687, %v671
  %v1120 = vpack.c.b16 %v688, %v672
  %v1121 = vpack.c.b16 %v689, %v673
  %v1122 = vpack.c.b16 %v690, %v674
  %v1123 = vpack.c.b16 %v691, %v675
  %v1124 = vpack.c.b16 %v692, %v676
  %v1125 = vpack.c.b16 %v693, %v677
  %v1126 = vpack.c.b16 %v694, %v678
  %v1127 = vpack.c.b16 %v695, %v679
  %v1128 = vpack.c.b16 %v696, %v680
  %v1129 = vpack.c.b16 %v713, %v697
  %v1130 = vpack.c.b16 %v714, %v698
  %v1131 = vpack.c.b16 %v715, %v699
  %v1132 = vpack.c.b16 %v716, %v700
  %v1133 = vpack.c.b16 %v717, %v701
  %v1134 = vpack.c.b16 %v718, %v702
  %v1135 = vpack.c.b16 %v719, %v703
  %v1136 = vpack.c.b16 %v720, %v704
  %v1137 = vpack.c.b16 %v721, %v705
  %v1138 = vpack.c.b16 %v722, %v706
  %v1139 = vpack.c.b16 %v723, %v707
  %v1140 = vpack.c.b16 %v724, %v708
  %v1141 = vpack.c.b16 %v725, %v709
  %v1142 = vpack.c.b16 %v726, %v710
  %v1143 = vpack.c.b16 %v727, %v711
  %v1144 = vpack.c.b16 %v728, %v712
  %v1145 = vpack.c.b16 %v745, %v729
  %v1146 = vpack.c.b16 %v746, %v730
  %v1147 = vpack.c.b16 %v747, %v731
  %v1148 = vpack.c.b16 %v748, %v732
  %v1149 = vpack.c.b16 %v749, %v733
  %v1150 = vpack.c.b16 %v750, %v734
  %v1151 = vpack.c.b16 %v751, %v735
  %v1152 = vpack.c.b16 %v752, %v736
  %v1153 = vpack.c.b16 %v753, %v737
  %v1154 = vpack.c.b16 %v754, %v738
  %v1155 = vpack.c.b16 %v755, %v739
  %v1156 = vpack.c.b16 %v756, %v740
  %v1157 = vpack.c.b16 %v757, %v741
  %v1158 = vpack.c.b16 %v758, %v742
  %v1159 = vpack.c.b16 %v759, %v743
  %v1160 = vpack.c.b16 %v760, %v744
  %v1161 = vpack.c.b16 %v777, %v761
  %v1162 = vpack.c.b16 %v778, %v762
  %v1163 = vpack.c.b16 %v779, %v763
  %v1164 = vpack.c.b16 %v780, %v764
  %v1165 = vpack.c.b16 %v781, %v765
  %v1166 = vpack.c.b16 %v782, %v766
  %v1167 = vpack.c.b16 %v783, %v767
  %v1168 = vpack.c.b16 %v784, %v768
  %v1169 = vpack.c.b16 %v785, %v769
  %v1170 = vpack.c.b16 %v786, %v770
  %v1171 = vpack.c.b16 %v787, %v771
  %v1172 = vpack.c.b16 %v788, %v772
  %v1173 = vpack.c.b16 %v789, %v773
  %v1174 = vpack.c.b16 %v790, %v774
  %v1175 = vpack.c.b16 %v791, %v775
  %v1176 = vpack.c.b16 %v792, %v776
  %v1177 = vpack.c.b16 %v809, %v793
  %v1178 = vpack.c.b16 %v810, %v794
  %v1179 = vpack.c.b16 %v811, %v795
  %v1180 = vpack.c.b16 %v812, %v796
  %v1181 = vpack.c.b16 %v813, %v797
  %v1182 = vpack.c.b16 %v814, %v798
  %v1183 = vpack.c.b16 %v815, %v799
  %v1184 = vpack.c.b16 %v816, %v800
  %v1185 = vpack.c.b16 %v817, %v801
  %v1186 = vpack.c.b16 %v818, %v802
  %v1187 = vpack.c.b16 %v819, %v803
  %v1188 = vpack.c.b16 %v820, %v804
  %v1189 = vpack.c.b16 %v821, %v805
  %v1190 = vpack.c.b16 %v822, %v806
  %v1191 = vpack.c.b16 %v823, %v807
  %v1192 = vpack.c.b16 %v824, %v808
  %v1193 = vpack.c.b16 %v841, %v825
  %v1194 = vpack.c.b16 %v842, %v826
  %v1195 = vpack.c.b16 %v843, %v827
  %v1196 = vpack.c.b16 %v844, %v828
  %v1197 = vpack.c.b16 %v845, %v829
  %v1198 = vpack.c.b16 %v846, %v830
  %v1199 = vpack.c.b16 %v847, %v831
  %v1200 = vpack.c.b16 %v848, %v832
  %v1201 = vpack.c.b16 %v849, %v833
  %v1202 = vpack.c.b16 %v850, %v834
  %v1203 = vpack.c.b16 %v851, %v835
  %v1204 = vpack.c.b16 %v852, %v836
  %v1205 = vpack.c.b16 %v853, %v837
  %v1206 = vpack.c.b16 %v854, %v838
  %v1207 = vpack.c.b16 %v855, %v839
  %v1208 = vpack.c.b16 %v856, %v840
  %v1209 = vpack.c.b16 %v873, %v857
  %v1210 = vpack.c.b16 %v874, %v858
  %v1211 = vpack.c.b16 %v875, %v859
  %v1212 = vpack.c.b16 %v876, %v860
  %v1213 = vpack.c.b16 %v877, %v861
  %v1214 = vpack.c.b16 %v878, %v862
  %v1215 = vpack.c.b16 %v879, %v863
  %v1216 = vpack.c.b16 %v880, %v864
  %v1217 = vpack.c.b16 %v881, %v865
  %v1218 = vpack.c.b16 %v882, %v866
  %v1219 = vpack.c.b16 %v883, %v867
  %v1220 = vpack.c.b16 %v884, %v868
  %v1221 = vpack.c.b16 %v885, %v869
  %v1222 = vpack.c.b16 %v886, %v870
  %v1223 = vpack.c.b16 %v887, %v871
  %v1224 = vpack.c.b16 %v888, %v872
  %v1225 = vpack.c.b16 %v905, %v889
  %v1226 = vpack.c.b16 %v906, %v890
  %v1227 = vpack.c.b16 %v907, %v891
  %v1228 = vpack.c.b16 %v908, %v892
  %v1229 = vpack.c.b16 %v909, %v893
  %v1230 = vpack.c.b16 %v910, %v894
  %v1231 = vpack.c.b16 %v911, %v895
  %v1232 = vpack.c.b16 %v912, %v896
  %v1233 = vpack.c.b16 %v913, %v897
  %v1234 = vpack.c.b16 %v914, %v898
  %v1235 = vpack.c.b16 %v915, %v899
  %v1236 = vpack.c.b16 %v916, %v900
  %v1237 = vpack.c.b16 %v917, %v901
  %v1238 = vpack.c.b16 %v918, %v902
  %v1239 = vpack.c.b16 %v919, %v903
  %v1240 = vpack.c.b16 %v920, %v904
  %v1241 = vpack.c.b16 %v937, %v921
  %v1242 = vpack.c.b16 %v938, %v922
  %v1243 = vpack.c.b16 %v939, %v923
  %v1244 = vpack.c.b16 %v940, %v924
  %v1245 = vpack.c.b16 %v941, %v925
  %v1246 = vpack.c.b16 %v942, %v926
  %v1247 = vpack.c.b16 %v943, %v927
  %v1248 = vpack.c.b16 %v944, %v928
  %v1249 = vpack.c.b16 %v945, %v929
  %v1250 = vpack.c.b16 %v946, %v930
  %v1251 = vpack.c.b16 %v947, %v931
  %v1252 = vpack.c.b16 %v948, %v932
  %v1253 = vpack.c.b16 %v949, %v933
  %v1254 = vpack.c.b16 %v950, %v934
  %v1255 = vpack.c.b16 %v951, %v935
  %v1256 = vpack.c.b16 %v952, %v936
  %v1257 = vpack.c.b16 %v969, %v953
  %v1258 = vpack.c.b16 %v970, %v954
  %v1259 = vpack.c.b16 %v971, %v955
  %v1260 = vpack.c.b16 %v972, %v956
  %v1261 = vpack.c.b16 %v973, %v957
  %v1262 = vpack.c.b16 %v974, %v958
  %v1263 = vpack.c.b16 %v975, %v959
  %v1264 = vpack.c.b16 %v976, %v960
  %v1265 = vpack.c.b16 %v977, %v961
  %v1266 = vpack.c.b16 %v978, %v962
  %v1267 = vpack.c.b16 %v979, %v963
  %v1268 = vpack.c.b16 %v980, %v964
  %v1269 = vpack.c.b16 %v981, %v965
  %v1270 = vpack.c.b16 %v982, %v966
  %v1271 = vpack.c.b16 %v983, %v967
  %v1272 = vpack.c.b16 %v984, %v968
  %v1273 = vpack.c.b16 %v1001, %v985
  %v1274 = vpack.c.b16 %v1002, %v986
  %v1275 = vpack.c.b16 %v1003, %v987
  %v1276 = vpack.c.b16 %v1004, %v988
  %v1277 = vpack.c.b16 %v1005, %v989
  %v1278 = vpack.c.b16 %v1006, %v990
  %v1279 = vpack.c.b16 %v1007, %v991
  %v1280 = vpack.c.b16 %v1008, %v992
  %v1281 = vpack.c.b16 %v1009, %v993
  %v1282 = vpack.c.b16 %v1010, %v994
  %v1283 = vpack.c.b16 %v1011, %v995
  %v1284 = vpack.c.b16 %v1012, %v996
  %v1285 = vpack.c.b16 %v1013, %v997
  %v1286 = vpack.c.b16 %v1014, %v998
  %v1287 = vpack.c.b16 %v1015, %v999
  %v1288 = vpack.c.b16 %v1016, %v1000
  %v1289 = vpack.c.b16 %v1033, %v1017
  %v1290 = vpack.c.b16 %v1034, %v1018
  %v1291 = vpack.c.b16 %v1035, %v1019
  %v1292 = vpack.c.b16 %v1036, %v1020
  %v1293 = vpack.c.b16 %v1037, %v1021
  %v1294 = vpack.c.b16 %v1038, %v1022
  %v1295 = vpack.c.b16 %v1039, %v1023
  %v1296 = vpack.c.b16 %v1040, %v1024
  %v1297 = vpack.c.b16 %v1041, %v1025
  %v1298 = vpack.c.b16 %v1042, %v1026
  %v1299 = vpack.c.b16 %v1043, %v1027
  %v1300 = vpack.c.b16 %v1044, %v1028
  %v1301 = vpack.c.b16 %v1045, %v1029
  %v1302 = vpack.c.b16 %v1046, %v1030
  %v1303 = vpack.c.b16 %v1047, %v1031
  %v1304 = vpack.c.b16 %v1048, %v1032
  %1561 = vmatprep.subr.bf16.mxu0 %v1162
  %1562 = vmatpush1.bf16.msra.mxu0 %v1161
  %1563 = vmatprep.subr.bf16.mxu0 %v1146
  %1564 = vmatpush1.bf16.msra.mxu0 %v1145
  %1565 = vmatprep.subr.bf16.mxu0 %v1130
  %1566 = vmatpush1.bf16.msra.mxu0 %v1129
  %1567 = vmatprep.subr.bf16.mxu0 %v1114
  %1568 = vmatpush1.bf16.msra.mxu0 %v1113
  %1569 = vmatprep.subr.bf16.mxu0 %v1098
  %1570 = vmatpush1.bf16.msra.mxu0 %v1097
  %1571 = vmatprep.subr.bf16.mxu0 %v1082
  %1572 = vmatpush1.bf16.msra.mxu0 %v1081
  %1573 = vmatprep.subr.bf16.mxu0 %v1066
  %1574 = vmatpush1.bf16.msra.mxu0 %v1065
  %1575 = vmatprep.subr.bf16.mxu0 %v1050
  %1576 = vmatpush1.bf16.msra.mxu0 %v1049
  %1577 = vmatprep.subr.bf16.mxu0 %v1290
  %1578 = vmatpush2.bf16.msra.mxu0 %v1289
  %1579 = vmatprep.subr.bf16.mxu0 %v1274
  %1580 = vmatpush2.bf16.msra.mxu0 %v1273
  %1581 = vmatprep.subr.bf16.mxu0 %v1258
  %1582 = vmatpush2.bf16.msra.mxu0 %v1257
  %1583 = vmatprep.subr.bf16.mxu0 %v1242
  %1584 = vmatpush2.bf16.msra.mxu0 %v1241
  %1585 = vmatprep.subr.bf16.mxu0 %v1226
  %1586 = vmatpush2.bf16.msra.mxu0 %v1225
  %1587 = vmatprep.subr.bf16.mxu0 %v1210
  %1588 = vmatpush2.bf16.msra.mxu0 %v1209
  %1589 = vmatprep.subr.bf16.mxu0 %v1194
  %1590 = vmatpush2.bf16.msra.mxu0 %v1193
  %1591 = vmatprep.subr.bf16.mxu0 %v1178
  %1592 = vmatpush2.bf16.msra.mxu0 %v1177
  %1593 = vmatprep.mubr.bf16.mxu0 %v278
  %1594 = vmatmul.mubr.bf16.gmra.mxu0 %v277
  %v1595 = vpop.f32.mrf.mxu0
  %v1596 = vadd.f32 0.0, %v1595
  %v1597 = vpop.f32.mrf.mxu0
  %v1598 = vadd.f32 0.0, %v1597
  %v1599 = vpop.f32.mrf.mxu0
  %v1600 = vpop.f32.mrf.mxu0
  %1601 = vdwg.mxu0
  %1602 = vmatprep.subr.bf16.mxu0 %v1164
  %1603 = vmatpush1.bf16.msra.mxu0 %v1163
  %1604 = vmatprep.subr.bf16.mxu0 %v1148
  %1605 = vmatpush1.bf16.msra.mxu0 %v1147
  %1606 = vmatprep.subr.bf16.mxu0 %v1132
  %1607 = vmatpush1.bf16.msra.mxu0 %v1131
  %1608 = vmatprep.subr.bf16.mxu0 %v1116
  %1609 = vmatpush1.bf16.msra.mxu0 %v1115
  %1610 = vmatprep.subr.bf16.mxu0 %v1100
  %1611 = vmatpush1.bf16.msra.mxu0 %v1099
  %1612 = vmatprep.subr.bf16.mxu0 %v1084
  %1613 = vmatpush1.bf16.msra.mxu0 %v1083
  %1614 = vmatprep.subr.bf16.mxu0 %v1068
  %1615 = vmatpush1.bf16.msra.mxu0 %v1067
  %1616 = vmatprep.subr.bf16.mxu0 %v1052
  %1617 = vmatpush1.bf16.msra.mxu0 %v1051
  %1618 = vmatprep.subr.bf16.mxu0 %v1292
  %1619 = vmatpush2.bf16.msra.mxu0 %v1291
  %1620 = vmatprep.subr.bf16.mxu0 %v1276
  %1621 = vmatpush2.bf16.msra.mxu0 %v1275
  %1622 = vmatprep.subr.bf16.mxu0 %v1260
  %1623 = vmatpush2.bf16.msra.mxu0 %v1259
  %1624 = vmatprep.subr.bf16.mxu0 %v1244
  %1625 = vmatpush2.bf16.msra.mxu0 %v1243
  %1626 = vmatprep.subr.bf16.mxu0 %v1228
  %1627 = vmatpush2.bf16.msra.mxu0 %v1227
  %1628 = vmatprep.subr.bf16.mxu0 %v1212
  %1629 = vmatpush2.bf16.msra.mxu0 %v1211
  %1630 = vmatprep.subr.bf16.mxu0 %v1196
  %1631 = vmatpush2.bf16.msra.mxu0 %v1195
  %1632 = vmatprep.subr.bf16.mxu0 %v1180
  %1633 = vmatpush2.bf16.msra.mxu0 %v1179
  %1634 = vmatprep.mubr.bf16.mxu0 %v278
  %1635 = vmatmul.mubr.bf16.gmra.mxu0 %v277
  %v1636 = vpop.f32.mrf.mxu0
  %v1637 = vadd.f32 0.0, %v1636
  %v1638 = vpop.f32.mrf.mxu0
  %v1639 = vadd.f32 0.0, %v1638
  %v1640 = vpop.f32.mrf.mxu0
  %v1641 = vpop.f32.mrf.mxu0
  %1642 = vdwg.mxu0
  %1643 = vmatprep.subr.bf16.mxu0 %v1166
  %1644 = vmatpush1.bf16.msra.mxu0 %v1165
  %1645 = vmatprep.subr.bf16.mxu0 %v1150
  %1646 = vmatpush1.bf16.msra.mxu0 %v1149
  %1647 = vmatprep.subr.bf16.mxu0 %v1134
  %1648 = vmatpush1.bf16.msra.mxu0 %v1133
  %1649 = vmatprep.subr.bf16.mxu0 %v1118
  %1650 = vmatpush1.bf16.msra.mxu0 %v1117
  %1651 = vmatprep.subr.bf16.mxu0 %v1102
  %1652 = vmatpush1.bf16.msra.mxu0 %v1101
  %1653 = vmatprep.subr.bf16.mxu0 %v1086
  %1654 = vmatpush1.bf16.msra.mxu0 %v1085
  %1655 = vmatprep.subr.bf16.mxu0 %v1070
  %1656 = vmatpush1.bf16.msra.mxu0 %v1069
  %1657 = vmatprep.subr.bf16.mxu0 %v1054
  %1658 = vmatpush1.bf16.msra.mxu0 %v1053
  %1659 = vmatprep.subr.bf16.mxu0 %v1294
  %1660 = vmatpush2.bf16.msra.mxu0 %v1293
  %1661 = vmatprep.subr.bf16.mxu0 %v1278
  %1662 = vmatpush2.bf16.msra.mxu0 %v1277
  %1663 = vmatprep.subr.bf16.mxu0 %v1262
  %1664 = vmatpush2.bf16.msra.mxu0 %v1261
  %1665 = vmatprep.subr.bf16.mxu0 %v1246
  %1666 = vmatpush2.bf16.msra.mxu0 %v1245
  %1667 = vmatprep.subr.bf16.mxu0 %v1230
  %1668 = vmatpush2.bf16.msra.mxu0 %v1229
  %1669 = vmatprep.subr.bf16.mxu0 %v1214
  %1670 = vmatpush2.bf16.msra.mxu0 %v1213
  %1671 = vmatprep.subr.bf16.mxu0 %v1198
  %1672 = vmatpush2.bf16.msra.mxu0 %v1197
  %1673 = vmatprep.subr.bf16.mxu0 %v1182
  %1674 = vmatpush2.bf16.msra.mxu0 %v1181
  %1675 = vmatprep.mubr.bf16.mxu0 %v278
  %1676 = vmatmul.mubr.bf16.gmra.mxu0 %v277
  %v1677 = vpop.f32.mrf.mxu0
  %v1678 = vadd.f32 0.0, %v1677
  %v1679 = vpop.f32.mrf.mxu0
  %v1680 = vadd.f32 0.0, %v1679
  %v1681 = vpop.f32.mrf.mxu0
  %v1682 = vpop.f32.mrf.mxu0
  %1683 = vdwg.mxu0
  %1684 = vmatprep.subr.bf16.mxu0 %v1168
  %1685 = vmatpush1.bf16.msra.mxu0 %v1167
  %1686 = vmatprep.subr.bf16.mxu0 %v1152
  %1687 = vmatpush1.bf16.msra.mxu0 %v1151
  %1688 = vmatprep.subr.bf16.mxu0 %v1136
  %1689 = vmatpush1.bf16.msra.mxu0 %v1135
  %1690 = vmatprep.subr.bf16.mxu0 %v1120
  %1691 = vmatpush1.bf16.msra.mxu0 %v1119
  %1692 = vmatprep.subr.bf16.mxu0 %v1104
  %1693 = vmatpush1.bf16.msra.mxu0 %v1103
  %1694 = vmatprep.subr.bf16.mxu0 %v1088
  %1695 = vmatpush1.bf16.msra.mxu0 %v1087
  %1696 = vmatprep.subr.bf16.mxu0 %v1072
  %1697 = vmatpush1.bf16.msra.mxu0 %v1071
  %1698 = vmatprep.subr.bf16.mxu0 %v1056
  %1699 = vmatpush1.bf16.msra.mxu0 %v1055
  %1700 = vmatprep.subr.bf16.mxu0 %v1296
  %1701 = vmatpush2.bf16.msra.mxu0 %v1295
  %1702 = vmatprep.subr.bf16.mxu0 %v1280
  %1703 = vmatpush2.bf16.msra.mxu0 %v1279
  %1704 = vmatprep.subr.bf16.mxu0 %v1264
  %1705 = vmatpush2.bf16.msra.mxu0 %v1263
  %1706 = vmatprep.subr.bf16.mxu0 %v1248
  %1707 = vmatpush2.bf16.msra.mxu0 %v1247
  %1708 = vmatprep.subr.bf16.mxu0 %v1232
  %1709 = vmatpush2.bf16.msra.mxu0 %v1231
  %1710 = vmatprep.subr.bf16.mxu0 %v1216
  %1711 = vmatpush2.bf16.msra.mxu0 %v1215
  %1712 = vmatprep.subr.bf16.mxu0 %v1200
  %1713 = vmatpush2.bf16.msra.mxu0 %v1199
  %1714 = vmatprep.subr.bf16.mxu0 %v1184
  %1715 = vmatpush2.bf16.msra.mxu0 %v1183
  %1716 = vmatprep.mubr.bf16.mxu0 %v278
  %1717 = vmatmul.mubr.bf16.gmra.mxu0 %v277
  %v1718 = vpop.f32.mrf.mxu0
  %v1719 = vadd.f32 0.0, %v1718
  %v1720 = vpop.f32.mrf.mxu0
  %v1721 = vadd.f32 0.0, %v1720
  %v1722 = vpop.f32.mrf.mxu0
  %v1723 = vpop.f32.mrf.mxu0
  %1724 = vdwg.mxu0
  %1725 = vmatprep.subr.bf16.mxu0 %v1170
  %1726 = vmatpush1.bf16.msra.mxu0 %v1169
  %1727 = vmatprep.subr.bf16.mxu0 %v1154
  %1728 = vmatpush1.bf16.msra.mxu0 %v1153
  %1729 = vmatprep.subr.bf16.mxu0 %v1138
  %1730 = vmatpush1.bf16.msra.mxu0 %v1137
  %1731 = vmatprep.subr.bf16.mxu0 %v1122
  %1732 = vmatpush1.bf16.msra.mxu0 %v1121
  %1733 = vmatprep.subr.bf16.mxu0 %v1106
  %1734 = vmatpush1.bf16.msra.mxu0 %v1105
  %1735 = vmatprep.subr.bf16.mxu0 %v1090
  %1736 = vmatpush1.bf16.msra.mxu0 %v1089
  %1737 = vmatprep.subr.bf16.mxu0 %v1074
  %1738 = vmatpush1.bf16.msra.mxu0 %v1073
  %1739 = vmatprep.subr.bf16.mxu0 %v1058
  %1740 = vmatpush1.bf16.msra.mxu0 %v1057
  %1741 = vmatprep.subr.bf16.mxu0 %v1298
  %1742 = vmatpush2.bf16.msra.mxu0 %v1297
  %1743 = vmatprep.subr.bf16.mxu0 %v1282
  %1744 = vmatpush2.bf16.msra.mxu0 %v1281
  %1745 = vmatprep.subr.bf16.mxu0 %v1266
  %1746 = vmatpush2.bf16.msra.mxu0 %v1265
  %1747 = vmatprep.subr.bf16.mxu0 %v1250
  %1748 = vmatpush2.bf16.msra.mxu0 %v1249
  %1749 = vmatprep.subr.bf16.mxu0 %v1234
  %1750 = vmatpush2.bf16.msra.mxu0 %v1233
  %1751 = vmatprep.subr.bf16.mxu0 %v1218
  %1752 = vmatpush2.bf16.msra.mxu0 %v1217
  %1753 = vmatprep.subr.bf16.mxu0 %v1202
  %1754 = vmatpush2.bf16.msra.mxu0 %v1201
  %1755 = vmatprep.subr.bf16.mxu0 %v1186
  %1756 = vmatpush2.bf16.msra.mxu0 %v1185
  %1757 = vmatprep.mubr.bf16.mxu0 %v278
  %1758 = vmatmul.mubr.bf16.gmra.mxu0 %v277
  %v1759 = vpop.f32.mrf.mxu0
  %v1760 = vadd.f32 0.0, %v1759
  %v1761 = vpop.f32.mrf.mxu0
  %v1762 = vadd.f32 0.0, %v1761
  %v1763 = vpop.f32.mrf.mxu0
  %v1764 = vpop.f32.mrf.mxu0
  %1765 = vdwg.mxu0
  %1766 = vmatprep.subr.bf16.mxu0 %v1172
  %1767 = vmatpush1.bf16.msra.mxu0 %v1171
  %1768 = vmatprep.subr.bf16.mxu0 %v1156
  %1769 = vmatpush1.bf16.msra.mxu0 %v1155
  %1770 = vmatprep.subr.bf16.mxu0 %v1140
  %1771 = vmatpush1.bf16.msra.mxu0 %v1139
  %1772 = vmatprep.subr.bf16.mxu0 %v1124
  %1773 = vmatpush1.bf16.msra.mxu0 %v1123
  %1774 = vmatprep.subr.bf16.mxu0 %v1108
  %1775 = vmatpush1.bf16.msra.mxu0 %v1107
  %1776 = vmatprep.subr.bf16.mxu0 %v1092
  %1777 = vmatpush1.bf16.msra.mxu0 %v1091
  %1778 = vmatprep.subr.bf16.mxu0 %v1076
  %1779 = vmatpush1.bf16.msra.mxu0 %v1075
  %1780 = vmatprep.subr.bf16.mxu0 %v1060
  %1781 = vmatpush1.bf16.msra.mxu0 %v1059
  %1782 = vmatprep.subr.bf16.mxu0 %v1300
  %1783 = vmatpush2.bf16.msra.mxu0 %v1299
  %1784 = vmatprep.subr.bf16.mxu0 %v1284
  %1785 = vmatpush2.bf16.msra.mxu0 %v1283
  %1786 = vmatprep.subr.bf16.mxu0 %v1268
  %1787 = vmatpush2.bf16.msra.mxu0 %v1267
  %1788 = vmatprep.subr.bf16.mxu0 %v1252
  %1789 = vmatpush2.bf16.msra.mxu0 %v1251
  %1790 = vmatprep.subr.bf16.mxu0 %v1236
  %1791 = vmatpush2.bf16.msra.mxu0 %v1235
  %1792 = vmatprep.subr.bf16.mxu0 %v1220
  %1793 = vmatpush2.bf16.msra.mxu0 %v1219
  %1794 = vmatprep.subr.bf16.mxu0 %v1204
  %1795 = vmatpush2.bf16.msra.mxu0 %v1203
  %1796 = vmatprep.subr.bf16.mxu0 %v1188
  %1797 = vmatpush2.bf16.msra.mxu0 %v1187
  %1798 = vmatprep.mubr.bf16.mxu0 %v278
  %1799 = vmatmul.mubr.bf16.gmra.mxu0 %v277
  %v1800 = vpop.f32.mrf.mxu0
  %v1801 = vadd.f32 0.0, %v1800
  %v1802 = vpop.f32.mrf.mxu0
  %v1803 = vadd.f32 0.0, %v1802
  %v1804 = vpop.f32.mrf.mxu0
  %v1805 = vpop.f32.mrf.mxu0
  %1806 = vdwg.mxu0
  %1807 = vmatprep.subr.bf16.mxu0 %v1174
  %1808 = vmatpush1.bf16.msra.mxu0 %v1173
  %1809 = vmatprep.subr.bf16.mxu0 %v1158
  %1810 = vmatpush1.bf16.msra.mxu0 %v1157
  %1811 = vmatprep.subr.bf16.mxu0 %v1142
  %1812 = vmatpush1.bf16.msra.mxu0 %v1141
  %1813 = vmatprep.subr.bf16.mxu0 %v1126
  %1814 = vmatpush1.bf16.msra.mxu0 %v1125
  %1815 = vmatprep.subr.bf16.mxu0 %v1110
  %1816 = vmatpush1.bf16.msra.mxu0 %v1109
  %1817 = vmatprep.subr.bf16.mxu0 %v1094
  %1818 = vmatpush1.bf16.msra.mxu0 %v1093
  %1819 = vmatprep.subr.bf16.mxu0 %v1078
  %1820 = vmatpush1.bf16.msra.mxu0 %v1077
  %1821 = vmatprep.subr.bf16.mxu0 %v1062
  %1822 = vmatpush1.bf16.msra.mxu0 %v1061
  %1823 = vmatprep.subr.bf16.mxu0 %v1302
  %1824 = vmatpush2.bf16.msra.mxu0 %v1301
  %1825 = vmatprep.subr.bf16.mxu0 %v1286
  %1826 = vmatpush2.bf16.msra.mxu0 %v1285
  %1827 = vmatprep.subr.bf16.mxu0 %v1270
  %1828 = vmatpush2.bf16.msra.mxu0 %v1269
  %1829 = vmatprep.subr.bf16.mxu0 %v1254
  %1830 = vmatpush2.bf16.msra.mxu0 %v1253
  %1831 = vmatprep.subr.bf16.mxu0 %v1238
  %1832 = vmatpush2.bf16.msra.mxu0 %v1237
  %1833 = vmatprep.subr.bf16.mxu0 %v1222
  %1834 = vmatpush2.bf16.msra.mxu0 %v1221
  %1835 = vmatprep.subr.bf16.mxu0 %v1206
  %1836 = vmatpush2.bf16.msra.mxu0 %v1205
  %1837 = vmatprep.subr.bf16.mxu0 %v1190
  %1838 = vmatpush2.bf16.msra.mxu0 %v1189
  %1839 = vmatprep.mubr.bf16.mxu0 %v278
  %1840 = vmatmul.mubr.bf16.gmra.mxu0 %v277
  %v1841 = vpop.f32.mrf.mxu0
  %v1842 = vadd.f32 0.0, %v1841
  %v1843 = vpop.f32.mrf.mxu0
  %v1844 = vadd.f32 0.0, %v1843
  %v1845 = vpop.f32.mrf.mxu0
  %v1846 = vpop.f32.mrf.mxu0
  %1847 = vdwg.mxu0
  %1848 = vmatprep.subr.bf16.mxu0 %v1176
  %1849 = vmatpush1.bf16.msra.mxu0 %v1175
  %1850 = vmatprep.subr.bf16.mxu0 %v1160
  %1851 = vmatpush1.bf16.msra.mxu0 %v1159
  %1852 = vmatprep.subr.bf16.mxu0 %v1144
  %1853 = vmatpush1.bf16.msra.mxu0 %v1143
  %1854 = vmatprep.subr.bf16.mxu0 %v1128
  %1855 = vmatpush1.bf16.msra.mxu0 %v1127
  %1856 = vmatprep.subr.bf16.mxu0 %v1112
  %1857 = vmatpush1.bf16.msra.mxu0 %v1111
  %1858 = vmatprep.subr.bf16.mxu0 %v1096
  %1859 = vmatpush1.bf16.msra.mxu0 %v1095
  %1860 = vmatprep.subr.bf16.mxu0 %v1080
  %1861 = vmatpush1.bf16.msra.mxu0 %v1079
  %1862 = vmatprep.subr.bf16.mxu0 %v1064
  %1863 = vmatpush1.bf16.msra.mxu0 %v1063
  %1864 = vmatprep.subr.bf16.mxu0 %v1304
  %1865 = vmatpush2.bf16.msra.mxu0 %v1303
  %1866 = vmatprep.subr.bf16.mxu0 %v1288
  %1867 = vmatpush2.bf16.msra.mxu0 %v1287
  %1868 = vmatprep.subr.bf16.mxu0 %v1272
  %1869 = vmatpush2.bf16.msra.mxu0 %v1271
  %1870 = vmatprep.subr.bf16.mxu0 %v1256
  %1871 = vmatpush2.bf16.msra.mxu0 %v1255
  %1872 = vmatprep.subr.bf16.mxu0 %v1240
  %1873 = vmatpush2.bf16.msra.mxu0 %v1239
  %1874 = vmatprep.subr.bf16.mxu0 %v1224
  %1875 = vmatpush2.bf16.msra.mxu0 %v1223
  %1876 = vmatprep.subr.bf16.mxu0 %v1208
  %1877 = vmatpush2.bf16.msra.mxu0 %v1207
  %1878 = vmatprep.subr.bf16.mxu0 %v1192
  %1879 = vmatpush2.bf16.msra.mxu0 %v1191
  %1880 = vmatprep.mubr.bf16.mxu0 %v278
  %1881 = vmatmul.mubr.bf16.gmra.mxu0 %v277
  %v1882 = vpop.f32.mrf.mxu0
  %v1883 = vadd.f32 0.0, %v1882
  %v1884 = vpop.f32.mrf.mxu0
  %v1885 = vadd.f32 0.0, %v1884
  %v1886 = vpop.f32.mrf.mxu0
  %v1887 = vpop.f32.mrf.mxu0
  %1888 = vdwg.mxu0
  %v1889 = vadd.f32 %v1596, %v1598
  %v1890 = vadd.f32 %v1889, %v1637
  %v1891 = vadd.f32 %v1890, %v1639
  %v1892 = vadd.f32 %v1891, %v1678
  %v1893 = vadd.f32 %v1892, %v1680
  %v1894 = vadd.f32 %v1893, %v1719
  %v1895 = vadd.f32 %v1894, %v1721
  %v1896 = vadd.f32 %v1895, %v1760
  %v1897 = vadd.f32 %v1896, %v1762
  %v1898 = vadd.f32 %v1897, %v1801
  %v1899 = vadd.f32 %v1898, %v1803
  %v1900 = vadd.f32 %v1899, %v1842
  %v1901 = vadd.f32 %v1900, %v1844
  %v1902 = vadd.f32 %v1901, %v1883
  %v1903 = vadd.f32 %v1902, %v1885
  %1904 = vadd.xlane.f32.xlu0 %v1903
  %v1905 = vpop.xlane.xlu0 %1904
  %v1906 = vmul.f32 %v1905, 0.00048828125
  %v1907 = vmul.f32 %v1596, %v1596
  %v1908 = vmul.f32 %v1598, %v1598
  %v1909 = vmul.f32 %v1637, %v1637
  %v1910 = vmul.f32 %v1639, %v1639
  %v1911 = vmul.f32 %v1678, %v1678
  %v1912 = vmul.f32 %v1680, %v1680
  %v1913 = vmul.f32 %v1719, %v1719
  %v1914 = vmul.f32 %v1721, %v1721
  %v1915 = vmul.f32 %v1760, %v1760
  %v1916 = vmul.f32 %v1762, %v1762
  %v1917 = vmul.f32 %v1801, %v1801
  %v1918 = vmul.f32 %v1803, %v1803
  %v1919 = vmul.f32 %v1842, %v1842
  %v1920 = vmul.f32 %v1844, %v1844
  %v1921 = vmul.f32 %v1883, %v1883
  %v1922 = vmul.f32 %v1885, %v1885
  %v1923 = vadd.f32 %v1907, %v1908
  %v1924 = vadd.f32 %v1923, %v1909
  %v1925 = vadd.f32 %v1924, %v1910
  %v1926 = vadd.f32 %v1925, %v1911
  %v1927 = vadd.f32 %v1926, %v1912
  %v1928 = vadd.f32 %v1927, %v1913
  %v1929 = vadd.f32 %v1928, %v1914
  %v1930 = vadd.f32 %v1929, %v1915
  %v1931 = vadd.f32 %v1930, %v1916
  %v1932 = vadd.f32 %v1931, %v1917
  %v1933 = vadd.f32 %v1932, %v1918
  %v1934 = vadd.f32 %v1933, %v1919
  %v1935 = vadd.f32 %v1934, %v1920
  %v1936 = vadd.f32 %v1935, %v1921
  %v1937 = vadd.f32 %v1936, %v1922
  %1938 = vadd.xlane.f32.xlu0 %v1937
  %v1939 = vpop.xlane.xlu0 %1938
  %v1940 = vmul.f32 %v1939, 0.00048828125
  %v1941 = vmul.f32 %v1906, %v1906
  %v1942 = vsub.f32 %v1940, %v1941
  %v1943 = vmax.f32 %v1942, 0.0
  %v1944 = vld [vmem:[%s2] sm:$0xff]
  %v1945 = vadd.f32 %v1943, 1e-05
  %v1946 = vrsqrt.pop %v1945
  %v1947 = vmul.f32 %v1944, %v1946
  %v1948 = vld [vmem:[%s3] sm:$0xff]
  %v1949 = vmul.f32 %v1947, %v1906
  %v1950 = vsub.f32 %v1948, %v1949
  %1952 = vset.pattern.permute.xlu0 0
  %1953 = vperm.xlu0 %1952, %v1947
  %v1954 = vpop.permute.xlu0 %1953
  %v1956 = vmul.f32 %v1954, %v1596
  %v1957 = vmul.f32 %v1954, %v1598
  %v1958 = vmul.f32 %v1954, %v1637
  %v1959 = vmul.f32 %v1954, %v1639
  %v1960 = vmul.f32 %v1954, %v1678
  %v1961 = vmul.f32 %v1954, %v1680
  %v1962 = vmul.f32 %v1954, %v1719
  %v1963 = vmul.f32 %v1954, %v1721
  %v1964 = vmul.f32 %v1954, %v1760
  %v1965 = vmul.f32 %v1954, %v1762
  %v1966 = vmul.f32 %v1954, %v1801
  %v1967 = vmul.f32 %v1954, %v1803
  %v1968 = vmul.f32 %v1954, %v1842
  %v1969 = vmul.f32 %v1954, %v1844
  %v1970 = vmul.f32 %v1954, %v1883
  %v1971 = vmul.f32 %v1954, %v1885
  %1973 = vset.pattern.permute.xlu0 0
  %1974 = vperm.xlu0 %1973, %v1950
  %v1975 = vpop.permute.xlu0 %1974
  %v1977 = vadd.f32 %v1956, %v1975
  %v1978 = vadd.f32 %v1957, %v1975
  %v1979 = vadd.f32 %v1958, %v1975
  %v1980 = vadd.f32 %v1959, %v1975
  %v1981 = vadd.f32 %v1960, %v1975
  %v1982 = vadd.f32 %v1961, %v1975
  %v1983 = vadd.f32 %v1962, %v1975
  %v1984 = vadd.f32 %v1963, %v1975
  %v1985 = vadd.f32 %v1964, %v1975
  %v1986 = vadd.f32 %v1965, %v1975
  %v1987 = vadd.f32 %v1966, %v1975
  %v1988 = vadd.f32 %v1967, %v1975
  %v1989 = vadd.f32 %v1968, %v1975
  %v1990 = vadd.f32 %v1969, %v1975
  %v1991 = vadd.f32 %v1970, %v1975
  %v1992 = vadd.f32 %v1971, %v1975
  %vm1993 = vcmp.ge.f32.partialorder %v1977, 0.0
  %vm1994 = vcmp.ge.f32.partialorder %v1978, 0.0
  %vm1995 = vcmp.ge.f32.partialorder %v1979, 0.0
  %vm1996 = vcmp.ge.f32.partialorder %v1980, 0.0
  %vm1997 = vcmp.ge.f32.partialorder %v1981, 0.0
  %vm1998 = vcmp.ge.f32.partialorder %v1982, 0.0
  %vm1999 = vcmp.ge.f32.partialorder %v1983, 0.0
  %vm2000 = vcmp.ge.f32.partialorder %v1984, 0.0
  %vm2001 = vcmp.ge.f32.partialorder %v1985, 0.0
  %vm2002 = vcmp.ge.f32.partialorder %v1986, 0.0
  %vm2003 = vcmp.ge.f32.partialorder %v1987, 0.0
  %vm2004 = vcmp.ge.f32.partialorder %v1988, 0.0
  %vm2005 = vcmp.ge.f32.partialorder %v1989, 0.0
  %vm2006 = vcmp.ge.f32.partialorder %v1990, 0.0
  %vm2007 = vcmp.ge.f32.partialorder %v1991, 0.0
  %vm2008 = vcmp.ge.f32.partialorder %v1992, 0.0
  %v2009 = vmul.f32 %v1977, 0.2
  %v2010 = vmul.f32 %v1978, 0.2
  %v2011 = vmul.f32 %v1979, 0.2
  %v2012 = vmul.f32 %v1980, 0.2
  %v2013 = vmul.f32 %v1981, 0.2
  %v2014 = vmul.f32 %v1982, 0.2
  %v2015 = vmul.f32 %v1983, 0.2
  %v2016 = vmul.f32 %v1984, 0.2
  %v2017 = vmul.f32 %v1985, 0.2
  %v2018 = vmul.f32 %v1986, 0.2
  %v2019 = vmul.f32 %v1987, 0.2
  %v2020 = vmul.f32 %v1988, 0.2
  %v2021 = vmul.f32 %v1989, 0.2
  %v2022 = vmul.f32 %v1990, 0.2
  %v2023 = vmul.f32 %v1991, 0.2
  %v2024 = vmul.f32 %v1992, 0.2
  %v2025 = vsel %vm1993, %v1977, %v2009
  %v2026 = vsel %vm1994, %v1978, %v2010
  %v2027 = vsel %vm1995, %v1979, %v2011
  %v2028 = vsel %vm1996, %v1980, %v2012
  %v2029 = vsel %vm1997, %v1981, %v2013
  %v2030 = vsel %vm1998, %v1982, %v2014
  %v2031 = vsel %vm1999, %v1983, %v2015
  %v2032 = vsel %vm2000, %v1984, %v2016
  %v2033 = vsel %vm2001, %v1985, %v2017
  %v2034 = vsel %vm2002, %v1986, %v2018
  %v2035 = vsel %vm2003, %v1987, %v2019
  %v2036 = vsel %vm2004, %v1988, %v2020
  %v2037 = vsel %vm2005, %v1989, %v2021
  %v2038 = vsel %vm2006, %v1990, %v2022
  %v2039 = vsel %vm2007, %v1991, %v2023
  %v2040 = vsel %vm2008, %v1992, %v2024
  %v2041 = vpack.c.bf16 %v2025, %v2025
  %v2042 = vpack.c.bf16 %v2026, %v2026
  %v2043 = vpack.c.bf16 %v2027, %v2027
  %v2044 = vpack.c.bf16 %v2028, %v2028
  %v2045 = vpack.c.bf16 %v2029, %v2029
  %v2046 = vpack.c.bf16 %v2030, %v2030
  %v2047 = vpack.c.bf16 %v2031, %v2031
  %v2048 = vpack.c.bf16 %v2032, %v2032
  %v2049 = vpack.c.bf16 %v2033, %v2033
  %v2050 = vpack.c.bf16 %v2034, %v2034
  %v2051 = vpack.c.bf16 %v2035, %v2035
  %v2052 = vpack.c.bf16 %v2036, %v2036
  %v2053 = vpack.c.bf16 %v2037, %v2037
  %v2054 = vpack.c.bf16 %v2038, %v2038
  %v2055 = vpack.c.bf16 %v2039, %v2039
  %v2056 = vpack.c.bf16 %v2040, %v2040
  %v2073 = vunpack.c.l.b16 %v2041
  %v2074 = vunpack.c.l.b16 %v2042
  %v2075 = vunpack.c.l.b16 %v2043
  %v2076 = vunpack.c.l.b16 %v2044
  %v2077 = vunpack.c.l.b16 %v2045
  %v2078 = vunpack.c.l.b16 %v2046
  %v2079 = vunpack.c.l.b16 %v2047
  %v2080 = vunpack.c.l.b16 %v2048
  %v2081 = vunpack.c.l.b16 %v2049
  %v2082 = vunpack.c.l.b16 %v2050
  %v2083 = vunpack.c.l.b16 %v2051
  %v2084 = vunpack.c.l.b16 %v2052
  %v2085 = vunpack.c.l.b16 %v2053
  %v2086 = vunpack.c.l.b16 %v2054
  %v2087 = vunpack.c.l.b16 %v2055
  %v2088 = vunpack.c.l.b16 %v2056
  %v2089 = vpack.c.b16 %v2074, %v2073
  %v2090 = vpack.c.b16 %v2076, %v2075
  %v2091 = vpack.c.b16 %v2078, %v2077
  %v2092 = vpack.c.b16 %v2080, %v2079
  %v2093 = vpack.c.b16 %v2082, %v2081
  %v2094 = vpack.c.b16 %v2084, %v2083
  %v2095 = vpack.c.b16 %v2086, %v2085
  %v2096 = vpack.c.b16 %v2088, %v2087
  %2105 = vst [vmem:[%s4] sm:$0xff] %v2089
  %2106 = vst [vmem:[%s4 + $0x8] sm:$0xff] %v2090
  %2107 = vst [vmem:[%s4 + $0x10] sm:$0xff] %v2091
  %2108 = vst [vmem:[%s4 + $0x18] sm:$0xff] %v2092
  %2109 = vst [vmem:[%s4 + $0x20] sm:$0xff] %v2093
  %2110 = vst [vmem:[%s4 + $0x28] sm:$0xff] %v2094
  %2111 = vst [vmem:[%s4 + $0x30] sm:$0xff] %v2095
  %2112 = vst [vmem:[%s4 + $0x38] sm:$0xff] %v2096
  // Predicated region
  $region18: #{generator_forward.8} parent=0 // pred_check
    _
  $region19: #{generator_forward.8} parent=0 // pred_check_branch
    %2114 = sbr.rel (0) target = $region21
  $region20: #{generator_forward.8} parent=0 // pred_region
    _
  $region21: #{generator_forward.8} parent=0 // pred_fallthru
    _
  // Predicated region
  $region22: #{generator_forward.8} parent=0 // pred_check
    _
  $region23: #{generator_forward.8} parent=0 // pred_check_branch
    %2116 = sbr.rel (0) target = $region25
  $region24: #{generator_forward.8} parent=0 // pred_region
    _
  $region25: #{generator_forward.8} parent=0 // pred_fallthru
    _

// kernel: generator_forward.9
$region0: #{generator_forward.9}
  #allocation0 [shape = 'u32[]', space=smem, size = 0x4, offset = 0x4, fixed_abs, tag = 'smem constant byte address 0x4 - core index']
  #allocation1 [shape = 'u32[144,128]{1,0:T(1,128)}', space=vmem, size = 0x12000, scoped, tag = 'internal scratch']
  %s0 = inlined_call_operand.vmem [shape: bf16[3,128], index: 0, kind: input, shape index: {}]
  %s1 = inlined_call_operand.vmem [shape: bf16[128,8192], index: 1, kind: input, shape index: {}]
  %s2 = inlined_call_operand.vmem [shape: f32[3,1], index: 2, kind: input, shape index: {}]
  %s3 = inlined_call_operand.vmem [shape: f32[3,8192], index: 3, kind: output, shape index: {}]
  %s4 = sld [smem:[#allocation0]]
  $region22: #{generator_forward.9} parent=0
    _
  %s6 = ssub.s32 1, %s4
  %s7 = scalar_select 0, %s6, %s4
  // Predicated region
  $region2: #{generator_forward.9} parent=0 // pred_check
    _
  $region3: #{generator_forward.9} parent=0 // pred_check_branch
    %9 = sbr.rel (0) target = $region5
  $region4: #{generator_forward.9} parent=0 // pred_region
    _
  $region5: #{generator_forward.9} parent=0 // pred_fallthru
    _
  // Predicated region
  $region6: #{generator_forward.9} parent=0 // pred_check
    _
  $region7: #{generator_forward.9} parent=0 // pred_check_branch
    %11 = sbr.rel (0) target = $region9
  $region8: #{generator_forward.9} parent=0 // pred_region
    _
  $region9: #{generator_forward.9} parent=0 // pred_fallthru
    _
  // Predicated region
  $region10: #{generator_forward.9} parent=0 // pred_check
    _
  $region11: #{generator_forward.9} parent=0 // pred_check_branch
    %13 = sbr.rel (0) target = $region13
  $region12: #{generator_forward.9} parent=0 // pred_region
    _
  $region13: #{generator_forward.9} parent=0 // pred_fallthru
    _
  %v15 = vld [vmem:[%s0] sm:$0x3]
  %v16 = vld [vmem:[%s1] sm:$0xff]
  %v17 = vld [vmem:[%s1 + $0x8] sm:$0xff]
  %v18 = vld [vmem:[%s1 + $0x10] sm:$0xff]
  %v19 = vld [vmem:[%s1 + $0x18] sm:$0xff]
  %v20 = vld [vmem:[%s1 + $0x20] sm:$0xff]
  %v21 = vld [vmem:[%s1 + $0x28] sm:$0xff]
  %v22 = vld [vmem:[%s1 + $0x30] sm:$0xff]
  %v23 = vld [vmem:[%s1 + $0x38] sm:$0xff]
  %v24 = vld [vmem:[%s1 + $0x40] sm:$0xff]
  %v25 = vld [vmem:[%s1 + $0x48] sm:$0xff]
  %v26 = vld [vmem:[%s1 + $0x50] sm:$0xff]
  %v27 = vld [vmem:[%s1 + $0x58] sm:$0xff]
  %v28 = vld [vmem:[%s1 + $0x60] sm:$0xff]
  %v29 = vld [vmem:[%s1 + $0x68] sm:$0xff]
  %v30 = vld [vmem:[%s1 + $0x70] sm:$0xff]
  %v31 = vld [vmem:[%s1 + $0x78] sm:$0xff]
  %v32 = vld [vmem:[%s1 + $0x80] sm:$0xff]
  %v33 = vld [vmem:[%s1 + $0x88] sm:$0xff]
  %v34 = vld [vmem:[%s1 + $0x90] sm:$0xff]
  %v35 = vld [vmem:[%s1 + $0x98] sm:$0xff]
  %v36 = vld [vmem:[%s1 + $0xa0] sm:$0xff]
  %v37 = vld [vmem:[%s1 + $0xa8] sm:$0xff]
  %v38 = vld [vmem:[%s1 + $0xb0] sm:$0xff]
  %v39 = vld [vmem:[%s1 + $0xb8] sm:$0xff]
  %v40 = vld [vmem:[%s1 + $0xc0] sm:$0xff]
  %v41 = vld [vmem:[%s1 + $0xc8] sm:$0xff]
  %v42 = vld [vmem:[%s1 + $0xd0] sm:$0xff]
  %v43 = vld [vmem:[%s1 + $0xd8] sm:$0xff]
  %v44 = vld [vmem:[%s1 + $0xe0] sm:$0xff]
  %v45 = vld [vmem:[%s1 + $0xe8] sm:$0xff]
  %v46 = vld [vmem:[%s1 + $0xf0] sm:$0xff]
  %v47 = vld [vmem:[%s1 + $0xf8] sm:$0xff]
  %v48 = vld [vmem:[%s1 + $0x100] sm:$0xff]
  %v49 = vld [vmem:[%s1 + $0x108] sm:$0xff]
  %v50 = vld [vmem:[%s1 + $0x110] sm:$0xff]
  %v51 = vld [vmem:[%s1 + $0x118] sm:$0xff]
  %v52 = vld [vmem:[%s1 + $0x120] sm:$0xff]
  %v53 = vld [vmem:[%s1 + $0x128] sm:$0xff]
  %v54 = vld [vmem:[%s1 + $0x130] sm:$0xff]
  %v55 = vld [vmem:[%s1 + $0x138] sm:$0xff]
  %v56 = vld [vmem:[%s1 + $0x140] sm:$0xff]
  %v57 = vld [vmem:[%s1 + $0x148] sm:$0xff]
  %v58 = vld [vmem:[%s1 + $0x150] sm:$0xff]
  %v59 = vld [vmem:[%s1 + $0x158] sm:$0xff]
  %v60 = vld [vmem:[%s1 + $0x160] sm:$0xff]
  %v61 = vld [vmem:[%s1 + $0x168] sm:$0xff]
  %v62 = vld [vmem:[%s1 + $0x170] sm:$0xff]
  %v63 = vld [vmem:[%s1 + $0x178] sm:$0xff]
  %v64 = vld [vmem:[%s1 + $0x180] sm:$0xff]
  %v65 = vld [vmem:[%s1 + $0x188] sm:$0xff]
  %v66 = vld [vmem:[%s1 + $0x190] sm:$0xff]
  %v67 = vld [vmem:[%s1 + $0x198] sm:$0xff]
  %v68 = vld [vmem:[%s1 + $0x1a0] sm:$0xff]
  %v69 = vld [vmem:[%s1 + $0x1a8] sm:$0xff]
  %v70 = vld [vmem:[%s1 + $0x1b0] sm:$0xff]
  %v71 = vld [vmem:[%s1 + $0x1b8] sm:$0xff]
  %v72 = vld [vmem:[%s1 + $0x1c0] sm:$0xff]
  %v73 = vld [vmem:[%s1 + $0x1c8] sm:$0xff]
  %v74 = vld [vmem:[%s1 + $0x1d0] sm:$0xff]
  %v75 = vld [vmem:[%s1 + $0x1d8] sm:$0xff]
  %v76 = vld [vmem:[%s1 + $0x1e0] sm:$0xff]
  %v77 = vld [vmem:[%s1 + $0x1e8] sm:$0xff]
  %v78 = vld [vmem:[%s1 + $0x1f0] sm:$0xff]
  %v79 = vld [vmem:[%s1 + $0x1f8] sm:$0xff]
  %v80 = vld [vmem:[%s1 + $0x200] sm:$0xff]
  %v81 = vld [vmem:[%s1 + $0x208] sm:$0xff]
  %v82 = vld [vmem:[%s1 + $0x210] sm:$0xff]
  %v83 = vld [vmem:[%s1 + $0x218] sm:$0xff]
  %v84 = vld [vmem:[%s1 + $0x220] sm:$0xff]
  %v85 = vld [vmem:[%s1 + $0x228] sm:$0xff]
  %v86 = vld [vmem:[%s1 + $0x230] sm:$0xff]
  %v87 = vld [vmem:[%s1 + $0x238] sm:$0xff]
  %v88 = vld [vmem:[%s1 + $0x240] sm:$0xff]
  %v89 = vld [vmem:[%s1 + $0x248] sm:$0xff]
  %v90 = vld [vmem:[%s1 + $0x250] sm:$0xff]
  %v91 = vld [vmem:[%s1 + $0x258] sm:$0xff]
  %v92 = vld [vmem:[%s1 + $0x260] sm:$0xff]
  %v93 = vld [vmem:[%s1 + $0x268] sm:$0xff]
  %v94 = vld [vmem:[%s1 + $0x270] sm:$0xff]
  %v95 = vld [vmem:[%s1 + $0x278] sm:$0xff]
  %v96 = vld [vmem:[%s1 + $0x280] sm:$0xff]
  %v97 = vld [vmem:[%s1 + $0x288] sm:$0xff]
  %v98 = vld [vmem:[%s1 + $0x290] sm:$0xff]
  %v99 = vld [vmem:[%s1 + $0x298] sm:$0xff]
  %v100 = vld [vmem:[%s1 + $0x2a0] sm:$0xff]
  %v101 = vld [vmem:[%s1 + $0x2a8] sm:$0xff]
  %v102 = vld [vmem:[%s1 + $0x2b0] sm:$0xff]
  %v103 = vld [vmem:[%s1 + $0x2b8] sm:$0xff]
  %v104 = vld [vmem:[%s1 + $0x2c0] sm:$0xff]
  %v105 = vld [vmem:[%s1 + $0x2c8] sm:$0xff]
  %v106 = vld [vmem:[%s1 + $0x2d0] sm:$0xff]
  %v107 = vld [vmem:[%s1 + $0x2d8] sm:$0xff]
  %v108 = vld [vmem:[%s1 + $0x2e0] sm:$0xff]
  %v109 = vld [vmem:[%s1 + $0x2e8] sm:$0xff]
  %v110 = vld [vmem:[%s1 + $0x2f0] sm:$0xff]
  %v111 = vld [vmem:[%s1 + $0x2f8] sm:$0xff]
  %v112 = vld [vmem:[%s1 + $0x300] sm:$0xff]
  %v113 = vld [vmem:[%s1 + $0x308] sm:$0xff]
  %v114 = vld [vmem:[%s1 + $0x310] sm:$0xff]
  %v115 = vld [vmem:[%s1 + $0x318] sm:$0xff]
  %v116 = vld [vmem:[%s1 + $0x320] sm:$0xff]
  %v117 = vld [vmem:[%s1 + $0x328] sm:$0xff]
  %v118 = vld [vmem:[%s1 + $0x330] sm:$0xff]
  %v119 = vld [vmem:[%s1 + $0x338] sm:$0xff]
  %v120 = vld [vmem:[%s1 + $0x340] sm:$0xff]
  %v121 = vld [vmem:[%s1 + $0x348] sm:$0xff]
  %v122 = vld [vmem:[%s1 + $0x350] sm:$0xff]
  %v123 = vld [vmem:[%s1 + $0x358] sm:$0xff]
  %v124 = vld [vmem:[%s1 + $0x360] sm:$0xff]
  %v125 = vld [vmem:[%s1 + $0x368] sm:$0xff]
  %v126 = vld [vmem:[%s1 + $0x370] sm:$0xff]
  %v127 = vld [vmem:[%s1 + $0x378] sm:$0xff]
  %v128 = vld [vmem:[%s1 + $0x380] sm:$0xff]
  %v129 = vld [vmem:[%s1 + $0x388] sm:$0xff]
  %v130 = vld [vmem:[%s1 + $0x390] sm:$0xff]
  %v131 = vld [vmem:[%s1 + $0x398] sm:$0xff]
  %v132 = vld [vmem:[%s1 + $0x3a0] sm:$0xff]
  %v133 = vld [vmem:[%s1 + $0x3a8] sm:$0xff]
  %v134 = vld [vmem:[%s1 + $0x3b0] sm:$0xff]
  %v135 = vld [vmem:[%s1 + $0x3b8] sm:$0xff]
  %v136 = vld [vmem:[%s1 + $0x3c0] sm:$0xff]
  %v137 = vld [vmem:[%s1 + $0x3c8] sm:$0xff]
  %v138 = vld [vmem:[%s1 + $0x3d0] sm:$0xff]
  %v139 = vld [vmem:[%s1 + $0x3d8] sm:$0xff]
  %v140 = vld [vmem:[%s1 + $0x3e0] sm:$0xff]
  %v141 = vld [vmem:[%s1 + $0x3e8] sm:$0xff]
  %v142 = vld [vmem:[%s1 + $0x3f0] sm:$0xff]
  %v143 = vld [vmem:[%s1 + $0x3f8] sm:$0xff]
  %v144 = vld [vmem:[%s1 + $0x400] sm:$0xff]
  %v145 = vld [vmem:[%s1 + $0x408] sm:$0xff]
  %v146 = vld [vmem:[%s1 + $0x410] sm:$0xff]
  %v147 = vld [vmem:[%s1 + $0x418] sm:$0xff]
  %v148 = vld [vmem:[%s1 + $0x420] sm:$0xff]
  %v149 = vld [vmem:[%s1 + $0x428] sm:$0xff]
  %v150 = vld [vmem:[%s1 + $0x430] sm:$0xff]
  %v151 = vld [vmem:[%s1 + $0x438] sm:$0xff]
  %v152 = vld [vmem:[%s1 + $0x440] sm:$0xff]
  %v153 = vld [vmem:[%s1 + $0x448] sm:$0xff]
  %v154 = vld [vmem:[%s1 + $0x450] sm:$0xff]
  %v155 = vld [vmem:[%s1 + $0x458] sm:$0xff]
  %v156 = vld [vmem:[%s1 + $0x460] sm:$0xff]
  %v157 = vld [vmem:[%s1 + $0x468] sm:$0xff]
  %v158 = vld [vmem:[%s1 + $0x470] sm:$0xff]
  %v159 = vld [vmem:[%s1 + $0x478] sm:$0xff]
  %v160 = vld [vmem:[%s1 + $0x480] sm:$0xff]
  %v161 = vld [vmem:[%s1 + $0x488] sm:$0xff]
  %v162 = vld [vmem:[%s1 + $0x490] sm:$0xff]
  %v163 = vld [vmem:[%s1 + $0x498] sm:$0xff]
  %v164 = vld [vmem:[%s1 + $0x4a0] sm:$0xff]
  %v165 = vld [vmem:[%s1 + $0x4a8] sm:$0xff]
  %v166 = vld [vmem:[%s1 + $0x4b0] sm:$0xff]
  %v167 = vld [vmem:[%s1 + $0x4b8] sm:$0xff]
  %v168 = vld [vmem:[%s1 + $0x4c0] sm:$0xff]
  %v169 = vld [vmem:[%s1 + $0x4c8] sm:$0xff]
  %v170 = vld [vmem:[%s1 + $0x4d0] sm:$0xff]
  %v171 = vld [vmem:[%s1 + $0x4d8] sm:$0xff]
  %v172 = vld [vmem:[%s1 + $0x4e0] sm:$0xff]
  %v173 = vld [vmem:[%s1 + $0x4e8] sm:$0xff]
  %v174 = vld [vmem:[%s1 + $0x4f0] sm:$0xff]
  %v175 = vld [vmem:[%s1 + $0x4f8] sm:$0xff]
  %v176 = vld [vmem:[%s1 + $0x500] sm:$0xff]
  %v177 = vld [vmem:[%s1 + $0x508] sm:$0xff]
  %v178 = vld [vmem:[%s1 + $0x510] sm:$0xff]
  %v179 = vld [vmem:[%s1 + $0x518] sm:$0xff]
  %v180 = vld [vmem:[%s1 + $0x520] sm:$0xff]
  %v181 = vld [vmem:[%s1 + $0x528] sm:$0xff]
  %v182 = vld [vmem:[%s1 + $0x530] sm:$0xff]
  %v183 = vld [vmem:[%s1 + $0x538] sm:$0xff]
  %v184 = vld [vmem:[%s1 + $0x540] sm:$0xff]
  %v185 = vld [vmem:[%s1 + $0x548] sm:$0xff]
  %v186 = vld [vmem:[%s1 + $0x550] sm:$0xff]
  %v187 = vld [vmem:[%s1 + $0x558] sm:$0xff]
  %v188 = vld [vmem:[%s1 + $0x560] sm:$0xff]
  %v189 = vld [vmem:[%s1 + $0x568] sm:$0xff]
  %v190 = vld [vmem:[%s1 + $0x570] sm:$0xff]
  %v191 = vld [vmem:[%s1 + $0x578] sm:$0xff]
  %v192 = vld [vmem:[%s1 + $0x580] sm:$0xff]
  %v193 = vld [vmem:[%s1 + $0x588] sm:$0xff]
  %v194 = vld [vmem:[%s1 + $0x590] sm:$0xff]
  %v195 = vld [vmem:[%s1 + $0x598] sm:$0xff]
  %v196 = vld [vmem:[%s1 + $0x5a0] sm:$0xff]
  %v197 = vld [vmem:[%s1 + $0x5a8] sm:$0xff]
  %v198 = vld [vmem:[%s1 + $0x5b0] sm:$0xff]
  %v199 = vld [vmem:[%s1 + $0x5b8] sm:$0xff]
  %v200 = vld [vmem:[%s1 + $0x5c0] sm:$0xff]
  %v201 = vld [vmem:[%s1 + $0x5c8] sm:$0xff]
  %v202 = vld [vmem:[%s1 + $0x5d0] sm:$0xff]
  %v203 = vld [vmem:[%s1 + $0x5d8] sm:$0xff]
  %v204 = vld [vmem:[%s1 + $0x5e0] sm:$0xff]
  %v205 = vld [vmem:[%s1 + $0x5e8] sm:$0xff]
  %v206 = vld [vmem:[%s1 + $0x5f0] sm:$0xff]
  %v207 = vld [vmem:[%s1 + $0x5f8] sm:$0xff]
  %v208 = vld [vmem:[%s1 + $0x600] sm:$0xff]
  %v209 = vld [vmem:[%s1 + $0x608] sm:$0xff]
  %v210 = vld [vmem:[%s1 + $0x610] sm:$0xff]
  %v211 = vld [vmem:[%s1 + $0x618] sm:$0xff]
  %v212 = vld [vmem:[%s1 + $0x620] sm:$0xff]
  %v213 = vld [vmem:[%s1 + $0x628] sm:$0xff]
  %v214 = vld [vmem:[%s1 + $0x630] sm:$0xff]
  %v215 = vld [vmem:[%s1 + $0x638] sm:$0xff]
  %v216 = vld [vmem:[%s1 + $0x640] sm:$0xff]
  %v217 = vld [vmem:[%s1 + $0x648] sm:$0xff]
  %v218 = vld [vmem:[%s1 + $0x650] sm:$0xff]
  %v219 = vld [vmem:[%s1 + $0x658] sm:$0xff]
  %v220 = vld [vmem:[%s1 + $0x660] sm:$0xff]
  %v221 = vld [vmem:[%s1 + $0x668] sm:$0xff]
  %v222 = vld [vmem:[%s1 + $0x670] sm:$0xff]
  %v223 = vld [vmem:[%s1 + $0x678] sm:$0xff]
  %v224 = vld [vmem:[%s1 + $0x680] sm:$0xff]
  %v225 = vld [vmem:[%s1 + $0x688] sm:$0xff]
  %v226 = vld [vmem:[%s1 + $0x690] sm:$0xff]
  %v227 = vld [vmem:[%s1 + $0x698] sm:$0xff]
  %v228 = vld [vmem:[%s1 + $0x6a0] sm:$0xff]
  %v229 = vld [vmem:[%s1 + $0x6a8] sm:$0xff]
  %v230 = vld [vmem:[%s1 + $0x6b0] sm:$0xff]
  %v231 = vld [vmem:[%s1 + $0x6b8] sm:$0xff]
  %v232 = vld [vmem:[%s1 + $0x6c0] sm:$0xff]
  %v233 = vld [vmem:[%s1 + $0x6c8] sm:$0xff]
  %v234 = vld [vmem:[%s1 + $0x6d0] sm:$0xff]
  %v235 = vld [vmem:[%s1 + $0x6d8] sm:$0xff]
  %v236 = vld [vmem:[%s1 + $0x6e0] sm:$0xff]
  %v237 = vld [vmem:[%s1 + $0x6e8] sm:$0xff]
  %v238 = vld [vmem:[%s1 + $0x6f0] sm:$0xff]
  %v239 = vld [vmem:[%s1 + $0x6f8] sm:$0xff]
  %v240 = vld [vmem:[%s1 + $0x700] sm:$0xff]
  %v241 = vld [vmem:[%s1 + $0x708] sm:$0xff]
  %v242 = vld [vmem:[%s1 + $0x710] sm:$0xff]
  %v243 = vld [vmem:[%s1 + $0x718] sm:$0xff]
  %v244 = vld [vmem:[%s1 + $0x720] sm:$0xff]
  %v245 = vld [vmem:[%s1 + $0x728] sm:$0xff]
  %v246 = vld [vmem:[%s1 + $0x730] sm:$0xff]
  %v247 = vld [vmem:[%s1 + $0x738] sm:$0xff]
  %v248 = vld [vmem:[%s1 + $0x740] sm:$0xff]
  %v249 = vld [vmem:[%s1 + $0x748] sm:$0xff]
  %v250 = vld [vmem:[%s1 + $0x750] sm:$0xff]
  %v251 = vld [vmem:[%s1 + $0x758] sm:$0xff]
  %v252 = vld [vmem:[%s1 + $0x760] sm:$0xff]
  %v253 = vld [vmem:[%s1 + $0x768] sm:$0xff]
  %v254 = vld [vmem:[%s1 + $0x770] sm:$0xff]
  %v255 = vld [vmem:[%s1 + $0x778] sm:$0xff]
  %v256 = vld [vmem:[%s1 + $0x780] sm:$0xff]
  %v257 = vld [vmem:[%s1 + $0x788] sm:$0xff]
  %v258 = vld [vmem:[%s1 + $0x790] sm:$0xff]
  %v259 = vld [vmem:[%s1 + $0x798] sm:$0xff]
  %v260 = vld [vmem:[%s1 + $0x7a0] sm:$0xff]
  %v261 = vld [vmem:[%s1 + $0x7a8] sm:$0xff]
  %v262 = vld [vmem:[%s1 + $0x7b0] sm:$0xff]
  %v263 = vld [vmem:[%s1 + $0x7b8] sm:$0xff]
  %v264 = vld [vmem:[%s1 + $0x7c0] sm:$0xff]
  %v265 = vld [vmem:[%s1 + $0x7c8] sm:$0xff]
  %v266 = vld [vmem:[%s1 + $0x7d0] sm:$0xff]
  %v267 = vld [vmem:[%s1 + $0x7d8] sm:$0xff]
  %v268 = vld [vmem:[%s1 + $0x7e0] sm:$0xff]
  %v269 = vld [vmem:[%s1 + $0x7e8] sm:$0xff]
  %v270 = vld [vmem:[%s1 + $0x7f0] sm:$0xff]
  %v271 = vld [vmem:[%s1 + $0x7f8] sm:$0xff]
  %v272 = vld [vmem:[%s1 + $0x800] sm:$0xff]
  %v273 = vld [vmem:[%s1 + $0x808] sm:$0xff]
  %v274 = vld [vmem:[%s1 + $0x810] sm:$0xff]
  %v275 = vld [vmem:[%s1 + $0x818] sm:$0xff]
  %v276 = vld [vmem:[%s1 + $0x820] sm:$0xff]
  %v277 = vld [vmem:[%s1 + $0x828] sm:$0xff]
  %v278 = vld [vmem:[%s1 + $0x830] sm:$0xff]
  %v279 = vld [vmem:[%s1 + $0x838] sm:$0xff]
  %v280 = vld [vmem:[%s1 + $0x840] sm:$0xff]
  %v281 = vld [vmem:[%s1 + $0x848] sm:$0xff]
  %v282 = vld [vmem:[%s1 + $0x850] sm:$0xff]
  %v283 = vld [vmem:[%s1 + $0x858] sm:$0xff]
  %v284 = vld [vmem:[%s1 + $0x860] sm:$0xff]
  %v285 = vld [vmem:[%s1 + $0x868] sm:$0xff]
  %v286 = vld [vmem:[%s1 + $0x870] sm:$0xff]
  %v287 = vld [vmem:[%s1 + $0x878] sm:$0xff]
  %v288 = vld [vmem:[%s1 + $0x880] sm:$0xff]
  %v289 = vld [vmem:[%s1 + $0x888] sm:$0xff]
  %v290 = vld [vmem:[%s1 + $0x890] sm:$0xff]
  %v291 = vld [vmem:[%s1 + $0x898] sm:$0xff]
  %v292 = vld [vmem:[%s1 + $0x8a0] sm:$0xff]
  %v293 = vld [vmem:[%s1 + $0x8a8] sm:$0xff]
  %v294 = vld [vmem:[%s1 + $0x8b0] sm:$0xff]
  %v295 = vld [vmem:[%s1 + $0x8b8] sm:$0xff]
  %v296 = vld [vmem:[%s1 + $0x8c0] sm:$0xff]
  %v297 = vld [vmem:[%s1 + $0x8c8] sm:$0xff]
  %v298 = vld [vmem:[%s1 + $0x8d0] sm:$0xff]
  %v299 = vld [vmem:[%s1 + $0x8d8] sm:$0xff]
  %v300 = vld [vmem:[%s1 + $0x8e0] sm:$0xff]
  %v301 = vld [vmem:[%s1 + $0x8e8] sm:$0xff]
  %v302 = vld [vmem:[%s1 + $0x8f0] sm:$0xff]
  %v303 = vld [vmem:[%s1 + $0x8f8] sm:$0xff]
  %v304 = vld [vmem:[%s1 + $0x900] sm:$0xff]
  %v305 = vld [vmem:[%s1 + $0x908] sm:$0xff]
  %v306 = vld [vmem:[%s1 + $0x910] sm:$0xff]
  %v307 = vld [vmem:[%s1 + $0x918] sm:$0xff]
  %v308 = vld [vmem:[%s1 + $0x920] sm:$0xff]
  %v309 = vld [vmem:[%s1 + $0x928] sm:$0xff]
  %v310 = vld [vmem:[%s1 + $0x930] sm:$0xff]
  %v311 = vld [vmem:[%s1 + $0x938] sm:$0xff]
  %v312 = vld [vmem:[%s1 + $0x940] sm:$0xff]
  %v313 = vld [vmem:[%s1 + $0x948] sm:$0xff]
  %v314 = vld [vmem:[%s1 + $0x950] sm:$0xff]
  %v315 = vld [vmem:[%s1 + $0x958] sm:$0xff]
  %v316 = vld [vmem:[%s1 + $0x960] sm:$0xff]
  %v317 = vld [vmem:[%s1 + $0x968] sm:$0xff]
  %v318 = vld [vmem:[%s1 + $0x970] sm:$0xff]
  %v319 = vld [vmem:[%s1 + $0x978] sm:$0xff]
  %v320 = vld [vmem:[%s1 + $0x980] sm:$0xff]
  %v321 = vld [vmem:[%s1 + $0x988] sm:$0xff]
  %v322 = vld [vmem:[%s1 + $0x990] sm:$0xff]
  %v323 = vld [vmem:[%s1 + $0x998] sm:$0xff]
  %v324 = vld [vmem:[%s1 + $0x9a0] sm:$0xff]
  %v325 = vld [vmem:[%s1 + $0x9a8] sm:$0xff]
  %v326 = vld [vmem:[%s1 + $0x9b0] sm:$0xff]
  %v327 = vld [vmem:[%s1 + $0x9b8] sm:$0xff]
  %v328 = vld [vmem:[%s1 + $0x9c0] sm:$0xff]
  %v329 = vld [vmem:[%s1 + $0x9c8] sm:$0xff]
  %v330 = vld [vmem:[%s1 + $0x9d0] sm:$0xff]
  %v331 = vld [vmem:[%s1 + $0x9d8] sm:$0xff]
  %v332 = vld [vmem:[%s1 + $0x9e0] sm:$0xff]
  %v333 = vld [vmem:[%s1 + $0x9e8] sm:$0xff]
  %v334 = vld [vmem:[%s1 + $0x9f0] sm:$0xff]
  %v335 = vld [vmem:[%s1 + $0x9f8] sm:$0xff]
  %v336 = vld [vmem:[%s1 + $0xa00] sm:$0xff]
  %v337 = vld [vmem:[%s1 + $0xa08] sm:$0xff]
  %v338 = vld [vmem:[%s1 + $0xa10] sm:$0xff]
  %v339 = vld [vmem:[%s1 + $0xa18] sm:$0xff]
  %v340 = vld [vmem:[%s1 + $0xa20] sm:$0xff]
  %v341 = vld [vmem:[%s1 + $0xa28] sm:$0xff]
  %v342 = vld [vmem:[%s1 + $0xa30] sm:$0xff]
  %v343 = vld [vmem:[%s1 + $0xa38] sm:$0xff]
  %v344 = vld [vmem:[%s1 + $0xa40] sm:$0xff]
  %v345 = vld [vmem:[%s1 + $0xa48] sm:$0xff]
  %v346 = vld [vmem:[%s1 + $0xa50] sm:$0xff]
  %v347 = vld [vmem:[%s1 + $0xa58] sm:$0xff]
  %v348 = vld [vmem:[%s1 + $0xa60] sm:$0xff]
  %v349 = vld [vmem:[%s1 + $0xa68] sm:$0xff]
  %v350 = vld [vmem:[%s1 + $0xa70] sm:$0xff]
  %v351 = vld [vmem:[%s1 + $0xa78] sm:$0xff]
  %v352 = vld [vmem:[%s1 + $0xa80] sm:$0xff]
  %v353 = vld [vmem:[%s1 + $0xa88] sm:$0xff]
  %v354 = vld [vmem:[%s1 + $0xa90] sm:$0xff]
  %v355 = vld [vmem:[%s1 + $0xa98] sm:$0xff]
  %v356 = vld [vmem:[%s1 + $0xaa0] sm:$0xff]
  %v357 = vld [vmem:[%s1 + $0xaa8] sm:$0xff]
  %v358 = vld [vmem:[%s1 + $0xab0] sm:$0xff]
  %v359 = vld [vmem:[%s1 + $0xab8] sm:$0xff]
  %v360 = vld [vmem:[%s1 + $0xac0] sm:$0xff]
  %v361 = vld [vmem:[%s1 + $0xac8] sm:$0xff]
  %v362 = vld [vmem:[%s1 + $0xad0] sm:$0xff]
  %v363 = vld [vmem:[%s1 + $0xad8] sm:$0xff]
  %v364 = vld [vmem:[%s1 + $0xae0] sm:$0xff]
  %v365 = vld [vmem:[%s1 + $0xae8] sm:$0xff]
  %v366 = vld [vmem:[%s1 + $0xaf0] sm:$0xff]
  %v367 = vld [vmem:[%s1 + $0xaf8] sm:$0xff]
  %v368 = vld [vmem:[%s1 + $0xb00] sm:$0xff]
  %v369 = vld [vmem:[%s1 + $0xb08] sm:$0xff]
  %v370 = vld [vmem:[%s1 + $0xb10] sm:$0xff]
  %v371 = vld [vmem:[%s1 + $0xb18] sm:$0xff]
  %v372 = vld [vmem:[%s1 + $0xb20] sm:$0xff]
  %v373 = vld [vmem:[%s1 + $0xb28] sm:$0xff]
  %v374 = vld [vmem:[%s1 + $0xb30] sm:$0xff]
  %v375 = vld [vmem:[%s1 + $0xb38] sm:$0xff]
  %v376 = vld [vmem:[%s1 + $0xb40] sm:$0xff]
  %v377 = vld [vmem:[%s1 + $0xb48] sm:$0xff]
  %v378 = vld [vmem:[%s1 + $0xb50] sm:$0xff]
  %v379 = vld [vmem:[%s1 + $0xb58] sm:$0xff]
  %v380 = vld [vmem:[%s1 + $0xb60] sm:$0xff]
  %v381 = vld [vmem:[%s1 + $0xb68] sm:$0xff]
  %v382 = vld [vmem:[%s1 + $0xb70] sm:$0xff]
  %v383 = vld [vmem:[%s1 + $0xb78] sm:$0xff]
  %v384 = vld [vmem:[%s1 + $0xb80] sm:$0xff]
  %v385 = vld [vmem:[%s1 + $0xb88] sm:$0xff]
  %v386 = vld [vmem:[%s1 + $0xb90] sm:$0xff]
  %v387 = vld [vmem:[%s1 + $0xb98] sm:$0xff]
  %v388 = vld [vmem:[%s1 + $0xba0] sm:$0xff]
  %v389 = vld [vmem:[%s1 + $0xba8] sm:$0xff]
  %v390 = vld [vmem:[%s1 + $0xbb0] sm:$0xff]
  %v391 = vld [vmem:[%s1 + $0xbb8] sm:$0xff]
  %v392 = vld [vmem:[%s1 + $0xbc0] sm:$0xff]
  %v393 = vld [vmem:[%s1 + $0xbc8] sm:$0xff]
  %v394 = vld [vmem:[%s1 + $0xbd0] sm:$0xff]
  %v395 = vld [vmem:[%s1 + $0xbd8] sm:$0xff]
  %v396 = vld [vmem:[%s1 + $0xbe0] sm:$0xff]
  %v397 = vld [vmem:[%s1 + $0xbe8] sm:$0xff]
  %v398 = vld [vmem:[%s1 + $0xbf0] sm:$0xff]
  %v399 = vld [vmem:[%s1 + $0xbf8] sm:$0xff]
  %v400 = vld [vmem:[%s1 + $0xc00] sm:$0xff]
  %v401 = vld [vmem:[%s1 + $0xc08] sm:$0xff]
  %v402 = vld [vmem:[%s1 + $0xc10] sm:$0xff]
  %v403 = vld [vmem:[%s1 + $0xc18] sm:$0xff]
  %v404 = vld [vmem:[%s1 + $0xc20] sm:$0xff]
  %v405 = vld [vmem:[%s1 + $0xc28] sm:$0xff]
  %v406 = vld [vmem:[%s1 + $0xc30] sm:$0xff]
  %v407 = vld [vmem:[%s1 + $0xc38] sm:$0xff]
  %v408 = vld [vmem:[%s1 + $0xc40] sm:$0xff]
  %v409 = vld [vmem:[%s1 + $0xc48] sm:$0xff]
  %v410 = vld [vmem:[%s1 + $0xc50] sm:$0xff]
  %v411 = vld [vmem:[%s1 + $0xc58] sm:$0xff]
  %v412 = vld [vmem:[%s1 + $0xc60] sm:$0xff]
  %v413 = vld [vmem:[%s1 + $0xc68] sm:$0xff]
  %v414 = vld [vmem:[%s1 + $0xc70] sm:$0xff]
  %v415 = vld [vmem:[%s1 + $0xc78] sm:$0xff]
  %v416 = vld [vmem:[%s1 + $0xc80] sm:$0xff]
  %v417 = vld [vmem:[%s1 + $0xc88] sm:$0xff]
  %v418 = vld [vmem:[%s1 + $0xc90] sm:$0xff]
  %v419 = vld [vmem:[%s1 + $0xc98] sm:$0xff]
  %v420 = vld [vmem:[%s1 + $0xca0] sm:$0xff]
  %v421 = vld [vmem:[%s1 + $0xca8] sm:$0xff]
  %v422 = vld [vmem:[%s1 + $0xcb0] sm:$0xff]
  %v423 = vld [vmem:[%s1 + $0xcb8] sm:$0xff]
  %v424 = vld [vmem:[%s1 + $0xcc0] sm:$0xff]
  %v425 = vld [vmem:[%s1 + $0xcc8] sm:$0xff]
  %v426 = vld [vmem:[%s1 + $0xcd0] sm:$0xff]
  %v427 = vld [vmem:[%s1 + $0xcd8] sm:$0xff]
  %v428 = vld [vmem:[%s1 + $0xce0] sm:$0xff]
  %v429 = vld [vmem:[%s1 + $0xce8] sm:$0xff]
  %v430 = vld [vmem:[%s1 + $0xcf0] sm:$0xff]
  %v431 = vld [vmem:[%s1 + $0xcf8] sm:$0xff]
  %v432 = vld [vmem:[%s1 + $0xd00] sm:$0xff]
  %v433 = vld [vmem:[%s1 + $0xd08] sm:$0xff]
  %v434 = vld [vmem:[%s1 + $0xd10] sm:$0xff]
  %v435 = vld [vmem:[%s1 + $0xd18] sm:$0xff]
  %v436 = vld [vmem:[%s1 + $0xd20] sm:$0xff]
  %v437 = vld [vmem:[%s1 + $0xd28] sm:$0xff]
  %v438 = vld [vmem:[%s1 + $0xd30] sm:$0xff]
  %v439 = vld [vmem:[%s1 + $0xd38] sm:$0xff]
  %v440 = vld [vmem:[%s1 + $0xd40] sm:$0xff]
  %v441 = vld [vmem:[%s1 + $0xd48] sm:$0xff]
  %v442 = vld [vmem:[%s1 + $0xd50] sm:$0xff]
  %v443 = vld [vmem:[%s1 + $0xd58] sm:$0xff]
  %v444 = vld [vmem:[%s1 + $0xd60] sm:$0xff]
  %v445 = vld [vmem:[%s1 + $0xd68] sm:$0xff]
  %v446 = vld [vmem:[%s1 + $0xd70] sm:$0xff]
  %v447 = vld [vmem:[%s1 + $0xd78] sm:$0xff]
  %v448 = vld [vmem:[%s1 + $0xd80] sm:$0xff]
  %v449 = vld [vmem:[%s1 + $0xd88] sm:$0xff]
  %v450 = vld [vmem:[%s1 + $0xd90] sm:$0xff]
  %v451 = vld [vmem:[%s1 + $0xd98] sm:$0xff]
  %v452 = vld [vmem:[%s1 + $0xda0] sm:$0xff]
  %v453 = vld [vmem:[%s1 + $0xda8] sm:$0xff]
  %v454 = vld [vmem:[%s1 + $0xdb0] sm:$0xff]
  %v455 = vld [vmem:[%s1 + $0xdb8] sm:$0xff]
  %v456 = vld [vmem:[%s1 + $0xdc0] sm:$0xff]
  %v457 = vld [vmem:[%s1 + $0xdc8] sm:$0xff]
  %v458 = vld [vmem:[%s1 + $0xdd0] sm:$0xff]
  %v459 = vld [vmem:[%s1 + $0xdd8] sm:$0xff]
  %v460 = vld [vmem:[%s1 + $0xde0] sm:$0xff]
  %v461 = vld [vmem:[%s1 + $0xde8] sm:$0xff]
  %v462 = vld [vmem:[%s1 + $0xdf0] sm:$0xff]
  %v463 = vld [vmem:[%s1 + $0xdf8] sm:$0xff]
  %v464 = vld [vmem:[%s1 + $0xe00] sm:$0xff]
  %v465 = vld [vmem:[%s1 + $0xe08] sm:$0xff]
  %v466 = vld [vmem:[%s1 + $0xe10] sm:$0xff]
  %v467 = vld [vmem:[%s1 + $0xe18] sm:$0xff]
  %v468 = vld [vmem:[%s1 + $0xe20] sm:$0xff]
  %v469 = vld [vmem:[%s1 + $0xe28] sm:$0xff]
  %v470 = vld [vmem:[%s1 + $0xe30] sm:$0xff]
  %v471 = vld [vmem:[%s1 + $0xe38] sm:$0xff]
  %v472 = vld [vmem:[%s1 + $0xe40] sm:$0xff]
  %v473 = vld [vmem:[%s1 + $0xe48] sm:$0xff]
  %v474 = vld [vmem:[%s1 + $0xe50] sm:$0xff]
  %v475 = vld [vmem:[%s1 + $0xe58] sm:$0xff]
  %v476 = vld [vmem:[%s1 + $0xe60] sm:$0xff]
  %v477 = vld [vmem:[%s1 + $0xe68] sm:$0xff]
  %v478 = vld [vmem:[%s1 + $0xe70] sm:$0xff]
  %v479 = vld [vmem:[%s1 + $0xe78] sm:$0xff]
  %v480 = vld [vmem:[%s1 + $0xe80] sm:$0xff]
  %v481 = vld [vmem:[%s1 + $0xe88] sm:$0xff]
  %v482 = vld [vmem:[%s1 + $0xe90] sm:$0xff]
  %v483 = vld [vmem:[%s1 + $0xe98] sm:$0xff]
  %v484 = vld [vmem:[%s1 + $0xea0] sm:$0xff]
  %v485 = vld [vmem:[%s1 + $0xea8] sm:$0xff]
  %v486 = vld [vmem:[%s1 + $0xeb0] sm:$0xff]
  %v487 = vld [vmem:[%s1 + $0xeb8] sm:$0xff]
  %v488 = vld [vmem:[%s1 + $0xec0] sm:$0xff]
  %v489 = vld [vmem:[%s1 + $0xec8] sm:$0xff]
  %v490 = vld [vmem:[%s1 + $0xed0] sm:$0xff]
  %v491 = vld [vmem:[%s1 + $0xed8] sm:$0xff]
  %v492 = vld [vmem:[%s1 + $0xee0] sm:$0xff]
  %v493 = vld [vmem:[%s1 + $0xee8] sm:$0xff]
  %v494 = vld [vmem:[%s1 + $0xef0] sm:$0xff]
  %v495 = vld [vmem:[%s1 + $0xef8] sm:$0xff]
  %v496 = vld [vmem:[%s1 + $0xf00] sm:$0xff]
  %v497 = vld [vmem:[%s1 + $0xf08] sm:$0xff]
  %v498 = vld [vmem:[%s1 + $0xf10] sm:$0xff]
  %v499 = vld [vmem:[%s1 + $0xf18] sm:$0xff]
  %v500 = vld [vmem:[%s1 + $0xf20] sm:$0xff]
  %v501 = vld [vmem:[%s1 + $0xf28] sm:$0xff]
  %v502 = vld [vmem:[%s1 + $0xf30] sm:$0xff]
  %v503 = vld [vmem:[%s1 + $0xf38] sm:$0xff]
  %v504 = vld [vmem:[%s1 + $0xf40] sm:$0xff]
  %v505 = vld [vmem:[%s1 + $0xf48] sm:$0xff]
  %v506 = vld [vmem:[%s1 + $0xf50] sm:$0xff]
  %v507 = vld [vmem:[%s1 + $0xf58] sm:$0xff]
  %v508 = vld [vmem:[%s1 + $0xf60] sm:$0xff]
  %v509 = vld [vmem:[%s1 + $0xf68] sm:$0xff]
  %v510 = vld [vmem:[%s1 + $0xf70] sm:$0xff]
  %v511 = vld [vmem:[%s1 + $0xf78] sm:$0xff]
  %v512 = vld [vmem:[%s1 + $0xf80] sm:$0xff]
  %v513 = vld [vmem:[%s1 + $0xf88] sm:$0xff]
  %v514 = vld [vmem:[%s1 + $0xf90] sm:$0xff]
  %v515 = vld [vmem:[%s1 + $0xf98] sm:$0xff]
  %v516 = vld [vmem:[%s1 + $0xfa0] sm:$0xff]
  %v517 = vld [vmem:[%s1 + $0xfa8] sm:$0xff]
  %v518 = vld [vmem:[%s1 + $0xfb0] sm:$0xff]
  %v519 = vld [vmem:[%s1 + $0xfb8] sm:$0xff]
  %v520 = vld [vmem:[%s1 + $0xfc0] sm:$0xff]
  %v521 = vld [vmem:[%s1 + $0xfc8] sm:$0xff]
  %v522 = vld [vmem:[%s1 + $0xfd0] sm:$0xff]
  %v523 = vld [vmem:[%s1 + $0xfd8] sm:$0xff]
  %v524 = vld [vmem:[%s1 + $0xfe0] sm:$0xff]
  %v525 = vld [vmem:[%s1 + $0xfe8] sm:$0xff]
  %v526 = vld [vmem:[%s1 + $0xff0] sm:$0xff]
  %v527 = vld [vmem:[%s1 + $0xff8] sm:$0xff]
  %v528 = vld [vmem:[%s2] sm:$0x7]
  %530 = vset.pattern.permute.xlu0 0
  %531 = vperm.xlu0 %530, %v528
  %v532 = vpop.permute.xlu0 %531
  %v1046 = vunpack.c.l.b16 %v16
  %v1047 = vunpack.c.h.b16 %v16
  %v1048 = vunpack.c.l.b16 %v17
  %v1049 = vunpack.c.h.b16 %v17
  %v1050 = vunpack.c.l.b16 %v18
  %v1051 = vunpack.c.h.b16 %v18
  %v1052 = vunpack.c.l.b16 %v19
  %v1053 = vunpack.c.h.b16 %v19
  %v1054 = vunpack.c.l.b16 %v20
  %v1055 = vunpack.c.h.b16 %v20
  %v1056 = vunpack.c.l.b16 %v21
  %v1057 = vunpack.c.h.b16 %v21
  %v1058 = vunpack.c.l.b16 %v22
  %v1059 = vunpack.c.h.b16 %v22
  %v1060 = vunpack.c.l.b16 %v23
  %v1061 = vunpack.c.h.b16 %v23
  %v1062 = vunpack.c.l.b16 %v24
  %v1063 = vunpack.c.h.b16 %v24
  %v1064 = vunpack.c.l.b16 %v25
  %v1065 = vunpack.c.h.b16 %v25
  %v1066 = vunpack.c.l.b16 %v26
  %v1067 = vunpack.c.h.b16 %v26
  %v1068 = vunpack.c.l.b16 %v27
  %v1069 = vunpack.c.h.b16 %v27
  %v1070 = vunpack.c.l.b16 %v28
  %v1071 = vunpack.c.h.b16 %v28
  %v1072 = vunpack.c.l.b16 %v29
  %v1073 = vunpack.c.h.b16 %v29
  %v1074 = vunpack.c.l.b16 %v30
  %v1075 = vunpack.c.h.b16 %v30
  %v1076 = vunpack.c.l.b16 %v31
  %v1077 = vunpack.c.h.b16 %v31
  %v1078 = vunpack.c.l.b16 %v32
  %v1079 = vunpack.c.h.b16 %v32
  %v1080 = vunpack.c.l.b16 %v33
  %v1081 = vunpack.c.h.b16 %v33
  %v1082 = vunpack.c.l.b16 %v34
  %v1083 = vunpack.c.h.b16 %v34
  %v1084 = vunpack.c.l.b16 %v35
  %v1085 = vunpack.c.h.b16 %v35
  %v1086 = vunpack.c.l.b16 %v36
  %v1087 = vunpack.c.h.b16 %v36
  %v1088 = vunpack.c.l.b16 %v37
  %v1089 = vunpack.c.h.b16 %v37
  %v1090 = vunpack.c.l.b16 %v38
  %v1091 = vunpack.c.h.b16 %v38
  %v1092 = vunpack.c.l.b16 %v39
  %v1093 = vunpack.c.h.b16 %v39
  %v1094 = vunpack.c.l.b16 %v40
  %v1095 = vunpack.c.h.b16 %v40
  %v1096 = vunpack.c.l.b16 %v41
  %v1097 = vunpack.c.h.b16 %v41
  %v1098 = vunpack.c.l.b16 %v42
  %v1099 = vunpack.c.h.b16 %v42
  %v1100 = vunpack.c.l.b16 %v43
  %v1101 = vunpack.c.h.b16 %v43
  %v1102 = vunpack.c.l.b16 %v44
  %v1103 = vunpack.c.h.b16 %v44
  %v1104 = vunpack.c.l.b16 %v45
  %v1105 = vunpack.c.h.b16 %v45
  %v1106 = vunpack.c.l.b16 %v46
  %v1107 = vunpack.c.h.b16 %v46
  %v1108 = vunpack.c.l.b16 %v47
  %v1109 = vunpack.c.h.b16 %v47
  %v1110 = vunpack.c.l.b16 %v48
  %v1111 = vunpack.c.h.b16 %v48
  %v1112 = vunpack.c.l.b16 %v49
  %v1113 = vunpack.c.h.b16 %v49
  %v1114 = vunpack.c.l.b16 %v50
  %v1115 = vunpack.c.h.b16 %v50
  %v1116 = vunpack.c.l.b16 %v51
  %v1117 = vunpack.c.h.b16 %v51
  %v1118 = vunpack.c.l.b16 %v52
  %v1119 = vunpack.c.h.b16 %v52
  %v1120 = vunpack.c.l.b16 %v53
  %v1121 = vunpack.c.h.b16 %v53
  %v1122 = vunpack.c.l.b16 %v54
  %v1123 = vunpack.c.h.b16 %v54
  %v1124 = vunpack.c.l.b16 %v55
  %v1125 = vunpack.c.h.b16 %v55
  %v1126 = vunpack.c.l.b16 %v56
  %v1127 = vunpack.c.h.b16 %v56
  %v1128 = vunpack.c.l.b16 %v57
  %v1129 = vunpack.c.h.b16 %v57
  %v1130 = vunpack.c.l.b16 %v58
  %v1131 = vunpack.c.h.b16 %v58
  %v1132 = vunpack.c.l.b16 %v59
  %v1133 = vunpack.c.h.b16 %v59
  %v1134 = vunpack.c.l.b16 %v60
  %v1135 = vunpack.c.h.b16 %v60
  %v1136 = vunpack.c.l.b16 %v61
  %v1137 = vunpack.c.h.b16 %v61
  %v1138 = vunpack.c.l.b16 %v62
  %v1139 = vunpack.c.h.b16 %v62
  %v1140 = vunpack.c.l.b16 %v63
  %v1141 = vunpack.c.h.b16 %v63
  %v1142 = vunpack.c.l.b16 %v64
  %v1143 = vunpack.c.h.b16 %v64
  %v1144 = vunpack.c.l.b16 %v65
  %v1145 = vunpack.c.h.b16 %v65
  %v1146 = vunpack.c.l.b16 %v66
  %v1147 = vunpack.c.h.b16 %v66
  %v1148 = vunpack.c.l.b16 %v67
  %v1149 = vunpack.c.h.b16 %v67
  %v1150 = vunpack.c.l.b16 %v68
  %v1151 = vunpack.c.h.b16 %v68
  %v1152 = vunpack.c.l.b16 %v69
  %v1153 = vunpack.c.h.b16 %v69
  %v1154 = vunpack.c.l.b16 %v70
  %v1155 = vunpack.c.h.b16 %v70
  %v1156 = vunpack.c.l.b16 %v71
  %v1157 = vunpack.c.h.b16 %v71
  %v1158 = vunpack.c.l.b16 %v72
  %v1159 = vunpack.c.h.b16 %v72
  %v1160 = vunpack.c.l.b16 %v73
  %v1161 = vunpack.c.h.b16 %v73
  %v1162 = vunpack.c.l.b16 %v74
  %v1163 = vunpack.c.h.b16 %v74
  %v1164 = vunpack.c.l.b16 %v75
  %v1165 = vunpack.c.h.b16 %v75
  %v1166 = vunpack.c.l.b16 %v76
  %v1167 = vunpack.c.h.b16 %v76
  %v1168 = vunpack.c.l.b16 %v77
  %v1169 = vunpack.c.h.b16 %v77
  %v1170 = vunpack.c.l.b16 %v78
  %v1171 = vunpack.c.h.b16 %v78
  %v1172 = vunpack.c.l.b16 %v79
  %v1173 = vunpack.c.h.b16 %v79
  %v1174 = vunpack.c.l.b16 %v80
  %v1175 = vunpack.c.h.b16 %v80
  %v1176 = vunpack.c.l.b16 %v81
  %v1177 = vunpack.c.h.b16 %v81
  %v1178 = vunpack.c.l.b16 %v82
  %v1179 = vunpack.c.h.b16 %v82
  %v1180 = vunpack.c.l.b16 %v83
  %v1181 = vunpack.c.h.b16 %v83
  %v1182 = vunpack.c.l.b16 %v84
  %v1183 = vunpack.c.h.b16 %v84
  %v1184 = vunpack.c.l.b16 %v85
  %v1185 = vunpack.c.h.b16 %v85
  %v1186 = vunpack.c.l.b16 %v86
  %v1187 = vunpack.c.h.b16 %v86
  %v1188 = vunpack.c.l.b16 %v87
  %v1189 = vunpack.c.h.b16 %v87
  %v1190 = vunpack.c.l.b16 %v88
  %v1191 = vunpack.c.h.b16 %v88
  %v1192 = vunpack.c.l.b16 %v89
  %v1193 = vunpack.c.h.b16 %v89
  %v1194 = vunpack.c.l.b16 %v90
  %v1195 = vunpack.c.h.b16 %v90
  %v1196 = vunpack.c.l.b16 %v91
  %v1197 = vunpack.c.h.b16 %v91
  %v1198 = vunpack.c.l.b16 %v92
  %v1199 = vunpack.c.h.b16 %v92
  %v1200 = vunpack.c.l.b16 %v93
  %v1201 = vunpack.c.h.b16 %v93
  %v1202 = vunpack.c.l.b16 %v94
  %v1203 = vunpack.c.h.b16 %v94
  %v1204 = vunpack.c.l.b16 %v95
  %v1205 = vunpack.c.h.b16 %v95
  %v1206 = vunpack.c.l.b16 %v96
  %v1207 = vunpack.c.h.b16 %v96
  %v1208 = vunpack.c.l.b16 %v97
  %v1209 = vunpack.c.h.b16 %v97
  %v1210 = vunpack.c.l.b16 %v98
  %v1211 = vunpack.c.h.b16 %v98
  %v1212 = vunpack.c.l.b16 %v99
  %v1213 = vunpack.c.h.b16 %v99
  %v1214 = vunpack.c.l.b16 %v100
  %v1215 = vunpack.c.h.b16 %v100
  %v1216 = vunpack.c.l.b16 %v101
  %v1217 = vunpack.c.h.b16 %v101
  %v1218 = vunpack.c.l.b16 %v102
  %v1219 = vunpack.c.h.b16 %v102
  %v1220 = vunpack.c.l.b16 %v103
  %v1221 = vunpack.c.h.b16 %v103
  %v1222 = vunpack.c.l.b16 %v104
  %v1223 = vunpack.c.h.b16 %v104
  %v1224 = vunpack.c.l.b16 %v105
  %v1225 = vunpack.c.h.b16 %v105
  %v1226 = vunpack.c.l.b16 %v106
  %v1227 = vunpack.c.h.b16 %v106
  %v1228 = vunpack.c.l.b16 %v107
  %v1229 = vunpack.c.h.b16 %v107
  %v1230 = vunpack.c.l.b16 %v108
  %v1231 = vunpack.c.h.b16 %v108
  %v1232 = vunpack.c.l.b16 %v109
  %v1233 = vunpack.c.h.b16 %v109
  %v1234 = vunpack.c.l.b16 %v110
  %v1235 = vunpack.c.h.b16 %v110
  %v1236 = vunpack.c.l.b16 %v111
  %v1237 = vunpack.c.h.b16 %v111
  %v1238 = vunpack.c.l.b16 %v112
  %v1239 = vunpack.c.h.b16 %v112
  %v1240 = vunpack.c.l.b16 %v113
  %v1241 = vunpack.c.h.b16 %v113
  %v1242 = vunpack.c.l.b16 %v114
  %v1243 = vunpack.c.h.b16 %v114
  %v1244 = vunpack.c.l.b16 %v115
  %v1245 = vunpack.c.h.b16 %v115
  %v1246 = vunpack.c.l.b16 %v116
  %v1247 = vunpack.c.h.b16 %v116
  %v1248 = vunpack.c.l.b16 %v117
  %v1249 = vunpack.c.h.b16 %v117
  %v1250 = vunpack.c.l.b16 %v118
  %v1251 = vunpack.c.h.b16 %v118
  %v1252 = vunpack.c.l.b16 %v119
  %v1253 = vunpack.c.h.b16 %v119
  %v1254 = vunpack.c.l.b16 %v120
  %v1255 = vunpack.c.h.b16 %v120
  %v1256 = vunpack.c.l.b16 %v121
  %v1257 = vunpack.c.h.b16 %v121
  %v1258 = vunpack.c.l.b16 %v122
  %v1259 = vunpack.c.h.b16 %v122
  %v1260 = vunpack.c.l.b16 %v123
  %v1261 = vunpack.c.h.b16 %v123
  %v1262 = vunpack.c.l.b16 %v124
  %v1263 = vunpack.c.h.b16 %v124
  %v1264 = vunpack.c.l.b16 %v125
  %v1265 = vunpack.c.h.b16 %v125
  %v1266 = vunpack.c.l.b16 %v126
  %v1267 = vunpack.c.h.b16 %v126
  %v1268 = vunpack.c.l.b16 %v127
  %v1269 = vunpack.c.h.b16 %v127
  %v1270 = vunpack.c.l.b16 %v128
  %v1271 = vunpack.c.h.b16 %v128
  %v1272 = vunpack.c.l.b16 %v129
  %v1273 = vunpack.c.h.b16 %v129
  %v1274 = vunpack.c.l.b16 %v130
  %v1275 = vunpack.c.h.b16 %v130
  %v1276 = vunpack.c.l.b16 %v131
  %v1277 = vunpack.c.h.b16 %v131
  %v1278 = vunpack.c.l.b16 %v132
  %v1279 = vunpack.c.h.b16 %v132
  %v1280 = vunpack.c.l.b16 %v133
  %v1281 = vunpack.c.h.b16 %v133
  %v1282 = vunpack.c.l.b16 %v134
  %v1283 = vunpack.c.h.b16 %v134
  %v1284 = vunpack.c.l.b16 %v135
  %v1285 = vunpack.c.h.b16 %v135
  %v1286 = vunpack.c.l.b16 %v136
  %v1287 = vunpack.c.h.b16 %v136
  %v1288 = vunpack.c.l.b16 %v137
  %v1289 = vunpack.c.h.b16 %v137
  %v1290 = vunpack.c.l.b16 %v138
  %v1291 = vunpack.c.h.b16 %v138
  %v1292 = vunpack.c.l.b16 %v139
  %v1293 = vunpack.c.h.b16 %v139
  %v1294 = vunpack.c.l.b16 %v140
  %v1295 = vunpack.c.h.b16 %v140
  %v1296 = vunpack.c.l.b16 %v141
  %v1297 = vunpack.c.h.b16 %v141
  %v1298 = vunpack.c.l.b16 %v142
  %v1299 = vunpack.c.h.b16 %v142
  %v1300 = vunpack.c.l.b16 %v143
  %v1301 = vunpack.c.h.b16 %v143
  %v1302 = vunpack.c.l.b16 %v144
  %v1303 = vunpack.c.h.b16 %v144
  %v1304 = vunpack.c.l.b16 %v145
  %v1305 = vunpack.c.h.b16 %v145
  %v1306 = vunpack.c.l.b16 %v146
  %v1307 = vunpack.c.h.b16 %v146
  %v1308 = vunpack.c.l.b16 %v147
  %v1309 = vunpack.c.h.b16 %v147
  %v1310 = vunpack.c.l.b16 %v148
  %v1311 = vunpack.c.h.b16 %v148
  %v1312 = vunpack.c.l.b16 %v149
  %v1313 = vunpack.c.h.b16 %v149
  %v1314 = vunpack.c.l.b16 %v150
  %v1315 = vunpack.c.h.b16 %v150
  %v1316 = vunpack.c.l.b16 %v151
  %v1317 = vunpack.c.h.b16 %v151
  %v1318 = vunpack.c.l.b16 %v152
  %v1319 = vunpack.c.h.b16 %v152
  %v1320 = vunpack.c.l.b16 %v153
  %v1321 = vunpack.c.h.b16 %v153
  %v1322 = vunpack.c.l.b16 %v154
  %v1323 = vunpack.c.h.b16 %v154
  %v1324 = vunpack.c.l.b16 %v155
  %v1325 = vunpack.c.h.b16 %v155
  %v1326 = vunpack.c.l.b16 %v156
  %v1327 = vunpack.c.h.b16 %v156
  %v1328 = vunpack.c.l.b16 %v157
  %v1329 = vunpack.c.h.b16 %v157
  %v1330 = vunpack.c.l.b16 %v158
  %v1331 = vunpack.c.h.b16 %v158
  %v1332 = vunpack.c.l.b16 %v159
  %v1333 = vunpack.c.h.b16 %v159
  %v1334 = vunpack.c.l.b16 %v160
  %v1335 = vunpack.c.h.b16 %v160
  %v1336 = vunpack.c.l.b16 %v161
  %v1337 = vunpack.c.h.b16 %v161
  %v1338 = vunpack.c.l.b16 %v162
  %v1339 = vunpack.c.h.b16 %v162
  %v1340 = vunpack.c.l.b16 %v163
  %v1341 = vunpack.c.h.b16 %v163
  %v1342 = vunpack.c.l.b16 %v164
  %v1343 = vunpack.c.h.b16 %v164
  %v1344 = vunpack.c.l.b16 %v165
  %v1345 = vunpack.c.h.b16 %v165
  %v1346 = vunpack.c.l.b16 %v166
  %v1347 = vunpack.c.h.b16 %v166
  %v1348 = vunpack.c.l.b16 %v167
  %v1349 = vunpack.c.h.b16 %v167
  %v1350 = vunpack.c.l.b16 %v168
  %v1351 = vunpack.c.h.b16 %v168
  %v1352 = vunpack.c.l.b16 %v169
  %v1353 = vunpack.c.h.b16 %v169
  %v1354 = vunpack.c.l.b16 %v170
  %v1355 = vunpack.c.h.b16 %v170
  %v1356 = vunpack.c.l.b16 %v171
  %v1357 = vunpack.c.h.b16 %v171
  %v1358 = vunpack.c.l.b16 %v172
  %v1359 = vunpack.c.h.b16 %v172
  %v1360 = vunpack.c.l.b16 %v173
  %v1361 = vunpack.c.h.b16 %v173
  %v1362 = vunpack.c.l.b16 %v174
  %v1363 = vunpack.c.h.b16 %v174
  %v1364 = vunpack.c.l.b16 %v175
  %v1365 = vunpack.c.h.b16 %v175
  %v1366 = vunpack.c.l.b16 %v176
  %v1367 = vunpack.c.h.b16 %v176
  %v1368 = vunpack.c.l.b16 %v177
  %v1369 = vunpack.c.h.b16 %v177
  %v1370 = vunpack.c.l.b16 %v178
  %v1371 = vunpack.c.h.b16 %v178
  %v1372 = vunpack.c.l.b16 %v179
  %v1373 = vunpack.c.h.b16 %v179
  %v1374 = vunpack.c.l.b16 %v180
  %v1375 = vunpack.c.h.b16 %v180
  %v1376 = vunpack.c.l.b16 %v181
  %v1377 = vunpack.c.h.b16 %v181
  %v1378 = vunpack.c.l.b16 %v182
  %v1379 = vunpack.c.h.b16 %v182
  %v1380 = vunpack.c.l.b16 %v183
  %v1381 = vunpack.c.h.b16 %v183
  %v1382 = vunpack.c.l.b16 %v184
  %v1383 = vunpack.c.h.b16 %v184
  %v1384 = vunpack.c.l.b16 %v185
  %v1385 = vunpack.c.h.b16 %v185
  %v1386 = vunpack.c.l.b16 %v186
  %v1387 = vunpack.c.h.b16 %v186
  %v1388 = vunpack.c.l.b16 %v187
  %v1389 = vunpack.c.h.b16 %v187
  %v1390 = vunpack.c.l.b16 %v188
  %v1391 = vunpack.c.h.b16 %v188
  %v1392 = vunpack.c.l.b16 %v189
  %v1393 = vunpack.c.h.b16 %v189
  %v1394 = vunpack.c.l.b16 %v190
  %v1395 = vunpack.c.h.b16 %v190
  %v1396 = vunpack.c.l.b16 %v191
  %v1397 = vunpack.c.h.b16 %v191
  %v1398 = vunpack.c.l.b16 %v192
  %v1399 = vunpack.c.h.b16 %v192
  %v1400 = vunpack.c.l.b16 %v193
  %v1401 = vunpack.c.h.b16 %v193
  %v1402 = vunpack.c.l.b16 %v194
  %v1403 = vunpack.c.h.b16 %v194
  %v1404 = vunpack.c.l.b16 %v195
  %v1405 = vunpack.c.h.b16 %v195
  %v1406 = vunpack.c.l.b16 %v196
  %v1407 = vunpack.c.h.b16 %v196
  %v1408 = vunpack.c.l.b16 %v197
  %v1409 = vunpack.c.h.b16 %v197
  %v1410 = vunpack.c.l.b16 %v198
  %v1411 = vunpack.c.h.b16 %v198
  %v1412 = vunpack.c.l.b16 %v199
  %v1413 = vunpack.c.h.b16 %v199
  %v1414 = vunpack.c.l.b16 %v200
  %v1415 = vunpack.c.h.b16 %v200
  %v1416 = vunpack.c.l.b16 %v201
  %v1417 = vunpack.c.h.b16 %v201
  %v1418 = vunpack.c.l.b16 %v202
  %v1419 = vunpack.c.h.b16 %v202
  %v1420 = vunpack.c.l.b16 %v203
  %v1421 = vunpack.c.h.b16 %v203
  %v1422 = vunpack.c.l.b16 %v204
  %v1423 = vunpack.c.h.b16 %v204
  %v1424 = vunpack.c.l.b16 %v205
  %v1425 = vunpack.c.h.b16 %v205
  %v1426 = vunpack.c.l.b16 %v206
  %v1427 = vunpack.c.h.b16 %v206
  %v1428 = vunpack.c.l.b16 %v207
  %v1429 = vunpack.c.h.b16 %v207
  %v1430 = vunpack.c.l.b16 %v208
  %v1431 = vunpack.c.h.b16 %v208
  %v1432 = vunpack.c.l.b16 %v209
  %v1433 = vunpack.c.h.b16 %v209
  %v1434 = vunpack.c.l.b16 %v210
  %v1435 = vunpack.c.h.b16 %v210
  %v1436 = vunpack.c.l.b16 %v211
  %v1437 = vunpack.c.h.b16 %v211
  %v1438 = vunpack.c.l.b16 %v212
  %v1439 = vunpack.c.h.b16 %v212
  %v1440 = vunpack.c.l.b16 %v213
  %v1441 = vunpack.c.h.b16 %v213
  %v1442 = vunpack.c.l.b16 %v214
  %v1443 = vunpack.c.h.b16 %v214
  %v1444 = vunpack.c.l.b16 %v215
  %v1445 = vunpack.c.h.b16 %v215
  %v1446 = vunpack.c.l.b16 %v216
  %v1447 = vunpack.c.h.b16 %v216
  %v1448 = vunpack.c.l.b16 %v217
  %v1449 = vunpack.c.h.b16 %v217
  %v1450 = vunpack.c.l.b16 %v218
  %v1451 = vunpack.c.h.b16 %v218
  %v1452 = vunpack.c.l.b16 %v219
  %v1453 = vunpack.c.h.b16 %v219
  %v1454 = vunpack.c.l.b16 %v220
  %v1455 = vunpack.c.h.b16 %v220
  %v1456 = vunpack.c.l.b16 %v221
  %v1457 = vunpack.c.h.b16 %v221
  %v1458 = vunpack.c.l.b16 %v222
  %v1459 = vunpack.c.h.b16 %v222
  %v1460 = vunpack.c.l.b16 %v223
  %v1461 = vunpack.c.h.b16 %v223
  %v1462 = vunpack.c.l.b16 %v224
  %v1463 = vunpack.c.h.b16 %v224
  %v1464 = vunpack.c.l.b16 %v225
  %v1465 = vunpack.c.h.b16 %v225
  %v1466 = vunpack.c.l.b16 %v226
  %v1467 = vunpack.c.h.b16 %v226
  %v1468 = vunpack.c.l.b16 %v227
  %v1469 = vunpack.c.h.b16 %v227
  %v1470 = vunpack.c.l.b16 %v228
  %v1471 = vunpack.c.h.b16 %v228
  %v1472 = vunpack.c.l.b16 %v229
  %v1473 = vunpack.c.h.b16 %v229
  %v1474 = vunpack.c.l.b16 %v230
  %v1475 = vunpack.c.h.b16 %v230
  %v1476 = vunpack.c.l.b16 %v231
  %v1477 = vunpack.c.h.b16 %v231
  %v1478 = vunpack.c.l.b16 %v232
  %v1479 = vunpack.c.h.b16 %v232
  %v1480 = vunpack.c.l.b16 %v233
  %v1481 = vunpack.c.h.b16 %v233
  %v1482 = vunpack.c.l.b16 %v234
  %v1483 = vunpack.c.h.b16 %v234
  %v1484 = vunpack.c.l.b16 %v235
  %v1485 = vunpack.c.h.b16 %v235
  %v1486 = vunpack.c.l.b16 %v236
  %v1487 = vunpack.c.h.b16 %v236
  %v1488 = vunpack.c.l.b16 %v237
  %v1489 = vunpack.c.h.b16 %v237
  %v1490 = vunpack.c.l.b16 %v238
  %v1491 = vunpack.c.h.b16 %v238
  %v1492 = vunpack.c.l.b16 %v239
  %v1493 = vunpack.c.h.b16 %v239
  %v1494 = vunpack.c.l.b16 %v240
  %v1495 = vunpack.c.h.b16 %v240
  %v1496 = vunpack.c.l.b16 %v241
  %v1497 = vunpack.c.h.b16 %v241
  %v1498 = vunpack.c.l.b16 %v242
  %v1499 = vunpack.c.h.b16 %v242
  %v1500 = vunpack.c.l.b16 %v243
  %v1501 = vunpack.c.h.b16 %v243
  %v1502 = vunpack.c.l.b16 %v244
  %v1503 = vunpack.c.h.b16 %v244
  %v1504 = vunpack.c.l.b16 %v245
  %v1505 = vunpack.c.h.b16 %v245
  %v1506 = vunpack.c.l.b16 %v246
  %v1507 = vunpack.c.h.b16 %v246
  %v1508 = vunpack.c.l.b16 %v247
  %v1509 = vunpack.c.h.b16 %v247
  %v1510 = vunpack.c.l.b16 %v248
  %v1511 = vunpack.c.h.b16 %v248
  %v1512 = vunpack.c.l.b16 %v249
  %v1513 = vunpack.c.h.b16 %v249
  %v1514 = vunpack.c.l.b16 %v250
  %v1515 = vunpack.c.h.b16 %v250
  %v1516 = vunpack.c.l.b16 %v251
  %v1517 = vunpack.c.h.b16 %v251
  %v1518 = vunpack.c.l.b16 %v252
  %v1519 = vunpack.c.h.b16 %v252
  %v1520 = vunpack.c.l.b16 %v253
  %v1521 = vunpack.c.h.b16 %v253
  %v1522 = vunpack.c.l.b16 %v254
  %v1523 = vunpack.c.h.b16 %v254
  %v1524 = vunpack.c.l.b16 %v255
  %v1525 = vunpack.c.h.b16 %v255
  %v1526 = vunpack.c.l.b16 %v256
  %v1527 = vunpack.c.h.b16 %v256
  %v1528 = vunpack.c.l.b16 %v257
  %v1529 = vunpack.c.h.b16 %v257
  %v1530 = vunpack.c.l.b16 %v258
  %v1531 = vunpack.c.h.b16 %v258
  %v1532 = vunpack.c.l.b16 %v259
  %v1533 = vunpack.c.h.b16 %v259
  %v1534 = vunpack.c.l.b16 %v260
  %v1535 = vunpack.c.h.b16 %v260
  %v1536 = vunpack.c.l.b16 %v261
  %v1537 = vunpack.c.h.b16 %v261
  %v1538 = vunpack.c.l.b16 %v262
  %v1539 = vunpack.c.h.b16 %v262
  %v1540 = vunpack.c.l.b16 %v263
  %v1541 = vunpack.c.h.b16 %v263
  %v1542 = vunpack.c.l.b16 %v264
  %v1543 = vunpack.c.h.b16 %v264
  %v1544 = vunpack.c.l.b16 %v265
  %v1545 = vunpack.c.h.b16 %v265
  %v1546 = vunpack.c.l.b16 %v266
  %v1547 = vunpack.c.h.b16 %v266
  %v1548 = vunpack.c.l.b16 %v267
  %v1549 = vunpack.c.h.b16 %v267
  %v1550 = vunpack.c.l.b16 %v268
  %v1551 = vunpack.c.h.b16 %v268
  %v1552 = vunpack.c.l.b16 %v269
  %v1553 = vunpack.c.h.b16 %v269
  %v1554 = vunpack.c.l.b16 %v270
  %v1555 = vunpack.c.h.b16 %v270
  %v1556 = vunpack.c.l.b16 %v271
  %v1557 = vunpack.c.h.b16 %v271
  %v1558 = vunpack.c.l.b16 %v272
  %v1559 = vunpack.c.h.b16 %v272
  %v1560 = vunpack.c.l.b16 %v273
  %v1561 = vunpack.c.h.b16 %v273
  %v1562 = vunpack.c.l.b16 %v274
  %v1563 = vunpack.c.h.b16 %v274
  %v1564 = vunpack.c.l.b16 %v275
  %v1565 = vunpack.c.h.b16 %v275
  %v1566 = vunpack.c.l.b16 %v276
  %v1567 = vunpack.c.h.b16 %v276
  %v1568 = vunpack.c.l.b16 %v277
  %v1569 = vunpack.c.h.b16 %v277
  %v1570 = vunpack.c.l.b16 %v278
  %v1571 = vunpack.c.h.b16 %v278
  %v1572 = vunpack.c.l.b16 %v279
  %v1573 = vunpack.c.h.b16 %v279
  %v1574 = vunpack.c.l.b16 %v280
  %v1575 = vunpack.c.h.b16 %v280
  %v1576 = vunpack.c.l.b16 %v281
  %v1577 = vunpack.c.h.b16 %v281
  %v1578 = vunpack.c.l.b16 %v282
  %v1579 = vunpack.c.h.b16 %v282
  %v1580 = vunpack.c.l.b16 %v283
  %v1581 = vunpack.c.h.b16 %v283
  %v1582 = vunpack.c.l.b16 %v284
  %v1583 = vunpack.c.h.b16 %v284
  %v1584 = vunpack.c.l.b16 %v285
  %v1585 = vunpack.c.h.b16 %v285
  %v1586 = vunpack.c.l.b16 %v286
  %v1587 = vunpack.c.h.b16 %v286
  %v1588 = vunpack.c.l.b16 %v287
  %v1589 = vunpack.c.h.b16 %v287
  %v1590 = vunpack.c.l.b16 %v288
  %v1591 = vunpack.c.h.b16 %v288
  %v1592 = vunpack.c.l.b16 %v289
  %v1593 = vunpack.c.h.b16 %v289
  %v1594 = vunpack.c.l.b16 %v290
  %v1595 = vunpack.c.h.b16 %v290
  %v1596 = vunpack.c.l.b16 %v291
  %v1597 = vunpack.c.h.b16 %v291
  %v1598 = vunpack.c.l.b16 %v292
  %v1599 = vunpack.c.h.b16 %v292
  %v1600 = vunpack.c.l.b16 %v293
  %v1601 = vunpack.c.h.b16 %v293
  %v1602 = vunpack.c.l.b16 %v294
  %v1603 = vunpack.c.h.b16 %v294
  %v1604 = vunpack.c.l.b16 %v295
  %v1605 = vunpack.c.h.b16 %v295
  %v1606 = vunpack.c.l.b16 %v296
  %v1607 = vunpack.c.h.b16 %v296
  %v1608 = vunpack.c.l.b16 %v297
  %v1609 = vunpack.c.h.b16 %v297
  %v1610 = vunpack.c.l.b16 %v298
  %v1611 = vunpack.c.h.b16 %v298
  %v1612 = vunpack.c.l.b16 %v299
  %v1613 = vunpack.c.h.b16 %v299
  %v1614 = vunpack.c.l.b16 %v300
  %v1615 = vunpack.c.h.b16 %v300
  %v1616 = vunpack.c.l.b16 %v301
  %v1617 = vunpack.c.h.b16 %v301
  %v1618 = vunpack.c.l.b16 %v302
  %v1619 = vunpack.c.h.b16 %v302
  %v1620 = vunpack.c.l.b16 %v303
  %v1621 = vunpack.c.h.b16 %v303
  %v1622 = vunpack.c.l.b16 %v304
  %v1623 = vunpack.c.h.b16 %v304
  %v1624 = vunpack.c.l.b16 %v305
  %v1625 = vunpack.c.h.b16 %v305
  %v1626 = vunpack.c.l.b16 %v306
  %v1627 = vunpack.c.h.b16 %v306
  %v1628 = vunpack.c.l.b16 %v307
  %v1629 = vunpack.c.h.b16 %v307
  %v1630 = vunpack.c.l.b16 %v308
  %v1631 = vunpack.c.h.b16 %v308
  %v1632 = vunpack.c.l.b16 %v309
  %v1633 = vunpack.c.h.b16 %v309
  %v1634 = vunpack.c.l.b16 %v310
  %v1635 = vunpack.c.h.b16 %v310
  %v1636 = vunpack.c.l.b16 %v311
  %v1637 = vunpack.c.h.b16 %v311
  %v1638 = vunpack.c.l.b16 %v312
  %v1639 = vunpack.c.h.b16 %v312
  %v1640 = vunpack.c.l.b16 %v313
  %v1641 = vunpack.c.h.b16 %v313
  %v1642 = vunpack.c.l.b16 %v314
  %v1643 = vunpack.c.h.b16 %v314
  %v1644 = vunpack.c.l.b16 %v315
  %v1645 = vunpack.c.h.b16 %v315
  %v1646 = vunpack.c.l.b16 %v316
  %v1647 = vunpack.c.h.b16 %v316
  %v1648 = vunpack.c.l.b16 %v317
  %v1649 = vunpack.c.h.b16 %v317
  %v1650 = vunpack.c.l.b16 %v318
  %v1651 = vunpack.c.h.b16 %v318
  %v1652 = vunpack.c.l.b16 %v319
  %v1653 = vunpack.c.h.b16 %v319
  %v1654 = vunpack.c.l.b16 %v320
  %v1655 = vunpack.c.h.b16 %v320
  %v1656 = vunpack.c.l.b16 %v321
  %v1657 = vunpack.c.h.b16 %v321
  %v1658 = vunpack.c.l.b16 %v322
  %v1659 = vunpack.c.h.b16 %v322
  %v1660 = vunpack.c.l.b16 %v323
  %v1661 = vunpack.c.h.b16 %v323
  %v1662 = vunpack.c.l.b16 %v324
  %v1663 = vunpack.c.h.b16 %v324
  %v1664 = vunpack.c.l.b16 %v325
  %v1665 = vunpack.c.h.b16 %v325
  %v1666 = vunpack.c.l.b16 %v326
  %v1667 = vunpack.c.h.b16 %v326
  %v1668 = vunpack.c.l.b16 %v327
  %v1669 = vunpack.c.h.b16 %v327
  %v1670 = vunpack.c.l.b16 %v328
  %v1671 = vunpack.c.h.b16 %v328
  %v1672 = vunpack.c.l.b16 %v329
  %v1673 = vunpack.c.h.b16 %v329
  %v1674 = vunpack.c.l.b16 %v330
  %v1675 = vunpack.c.h.b16 %v330
  %v1676 = vunpack.c.l.b16 %v331
  %v1677 = vunpack.c.h.b16 %v331
  %v1678 = vunpack.c.l.b16 %v332
  %v1679 = vunpack.c.h.b16 %v332
  %v1680 = vunpack.c.l.b16 %v333
  %v1681 = vunpack.c.h.b16 %v333
  %v1682 = vunpack.c.l.b16 %v334
  %v1683 = vunpack.c.h.b16 %v334
  %v1684 = vunpack.c.l.b16 %v335
  %v1685 = vunpack.c.h.b16 %v335
  %v1686 = vunpack.c.l.b16 %v336
  %v1687 = vunpack.c.h.b16 %v336
  %v1688 = vunpack.c.l.b16 %v337
  %v1689 = vunpack.c.h.b16 %v337
  %v1690 = vunpack.c.l.b16 %v338
  %v1691 = vunpack.c.h.b16 %v338
  %v1692 = vunpack.c.l.b16 %v339
  %v1693 = vunpack.c.h.b16 %v339
  %v1694 = vunpack.c.l.b16 %v340
  %v1695 = vunpack.c.h.b16 %v340
  %v1696 = vunpack.c.l.b16 %v341
  %v1697 = vunpack.c.h.b16 %v341
  %v1698 = vunpack.c.l.b16 %v342
  %v1699 = vunpack.c.h.b16 %v342
  %v1700 = vunpack.c.l.b16 %v343
  %v1701 = vunpack.c.h.b16 %v343
  %v1702 = vunpack.c.l.b16 %v344
  %v1703 = vunpack.c.h.b16 %v344
  %v1704 = vunpack.c.l.b16 %v345
  %v1705 = vunpack.c.h.b16 %v345
  %v1706 = vunpack.c.l.b16 %v346
  %v1707 = vunpack.c.h.b16 %v346
  %v1708 = vunpack.c.l.b16 %v347
  %v1709 = vunpack.c.h.b16 %v347
  %v1710 = vunpack.c.l.b16 %v348
  %v1711 = vunpack.c.h.b16 %v348
  %v1712 = vunpack.c.l.b16 %v349
  %v1713 = vunpack.c.h.b16 %v349
  %v1714 = vunpack.c.l.b16 %v350
  %v1715 = vunpack.c.h.b16 %v350
  %v1716 = vunpack.c.l.b16 %v351
  %v1717 = vunpack.c.h.b16 %v351
  %v1718 = vunpack.c.l.b16 %v352
  %v1719 = vunpack.c.h.b16 %v352
  %v1720 = vunpack.c.l.b16 %v353
  %v1721 = vunpack.c.h.b16 %v353
  %v1722 = vunpack.c.l.b16 %v354
  %v1723 = vunpack.c.h.b16 %v354
  %v1724 = vunpack.c.l.b16 %v355
  %v1725 = vunpack.c.h.b16 %v355
  %v1726 = vunpack.c.l.b16 %v356
  %v1727 = vunpack.c.h.b16 %v356
  %v1728 = vunpack.c.l.b16 %v357
  %v1729 = vunpack.c.h.b16 %v357
  %v1730 = vunpack.c.l.b16 %v358
  %v1731 = vunpack.c.h.b16 %v358
  %v1732 = vunpack.c.l.b16 %v359
  %v1733 = vunpack.c.h.b16 %v359
  %v1734 = vunpack.c.l.b16 %v360
  %v1735 = vunpack.c.h.b16 %v360
  %v1736 = vunpack.c.l.b16 %v361
  %v1737 = vunpack.c.h.b16 %v361
  %v1738 = vunpack.c.l.b16 %v362
  %v1739 = vunpack.c.h.b16 %v362
  %v1740 = vunpack.c.l.b16 %v363
  %v1741 = vunpack.c.h.b16 %v363
  %v1742 = vunpack.c.l.b16 %v364
  %v1743 = vunpack.c.h.b16 %v364
  %v1744 = vunpack.c.l.b16 %v365
  %v1745 = vunpack.c.h.b16 %v365
  %v1746 = vunpack.c.l.b16 %v366
  %v1747 = vunpack.c.h.b16 %v366
  %v1748 = vunpack.c.l.b16 %v367
  %v1749 = vunpack.c.h.b16 %v367
  %v1750 = vunpack.c.l.b16 %v368
  %v1751 = vunpack.c.h.b16 %v368
  %v1752 = vunpack.c.l.b16 %v369
  %v1753 = vunpack.c.h.b16 %v369
  %v1754 = vunpack.c.l.b16 %v370
  %v1755 = vunpack.c.h.b16 %v370
  %v1756 = vunpack.c.l.b16 %v371
  %v1757 = vunpack.c.h.b16 %v371
  %v1758 = vunpack.c.l.b16 %v372
  %v1759 = vunpack.c.h.b16 %v372
  %v1760 = vunpack.c.l.b16 %v373
  %v1761 = vunpack.c.h.b16 %v373
  %v1762 = vunpack.c.l.b16 %v374
  %v1763 = vunpack.c.h.b16 %v374
  %v1764 = vunpack.c.l.b16 %v375
  %v1765 = vunpack.c.h.b16 %v375
  %v1766 = vunpack.c.l.b16 %v376
  %v1767 = vunpack.c.h.b16 %v376
  %v1768 = vunpack.c.l.b16 %v377
  %v1769 = vunpack.c.h.b16 %v377
  %v1770 = vunpack.c.l.b16 %v378
  %v1771 = vunpack.c.h.b16 %v378
  %v1772 = vunpack.c.l.b16 %v379
  %v1773 = vunpack.c.h.b16 %v379
  %v1774 = vunpack.c.l.b16 %v380
  %v1775 = vunpack.c.h.b16 %v380
  %v1776 = vunpack.c.l.b16 %v381
  %v1777 = vunpack.c.h.b16 %v381
  %v1778 = vunpack.c.l.b16 %v382
  %v1779 = vunpack.c.h.b16 %v382
  %v1780 = vunpack.c.l.b16 %v383
  %v1781 = vunpack.c.h.b16 %v383
  %v1782 = vunpack.c.l.b16 %v384
  %v1783 = vunpack.c.h.b16 %v384
  %v1784 = vunpack.c.l.b16 %v385
  %v1785 = vunpack.c.h.b16 %v385
  %v1786 = vunpack.c.l.b16 %v386
  %v1787 = vunpack.c.h.b16 %v386
  %v1788 = vunpack.c.l.b16 %v387
  %v1789 = vunpack.c.h.b16 %v387
  %v1790 = vunpack.c.l.b16 %v388
  %v1791 = vunpack.c.h.b16 %v388
  %v1792 = vunpack.c.l.b16 %v389
  %v1793 = vunpack.c.h.b16 %v389
  %v1794 = vunpack.c.l.b16 %v390
  %v1795 = vunpack.c.h.b16 %v390
  %v1796 = vunpack.c.l.b16 %v391
  %v1797 = vunpack.c.h.b16 %v391
  %v1798 = vunpack.c.l.b16 %v392
  %v1799 = vunpack.c.h.b16 %v392
  %v1800 = vunpack.c.l.b16 %v393
  %v1801 = vunpack.c.h.b16 %v393
  %v1802 = vunpack.c.l.b16 %v394
  %v1803 = vunpack.c.h.b16 %v394
  %v1804 = vunpack.c.l.b16 %v395
  %v1805 = vunpack.c.h.b16 %v395
  %v1806 = vunpack.c.l.b16 %v396
  %v1807 = vunpack.c.h.b16 %v396
  %v1808 = vunpack.c.l.b16 %v397
  %v1809 = vunpack.c.h.b16 %v397
  %v1810 = vunpack.c.l.b16 %v398
  %v1811 = vunpack.c.h.b16 %v398
  %v1812 = vunpack.c.l.b16 %v399
  %v1813 = vunpack.c.h.b16 %v399
  %v1814 = vunpack.c.l.b16 %v400
  %v1815 = vunpack.c.h.b16 %v400
  %v1816 = vunpack.c.l.b16 %v401
  %v1817 = vunpack.c.h.b16 %v401
  %v1818 = vunpack.c.l.b16 %v402
  %v1819 = vunpack.c.h.b16 %v402
  %v1820 = vunpack.c.l.b16 %v403
  %v1821 = vunpack.c.h.b16 %v403
  %v1822 = vunpack.c.l.b16 %v404
  %v1823 = vunpack.c.h.b16 %v404
  %v1824 = vunpack.c.l.b16 %v405
  %v1825 = vunpack.c.h.b16 %v405
  %v1826 = vunpack.c.l.b16 %v406
  %v1827 = vunpack.c.h.b16 %v406
  %v1828 = vunpack.c.l.b16 %v407
  %v1829 = vunpack.c.h.b16 %v407
  %v1830 = vunpack.c.l.b16 %v408
  %v1831 = vunpack.c.h.b16 %v408
  %v1832 = vunpack.c.l.b16 %v409
  %v1833 = vunpack.c.h.b16 %v409
  %v1834 = vunpack.c.l.b16 %v410
  %v1835 = vunpack.c.h.b16 %v410
  %v1836 = vunpack.c.l.b16 %v411
  %v1837 = vunpack.c.h.b16 %v411
  %v1838 = vunpack.c.l.b16 %v412
  %v1839 = vunpack.c.h.b16 %v412
  %v1840 = vunpack.c.l.b16 %v413
  %v1841 = vunpack.c.h.b16 %v413
  %v1842 = vunpack.c.l.b16 %v414
  %v1843 = vunpack.c.h.b16 %v414
  %v1844 = vunpack.c.l.b16 %v415
  %v1845 = vunpack.c.h.b16 %v415
  %v1846 = vunpack.c.l.b16 %v416
  %v1847 = vunpack.c.h.b16 %v416
  %v1848 = vunpack.c.l.b16 %v417
  %v1849 = vunpack.c.h.b16 %v417
  %v1850 = vunpack.c.l.b16 %v418
  %v1851 = vunpack.c.h.b16 %v418
  %v1852 = vunpack.c.l.b16 %v419
  %v1853 = vunpack.c.h.b16 %v419
  %v1854 = vunpack.c.l.b16 %v420
  %v1855 = vunpack.c.h.b16 %v420
  %v1856 = vunpack.c.l.b16 %v421
  %v1857 = vunpack.c.h.b16 %v421
  %v1858 = vunpack.c.l.b16 %v422
  %v1859 = vunpack.c.h.b16 %v422
  %v1860 = vunpack.c.l.b16 %v423
  %v1861 = vunpack.c.h.b16 %v423
  %v1862 = vunpack.c.l.b16 %v424
  %v1863 = vunpack.c.h.b16 %v424
  %v1864 = vunpack.c.l.b16 %v425
  %v1865 = vunpack.c.h.b16 %v425
  %v1866 = vunpack.c.l.b16 %v426
  %v1867 = vunpack.c.h.b16 %v426
  %v1868 = vunpack.c.l.b16 %v427
  %v1869 = vunpack.c.h.b16 %v427
  %v1870 = vunpack.c.l.b16 %v428
  %v1871 = vunpack.c.h.b16 %v428
  %v1872 = vunpack.c.l.b16 %v429
  %v1873 = vunpack.c.h.b16 %v429
  %v1874 = vunpack.c.l.b16 %v430
  %v1875 = vunpack.c.h.b16 %v430
  %v1876 = vunpack.c.l.b16 %v431
  %v1877 = vunpack.c.h.b16 %v431
  %v1878 = vunpack.c.l.b16 %v432
  %v1879 = vunpack.c.h.b16 %v432
  %v1880 = vunpack.c.l.b16 %v433
  %v1881 = vunpack.c.h.b16 %v433
  %v1882 = vunpack.c.l.b16 %v434
  %v1883 = vunpack.c.h.b16 %v434
  %v1884 = vunpack.c.l.b16 %v435
  %v1885 = vunpack.c.h.b16 %v435
  %v1886 = vunpack.c.l.b16 %v436
  %v1887 = vunpack.c.h.b16 %v436
  %v1888 = vunpack.c.l.b16 %v437
  %v1889 = vunpack.c.h.b16 %v437
  %v1890 = vunpack.c.l.b16 %v438
  %v1891 = vunpack.c.h.b16 %v438
  %v1892 = vunpack.c.l.b16 %v439
  %v1893 = vunpack.c.h.b16 %v439
  %v1894 = vunpack.c.l.b16 %v440
  %v1895 = vunpack.c.h.b16 %v440
  %v1896 = vunpack.c.l.b16 %v441
  %v1897 = vunpack.c.h.b16 %v441
  %v1898 = vunpack.c.l.b16 %v442
  %v1899 = vunpack.c.h.b16 %v442
  %v1900 = vunpack.c.l.b16 %v443
  %v1901 = vunpack.c.h.b16 %v443
  %v1902 = vunpack.c.l.b16 %v444
  %v1903 = vunpack.c.h.b16 %v444
  %v1904 = vunpack.c.l.b16 %v445
  %v1905 = vunpack.c.h.b16 %v445
  %v1906 = vunpack.c.l.b16 %v446
  %v1907 = vunpack.c.h.b16 %v446
  %v1908 = vunpack.c.l.b16 %v447
  %v1909 = vunpack.c.h.b16 %v447
  %v1910 = vunpack.c.l.b16 %v448
  %v1911 = vunpack.c.h.b16 %v448
  %v1912 = vunpack.c.l.b16 %v449
  %v1913 = vunpack.c.h.b16 %v449
  %v1914 = vunpack.c.l.b16 %v450
  %v1915 = vunpack.c.h.b16 %v450
  %v1916 = vunpack.c.l.b16 %v451
  %v1917 = vunpack.c.h.b16 %v451
  %v1918 = vunpack.c.l.b16 %v452
  %v1919 = vunpack.c.h.b16 %v452
  %v1920 = vunpack.c.l.b16 %v453
  %v1921 = vunpack.c.h.b16 %v453
  %v1922 = vunpack.c.l.b16 %v454
  %v1923 = vunpack.c.h.b16 %v454
  %v1924 = vunpack.c.l.b16 %v455
  %v1925 = vunpack.c.h.b16 %v455
  %v1926 = vunpack.c.l.b16 %v456
  %v1927 = vunpack.c.h.b16 %v456
  %v1928 = vunpack.c.l.b16 %v457
  %v1929 = vunpack.c.h.b16 %v457
  %v1930 = vunpack.c.l.b16 %v458
  %v1931 = vunpack.c.h.b16 %v458
  %v1932 = vunpack.c.l.b16 %v459
  %v1933 = vunpack.c.h.b16 %v459
  %v1934 = vunpack.c.l.b16 %v460
  %v1935 = vunpack.c.h.b16 %v460
  %v1936 = vunpack.c.l.b16 %v461
  %v1937 = vunpack.c.h.b16 %v461
  %v1938 = vunpack.c.l.b16 %v462
  %v1939 = vunpack.c.h.b16 %v462
  %v1940 = vunpack.c.l.b16 %v463
  %v1941 = vunpack.c.h.b16 %v463
  %v1942 = vunpack.c.l.b16 %v464
  %v1943 = vunpack.c.h.b16 %v464
  %v1944 = vunpack.c.l.b16 %v465
  %v1945 = vunpack.c.h.b16 %v465
  %v1946 = vunpack.c.l.b16 %v466
  %v1947 = vunpack.c.h.b16 %v466
  %v1948 = vunpack.c.l.b16 %v467
  %v1949 = vunpack.c.h.b16 %v467
  %v1950 = vunpack.c.l.b16 %v468
  %v1951 = vunpack.c.h.b16 %v468
  %v1952 = vunpack.c.l.b16 %v469
  %v1953 = vunpack.c.h.b16 %v469
  %v1954 = vunpack.c.l.b16 %v470
  %v1955 = vunpack.c.h.b16 %v470
  %v1956 = vunpack.c.l.b16 %v471
  %v1957 = vunpack.c.h.b16 %v471
  %v1958 = vunpack.c.l.b16 %v472
  %v1959 = vunpack.c.h.b16 %v472
  %v1960 = vunpack.c.l.b16 %v473
  %v1961 = vunpack.c.h.b16 %v473
  %v1962 = vunpack.c.l.b16 %v474
  %v1963 = vunpack.c.h.b16 %v474
  %v1964 = vunpack.c.l.b16 %v475
  %v1965 = vunpack.c.h.b16 %v475
  %v1966 = vunpack.c.l.b16 %v476
  %v1967 = vunpack.c.h.b16 %v476
  %v1968 = vunpack.c.l.b16 %v477
  %v1969 = vunpack.c.h.b16 %v477
  %v1970 = vunpack.c.l.b16 %v478
  %v1971 = vunpack.c.h.b16 %v478
  %v1972 = vunpack.c.l.b16 %v479
  %v1973 = vunpack.c.h.b16 %v479
  %v1974 = vunpack.c.l.b16 %v480
  %v1975 = vunpack.c.h.b16 %v480
  %v1976 = vunpack.c.l.b16 %v481
  %v1977 = vunpack.c.h.b16 %v481
  %v1978 = vunpack.c.l.b16 %v482
  %v1979 = vunpack.c.h.b16 %v482
  %v1980 = vunpack.c.l.b16 %v483
  %v1981 = vunpack.c.h.b16 %v483
  %v1982 = vunpack.c.l.b16 %v484
  %v1983 = vunpack.c.h.b16 %v484
  %v1984 = vunpack.c.l.b16 %v485
  %v1985 = vunpack.c.h.b16 %v485
  %v1986 = vunpack.c.l.b16 %v486
  %v1987 = vunpack.c.h.b16 %v486
  %v1988 = vunpack.c.l.b16 %v487
  %v1989 = vunpack.c.h.b16 %v487
  %v1990 = vunpack.c.l.b16 %v488
  %v1991 = vunpack.c.h.b16 %v488
  %v1992 = vunpack.c.l.b16 %v489
  %v1993 = vunpack.c.h.b16 %v489
  %v1994 = vunpack.c.l.b16 %v490
  %v1995 = vunpack.c.h.b16 %v490
  %v1996 = vunpack.c.l.b16 %v491
  %v1997 = vunpack.c.h.b16 %v491
  %v1998 = vunpack.c.l.b16 %v492
  %v1999 = vunpack.c.h.b16 %v492
  %v2000 = vunpack.c.l.b16 %v493
  %v2001 = vunpack.c.h.b16 %v493
  %v2002 = vunpack.c.l.b16 %v494
  %v2003 = vunpack.c.h.b16 %v494
  %v2004 = vunpack.c.l.b16 %v495
  %v2005 = vunpack.c.h.b16 %v495
  %v2006 = vunpack.c.l.b16 %v496
  %v2007 = vunpack.c.h.b16 %v496
  %v2008 = vunpack.c.l.b16 %v497
  %v2009 = vunpack.c.h.b16 %v497
  %v2010 = vunpack.c.l.b16 %v498
  %v2011 = vunpack.c.h.b16 %v498
  %v2012 = vunpack.c.l.b16 %v499
  %v2013 = vunpack.c.h.b16 %v499
  %v2014 = vunpack.c.l.b16 %v500
  %v2015 = vunpack.c.h.b16 %v500
  %v2016 = vunpack.c.l.b16 %v501
  %v2017 = vunpack.c.h.b16 %v501
  %v2018 = vunpack.c.l.b16 %v502
  %v2019 = vunpack.c.h.b16 %v502
  %v2020 = vunpack.c.l.b16 %v503
  %v2021 = vunpack.c.h.b16 %v503
  %v2022 = vunpack.c.l.b16 %v504
  %v2023 = vunpack.c.h.b16 %v504
  %v2024 = vunpack.c.l.b16 %v505
  %v2025 = vunpack.c.h.b16 %v505
  %v2026 = vunpack.c.l.b16 %v506
  %v2027 = vunpack.c.h.b16 %v506
  %v2028 = vunpack.c.l.b16 %v507
  %v2029 = vunpack.c.h.b16 %v507
  %v2030 = vunpack.c.l.b16 %v508
  %v2031 = vunpack.c.h.b16 %v508
  %v2032 = vunpack.c.l.b16 %v509
  %v2033 = vunpack.c.h.b16 %v509
  %v2034 = vunpack.c.l.b16 %v510
  %v2035 = vunpack.c.h.b16 %v510
  %v2036 = vunpack.c.l.b16 %v511
  %v2037 = vunpack.c.h.b16 %v511
  %v2038 = vunpack.c.l.b16 %v512
  %v2039 = vunpack.c.h.b16 %v512
  %v2040 = vunpack.c.l.b16 %v513
  %v2041 = vunpack.c.h.b16 %v513
  %v2042 = vunpack.c.l.b16 %v514
  %v2043 = vunpack.c.h.b16 %v514
  %v2044 = vunpack.c.l.b16 %v515
  %v2045 = vunpack.c.h.b16 %v515
  %v2046 = vunpack.c.l.b16 %v516
  %v2047 = vunpack.c.h.b16 %v516
  %v2048 = vunpack.c.l.b16 %v517
  %v2049 = vunpack.c.h.b16 %v517
  %v2050 = vunpack.c.l.b16 %v518
  %v2051 = vunpack.c.h.b16 %v518
  %v2052 = vunpack.c.l.b16 %v519
  %v2053 = vunpack.c.h.b16 %v519
  %v2054 = vunpack.c.l.b16 %v520
  %v2055 = vunpack.c.h.b16 %v520
  %v2056 = vunpack.c.l.b16 %v521
  %v2057 = vunpack.c.h.b16 %v521
  %v2058 = vunpack.c.l.b16 %v522
  %v2059 = vunpack.c.h.b16 %v522
  %v2060 = vunpack.c.l.b16 %v523
  %v2061 = vunpack.c.h.b16 %v523
  %v2062 = vunpack.c.l.b16 %v524
  %v2063 = vunpack.c.h.b16 %v524
  %v2064 = vunpack.c.l.b16 %v525
  %v2065 = vunpack.c.h.b16 %v525
  %v2066 = vunpack.c.l.b16 %v526
  %v2067 = vunpack.c.h.b16 %v526
  %v2068 = vunpack.c.l.b16 %v527
  %v2069 = vunpack.c.h.b16 %v527
  %v2070 = vpack.c.b16 %v1110, %v1046
  %v2071 = vpack.c.b16 %v1111, %v1047
  %v2072 = vpack.c.b16 %v1112, %v1048
  %v2073 = vpack.c.b16 %v1113, %v1049
  %v2074 = vpack.c.b16 %v1114, %v1050
  %v2075 = vpack.c.b16 %v1115, %v1051
  %v2076 = vpack.c.b16 %v1116, %v1052
  %v2077 = vpack.c.b16 %v1117, %v1053
  %v2078 = vpack.c.b16 %v1118, %v1054
  %v2079 = vpack.c.b16 %v1119, %v1055
  %v2080 = vpack.c.b16 %v1120, %v1056
  %v2081 = vpack.c.b16 %v1121, %v1057
  %v2082 = vpack.c.b16 %v1122, %v1058
  %v2083 = vpack.c.b16 %v1123, %v1059
  %v2084 = vpack.c.b16 %v1124, %v1060
  %v2085 = vpack.c.b16 %v1125, %v1061
  %v2086 = vpack.c.b16 %v1126, %v1062
  %v2087 = vpack.c.b16 %v1127, %v1063
  %v2088 = vpack.c.b16 %v1128, %v1064
  %v2089 = vpack.c.b16 %v1129, %v1065
  %v2090 = vpack.c.b16 %v1130, %v1066
  %v2091 = vpack.c.b16 %v1131, %v1067
  %v2092 = vpack.c.b16 %v1132, %v1068
  %v2093 = vpack.c.b16 %v1133, %v1069
  %v2094 = vpack.c.b16 %v1134, %v1070
  %v2095 = vpack.c.b16 %v1135, %v1071
  %v2096 = vpack.c.b16 %v1136, %v1072
  %v2097 = vpack.c.b16 %v1137, %v1073
  %v2098 = vpack.c.b16 %v1138, %v1074
  %v2099 = vpack.c.b16 %v1139, %v1075
  %v2100 = vpack.c.b16 %v1140, %v1076
  %v2101 = vpack.c.b16 %v1141, %v1077
  %v2102 = vpack.c.b16 %v1142, %v1078
  %v2103 = vpack.c.b16 %v1143, %v1079
  %v2104 = vpack.c.b16 %v1144, %v1080
  %v2105 = vpack.c.b16 %v1145, %v1081
  %v2106 = vpack.c.b16 %v1146, %v1082
  %v2107 = vpack.c.b16 %v1147, %v1083
  %v2108 = vpack.c.b16 %v1148, %v1084
  %v2109 = vpack.c.b16 %v1149, %v1085
  %v2110 = vpack.c.b16 %v1150, %v1086
  %v2111 = vpack.c.b16 %v1151, %v1087
  %v2112 = vpack.c.b16 %v1152, %v1088
  %v2113 = vpack.c.b16 %v1153, %v1089
  %v2114 = vpack.c.b16 %v1154, %v1090
  %v2115 = vpack.c.b16 %v1155, %v1091
  %v2116 = vpack.c.b16 %v1156, %v1092
  %v2117 = vpack.c.b16 %v1157, %v1093
  %v2118 = vpack.c.b16 %v1158, %v1094
  %v2119 = vpack.c.b16 %v1159, %v1095
  %v2120 = vpack.c.b16 %v1160, %v1096
  %v2121 = vpack.c.b16 %v1161, %v1097
  %v2122 = vpack.c.b16 %v1162, %v1098
  %v2123 = vpack.c.b16 %v1163, %v1099
  %v2124 = vpack.c.b16 %v1164, %v1100
  %v2125 = vpack.c.b16 %v1165, %v1101
  %v2126 = vpack.c.b16 %v1166, %v1102
  %v2127 = vpack.c.b16 %v1167, %v1103
  %v2128 = vpack.c.b16 %v1168, %v1104
  %v2129 = vpack.c.b16 %v1169, %v1105
  %v2130 = vpack.c.b16 %v1170, %v1106
  %v2131 = vpack.c.b16 %v1171, %v1107
  %v2132 = vpack.c.b16 %v1172, %v1108
  %v2133 = vpack.c.b16 %v1173, %v1109
  %v2134 = vpack.c.b16 %v1238, %v1174
  %v2135 = vpack.c.b16 %v1239, %v1175
  %v2136 = vpack.c.b16 %v1240, %v1176
  %v2137 = vpack.c.b16 %v1241, %v1177
  %v2138 = vpack.c.b16 %v1242, %v1178
  %v2139 = vpack.c.b16 %v1243, %v1179
  %v2140 = vpack.c.b16 %v1244, %v1180
  %v2141 = vpack.c.b16 %v1245, %v1181
  %v2142 = vpack.c.b16 %v1246, %v1182
  %v2143 = vpack.c.b16 %v1247, %v1183
  %v2144 = vpack.c.b16 %v1248, %v1184
  %v2145 = vpack.c.b16 %v1249, %v1185
  %v2146 = vpack.c.b16 %v1250, %v1186
  %v2147 = vpack.c.b16 %v1251, %v1187
  %v2148 = vpack.c.b16 %v1252, %v1188
  %v2149 = vpack.c.b16 %v1253, %v1189
  %v2150 = vpack.c.b16 %v1254, %v1190
  %v2151 = vpack.c.b16 %v1255, %v1191
  %v2152 = vpack.c.b16 %v1256, %v1192
  %v2153 = vpack.c.b16 %v1257, %v1193
  %v2154 = vpack.c.b16 %v1258, %v1194
  %v2155 = vpack.c.b16 %v1259, %v1195
  %v2156 = vpack.c.b16 %v1260, %v1196
  %v2157 = vpack.c.b16 %v1261, %v1197
  %v2158 = vpack.c.b16 %v1262, %v1198
  %v2159 = vpack.c.b16 %v1263, %v1199
  %v2160 = vpack.c.b16 %v1264, %v1200
  %v2161 = vpack.c.b16 %v1265, %v1201
  %v2162 = vpack.c.b16 %v1266, %v1202
  %v2163 = vpack.c.b16 %v1267, %v1203
  %v2164 = vpack.c.b16 %v1268, %v1204
  %v2165 = vpack.c.b16 %v1269, %v1205
  %v2166 = vpack.c.b16 %v1270, %v1206
  %v2167 = vpack.c.b16 %v1271, %v1207
  %v2168 = vpack.c.b16 %v1272, %v1208
  %v2169 = vpack.c.b16 %v1273, %v1209
  %v2170 = vpack.c.b16 %v1274, %v1210
  %v2171 = vpack.c.b16 %v1275, %v1211
  %v2172 = vpack.c.b16 %v1276, %v1212
  %v2173 = vpack.c.b16 %v1277, %v1213
  %v2174 = vpack.c.b16 %v1278, %v1214
  %v2175 = vpack.c.b16 %v1279, %v1215
  %v2176 = vpack.c.b16 %v1280, %v1216
  %v2177 = vpack.c.b16 %v1281, %v1217
  %v2178 = vpack.c.b16 %v1282, %v1218
  %v2179 = vpack.c.b16 %v1283, %v1219
  %v2180 = vpack.c.b16 %v1284, %v1220
  %v2181 = vpack.c.b16 %v1285, %v1221
  %v2182 = vpack.c.b16 %v1286, %v1222
  %v2183 = vpack.c.b16 %v1287, %v1223
  %v2184 = vpack.c.b16 %v1288, %v1224
  %v2185 = vpack.c.b16 %v1289, %v1225
  %v2186 = vpack.c.b16 %v1290, %v1226
  %v2187 = vpack.c.b16 %v1291, %v1227
  %v2188 = vpack.c.b16 %v1292, %v1228
  %v2189 = vpack.c.b16 %v1293, %v1229
  %v2190 = vpack.c.b16 %v1294, %v1230
  %v2191 = vpack.c.b16 %v1295, %v1231
  %v2192 = vpack.c.b16 %v1296, %v1232
  %v2193 = vpack.c.b16 %v1297, %v1233
  %v2194 = vpack.c.b16 %v1298, %v1234
  %v2195 = vpack.c.b16 %v1299, %v1235
  %v2196 = vpack.c.b16 %v1300, %v1236
  %v2197 = vpack.c.b16 %v1301, %v1237
  %v2198 = vpack.c.b16 %v1366, %v1302
  %v2199 = vpack.c.b16 %v1367, %v1303
  %v2200 = vpack.c.b16 %v1368, %v1304
  %v2201 = vpack.c.b16 %v1369, %v1305
  %v2202 = vpack.c.b16 %v1370, %v1306
  %v2203 = vpack.c.b16 %v1371, %v1307
  %v2204 = vpack.c.b16 %v1372, %v1308
  %v2205 = vpack.c.b16 %v1373, %v1309
  %v2206 = vpack.c.b16 %v1374, %v1310
  %v2207 = vpack.c.b16 %v1375, %v1311
  %v2208 = vpack.c.b16 %v1376, %v1312
  %v2209 = vpack.c.b16 %v1377, %v1313
  %v2210 = vpack.c.b16 %v1378, %v1314
  %v2211 = vpack.c.b16 %v1379, %v1315
  %v2212 = vpack.c.b16 %v1380, %v1316
  %v2213 = vpack.c.b16 %v1381, %v1317
  %v2214 = vpack.c.b16 %v1382, %v1318
  %v2215 = vpack.c.b16 %v1383, %v1319
  %v2216 = vpack.c.b16 %v1384, %v1320
  %v2217 = vpack.c.b16 %v1385, %v1321
  %v2218 = vpack.c.b16 %v1386, %v1322
  %v2219 = vpack.c.b16 %v1387, %v1323
  %v2220 = vpack.c.b16 %v1388, %v1324
  %v2221 = vpack.c.b16 %v1389, %v1325
  %v2222 = vpack.c.b16 %v1390, %v1326
  %v2223 = vpack.c.b16 %v1391, %v1327
  %v2224 = vpack.c.b16 %v1392, %v1328
  %v2225 = vpack.c.b16 %v1393, %v1329
  %v2226 = vpack.c.b16 %v1394, %v1330
  %v2227 = vpack.c.b16 %v1395, %v1331
  %v2228 = vpack.c.b16 %v1396, %v1332
  %v2229 = vpack.c.b16 %v1397, %v1333
  %v2230 = vpack.c.b16 %v1398, %v1334
  %v2231 = vpack.c.b16 %v1399, %v1335
  %v2232 = vpack.c.b16 %v1400, %v1336
  %v2233 = vpack.c.b16 %v1401, %v1337
  %v2234 = vpack.c.b16 %v1402, %v1338
  %v2235 = vpack.c.b16 %v1403, %v1339
  %v2236 = vpack.c.b16 %v1404, %v1340
  %v2237 = vpack.c.b16 %v1405, %v1341
  %v2238 = vpack.c.b16 %v1406, %v1342
  %v2239 = vpack.c.b16 %v1407, %v1343
  %v2240 = vpack.c.b16 %v1408, %v1344
  %v2241 = vpack.c.b16 %v1409, %v1345
  %v2242 = vpack.c.b16 %v1410, %v1346
  %v2243 = vpack.c.b16 %v1411, %v1347
  %v2244 = vpack.c.b16 %v1412, %v1348
  %v2245 = vpack.c.b16 %v1413, %v1349
  %v2246 = vpack.c.b16 %v1414, %v1350
  %v2247 = vpack.c.b16 %v1415, %v1351
  %v2248 = vpack.c.b16 %v1416, %v1352
  %v2249 = vpack.c.b16 %v1417, %v1353
  %v2250 = vpack.c.b16 %v1418, %v1354
  %v2251 = vpack.c.b16 %v1419, %v1355
  %v2252 = vpack.c.b16 %v1420, %v1356
  %v2253 = vpack.c.b16 %v1421, %v1357
  %v2254 = vpack.c.b16 %v1422, %v1358
  %v2255 = vpack.c.b16 %v1423, %v1359
  %v2256 = vpack.c.b16 %v1424, %v1360
  %v2257 = vpack.c.b16 %v1425, %v1361
  %v2258 = vpack.c.b16 %v1426, %v1362
  %v2259 = vpack.c.b16 %v1427, %v1363
  %v2260 = vpack.c.b16 %v1428, %v1364
  %v2261 = vpack.c.b16 %v1429, %v1365
  %v2262 = vpack.c.b16 %v1494, %v1430
  %v2263 = vpack.c.b16 %v1495, %v1431
  %v2264 = vpack.c.b16 %v1496, %v1432
  %v2265 = vpack.c.b16 %v1497, %v1433
  %v2266 = vpack.c.b16 %v1498, %v1434
  %v2267 = vpack.c.b16 %v1499, %v1435
  %v2268 = vpack.c.b16 %v1500, %v1436
  %v2269 = vpack.c.b16 %v1501, %v1437
  %v2270 = vpack.c.b16 %v1502, %v1438
  %v2271 = vpack.c.b16 %v1503, %v1439
  %v2272 = vpack.c.b16 %v1504, %v1440
  %v2273 = vpack.c.b16 %v1505, %v1441
  %v2274 = vpack.c.b16 %v1506, %v1442
  %v2275 = vpack.c.b16 %v1507, %v1443
  %v2276 = vpack.c.b16 %v1508, %v1444
  %v2277 = vpack.c.b16 %v1509, %v1445
  %v2278 = vpack.c.b16 %v1510, %v1446
  %v2279 = vpack.c.b16 %v1511, %v1447
  %v2280 = vpack.c.b16 %v1512, %v1448
  %v2281 = vpack.c.b16 %v1513, %v1449
  %v2282 = vpack.c.b16 %v1514, %v1450
  %v2283 = vpack.c.b16 %v1515, %v1451
  %v2284 = vpack.c.b16 %v1516, %v1452
  %v2285 = vpack.c.b16 %v1517, %v1453
  %v2286 = vpack.c.b16 %v1518, %v1454
  %v2287 = vpack.c.b16 %v1519, %v1455
  %v2288 = vpack.c.b16 %v1520, %v1456
  %v2289 = vpack.c.b16 %v1521, %v1457
  %v2290 = vpack.c.b16 %v1522, %v1458
  %v2291 = vpack.c.b16 %v1523, %v1459
  %v2292 = vpack.c.b16 %v1524, %v1460
  %v2293 = vpack.c.b16 %v1525, %v1461
  %v2294 = vpack.c.b16 %v1526, %v1462
  %v2295 = vpack.c.b16 %v1527, %v1463
  %v2296 = vpack.c.b16 %v1528, %v1464
  %v2297 = vpack.c.b16 %v1529, %v1465
  %v2298 = vpack.c.b16 %v1530, %v1466
  %v2299 = vpack.c.b16 %v1531, %v1467
  %v2300 = vpack.c.b16 %v1532, %v1468
  %v2301 = vpack.c.b16 %v1533, %v1469
  %v2302 = vpack.c.b16 %v1534, %v1470
  %v2303 = vpack.c.b16 %v1535, %v1471
  %v2304 = vpack.c.b16 %v1536, %v1472
  %v2305 = vpack.c.b16 %v1537, %v1473
  %v2306 = vpack.c.b16 %v1538, %v1474
  %v2307 = vpack.c.b16 %v1539, %v1475
  %v2308 = vpack.c.b16 %v1540, %v1476
  %v2309 = vpack.c.b16 %v1541, %v1477
  %v2310 = vpack.c.b16 %v1542, %v1478
  %v2311 = vpack.c.b16 %v1543, %v1479
  %v2312 = vpack.c.b16 %v1544, %v1480
  %v2313 = vpack.c.b16 %v1545, %v1481
  %v2314 = vpack.c.b16 %v1546, %v1482
  %v2315 = vpack.c.b16 %v1547, %v1483
  %v2316 = vpack.c.b16 %v1548, %v1484
  %v2317 = vpack.c.b16 %v1549, %v1485
  %v2318 = vpack.c.b16 %v1550, %v1486
  %v2319 = vpack.c.b16 %v1551, %v1487
  %v2320 = vpack.c.b16 %v1552, %v1488
  %v2321 = vpack.c.b16 %v1553, %v1489
  %v2322 = vpack.c.b16 %v1554, %v1490
  %v2323 = vpack.c.b16 %v1555, %v1491
  %v2324 = vpack.c.b16 %v1556, %v1492
  %v2325 = vpack.c.b16 %v1557, %v1493
  %v2326 = vpack.c.b16 %v1622, %v1558
  %v2327 = vpack.c.b16 %v1623, %v1559
  %v2328 = vpack.c.b16 %v1624, %v1560
  %v2329 = vpack.c.b16 %v1625, %v1561
  %v2330 = vpack.c.b16 %v1626, %v1562
  %v2331 = vpack.c.b16 %v1627, %v1563
  %v2332 = vpack.c.b16 %v1628, %v1564
  %v2333 = vpack.c.b16 %v1629, %v1565
  %v2334 = vpack.c.b16 %v1630, %v1566
  %v2335 = vpack.c.b16 %v1631, %v1567
  %v2336 = vpack.c.b16 %v1632, %v1568
  %v2337 = vpack.c.b16 %v1633, %v1569
  %v2338 = vpack.c.b16 %v1634, %v1570
  %v2339 = vpack.c.b16 %v1635, %v1571
  %v2340 = vpack.c.b16 %v1636, %v1572
  %v2341 = vpack.c.b16 %v1637, %v1573
  %v2342 = vpack.c.b16 %v1638, %v1574
  %v2343 = vpack.c.b16 %v1639, %v1575
  %v2344 = vpack.c.b16 %v1640, %v1576
  %v2345 = vpack.c.b16 %v1641, %v1577
  %v2346 = vpack.c.b16 %v1642, %v1578
  %v2347 = vpack.c.b16 %v1643, %v1579
  %v2348 = vpack.c.b16 %v1644, %v1580
  %v2349 = vpack.c.b16 %v1645, %v1581
  %v2350 = vpack.c.b16 %v1646, %v1582
  %v2351 = vpack.c.b16 %v1647, %v1583
  %v2352 = vpack.c.b16 %v1648, %v1584
  %v2353 = vpack.c.b16 %v1649, %v1585
  %v2354 = vpack.c.b16 %v1650, %v1586
  %v2355 = vpack.c.b16 %v1651, %v1587
  %v2356 = vpack.c.b16 %v1652, %v1588
  %v2357 = vpack.c.b16 %v1653, %v1589
  %v2358 = vpack.c.b16 %v1654, %v1590
  %v2359 = vpack.c.b16 %v1655, %v1591
  %v2360 = vpack.c.b16 %v1656, %v1592
  %v2361 = vpack.c.b16 %v1657, %v1593
  %v2362 = vpack.c.b16 %v1658, %v1594
  %v2363 = vpack.c.b16 %v1659, %v1595
  %v2364 = vpack.c.b16 %v1660, %v1596
  %v2365 = vpack.c.b16 %v1661, %v1597
  %v2366 = vpack.c.b16 %v1662, %v1598
  %v2367 = vpack.c.b16 %v1663, %v1599
  %v2368 = vpack.c.b16 %v1664, %v1600
  %v2369 = vpack.c.b16 %v1665, %v1601
  %v2370 = vpack.c.b16 %v1666, %v1602
  %v2371 = vpack.c.b16 %v1667, %v1603
  %v2372 = vpack.c.b16 %v1668, %v1604
  %v2373 = vpack.c.b16 %v1669, %v1605
  %v2374 = vpack.c.b16 %v1670, %v1606
  %v2375 = vpack.c.b16 %v1671, %v1607
  %v2376 = vpack.c.b16 %v1672, %v1608
  %v2377 = vpack.c.b16 %v1673, %v1609
  %v2378 = vpack.c.b16 %v1674, %v1610
  %v2379 = vpack.c.b16 %v1675, %v1611
  %v2380 = vpack.c.b16 %v1676, %v1612
  %v2381 = vpack.c.b16 %v1677, %v1613
  %v2382 = vpack.c.b16 %v1678, %v1614
  %v2383 = vpack.c.b16 %v1679, %v1615
  %v2384 = vpack.c.b16 %v1680, %v1616
  %v2385 = vpack.c.b16 %v1681, %v1617
  %v2386 = vpack.c.b16 %v1682, %v1618
  %v2387 = vpack.c.b16 %v1683, %v1619
  %v2388 = vpack.c.b16 %v1684, %v1620
  %v2389 = vpack.c.b16 %v1685, %v1621
  %v2390 = vpack.c.b16 %v1750, %v1686
  %v2391 = vpack.c.b16 %v1751, %v1687
  %v2392 = vpack.c.b16 %v1752, %v1688
  %v2393 = vpack.c.b16 %v1753, %v1689
  %v2394 = vpack.c.b16 %v1754, %v1690
  %v2395 = vpack.c.b16 %v1755, %v1691
  %v2396 = vpack.c.b16 %v1756, %v1692
  %v2397 = vpack.c.b16 %v1757, %v1693
  %v2398 = vpack.c.b16 %v1758, %v1694
  %v2399 = vpack.c.b16 %v1759, %v1695
  %v2400 = vpack.c.b16 %v1760, %v1696
  %v2401 = vpack.c.b16 %v1761, %v1697
  %v2402 = vpack.c.b16 %v1762, %v1698
  %v2403 = vpack.c.b16 %v1763, %v1699
  %v2404 = vpack.c.b16 %v1764, %v1700
  %v2405 = vpack.c.b16 %v1765, %v1701
  %v2406 = vpack.c.b16 %v1766, %v1702
  %v2407 = vpack.c.b16 %v1767, %v1703
  %v2408 = vpack.c.b16 %v1768, %v1704
  %v2409 = vpack.c.b16 %v1769, %v1705
  %v2410 = vpack.c.b16 %v1770, %v1706
  %v2411 = vpack.c.b16 %v1771, %v1707
  %v2412 = vpack.c.b16 %v1772, %v1708
  %v2413 = vpack.c.b16 %v1773, %v1709
  %v2414 = vpack.c.b16 %v1774, %v1710
  %v2415 = vpack.c.b16 %v1775, %v1711
  %v2416 = vpack.c.b16 %v1776, %v1712
  %v2417 = vpack.c.b16 %v1777, %v1713
  %v2418 = vpack.c.b16 %v1778, %v1714
  %v2419 = vpack.c.b16 %v1779, %v1715
  %v2420 = vpack.c.b16 %v1780, %v1716
  %v2421 = vpack.c.b16 %v1781, %v1717
  %v2422 = vpack.c.b16 %v1782, %v1718
  %v2423 = vpack.c.b16 %v1783, %v1719
  %v2424 = vpack.c.b16 %v1784, %v1720
  %v2425 = vpack.c.b16 %v1785, %v1721
  %v2426 = vpack.c.b16 %v1786, %v1722
  %v2427 = vpack.c.b16 %v1787, %v1723
  %v2428 = vpack.c.b16 %v1788, %v1724
  %v2429 = vpack.c.b16 %v1789, %v1725
  %v2430 = vpack.c.b16 %v1790, %v1726
  %v2431 = vpack.c.b16 %v1791, %v1727
  %v2432 = vpack.c.b16 %v1792, %v1728
  %v2433 = vpack.c.b16 %v1793, %v1729
  %v2434 = vpack.c.b16 %v1794, %v1730
  %v2435 = vpack.c.b16 %v1795, %v1731
  %v2436 = vpack.c.b16 %v1796, %v1732
  %v2437 = vpack.c.b16 %v1797, %v1733
  %v2438 = vpack.c.b16 %v1798, %v1734
  %v2439 = vpack.c.b16 %v1799, %v1735
  %v2440 = vpack.c.b16 %v1800, %v1736
  %v2441 = vpack.c.b16 %v1801, %v1737
  %v2442 = vpack.c.b16 %v1802, %v1738
  %v2443 = vpack.c.b16 %v1803, %v1739
  %v2444 = vpack.c.b16 %v1804, %v1740
  %v2445 = vpack.c.b16 %v1805, %v1741
  %v2446 = vpack.c.b16 %v1806, %v1742
  %v2447 = vpack.c.b16 %v1807, %v1743
  %v2448 = vpack.c.b16 %v1808, %v1744
  %v2449 = vpack.c.b16 %v1809, %v1745
  %v2450 = vpack.c.b16 %v1810, %v1746
  %v2451 = vpack.c.b16 %v1811, %v1747
  %v2452 = vpack.c.b16 %v1812, %v1748
  %v2453 = vpack.c.b16 %v1813, %v1749
  %v2454 = vpack.c.b16 %v1878, %v1814
  %v2455 = vpack.c.b16 %v1879, %v1815
  %v2456 = vpack.c.b16 %v1880, %v1816
  %v2457 = vpack.c.b16 %v1881, %v1817
  %v2458 = vpack.c.b16 %v1882, %v1818
  %v2459 = vpack.c.b16 %v1883, %v1819
  %v2460 = vpack.c.b16 %v1884, %v1820
  %v2461 = vpack.c.b16 %v1885, %v1821
  %v2462 = vpack.c.b16 %v1886, %v1822
  %v2463 = vpack.c.b16 %v1887, %v1823
  %v2464 = vpack.c.b16 %v1888, %v1824
  %v2465 = vpack.c.b16 %v1889, %v1825
  %v2466 = vpack.c.b16 %v1890, %v1826
  %v2467 = vpack.c.b16 %v1891, %v1827
  %v2468 = vpack.c.b16 %v1892, %v1828
  %v2469 = vpack.c.b16 %v1893, %v1829
  %v2470 = vpack.c.b16 %v1894, %v1830
  %v2471 = vpack.c.b16 %v1895, %v1831
  %v2472 = vpack.c.b16 %v1896, %v1832
  %v2473 = vpack.c.b16 %v1897, %v1833
  %v2474 = vpack.c.b16 %v1898, %v1834
  %v2475 = vpack.c.b16 %v1899, %v1835
  %v2476 = vpack.c.b16 %v1900, %v1836
  %v2477 = vpack.c.b16 %v1901, %v1837
  %v2478 = vpack.c.b16 %v1902, %v1838
  %v2479 = vpack.c.b16 %v1903, %v1839
  %v2480 = vpack.c.b16 %v1904, %v1840
  %v2481 = vpack.c.b16 %v1905, %v1841
  %v2482 = vpack.c.b16 %v1906, %v1842
  %v2483 = vpack.c.b16 %v1907, %v1843
  %v2484 = vpack.c.b16 %v1908, %v1844
  %v2485 = vpack.c.b16 %v1909, %v1845
  %v2486 = vpack.c.b16 %v1910, %v1846
  %v2487 = vpack.c.b16 %v1911, %v1847
  %v2488 = vpack.c.b16 %v1912, %v1848
  %v2489 = vpack.c.b16 %v1913, %v1849
  %v2490 = vpack.c.b16 %v1914, %v1850
  %v2491 = vpack.c.b16 %v1915, %v1851
  %v2492 = vpack.c.b16 %v1916, %v1852
  %v2493 = vpack.c.b16 %v1917, %v1853
  %v2494 = vpack.c.b16 %v1918, %v1854
  %v2495 = vpack.c.b16 %v1919, %v1855
  %v2496 = vpack.c.b16 %v1920, %v1856
  %v2497 = vpack.c.b16 %v1921, %v1857
  %v2498 = vpack.c.b16 %v1922, %v1858
  %v2499 = vpack.c.b16 %v1923, %v1859
  %v2500 = vpack.c.b16 %v1924, %v1860
  %v2501 = vpack.c.b16 %v1925, %v1861
  %v2502 = vpack.c.b16 %v1926, %v1862
  %v2503 = vpack.c.b16 %v1927, %v1863
  %v2504 = vpack.c.b16 %v1928, %v1864
  %v2505 = vpack.c.b16 %v1929, %v1865
  %v2506 = vpack.c.b16 %v1930, %v1866
  %v2507 = vpack.c.b16 %v1931, %v1867
  %v2508 = vpack.c.b16 %v1932, %v1868
  %v2509 = vpack.c.b16 %v1933, %v1869
  %v2510 = vpack.c.b16 %v1934, %v1870
  %v2511 = vpack.c.b16 %v1935, %v1871
  %v2512 = vpack.c.b16 %v1936, %v1872
  %v2513 = vpack.c.b16 %v1937, %v1873
  %v2514 = vpack.c.b16 %v1938, %v1874
  %v2515 = vpack.c.b16 %v1939, %v1875
  %v2516 = vpack.c.b16 %v1940, %v1876
  %v2517 = vpack.c.b16 %v1941, %v1877
  %v2518 = vpack.c.b16 %v2006, %v1942
  %v2519 = vpack.c.b16 %v2007, %v1943
  %v2520 = vpack.c.b16 %v2008, %v1944
  %v2521 = vpack.c.b16 %v2009, %v1945
  %v2522 = vpack.c.b16 %v2010, %v1946
  %v2523 = vpack.c.b16 %v2011, %v1947
  %v2524 = vpack.c.b16 %v2012, %v1948
  %v2525 = vpack.c.b16 %v2013, %v1949
  %v2526 = vpack.c.b16 %v2014, %v1950
  %v2527 = vpack.c.b16 %v2015, %v1951
  %v2528 = vpack.c.b16 %v2016, %v1952
  %v2529 = vpack.c.b16 %v2017, %v1953
  %v2530 = vpack.c.b16 %v2018, %v1954
  %v2531 = vpack.c.b16 %v2019, %v1955
  %v2532 = vpack.c.b16 %v2020, %v1956
  %v2533 = vpack.c.b16 %v2021, %v1957
  %v2534 = vpack.c.b16 %v2022, %v1958
  %v2535 = vpack.c.b16 %v2023, %v1959
  %v2536 = vpack.c.b16 %v2024, %v1960
  %v2537 = vpack.c.b16 %v2025, %v1961
  %v2538 = vpack.c.b16 %v2026, %v1962
  %v2539 = vpack.c.b16 %v2027, %v1963
  %v2540 = vpack.c.b16 %v2028, %v1964
  %v2541 = vpack.c.b16 %v2029, %v1965
  %v2542 = vpack.c.b16 %v2030, %v1966
  %v2543 = vpack.c.b16 %v2031, %v1967
  %v2544 = vpack.c.b16 %v2032, %v1968
  %v2545 = vpack.c.b16 %v2033, %v1969
  %v2546 = vpack.c.b16 %v2034, %v1970
  %v2547 = vpack.c.b16 %v2035, %v1971
  %v2548 = vpack.c.b16 %v2036, %v1972
  %v2549 = vpack.c.b16 %v2037, %v1973
  %v2550 = vpack.c.b16 %v2038, %v1974
  %v2551 = vpack.c.b16 %v2039, %v1975
  %v2552 = vpack.c.b16 %v2040, %v1976
  %v2553 = vpack.c.b16 %v2041, %v1977
  %v2554 = vpack.c.b16 %v2042, %v1978
  %v2555 = vpack.c.b16 %v2043, %v1979
  %v2556 = vpack.c.b16 %v2044, %v1980
  %v2557 = vpack.c.b16 %v2045, %v1981
  %v2558 = vpack.c.b16 %v2046, %v1982
  %v2559 = vpack.c.b16 %v2047, %v1983
  %v2560 = vpack.c.b16 %v2048, %v1984
  %v2561 = vpack.c.b16 %v2049, %v1985
  %v2562 = vpack.c.b16 %v2050, %v1986
  %v2563 = vpack.c.b16 %v2051, %v1987
  %v2564 = vpack.c.b16 %v2052, %v1988
  %v2565 = vpack.c.b16 %v2053, %v1989
  %v2566 = vpack.c.b16 %v2054, %v1990
  %v2567 = vpack.c.b16 %v2055, %v1991
  %v2568 = vpack.c.b16 %v2056, %v1992
  %v2569 = vpack.c.b16 %v2057, %v1993
  %v2570 = vpack.c.b16 %v2058, %v1994
  %v2571 = vpack.c.b16 %v2059, %v1995
  %v2572 = vpack.c.b16 %v2060, %v1996
  %v2573 = vpack.c.b16 %v2061, %v1997
  %v2574 = vpack.c.b16 %v2062, %v1998
  %v2575 = vpack.c.b16 %v2063, %v1999
  %v2576 = vpack.c.b16 %v2064, %v2000
  %v2577 = vpack.c.b16 %v2065, %v2001
  %v2578 = vpack.c.b16 %v2066, %v2002
  %v2579 = vpack.c.b16 %v2067, %v2003
  %v2580 = vpack.c.b16 %v2068, %v2004
  %v2581 = vpack.c.b16 %v2069, %v2005
  %3094 = vmatprep.subr.bf16.mxu0 %v2519
  %3095 = vmatpush1.bf16.msra.mxu0 %v2518
  %3096 = vmatprep.subr.bf16.mxu0 %v2455
  %3097 = vmatpush1.bf16.msra.mxu0 %v2454
  %3098 = vmatprep.subr.bf16.mxu0 %v2391
  %3099 = vmatpush1.bf16.msra.mxu0 %v2390
  %3100 = vmatprep.subr.bf16.mxu0 %v2327
  %3101 = vmatpush1.bf16.msra.mxu0 %v2326
  %3102 = vmatprep.subr.bf16.mxu0 %v2263
  %3103 = vmatpush1.bf16.msra.mxu0 %v2262
  %3104 = vmatprep.subr.bf16.mxu0 %v2199
  %3105 = vmatpush1.bf16.msra.mxu0 %v2198
  %3106 = vmatprep.subr.bf16.mxu0 %v2135
  %3107 = vmatpush1.bf16.msra.mxu0 %v2134
  %3108 = vmatprep.subr.bf16.mxu0 %v2071
  %3109 = vmatpush1.bf16.msra.mxu0 %v2070
  %3110 = vmatprep.subr.bf16.mxu0 0
  %3111 = vmatpush2.bf16.msra.mxu0 0
  %3112 = vmatprep.subr.bf16.mxu0 0
  %3113 = vmatpush2.bf16.msra.mxu0 0
  %3114 = vmatprep.subr.bf16.mxu0 0
  %3115 = vmatpush2.bf16.msra.mxu0 0
  %3116 = vmatprep.subr.bf16.mxu0 0
  %3117 = vmatpush2.bf16.msra.mxu0 0
  %3118 = vmatprep.subr.bf16.mxu0 0
  %3119 = vmatpush2.bf16.msra.mxu0 0
  %3120 = vmatprep.subr.bf16.mxu0 0
  %3121 = vmatpush2.bf16.msra.mxu0 0
  %3122 = vmatprep.subr.bf16.mxu0 0
  %3123 = vmatpush2.bf16.msra.mxu0 0
  %3124 = vmatprep.subr.bf16.mxu0 0
  %3125 = vmatpush2.bf16.msra.mxu0 0
  %3126 = vmatprep.mubr.bf16.mxu0 0
  %3127 = vmatmul.mubr.bf16.gmra.mxu0 %v15
  %v3128 = vpop.f32.mrf.mxu0
  %v3129 = vadd.f32 %v532, %v3128
  %v3130 = vpop.f32.mrf.mxu0
  %v3131 = vadd.f32 %v532, %v3130
  %v3132 = vpop.f32.mrf.mxu0
  %v3133 = vpop.f32.mrf.mxu0
  %3134 = vdwg.mxu0
  %3135 = vmatprep.subr.bf16.mxu0 %v2521
  %3136 = vmatpush1.bf16.msra.mxu0 %v2520
  %3137 = vmatprep.subr.bf16.mxu0 %v2457
  %3138 = vmatpush1.bf16.msra.mxu0 %v2456
  %3139 = vmatprep.subr.bf16.mxu0 %v2393
  %3140 = vmatpush1.bf16.msra.mxu0 %v2392
  %3141 = vmatprep.subr.bf16.mxu0 %v2329
  %3142 = vmatpush1.bf16.msra.mxu0 %v2328
  %3143 = vmatprep.subr.bf16.mxu0 %v2265
  %3144 = vmatpush1.bf16.msra.mxu0 %v2264
  %3145 = vmatprep.subr.bf16.mxu0 %v2201
  %3146 = vmatpush1.bf16.msra.mxu0 %v2200
  %3147 = vmatprep.subr.bf16.mxu0 %v2137
  %3148 = vmatpush1.bf16.msra.mxu0 %v2136
  %3149 = vmatprep.subr.bf16.mxu0 %v2073
  %3150 = vmatpush1.bf16.msra.mxu0 %v2072
  %3151 = vmatprep.subr.bf16.mxu0 0
  %3152 = vmatpush2.bf16.msra.mxu0 0
  %3153 = vmatprep.subr.bf16.mxu0 0
  %3154 = vmatpush2.bf16.msra.mxu0 0
  %3155 = vmatprep.subr.bf16.mxu0 0
  %3156 = vmatpush2.bf16.msra.mxu0 0
  %3157 = vmatprep.subr.bf16.mxu0 0
  %3158 = vmatpush2.bf16.msra.mxu0 0
  %3159 = vmatprep.subr.bf16.mxu0 0
  %3160 = vmatpush2.bf16.msra.mxu0 0
  %3161 = vmatprep.subr.bf16.mxu0 0
  %3162 = vmatpush2.bf16.msra.mxu0 0
  %3163 = vmatprep.subr.bf16.mxu0 0
  %3164 = vmatpush2.bf16.msra.mxu0 0
  %3165 = vmatprep.subr.bf16.mxu0 0
  %3166 = vmatpush2.bf16.msra.mxu0 0
  %3167 = vmatprep.mubr.bf16.mxu0 0
  %3168 = vmatmul.mubr.bf16.gmra.mxu0 %v15
  %v3169 = vpop.f32.mrf.mxu0
  %v3170 = vadd.f32 %v532, %v3169
  %v3171 = vpop.f32.mrf.mxu0
  %v3172 = vadd.f32 %v532, %v3171
  %v3173 = vpop.f32.mrf.mxu0
  %v3174 = vpop.f32.mrf.mxu0
  %3175 = vdwg.mxu0
  %3176 = vmatprep.subr.bf16.mxu0 %v2523
  %3177 = vmatpush1.bf16.msra.mxu0 %v2522
  %3178 = vmatprep.subr.bf16.mxu0 %v2459
  %3179 = vmatpush1.bf16.msra.mxu0 %v2458
  %3180 = vmatprep.subr.bf16.mxu0 %v2395
  %3181 = vmatpush1.bf16.msra.mxu0 %v2394
  %3182 = vmatprep.subr.bf16.mxu0 %v2331
  %3183 = vmatpush1.bf16.msra.mxu0 %v2330
  %3184 = vmatprep.subr.bf16.mxu0 %v2267
  %3185 = vmatpush1.bf16.msra.mxu0 %v2266
  %3186 = vmatprep.subr.bf16.mxu0 %v2203
  %3187 = vmatpush1.bf16.msra.mxu0 %v2202
  %3188 = vmatprep.subr.bf16.mxu0 %v2139
  %3189 = vmatpush1.bf16.msra.mxu0 %v2138
  %3190 = vmatprep.subr.bf16.mxu0 %v2075
  %3191 = vmatpush1.bf16.msra.mxu0 %v2074
  %3192 = vmatprep.subr.bf16.mxu0 0
  %3193 = vmatpush2.bf16.msra.mxu0 0
  %3194 = vmatprep.subr.bf16.mxu0 0
  %3195 = vmatpush2.bf16.msra.mxu0 0
  %3196 = vmatprep.subr.bf16.mxu0 0
  %3197 = vmatpush2.bf16.msra.mxu0 0
  %3198 = vmatprep.subr.bf16.mxu0 0
  %3199 = vmatpush2.bf16.msra.mxu0 0
  %3200 = vmatprep.subr.bf16.mxu0 0
  %3201 = vmatpush2.bf16.msra.mxu0 0
  %3202 = vmatprep.subr.bf16.mxu0 0
  %3203 = vmatpush2.bf16.msra.mxu0 0
  %3204 = vmatprep.subr.bf16.mxu0 0
  %3205 = vmatpush2.bf16.msra.mxu0 0
  %3206 = vmatprep.subr.bf16.mxu0 0
  %3207 = vmatpush2.bf16.msra.mxu0 0
  %3208 = vmatprep.mubr.bf16.mxu0 0
  %3209 = vmatmul.mubr.bf16.gmra.mxu0 %v15
  %v3210 = vpop.f32.mrf.mxu0
  %v3211 = vadd.f32 %v532, %v3210
  %v3212 = vpop.f32.mrf.mxu0
  %v3213 = vadd.f32 %v532, %v3212
  %v3214 = vpop.f32.mrf.mxu0
  %v3215 = vpop.f32.mrf.mxu0
  %3216 = vdwg.mxu0
  %3217 = vmatprep.subr.bf16.mxu0 %v2525
  %3218 = vmatpush1.bf16.msra.mxu0 %v2524
  %3219 = vmatprep.subr.bf16.mxu0 %v2461
  %3220 = vmatpush1.bf16.msra.mxu0 %v2460
  %3221 = vmatprep.subr.bf16.mxu0 %v2397
  %3222 = vmatpush1.bf16.msra.mxu0 %v2396
  %3223 = vmatprep.subr.bf16.mxu0 %v2333
  %3224 = vmatpush1.bf16.msra.mxu0 %v2332
  %3225 = vmatprep.subr.bf16.mxu0 %v2269
  %3226 = vmatpush1.bf16.msra.mxu0 %v2268
  %3227 = vmatprep.subr.bf16.mxu0 %v2205
  %3228 = vmatpush1.bf16.msra.mxu0 %v2204
  %3229 = vmatprep.subr.bf16.mxu0 %v2141
  %3230 = vmatpush1.bf16.msra.mxu0 %v2140
  %3231 = vmatprep.subr.bf16.mxu0 %v2077
  %3232 = vmatpush1.bf16.msra.mxu0 %v2076
  %3233 = vmatprep.subr.bf16.mxu0 0
  %3234 = vmatpush2.bf16.msra.mxu0 0
  %3235 = vmatprep.subr.bf16.mxu0 0
  %3236 = vmatpush2.bf16.msra.mxu0 0
  %3237 = vmatprep.subr.bf16.mxu0 0
  %3238 = vmatpush2.bf16.msra.mxu0 0
  %3239 = vmatprep.subr.bf16.mxu0 0
  %3240 = vmatpush2.bf16.msra.mxu0 0
  %3241 = vmatprep.subr.bf16.mxu0 0
  %3242 = vmatpush2.bf16.msra.mxu0 0
  %3243 = vmatprep.subr.bf16.mxu0 0
  %3244 = vmatpush2.bf16.msra.mxu0 0
  %3245 = vmatprep.subr.bf16.mxu0 0
  %3246 = vmatpush2.bf16.msra.mxu0 0
  %3247 = vmatprep.subr.bf16.mxu0 0
  %3248 = vmatpush2.bf16.msra.mxu0 0
  %3249 = vmatprep.mubr.bf16.mxu0 0
  %3250 = vmatmul.mubr.bf16.gmra.mxu0 %v15
  %v3251 = vpop.f32.mrf.mxu0
  %v3252 = vadd.f32 %v532, %v3251
  %v3253 = vpop.f32.mrf.mxu0
  %v3254 = vadd.f32 %v532, %v3253
  %v3255 = vpop.f32.mrf.mxu0
  %v3256 = vpop.f32.mrf.mxu0
  %3257 = vdwg.mxu0
  %3258 = vmatprep.subr.bf16.mxu0 %v2527
  %3259 = vmatpush1.bf16.msra.mxu0 %v2526
  %3260 = vmatprep.subr.bf16.mxu0 %v2463
  %3261 = vmatpush1.bf16.msra.mxu0 %v2462
  %3262 = vmatprep.subr.bf16.mxu0 %v2399
  %3263 = vmatpush1.bf16.msra.mxu0 %v2398
  %3264 = vmatprep.subr.bf16.mxu0 %v2335
  %3265 = vmatpush1.bf16.msra.mxu0 %v2334
  %3266 = vmatprep.subr.bf16.mxu0 %v2271
  %3267 = vmatpush1.bf16.msra.mxu0 %v2270
  %3268 = vmatprep.subr.bf16.mxu0 %v2207
  %3269 = vmatpush1.bf16.msra.mxu0 %v2206
  %3270 = vmatprep.subr.bf16.mxu0 %v2143
  %3271 = vmatpush1.bf16.msra.mxu0 %v2142
  %3272 = vmatprep.subr.bf16.mxu0 %v2079
  %3273 = vmatpush1.bf16.msra.mxu0 %v2078
  %3274 = vmatprep.subr.bf16.mxu0 0
  %3275 = vmatpush2.bf16.msra.mxu0 0
  %3276 = vmatprep.subr.bf16.mxu0 0
  %3277 = vmatpush2.bf16.msra.mxu0 0
  %3278 = vmatprep.subr.bf16.mxu0 0
  %3279 = vmatpush2.bf16.msra.mxu0 0
  %3280 = vmatprep.subr.bf16.mxu0 0
  %3281 = vmatpush2.bf16.msra.mxu0 0
  %3282 = vmatprep.subr.bf16.mxu0 0
  %3283 = vmatpush2.bf16.msra.mxu0 0
  %3284 = vmatprep.subr.bf16.mxu0 0
  %3285 = vmatpush2.bf16.msra.mxu0 0
  %3286 = vmatprep.subr.bf16.mxu0 0
  %3287 = vmatpush2.bf16.msra.mxu0 0
  %3288 = vmatprep.subr.bf16.mxu0 0
  %3289 = vmatpush2.bf16.msra.mxu0 0
  %3290 = vmatprep.mubr.bf16.mxu0 0
  %3291 = vmatmul.mubr.bf16.gmra.mxu0 %v15
  %v3292 = vpop.f32.mrf.mxu0
  %v3293 = vadd.f32 %v532, %v3292
  %v3294 = vpop.f32.mrf.mxu0
  %v3295 = vadd.f32 %v532, %v3294
  %v3296 = vpop.f32.mrf.mxu0
  %v3297 = vpop.f32.mrf.mxu0
  %3298 = vdwg.mxu0
  %3299 = vmatprep.subr.bf16.mxu0 %v2529
  %3300 = vmatpush1.bf16.msra.mxu0 %v2528
  %3301 = vmatprep.subr.bf16.mxu0 %v2465
  %3302 = vmatpush1.bf16.msra.mxu0 %v2464
  %3303 = vmatprep.subr.bf16.mxu0 %v2401
  %3304 = vmatpush1.bf16.msra.mxu0 %v2400
  %3305 = vmatprep.subr.bf16.mxu0 %v2337
  %3306 = vmatpush1.bf16.msra.mxu0 %v2336
  %3307 = vmatprep.subr.bf16.mxu0 %v2273
  %3308 = vmatpush1.bf16.msra.mxu0 %v2272
  %3309 = vmatprep.subr.bf16.mxu0 %v2209
  %3310 = vmatpush1.bf16.msra.mxu0 %v2208
  %3311 = vmatprep.subr.bf16.mxu0 %v2145
  %3312 = vmatpush1.bf16.msra.mxu0 %v2144
  %3313 = vmatprep.subr.bf16.mxu0 %v2081
  %3314 = vmatpush1.bf16.msra.mxu0 %v2080
  %3315 = vmatprep.subr.bf16.mxu0 0
  %3316 = vmatpush2.bf16.msra.mxu0 0
  %3317 = vmatprep.subr.bf16.mxu0 0
  %3318 = vmatpush2.bf16.msra.mxu0 0
  %3319 = vmatprep.subr.bf16.mxu0 0
  %3320 = vmatpush2.bf16.msra.mxu0 0
  %3321 = vmatprep.subr.bf16.mxu0 0
  %3322 = vmatpush2.bf16.msra.mxu0 0
  %3323 = vmatprep.subr.bf16.mxu0 0
  %3324 = vmatpush2.bf16.msra.mxu0 0
  %3325 = vmatprep.subr.bf16.mxu0 0
  %3326 = vmatpush2.bf16.msra.mxu0 0
  %3327 = vmatprep.subr.bf16.mxu0 0
  %3328 = vmatpush2.bf16.msra.mxu0 0
  %3329 = vmatprep.subr.bf16.mxu0 0
  %3330 = vmatpush2.bf16.msra.mxu0 0
  %3331 = vmatprep.mubr.bf16.mxu0 0
  %3332 = vmatmul.mubr.bf16.gmra.mxu0 %v15
  %v3333 = vpop.f32.mrf.mxu0
  %v3334 = vadd.f32 %v532, %v3333
  %v3335 = vpop.f32.mrf.mxu0
  %v3336 = vadd.f32 %v532, %v3335
  %v3337 = vpop.f32.mrf.mxu0
  %v3338 = vpop.f32.mrf.mxu0
  %3339 = vdwg.mxu0
  %3340 = vmatprep.subr.bf16.mxu0 %v2531
  %3341 = vmatpush1.bf16.msra.mxu0 %v2530
  %3342 = vmatprep.subr.bf16.mxu0 %v2467
  %3343 = vmatpush1.bf16.msra.mxu0 %v2466
  %3344 = vmatprep.subr.bf16.mxu0 %v2403
  %3345 = vmatpush1.bf16.msra.mxu0 %v2402
  %3346 = vmatprep.subr.bf16.mxu0 %v2339
  %3347 = vmatpush1.bf16.msra.mxu0 %v2338
  %3348 = vmatprep.subr.bf16.mxu0 %v2275
  %3349 = vmatpush1.bf16.msra.mxu0 %v2274
  %3350 = vmatprep.subr.bf16.mxu0 %v2211
  %3351 = vmatpush1.bf16.msra.mxu0 %v2210
  %3352 = vmatprep.subr.bf16.mxu0 %v2147
  %3353 = vmatpush1.bf16.msra.mxu0 %v2146
  %3354 = vmatprep.subr.bf16.mxu0 %v2083
  %3355 = vmatpush1.bf16.msra.mxu0 %v2082
  %3356 = vmatprep.subr.bf16.mxu0 0
  %3357 = vmatpush2.bf16.msra.mxu0 0
  %3358 = vmatprep.subr.bf16.mxu0 0
  %3359 = vmatpush2.bf16.msra.mxu0 0
  %3360 = vmatprep.subr.bf16.mxu0 0
  %3361 = vmatpush2.bf16.msra.mxu0 0
  %3362 = vmatprep.subr.bf16.mxu0 0
  %3363 = vmatpush2.bf16.msra.mxu0 0
  %3364 = vmatprep.subr.bf16.mxu0 0
  %3365 = vmatpush2.bf16.msra.mxu0 0
  %3366 = vmatprep.subr.bf16.mxu0 0
  %3367 = vmatpush2.bf16.msra.mxu0 0
  %3368 = vmatprep.subr.bf16.mxu0 0
  %3369 = vmatpush2.bf16.msra.mxu0 0
  %3370 = vmatprep.subr.bf16.mxu0 0
  %3371 = vmatpush2.bf16.msra.mxu0 0
  %3372 = vmatprep.mubr.bf16.mxu0 0
  %3373 = vmatmul.mubr.bf16.gmra.mxu0 %v15
  %v3374 = vpop.f32.mrf.mxu0
  %v3375 = vadd.f32 %v532, %v3374
  %v3376 = vpop.f32.mrf.mxu0
  %v3377 = vadd.f32 %v532, %v3376
  %v3378 = vpop.f32.mrf.mxu0
  %v3379 = vpop.f32.mrf.mxu0
  %3380 = vdwg.mxu0
  %3381 = vmatprep.subr.bf16.mxu0 %v2533
  %3382 = vmatpush1.bf16.msra.mxu0 %v2532
  %3383 = vmatprep.subr.bf16.mxu0 %v2469
  %3384 = vmatpush1.bf16.msra.mxu0 %v2468
  %3385 = vmatprep.subr.bf16.mxu0 %v2405
  %3386 = vmatpush1.bf16.msra.mxu0 %v2404
  %3387 = vmatprep.subr.bf16.mxu0 %v2341
  %3388 = vmatpush1.bf16.msra.mxu0 %v2340
  %3389 = vmatprep.subr.bf16.mxu0 %v2277
  %3390 = vmatpush1.bf16.msra.mxu0 %v2276
  %3391 = vmatprep.subr.bf16.mxu0 %v2213
  %3392 = vmatpush1.bf16.msra.mxu0 %v2212
  %3393 = vmatprep.subr.bf16.mxu0 %v2149
  %3394 = vmatpush1.bf16.msra.mxu0 %v2148
  %3395 = vmatprep.subr.bf16.mxu0 %v2085
  %3396 = vmatpush1.bf16.msra.mxu0 %v2084
  %3397 = vmatprep.subr.bf16.mxu0 0
  %3398 = vmatpush2.bf16.msra.mxu0 0
  %3399 = vmatprep.subr.bf16.mxu0 0
  %3400 = vmatpush2.bf16.msra.mxu0 0
  %3401 = vmatprep.subr.bf16.mxu0 0
  %3402 = vmatpush2.bf16.msra.mxu0 0
  %3403 = vmatprep.subr.bf16.mxu0 0
  %3404 = vmatpush2.bf16.msra.mxu0 0
  %3405 = vmatprep.subr.bf16.mxu0 0
  %3406 = vmatpush2.bf16.msra.mxu0 0
  %3407 = vmatprep.subr.bf16.mxu0 0
  %3408 = vmatpush2.bf16.msra.mxu0 0
  %3409 = vmatprep.subr.bf16.mxu0 0
  %3410 = vmatpush2.bf16.msra.mxu0 0
  %3411 = vmatprep.subr.bf16.mxu0 0
  %3412 = vmatpush2.bf16.msra.mxu0 0
  %3413 = vmatprep.mubr.bf16.mxu0 0
  %3414 = vmatmul.mubr.bf16.gmra.mxu0 %v15
  %v3415 = vpop.f32.mrf.mxu0
  %v3416 = vadd.f32 %v532, %v3415
  %v3417 = vpop.f32.mrf.mxu0
  %v3418 = vadd.f32 %v532, %v3417
  %v3419 = vpop.f32.mrf.mxu0
  %v3420 = vpop.f32.mrf.mxu0
  %3421 = vdwg.mxu0
  %3422 = vmatprep.subr.bf16.mxu0 %v2535
  %3423 = vmatpush1.bf16.msra.mxu0 %v2534
  %3424 = vmatprep.subr.bf16.mxu0 %v2471
  %3425 = vmatpush1.bf16.msra.mxu0 %v2470
  %3426 = vmatprep.subr.bf16.mxu0 %v2407
  %3427 = vmatpush1.bf16.msra.mxu0 %v2406
  %3428 = vmatprep.subr.bf16.mxu0 %v2343
  %3429 = vmatpush1.bf16.msra.mxu0 %v2342
  %3430 = vmatprep.subr.bf16.mxu0 %v2279
  %3431 = vmatpush1.bf16.msra.mxu0 %v2278
  %3432 = vmatprep.subr.bf16.mxu0 %v2215
  %3433 = vmatpush1.bf16.msra.mxu0 %v2214
  %3434 = vmatprep.subr.bf16.mxu0 %v2151
  %3435 = vmatpush1.bf16.msra.mxu0 %v2150
  %3436 = vmatprep.subr.bf16.mxu0 %v2087
  %3437 = vmatpush1.bf16.msra.mxu0 %v2086
  %3438 = vmatprep.subr.bf16.mxu0 0
  %3439 = vmatpush2.bf16.msra.mxu0 0
  %3440 = vmatprep.subr.bf16.mxu0 0
  %3441 = vmatpush2.bf16.msra.mxu0 0
  %3442 = vmatprep.subr.bf16.mxu0 0
  %3443 = vmatpush2.bf16.msra.mxu0 0
  %3444 = vmatprep.subr.bf16.mxu0 0
  %3445 = vmatpush2.bf16.msra.mxu0 0
  %3446 = vmatprep.subr.bf16.mxu0 0
  %3447 = vmatpush2.bf16.msra.mxu0 0
  %3448 = vmatprep.subr.bf16.mxu0 0
  %3449 = vmatpush2.bf16.msra.mxu0 0
  %3450 = vmatprep.subr.bf16.mxu0 0
  %3451 = vmatpush2.bf16.msra.mxu0 0
  %3452 = vmatprep.subr.bf16.mxu0 0
  %3453 = vmatpush2.bf16.msra.mxu0 0
  %3454 = vmatprep.mubr.bf16.mxu0 0
  %3455 = vmatmul.mubr.bf16.gmra.mxu0 %v15
  %v3456 = vpop.f32.mrf.mxu0
  %v3457 = vadd.f32 %v532, %v3456
  %v3458 = vpop.f32.mrf.mxu0
  %v3459 = vadd.f32 %v532, %v3458
  %v3460 = vpop.f32.mrf.mxu0
  %v3461 = vpop.f32.mrf.mxu0
  %3462 = vdwg.mxu0
  %3463 = vmatprep.subr.bf16.mxu0 %v2537
  %3464 = vmatpush1.bf16.msra.mxu0 %v2536
  %3465 = vmatprep.subr.bf16.mxu0 %v2473
  %3466 = vmatpush1.bf16.msra.mxu0 %v2472
  %3467 = vmatprep.subr.bf16.mxu0 %v2409
  %3468 = vmatpush1.bf16.msra.mxu0 %v2408
  %3469 = vmatprep.subr.bf16.mxu0 %v2345
  %3470 = vmatpush1.bf16.msra.mxu0 %v2344
  %3471 = vmatprep.subr.bf16.mxu0 %v2281
  %3472 = vmatpush1.bf16.msra.mxu0 %v2280
  %3473 = vmatprep.subr.bf16.mxu0 %v2217
  %3474 = vmatpush1.bf16.msra.mxu0 %v2216
  %3475 = vmatprep.subr.bf16.mxu0 %v2153
  %3476 = vmatpush1.bf16.msra.mxu0 %v2152
  %3477 = vmatprep.subr.bf16.mxu0 %v2089
  %3478 = vmatpush1.bf16.msra.mxu0 %v2088
  %3479 = vmatprep.subr.bf16.mxu0 0
  %3480 = vmatpush2.bf16.msra.mxu0 0
  %3481 = vmatprep.subr.bf16.mxu0 0
  %3482 = vmatpush2.bf16.msra.mxu0 0
  %3483 = vmatprep.subr.bf16.mxu0 0
  %3484 = vmatpush2.bf16.msra.mxu0 0
  %3485 = vmatprep.subr.bf16.mxu0 0
  %3486 = vmatpush2.bf16.msra.mxu0 0
  %3487 = vmatprep.subr.bf16.mxu0 0
  %3488 = vmatpush2.bf16.msra.mxu0 0
  %3489 = vmatprep.subr.bf16.mxu0 0
  %3490 = vmatpush2.bf16.msra.mxu0 0
  %3491 = vmatprep.subr.bf16.mxu0 0
  %3492 = vmatpush2.bf16.msra.mxu0 0
  %3493 = vmatprep.subr.bf16.mxu0 0
  %3494 = vmatpush2.bf16.msra.mxu0 0
  %3495 = vmatprep.mubr.bf16.mxu0 0
  %3496 = vmatmul.mubr.bf16.gmra.mxu0 %v15
  %v3497 = vpop.f32.mrf.mxu0
  %v3498 = vadd.f32 %v532, %v3497
  %v3499 = vpop.f32.mrf.mxu0
  %v3500 = vadd.f32 %v532, %v3499
  %v3501 = vpop.f32.mrf.mxu0
  %v3502 = vpop.f32.mrf.mxu0
  %3503 = vdwg.mxu0
  %3504 = vmatprep.subr.bf16.mxu0 %v2539
  %3505 = vmatpush1.bf16.msra.mxu0 %v2538
  %3506 = vmatprep.subr.bf16.mxu0 %v2475
  %3507 = vmatpush1.bf16.msra.mxu0 %v2474
  %3508 = vmatprep.subr.bf16.mxu0 %v2411
  %3509 = vmatpush1.bf16.msra.mxu0 %v2410
  %3510 = vmatprep.subr.bf16.mxu0 %v2347
  %3511 = vmatpush1.bf16.msra.mxu0 %v2346
  %3512 = vmatprep.subr.bf16.mxu0 %v2283
  %3513 = vmatpush1.bf16.msra.mxu0 %v2282
  %3514 = vmatprep.subr.bf16.mxu0 %v2219
  %3515 = vmatpush1.bf16.msra.mxu0 %v2218
  %3516 = vmatprep.subr.bf16.mxu0 %v2155
  %3517 = vmatpush1.bf16.msra.mxu0 %v2154
  %3518 = vmatprep.subr.bf16.mxu0 %v2091
  %3519 = vmatpush1.bf16.msra.mxu0 %v2090
  %3520 = vmatprep.subr.bf16.mxu0 0
  %3521 = vmatpush2.bf16.msra.mxu0 0
  %3522 = vmatprep.subr.bf16.mxu0 0
  %3523 = vmatpush2.bf16.msra.mxu0 0
  %3524 = vmatprep.subr.bf16.mxu0 0
  %3525 = vmatpush2.bf16.msra.mxu0 0
  %3526 = vmatprep.subr.bf16.mxu0 0
  %3527 = vmatpush2.bf16.msra.mxu0 0
  %3528 = vmatprep.subr.bf16.mxu0 0
  %3529 = vmatpush2.bf16.msra.mxu0 0
  %3530 = vmatprep.subr.bf16.mxu0 0
  %3531 = vmatpush2.bf16.msra.mxu0 0
  %3532 = vmatprep.subr.bf16.mxu0 0
  %3533 = vmatpush2.bf16.msra.mxu0 0
  %3534 = vmatprep.subr.bf16.mxu0 0
  %3535 = vmatpush2.bf16.msra.mxu0 0
  %3536 = vmatprep.mubr.bf16.mxu0 0
  %3537 = vmatmul.mubr.bf16.gmra.mxu0 %v15
  %v3538 = vpop.f32.mrf.mxu0
  %v3539 = vadd.f32 %v532, %v3538
  %v3540 = vpop.f32.mrf.mxu0
  %v3541 = vadd.f32 %v532, %v3540
  %v3542 = vpop.f32.mrf.mxu0
  %v3543 = vpop.f32.mrf.mxu0
  %3544 = vdwg.mxu0
  %3545 = vmatprep.subr.bf16.mxu0 %v2541
  %3546 = vmatpush1.bf16.msra.mxu0 %v2540
  %3547 = vmatprep.subr.bf16.mxu0 %v2477
  %3548 = vmatpush1.bf16.msra.mxu0 %v2476
  %3549 = vmatprep.subr.bf16.mxu0 %v2413
  %3550 = vmatpush1.bf16.msra.mxu0 %v2412
  %3551 = vmatprep.subr.bf16.mxu0 %v2349
  %3552 = vmatpush1.bf16.msra.mxu0 %v2348
  %3553 = vmatprep.subr.bf16.mxu0 %v2285
  %3554 = vmatpush1.bf16.msra.mxu0 %v2284
  %3555 = vmatprep.subr.bf16.mxu0 %v2221
  %3556 = vmatpush1.bf16.msra.mxu0 %v2220
  %3557 = vmatprep.subr.bf16.mxu0 %v2157
  %3558 = vmatpush1.bf16.msra.mxu0 %v2156
  %3559 = vmatprep.subr.bf16.mxu0 %v2093
  %3560 = vmatpush1.bf16.msra.mxu0 %v2092
  %3561 = vmatprep.subr.bf16.mxu0 0
  %3562 = vmatpush2.bf16.msra.mxu0 0
  %3563 = vmatprep.subr.bf16.mxu0 0
  %3564 = vmatpush2.bf16.msra.mxu0 0
  %3565 = vmatprep.subr.bf16.mxu0 0
  %3566 = vmatpush2.bf16.msra.mxu0 0
  %3567 = vmatprep.subr.bf16.mxu0 0
  %3568 = vmatpush2.bf16.msra.mxu0 0
  %3569 = vmatprep.subr.bf16.mxu0 0
  %3570 = vmatpush2.bf16.msra.mxu0 0
  %3571 = vmatprep.subr.bf16.mxu0 0
  %3572 = vmatpush2.bf16.msra.mxu0 0
  %3573 = vmatprep.subr.bf16.mxu0 0
  %3574 = vmatpush2.bf16.msra.mxu0 0
  %3575 = vmatprep.subr.bf16.mxu0 0
  %3576 = vmatpush2.bf16.msra.mxu0 0
  %3577 = vmatprep.mubr.bf16.mxu0 0
  %3578 = vmatmul.mubr.bf16.gmra.mxu0 %v15
  %v3579 = vpop.f32.mrf.mxu0
  %v3580 = vadd.f32 %v532, %v3579
  %v3581 = vpop.f32.mrf.mxu0
  %v3582 = vadd.f32 %v532, %v3581
  %v3583 = vpop.f32.mrf.mxu0
  %v3584 = vpop.f32.mrf.mxu0
  %3585 = vdwg.mxu0
  %3586 = vmatprep.subr.bf16.mxu0 %v2543
  %3587 = vmatpush1.bf16.msra.mxu0 %v2542
  %3588 = vmatprep.subr.bf16.mxu0 %v2479
  %3589 = vmatpush1.bf16.msra.mxu0 %v2478
  %3590 = vmatprep.subr.bf16.mxu0 %v2415
  %3591 = vmatpush1.bf16.msra.mxu0 %v2414
  %3592 = vmatprep.subr.bf16.mxu0 %v2351
  %3593 = vmatpush1.bf16.msra.mxu0 %v2350
  %3594 = vmatprep.subr.bf16.mxu0 %v2287
  %3595 = vmatpush1.bf16.msra.mxu0 %v2286
  %3596 = vmatprep.subr.bf16.mxu0 %v2223
  %3597 = vmatpush1.bf16.msra.mxu0 %v2222
  %3598 = vmatprep.subr.bf16.mxu0 %v2159
  %3599 = vmatpush1.bf16.msra.mxu0 %v2158
  %3600 = vmatprep.subr.bf16.mxu0 %v2095
  %3601 = vmatpush1.bf16.msra.mxu0 %v2094
  %3602 = vmatprep.subr.bf16.mxu0 0
  %3603 = vmatpush2.bf16.msra.mxu0 0
  %3604 = vmatprep.subr.bf16.mxu0 0
  %3605 = vmatpush2.bf16.msra.mxu0 0
  %3606 = vmatprep.subr.bf16.mxu0 0
  %3607 = vmatpush2.bf16.msra.mxu0 0
  %3608 = vmatprep.subr.bf16.mxu0 0
  %3609 = vmatpush2.bf16.msra.mxu0 0
  %3610 = vmatprep.subr.bf16.mxu0 0
  %3611 = vmatpush2.bf16.msra.mxu0 0
  %3612 = vmatprep.subr.bf16.mxu0 0
  %3613 = vmatpush2.bf16.msra.mxu0 0
  %3614 = vmatprep.subr.bf16.mxu0 0
  %3615 = vmatpush2.bf16.msra.mxu0 0
  %3616 = vmatprep.subr.bf16.mxu0 0
  %3617 = vmatpush2.bf16.msra.mxu0 0
  %3618 = vmatprep.mubr.bf16.mxu0 0
  %3619 = vmatmul.mubr.bf16.gmra.mxu0 %v15
  %v3620 = vpop.f32.mrf.mxu0
  %v3621 = vadd.f32 %v532, %v3620
  %v3622 = vpop.f32.mrf.mxu0
  %v3623 = vadd.f32 %v532, %v3622
  %v3624 = vpop.f32.mrf.mxu0
  %v3625 = vpop.f32.mrf.mxu0
  %3626 = vdwg.mxu0
  %3627 = vmatprep.subr.bf16.mxu0 %v2545
  %3628 = vmatpush1.bf16.msra.mxu0 %v2544
  %3629 = vmatprep.subr.bf16.mxu0 %v2481
  %3630 = vmatpush1.bf16.msra.mxu0 %v2480
  %3631 = vmatprep.subr.bf16.mxu0 %v2417
  %3632 = vmatpush1.bf16.msra.mxu0 %v2416
  %3633 = vmatprep.subr.bf16.mxu0 %v2353
  %3634 = vmatpush1.bf16.msra.mxu0 %v2352
  %3635 = vmatprep.subr.bf16.mxu0 %v2289
  %3636 = vmatpush1.bf16.msra.mxu0 %v2288
  %3637 = vmatprep.subr.bf16.mxu0 %v2225
  %3638 = vmatpush1.bf16.msra.mxu0 %v2224
  %3639 = vmatprep.subr.bf16.mxu0 %v2161
  %3640 = vmatpush1.bf16.msra.mxu0 %v2160
  %3641 = vmatprep.subr.bf16.mxu0 %v2097
  %3642 = vmatpush1.bf16.msra.mxu0 %v2096
  %3643 = vmatprep.subr.bf16.mxu0 0
  %3644 = vmatpush2.bf16.msra.mxu0 0
  %3645 = vmatprep.subr.bf16.mxu0 0
  %3646 = vmatpush2.bf16.msra.mxu0 0
  %3647 = vmatprep.subr.bf16.mxu0 0
  %3648 = vmatpush2.bf16.msra.mxu0 0
  %3649 = vmatprep.subr.bf16.mxu0 0
  %3650 = vmatpush2.bf16.msra.mxu0 0
  %3651 = vmatprep.subr.bf16.mxu0 0
  %3652 = vmatpush2.bf16.msra.mxu0 0
  %3653 = vmatprep.subr.bf16.mxu0 0
  %3654 = vmatpush2.bf16.msra.mxu0 0
  %3655 = vmatprep.subr.bf16.mxu0 0
  %3656 = vmatpush2.bf16.msra.mxu0 0
  %3657 = vmatprep.subr.bf16.mxu0 0
  %3658 = vmatpush2.bf16.msra.mxu0 0
  %3659 = vmatprep.mubr.bf16.mxu0 0
  %3660 = vmatmul.mubr.bf16.gmra.mxu0 %v15
  %v3661 = vpop.f32.mrf.mxu0
  %v3662 = vadd.f32 %v532, %v3661
  %v3663 = vpop.f32.mrf.mxu0
  %v3664 = vadd.f32 %v532, %v3663
  %v3665 = vpop.f32.mrf.mxu0
  %v3666 = vpop.f32.mrf.mxu0
  %3667 = vdwg.mxu0
  %3668 = vmatprep.subr.bf16.mxu0 %v2547
  %3669 = vmatpush1.bf16.msra.mxu0 %v2546
  %3670 = vmatprep.subr.bf16.mxu0 %v2483
  %3671 = vmatpush1.bf16.msra.mxu0 %v2482
  %3672 = vmatprep.subr.bf16.mxu0 %v2419
  %3673 = vmatpush1.bf16.msra.mxu0 %v2418
  %3674 = vmatprep.subr.bf16.mxu0 %v2355
  %3675 = vmatpush1.bf16.msra.mxu0 %v2354
  %3676 = vmatprep.subr.bf16.mxu0 %v2291
  %3677 = vmatpush1.bf16.msra.mxu0 %v2290
  %3678 = vmatprep.subr.bf16.mxu0 %v2227
  %3679 = vmatpush1.bf16.msra.mxu0 %v2226
  %3680 = vmatprep.subr.bf16.mxu0 %v2163
  %3681 = vmatpush1.bf16.msra.mxu0 %v2162
  %3682 = vmatprep.subr.bf16.mxu0 %v2099
  %3683 = vmatpush1.bf16.msra.mxu0 %v2098
  %3684 = vmatprep.subr.bf16.mxu0 0
  %3685 = vmatpush2.bf16.msra.mxu0 0
  %3686 = vmatprep.subr.bf16.mxu0 0
  %3687 = vmatpush2.bf16.msra.mxu0 0
  %3688 = vmatprep.subr.bf16.mxu0 0
  %3689 = vmatpush2.bf16.msra.mxu0 0
  %3690 = vmatprep.subr.bf16.mxu0 0
  %3691 = vmatpush2.bf16.msra.mxu0 0
  %3692 = vmatprep.subr.bf16.mxu0 0
  %3693 = vmatpush2.bf16.msra.mxu0 0
  %3694 = vmatprep.subr.bf16.mxu0 0
  %3695 = vmatpush2.bf16.msra.mxu0 0
  %3696 = vmatprep.subr.bf16.mxu0 0
  %3697 = vmatpush2.bf16.msra.mxu0 0
  %3698 = vmatprep.subr.bf16.mxu0 0
  %3699 = vmatpush2.bf16.msra.mxu0 0
  %3700 = vmatprep.mubr.bf16.mxu0 0
  %3701 = vmatmul.mubr.bf16.gmra.mxu0 %v15
  %v3702 = vpop.f32.mrf.mxu0
  %v3703 = vadd.f32 %v532, %v3702
  %v3704 = vpop.f32.mrf.mxu0
  %v3705 = vadd.f32 %v532, %v3704
  %v3706 = vpop.f32.mrf.mxu0
  %v3707 = vpop.f32.mrf.mxu0
  %3708 = vdwg.mxu0
  %3709 = vmatprep.subr.bf16.mxu0 %v2549
  %3710 = vmatpush1.bf16.msra.mxu0 %v2548
  %3711 = vmatprep.subr.bf16.mxu0 %v2485
  %3712 = vmatpush1.bf16.msra.mxu0 %v2484
  %3713 = vmatprep.subr.bf16.mxu0 %v2421
  %3714 = vmatpush1.bf16.msra.mxu0 %v2420
  %3715 = vmatprep.subr.bf16.mxu0 %v2357
  %3716 = vmatpush1.bf16.msra.mxu0 %v2356
  %3717 = vmatprep.subr.bf16.mxu0 %v2293
  %3718 = vmatpush1.bf16.msra.mxu0 %v2292
  %3719 = vmatprep.subr.bf16.mxu0 %v2229
  %3720 = vmatpush1.bf16.msra.mxu0 %v2228
  %3721 = vmatprep.subr.bf16.mxu0 %v2165
  %3722 = vmatpush1.bf16.msra.mxu0 %v2164
  %3723 = vmatprep.subr.bf16.mxu0 %v2101
  %3724 = vmatpush1.bf16.msra.mxu0 %v2100
  %3725 = vmatprep.subr.bf16.mxu0 0
  %3726 = vmatpush2.bf16.msra.mxu0 0
  %3727 = vmatprep.subr.bf16.mxu0 0
  %3728 = vmatpush2.bf16.msra.mxu0 0
  %3729 = vmatprep.subr.bf16.mxu0 0
  %3730 = vmatpush2.bf16.msra.mxu0 0
  %3731 = vmatprep.subr.bf16.mxu0 0
  %3732 = vmatpush2.bf16.msra.mxu0 0
  %3733 = vmatprep.subr.bf16.mxu0 0
  %3734 = vmatpush2.bf16.msra.mxu0 0
  %3735 = vmatprep.subr.bf16.mxu0 0
  %3736 = vmatpush2.bf16.msra.mxu0 0
  %3737 = vmatprep.subr.bf16.mxu0 0
  %3738 = vmatpush2.bf16.msra.mxu0 0
  %3739 = vmatprep.subr.bf16.mxu0 0
  %3740 = vmatpush2.bf16.msra.mxu0 0
  %3741 = vmatprep.mubr.bf16.mxu0 0
  %3742 = vmatmul.mubr.bf16.gmra.mxu0 %v15
  %v3743 = vpop.f32.mrf.mxu0
  %v3744 = vadd.f32 %v532, %v3743
  %v3745 = vpop.f32.mrf.mxu0
  %v3746 = vadd.f32 %v532, %v3745
  %v3747 = vpop.f32.mrf.mxu0
  %v3748 = vpop.f32.mrf.mxu0
  %3749 = vdwg.mxu0
  %3750 = vmatprep.subr.bf16.mxu0 %v2551
  %3751 = vmatpush1.bf16.msra.mxu0 %v2550
  %3752 = vmatprep.subr.bf16.mxu0 %v2487
  %3753 = vmatpush1.bf16.msra.mxu0 %v2486
  %3754 = vmatprep.subr.bf16.mxu0 %v2423
  %3755 = vmatpush1.bf16.msra.mxu0 %v2422
  %3756 = vmatprep.subr.bf16.mxu0 %v2359
  %3757 = vmatpush1.bf16.msra.mxu0 %v2358
  %3758 = vmatprep.subr.bf16.mxu0 %v2295
  %3759 = vmatpush1.bf16.msra.mxu0 %v2294
  %3760 = vmatprep.subr.bf16.mxu0 %v2231
  %3761 = vmatpush1.bf16.msra.mxu0 %v2230
  %3762 = vmatprep.subr.bf16.mxu0 %v2167
  %3763 = vmatpush1.bf16.msra.mxu0 %v2166
  %3764 = vmatprep.subr.bf16.mxu0 %v2103
  %3765 = vmatpush1.bf16.msra.mxu0 %v2102
  %3766 = vmatprep.subr.bf16.mxu0 0
  %3767 = vmatpush2.bf16.msra.mxu0 0
  %3768 = vmatprep.subr.bf16.mxu0 0
  %3769 = vmatpush2.bf16.msra.mxu0 0
  %3770 = vmatprep.subr.bf16.mxu0 0
  %3771 = vmatpush2.bf16.msra.mxu0 0
  %3772 = vmatprep.subr.bf16.mxu0 0
  %3773 = vmatpush2.bf16.msra.mxu0 0
  %3774 = vmatprep.subr.bf16.mxu0 0
  %3775 = vmatpush2.bf16.msra.mxu0 0
  %3776 = vmatprep.subr.bf16.mxu0 0
  %3777 = vmatpush2.bf16.msra.mxu0 0
  %3778 = vmatprep.subr.bf16.mxu0 0
  %3779 = vmatpush2.bf16.msra.mxu0 0
  %3780 = vmatprep.subr.bf16.mxu0 0
  %3781 = vmatpush2.bf16.msra.mxu0 0
  %3782 = vmatprep.mubr.bf16.mxu0 0
  %3783 = vmatmul.mubr.bf16.gmra.mxu0 %v15
  %v3784 = vpop.f32.mrf.mxu0
  %v3785 = vadd.f32 %v532, %v3784
  %v3786 = vpop.f32.mrf.mxu0
  %v3787 = vadd.f32 %v532, %v3786
  %v3788 = vpop.f32.mrf.mxu0
  %v3789 = vpop.f32.mrf.mxu0
  %3790 = vdwg.mxu0
  %3791 = vmatprep.subr.bf16.mxu0 %v2553
  %3792 = vmatpush1.bf16.msra.mxu0 %v2552
  %3793 = vmatprep.subr.bf16.mxu0 %v2489
  %3794 = vmatpush1.bf16.msra.mxu0 %v2488
  %3795 = vmatprep.subr.bf16.mxu0 %v2425
  %3796 = vmatpush1.bf16.msra.mxu0 %v2424
  %3797 = vmatprep.subr.bf16.mxu0 %v2361
  %3798 = vmatpush1.bf16.msra.mxu0 %v2360
  %3799 = vmatprep.subr.bf16.mxu0 %v2297
  %3800 = vmatpush1.bf16.msra.mxu0 %v2296
  %3801 = vmatprep.subr.bf16.mxu0 %v2233
  %3802 = vmatpush1.bf16.msra.mxu0 %v2232
  %3803 = vmatprep.subr.bf16.mxu0 %v2169
  %3804 = vmatpush1.bf16.msra.mxu0 %v2168
  %3805 = vmatprep.subr.bf16.mxu0 %v2105
  %3806 = vmatpush1.bf16.msra.mxu0 %v2104
  %3807 = vmatprep.subr.bf16.mxu0 0
  %3808 = vmatpush2.bf16.msra.mxu0 0
  %3809 = vmatprep.subr.bf16.mxu0 0
  %3810 = vmatpush2.bf16.msra.mxu0 0
  %3811 = vmatprep.subr.bf16.mxu0 0
  %3812 = vmatpush2.bf16.msra.mxu0 0
  %3813 = vmatprep.subr.bf16.mxu0 0
  %3814 = vmatpush2.bf16.msra.mxu0 0
  %3815 = vmatprep.subr.bf16.mxu0 0
  %3816 = vmatpush2.bf16.msra.mxu0 0
  %3817 = vmatprep.subr.bf16.mxu0 0
  %3818 = vmatpush2.bf16.msra.mxu0 0
  %3819 = vmatprep.subr.bf16.mxu0 0
  %3820 = vmatpush2.bf16.msra.mxu0 0
  %3821 = vmatprep.subr.bf16.mxu0 0
  %3822 = vmatpush2.bf16.msra.mxu0 0
  %3823 = vmatprep.mubr.bf16.mxu0 0
  %3824 = vmatmul.mubr.bf16.gmra.mxu0 %v15
  %v3825 = vpop.f32.mrf.mxu0
  %v3826 = vadd.f32 %v532, %v3825
  %v3827 = vpop.f32.mrf.mxu0
  %v3828 = vadd.f32 %v532, %v3827
  %v3829 = vpop.f32.mrf.mxu0
  %v3830 = vpop.f32.mrf.mxu0
  %3831 = vdwg.mxu0
  %3832 = vmatprep.subr.bf16.mxu0 %v2555
  %3833 = vmatpush1.bf16.msra.mxu0 %v2554
  %3834 = vmatprep.subr.bf16.mxu0 %v2491
  %3835 = vmatpush1.bf16.msra.mxu0 %v2490
  %3836 = vmatprep.subr.bf16.mxu0 %v2427
  %3837 = vmatpush1.bf16.msra.mxu0 %v2426
  %3838 = vmatprep.subr.bf16.mxu0 %v2363
  %3839 = vmatpush1.bf16.msra.mxu0 %v2362
  %3840 = vmatprep.subr.bf16.mxu0 %v2299
  %3841 = vmatpush1.bf16.msra.mxu0 %v2298
  %3842 = vmatprep.subr.bf16.mxu0 %v2235
  %3843 = vmatpush1.bf16.msra.mxu0 %v2234
  %3844 = vmatprep.subr.bf16.mxu0 %v2171
  %3845 = vmatpush1.bf16.msra.mxu0 %v2170
  %3846 = vmatprep.subr.bf16.mxu0 %v2107
  %3847 = vmatpush1.bf16.msra.mxu0 %v2106
  %3848 = vmatprep.subr.bf16.mxu0 0
  %3849 = vmatpush2.bf16.msra.mxu0 0
  %3850 = vmatprep.subr.bf16.mxu0 0
  %3851 = vmatpush2.bf16.msra.mxu0 0
  %3852 = vmatprep.subr.bf16.mxu0 0
  %3853 = vmatpush2.bf16.msra.mxu0 0
  %3854 = vmatprep.subr.bf16.mxu0 0
  %3855 = vmatpush2.bf16.msra.mxu0 0
  %3856 = vmatprep.subr.bf16.mxu0 0
  %3857 = vmatpush2.bf16.msra.mxu0 0
  %3858 = vmatprep.subr.bf16.mxu0 0
  %3859 = vmatpush2.bf16.msra.mxu0 0
  %3860 = vmatprep.subr.bf16.mxu0 0
  %3861 = vmatpush2.bf16.msra.mxu0 0
  %3862 = vmatprep.subr.bf16.mxu0 0
  %3863 = vmatpush2.bf16.msra.mxu0 0
  %3864 = vmatprep.mubr.bf16.mxu0 0
  %3865 = vmatmul.mubr.bf16.gmra.mxu0 %v15
  %v3866 = vpop.f32.mrf.mxu0
  %v3867 = vadd.f32 %v532, %v3866
  %v3868 = vpop.f32.mrf.mxu0
  %v3869 = vadd.f32 %v532, %v3868
  %v3870 = vpop.f32.mrf.mxu0
  %v3871 = vpop.f32.mrf.mxu0
  %3872 = vdwg.mxu0
  %3873 = vmatprep.subr.bf16.mxu0 %v2557
  %3874 = vmatpush1.bf16.msra.mxu0 %v2556
  %3875 = vmatprep.subr.bf16.mxu0 %v2493
  %3876 = vmatpush1.bf16.msra.mxu0 %v2492
  %3877 = vmatprep.subr.bf16.mxu0 %v2429
  %3878 = vmatpush1.bf16.msra.mxu0 %v2428
  %3879 = vmatprep.subr.bf16.mxu0 %v2365
  %3880 = vmatpush1.bf16.msra.mxu0 %v2364
  %3881 = vmatprep.subr.bf16.mxu0 %v2301
  %3882 = vmatpush1.bf16.msra.mxu0 %v2300
  %3883 = vmatprep.subr.bf16.mxu0 %v2237
  %3884 = vmatpush1.bf16.msra.mxu0 %v2236
  %3885 = vmatprep.subr.bf16.mxu0 %v2173
  %3886 = vmatpush1.bf16.msra.mxu0 %v2172
  %3887 = vmatprep.subr.bf16.mxu0 %v2109
  %3888 = vmatpush1.bf16.msra.mxu0 %v2108
  %3889 = vmatprep.subr.bf16.mxu0 0
  %3890 = vmatpush2.bf16.msra.mxu0 0
  %3891 = vmatprep.subr.bf16.mxu0 0
  %3892 = vmatpush2.bf16.msra.mxu0 0
  %3893 = vmatprep.subr.bf16.mxu0 0
  %3894 = vmatpush2.bf16.msra.mxu0 0
  %3895 = vmatprep.subr.bf16.mxu0 0
  %3896 = vmatpush2.bf16.msra.mxu0 0
  %3897 = vmatprep.subr.bf16.mxu0 0
  %3898 = vmatpush2.bf16.msra.mxu0 0
  %3899 = vmatprep.subr.bf16.mxu0 0
  %3900 = vmatpush2.bf16.msra.mxu0 0
  %3901 = vmatprep.subr.bf16.mxu0 0
  %3902 = vmatpush2.bf16.msra.mxu0 0
  %3903 = vmatprep.subr.bf16.mxu0 0
  %3904 = vmatpush2.bf16.msra.mxu0 0
  %3905 = vmatprep.mubr.bf16.mxu0 0
  %3906 = vmatmul.mubr.bf16.gmra.mxu0 %v15
  %v3907 = vpop.f32.mrf.mxu0
  %v3908 = vadd.f32 %v532, %v3907
  %v3909 = vpop.f32.mrf.mxu0
  %v3910 = vadd.f32 %v532, %v3909
  %v3911 = vpop.f32.mrf.mxu0
  %v3912 = vpop.f32.mrf.mxu0
  %3913 = vdwg.mxu0
  %3914 = vmatprep.subr.bf16.mxu0 %v2559
  %3915 = vmatpush1.bf16.msra.mxu0 %v2558
  %3916 = vmatprep.subr.bf16.mxu0 %v2495
  %3917 = vmatpush1.bf16.msra.mxu0 %v2494
  %3918 = vmatprep.subr.bf16.mxu0 %v2431
  %3919 = vmatpush1.bf16.msra.mxu0 %v2430
  %3920 = vmatprep.subr.bf16.mxu0 %v2367
  %3921 = vmatpush1.bf16.msra.mxu0 %v2366
  %3922 = vmatprep.subr.bf16.mxu0 %v2303
  %3923 = vmatpush1.bf16.msra.mxu0 %v2302
  %3924 = vmatprep.subr.bf16.mxu0 %v2239
  %3925 = vmatpush1.bf16.msra.mxu0 %v2238
  %3926 = vmatprep.subr.bf16.mxu0 %v2175
  %3927 = vmatpush1.bf16.msra.mxu0 %v2174
  %3928 = vmatprep.subr.bf16.mxu0 %v2111
  %3929 = vmatpush1.bf16.msra.mxu0 %v2110
  %3930 = vmatprep.subr.bf16.mxu0 0
  %3931 = vmatpush2.bf16.msra.mxu0 0
  %3932 = vmatprep.subr.bf16.mxu0 0
  %3933 = vmatpush2.bf16.msra.mxu0 0
  %3934 = vmatprep.subr.bf16.mxu0 0
  %3935 = vmatpush2.bf16.msra.mxu0 0
  %3936 = vmatprep.subr.bf16.mxu0 0
  %3937 = vmatpush2.bf16.msra.mxu0 0
  %3938 = vmatprep.subr.bf16.mxu0 0
  %3939 = vmatpush2.bf16.msra.mxu0 0
  %3940 = vmatprep.subr.bf16.mxu0 0
  %3941 = vmatpush2.bf16.msra.mxu0 0
  %3942 = vmatprep.subr.bf16.mxu0 0
  %3943 = vmatpush2.bf16.msra.mxu0 0
  %3944 = vmatprep.subr.bf16.mxu0 0
  %3945 = vmatpush2.bf16.msra.mxu0 0
  %3946 = vmatprep.mubr.bf16.mxu0 0
  %3947 = vmatmul.mubr.bf16.gmra.mxu0 %v15
  %v3948 = vpop.f32.mrf.mxu0
  %v3949 = vadd.f32 %v532, %v3948
  %v3950 = vpop.f32.mrf.mxu0
  %v3951 = vadd.f32 %v532, %v3950
  %v3952 = vpop.f32.mrf.mxu0
  %v3953 = vpop.f32.mrf.mxu0
  %3954 = vdwg.mxu0
  %3955 = vmatprep.subr.bf16.mxu0 %v2561
  %3956 = vmatpush1.bf16.msra.mxu0 %v2560
  %3957 = vmatprep.subr.bf16.mxu0 %v2497
  %3958 = vmatpush1.bf16.msra.mxu0 %v2496
  %3959 = vmatprep.subr.bf16.mxu0 %v2433
  %3960 = vmatpush1.bf16.msra.mxu0 %v2432
  %3961 = vmatprep.subr.bf16.mxu0 %v2369
  %3962 = vmatpush1.bf16.msra.mxu0 %v2368
  %3963 = vmatprep.subr.bf16.mxu0 %v2305
  %3964 = vmatpush1.bf16.msra.mxu0 %v2304
  %3965 = vmatprep.subr.bf16.mxu0 %v2241
  %3966 = vmatpush1.bf16.msra.mxu0 %v2240
  %3967 = vmatprep.subr.bf16.mxu0 %v2177
  %3968 = vmatpush1.bf16.msra.mxu0 %v2176
  %3969 = vmatprep.subr.bf16.mxu0 %v2113
  %3970 = vmatpush1.bf16.msra.mxu0 %v2112
  %3971 = vmatprep.subr.bf16.mxu0 0
  %3972 = vmatpush2.bf16.msra.mxu0 0
  %3973 = vmatprep.subr.bf16.mxu0 0
  %3974 = vmatpush2.bf16.msra.mxu0 0
  %3975 = vmatprep.subr.bf16.mxu0 0
  %3976 = vmatpush2.bf16.msra.mxu0 0
  %3977 = vmatprep.subr.bf16.mxu0 0
  %3978 = vmatpush2.bf16.msra.mxu0 0
  %3979 = vmatprep.subr.bf16.mxu0 0
  %3980 = vmatpush2.bf16.msra.mxu0 0
  %3981 = vmatprep.subr.bf16.mxu0 0
  %3982 = vmatpush2.bf16.msra.mxu0 0
  %3983 = vmatprep.subr.bf16.mxu0 0
  %3984 = vmatpush2.bf16.msra.mxu0 0
  %3985 = vmatprep.subr.bf16.mxu0 0
  %3986 = vmatpush2.bf16.msra.mxu0 0
  %3987 = vmatprep.mubr.bf16.mxu0 0
  %3988 = vmatmul.mubr.bf16.gmra.mxu0 %v15
  %v3989 = vpop.f32.mrf.mxu0
  %v3990 = vadd.f32 %v532, %v3989
  %v3991 = vpop.f32.mrf.mxu0
  %v3992 = vadd.f32 %v532, %v3991
  %v3993 = vpop.f32.mrf.mxu0
  %v3994 = vpop.f32.mrf.mxu0
  %3995 = vdwg.mxu0
  %3996 = vmatprep.subr.bf16.mxu0 %v2563
  %3997 = vmatpush1.bf16.msra.mxu0 %v2562
  %3998 = vmatprep.subr.bf16.mxu0 %v2499
  %3999 = vmatpush1.bf16.msra.mxu0 %v2498
  %4000 = vmatprep.subr.bf16.mxu0 %v2435
  %4001 = vmatpush1.bf16.msra.mxu0 %v2434
  %4002 = vmatprep.subr.bf16.mxu0 %v2371
  %4003 = vmatpush1.bf16.msra.mxu0 %v2370
  %4004 = vmatprep.subr.bf16.mxu0 %v2307
  %4005 = vmatpush1.bf16.msra.mxu0 %v2306
  %4006 = vmatprep.subr.bf16.mxu0 %v2243
  %4007 = vmatpush1.bf16.msra.mxu0 %v2242
  %4008 = vmatprep.subr.bf16.mxu0 %v2179
  %4009 = vmatpush1.bf16.msra.mxu0 %v2178
  %4010 = vmatprep.subr.bf16.mxu0 %v2115
  %4011 = vmatpush1.bf16.msra.mxu0 %v2114
  %4012 = vmatprep.subr.bf16.mxu0 0
  %4013 = vmatpush2.bf16.msra.mxu0 0
  %4014 = vmatprep.subr.bf16.mxu0 0
  %4015 = vmatpush2.bf16.msra.mxu0 0
  %4016 = vmatprep.subr.bf16.mxu0 0
  %4017 = vmatpush2.bf16.msra.mxu0 0
  %4018 = vmatprep.subr.bf16.mxu0 0
  %4019 = vmatpush2.bf16.msra.mxu0 0
  %4020 = vmatprep.subr.bf16.mxu0 0
  %4021 = vmatpush2.bf16.msra.mxu0 0
  %4022 = vmatprep.subr.bf16.mxu0 0
  %4023 = vmatpush2.bf16.msra.mxu0 0
  %4024 = vmatprep.subr.bf16.mxu0 0
  %4025 = vmatpush2.bf16.msra.mxu0 0
  %4026 = vmatprep.subr.bf16.mxu0 0
  %4027 = vmatpush2.bf16.msra.mxu0 0
  %4028 = vmatprep.mubr.bf16.mxu0 0
  %4029 = vmatmul.mubr.bf16.gmra.mxu0 %v15
  %v4030 = vpop.f32.mrf.mxu0
  %v4031 = vadd.f32 %v532, %v4030
  %v4032 = vpop.f32.mrf.mxu0
  %v4033 = vadd.f32 %v532, %v4032
  %v4034 = vpop.f32.mrf.mxu0
  %v4035 = vpop.f32.mrf.mxu0
  %4036 = vdwg.mxu0
  %4037 = vmatprep.subr.bf16.mxu0 %v2565
  %4038 = vmatpush1.bf16.msra.mxu0 %v2564
  %4039 = vmatprep.subr.bf16.mxu0 %v2501
  %4040 = vmatpush1.bf16.msra.mxu0 %v2500
  %4041 = vmatprep.subr.bf16.mxu0 %v2437
  %4042 = vmatpush1.bf16.msra.mxu0 %v2436
  %4043 = vmatprep.subr.bf16.mxu0 %v2373
  %4044 = vmatpush1.bf16.msra.mxu0 %v2372
  %4045 = vmatprep.subr.bf16.mxu0 %v2309
  %4046 = vmatpush1.bf16.msra.mxu0 %v2308
  %4047 = vmatprep.subr.bf16.mxu0 %v2245
  %4048 = vmatpush1.bf16.msra.mxu0 %v2244
  %4049 = vmatprep.subr.bf16.mxu0 %v2181
  %4050 = vmatpush1.bf16.msra.mxu0 %v2180
  %4051 = vmatprep.subr.bf16.mxu0 %v2117
  %4052 = vmatpush1.bf16.msra.mxu0 %v2116
  %4053 = vmatprep.subr.bf16.mxu0 0
  %4054 = vmatpush2.bf16.msra.mxu0 0
  %4055 = vmatprep.subr.bf16.mxu0 0
  %4056 = vmatpush2.bf16.msra.mxu0 0
  %4057 = vmatprep.subr.bf16.mxu0 0
  %4058 = vmatpush2.bf16.msra.mxu0 0
  %4059 = vmatprep.subr.bf16.mxu0 0
  %4060 = vmatpush2.bf16.msra.mxu0 0
  %4061 = vmatprep.subr.bf16.mxu0 0
  %4062 = vmatpush2.bf16.msra.mxu0 0
  %4063 = vmatprep.subr.bf16.mxu0 0
  %4064 = vmatpush2.bf16.msra.mxu0 0
  %4065 = vmatprep.subr.bf16.mxu0 0
  %4066 = vmatpush2.bf16.msra.mxu0 0
  %4067 = vmatprep.subr.bf16.mxu0 0
  %4068 = vmatpush2.bf16.msra.mxu0 0
  %4069 = vmatprep.mubr.bf16.mxu0 0
  %4070 = vmatmul.mubr.bf16.gmra.mxu0 %v15
  %v4071 = vpop.f32.mrf.mxu0
  %v4072 = vadd.f32 %v532, %v4071
  %v4073 = vpop.f32.mrf.mxu0
  %v4074 = vadd.f32 %v532, %v4073
  %v4075 = vpop.f32.mrf.mxu0
  %v4076 = vpop.f32.mrf.mxu0
  %4077 = vdwg.mxu0
  %4078 = vmatprep.subr.bf16.mxu0 %v2567
  %4079 = vmatpush1.bf16.msra.mxu0 %v2566
  %4080 = vmatprep.subr.bf16.mxu0 %v2503
  %4081 = vmatpush1.bf16.msra.mxu0 %v2502
  %4082 = vmatprep.subr.bf16.mxu0 %v2439
  %4083 = vmatpush1.bf16.msra.mxu0 %v2438
  %4084 = vmatprep.subr.bf16.mxu0 %v2375
  %4085 = vmatpush1.bf16.msra.mxu0 %v2374
  %4086 = vmatprep.subr.bf16.mxu0 %v2311
  %4087 = vmatpush1.bf16.msra.mxu0 %v2310
  %4088 = vmatprep.subr.bf16.mxu0 %v2247
  %4089 = vmatpush1.bf16.msra.mxu0 %v2246
  %4090 = vmatprep.subr.bf16.mxu0 %v2183
  %4091 = vmatpush1.bf16.msra.mxu0 %v2182
  %4092 = vmatprep.subr.bf16.mxu0 %v2119
  %4093 = vmatpush1.bf16.msra.mxu0 %v2118
  %4094 = vmatprep.subr.bf16.mxu0 0
  %4095 = vmatpush2.bf16.msra.mxu0 0
  %4096 = vmatprep.subr.bf16.mxu0 0
  %4097 = vmatpush2.bf16.msra.mxu0 0
  %4098 = vmatprep.subr.bf16.mxu0 0
  %4099 = vmatpush2.bf16.msra.mxu0 0
  %4100 = vmatprep.subr.bf16.mxu0 0
  %4101 = vmatpush2.bf16.msra.mxu0 0
  %4102 = vmatprep.subr.bf16.mxu0 0
  %4103 = vmatpush2.bf16.msra.mxu0 0
  %4104 = vmatprep.subr.bf16.mxu0 0
  %4105 = vmatpush2.bf16.msra.mxu0 0
  %4106 = vmatprep.subr.bf16.mxu0 0
  %4107 = vmatpush2.bf16.msra.mxu0 0
  %4108 = vmatprep.subr.bf16.mxu0 0
  %4109 = vmatpush2.bf16.msra.mxu0 0
  %4110 = vmatprep.mubr.bf16.mxu0 0
  %4111 = vmatmul.mubr.bf16.gmra.mxu0 %v15
  %v4112 = vpop.f32.mrf.mxu0
  %v4113 = vadd.f32 %v532, %v4112
  %v4114 = vpop.f32.mrf.mxu0
  %v4115 = vadd.f32 %v532, %v4114
  %v4116 = vpop.f32.mrf.mxu0
  %v4117 = vpop.f32.mrf.mxu0
  %4118 = vdwg.mxu0
  %4119 = vmatprep.subr.bf16.mxu0 %v2569
  %4120 = vmatpush1.bf16.msra.mxu0 %v2568
  %4121 = vmatprep.subr.bf16.mxu0 %v2505
  %4122 = vmatpush1.bf16.msra.mxu0 %v2504
  %4123 = vmatprep.subr.bf16.mxu0 %v2441
  %4124 = vmatpush1.bf16.msra.mxu0 %v2440
  %4125 = vmatprep.subr.bf16.mxu0 %v2377
  %4126 = vmatpush1.bf16.msra.mxu0 %v2376
  %4127 = vmatprep.subr.bf16.mxu0 %v2313
  %4128 = vmatpush1.bf16.msra.mxu0 %v2312
  %4129 = vmatprep.subr.bf16.mxu0 %v2249
  %4130 = vmatpush1.bf16.msra.mxu0 %v2248
  %4131 = vmatprep.subr.bf16.mxu0 %v2185
  %4132 = vmatpush1.bf16.msra.mxu0 %v2184
  %4133 = vmatprep.subr.bf16.mxu0 %v2121
  %4134 = vmatpush1.bf16.msra.mxu0 %v2120
  %4135 = vmatprep.subr.bf16.mxu0 0
  %4136 = vmatpush2.bf16.msra.mxu0 0
  %4137 = vmatprep.subr.bf16.mxu0 0
  %4138 = vmatpush2.bf16.msra.mxu0 0
  %4139 = vmatprep.subr.bf16.mxu0 0
  %4140 = vmatpush2.bf16.msra.mxu0 0
  %4141 = vmatprep.subr.bf16.mxu0 0
  %4142 = vmatpush2.bf16.msra.mxu0 0
  %4143 = vmatprep.subr.bf16.mxu0 0
  %4144 = vmatpush2.bf16.msra.mxu0 0
  %4145 = vmatprep.subr.bf16.mxu0 0
  %4146 = vmatpush2.bf16.msra.mxu0 0
  %4147 = vmatprep.subr.bf16.mxu0 0
  %4148 = vmatpush2.bf16.msra.mxu0 0
  %4149 = vmatprep.subr.bf16.mxu0 0
  %4150 = vmatpush2.bf16.msra.mxu0 0
  %4151 = vmatprep.mubr.bf16.mxu0 0
  %4152 = vmatmul.mubr.bf16.gmra.mxu0 %v15
  %v4153 = vpop.f32.mrf.mxu0
  %v4154 = vadd.f32 %v532, %v4153
  %v4155 = vpop.f32.mrf.mxu0
  %v4156 = vadd.f32 %v532, %v4155
  %v4157 = vpop.f32.mrf.mxu0
  %v4158 = vpop.f32.mrf.mxu0
  %4159 = vdwg.mxu0
  %4160 = vmatprep.subr.bf16.mxu0 %v2571
  %4161 = vmatpush1.bf16.msra.mxu0 %v2570
  %4162 = vmatprep.subr.bf16.mxu0 %v2507
  %4163 = vmatpush1.bf16.msra.mxu0 %v2506
  %4164 = vmatprep.subr.bf16.mxu0 %v2443
  %4165 = vmatpush1.bf16.msra.mxu0 %v2442
  %4166 = vmatprep.subr.bf16.mxu0 %v2379
  %4167 = vmatpush1.bf16.msra.mxu0 %v2378
  %4168 = vmatprep.subr.bf16.mxu0 %v2315
  %4169 = vmatpush1.bf16.msra.mxu0 %v2314
  %4170 = vmatprep.subr.bf16.mxu0 %v2251
  %4171 = vmatpush1.bf16.msra.mxu0 %v2250
  %4172 = vmatprep.subr.bf16.mxu0 %v2187
  %4173 = vmatpush1.bf16.msra.mxu0 %v2186
  %4174 = vmatprep.subr.bf16.mxu0 %v2123
  %4175 = vmatpush1.bf16.msra.mxu0 %v2122
  %4176 = vmatprep.subr.bf16.mxu0 0
  %4177 = vmatpush2.bf16.msra.mxu0 0
  %4178 = vmatprep.subr.bf16.mxu0 0
  %4179 = vmatpush2.bf16.msra.mxu0 0
  %4180 = vmatprep.subr.bf16.mxu0 0
  %4181 = vmatpush2.bf16.msra.mxu0 0
  %4182 = vmatprep.subr.bf16.mxu0 0
  %4183 = vmatpush2.bf16.msra.mxu0 0
  %4184 = vmatprep.subr.bf16.mxu0 0
  %4185 = vmatpush2.bf16.msra.mxu0 0
  %4186 = vmatprep.subr.bf16.mxu0 0
  %4187 = vmatpush2.bf16.msra.mxu0 0
  %4188 = vmatprep.subr.bf16.mxu0 0
  %4189 = vmatpush2.bf16.msra.mxu0 0
  %4190 = vmatprep.subr.bf16.mxu0 0
  %4191 = vmatpush2.bf16.msra.mxu0 0
  %4192 = vmatprep.mubr.bf16.mxu0 0
  %4193 = vmatmul.mubr.bf16.gmra.mxu0 %v15
  %v4194 = vpop.f32.mrf.mxu0
  %v4195 = vadd.f32 %v532, %v4194
  %v4196 = vpop.f32.mrf.mxu0
  %v4197 = vadd.f32 %v532, %v4196
  %v4198 = vpop.f32.mrf.mxu0
  %v4199 = vpop.f32.mrf.mxu0
  %4200 = vdwg.mxu0
  %4201 = vmatprep.subr.bf16.mxu0 %v2573
  %4202 = vmatpush1.bf16.msra.mxu0 %v2572
  %4203 = vmatprep.subr.bf16.mxu0 %v2509
  %4204 = vmatpush1.bf16.msra.mxu0 %v2508
  %4205 = vmatprep.subr.bf16.mxu0 %v2445
  %4206 = vmatpush1.bf16.msra.mxu0 %v2444
  %4207 = vmatprep.subr.bf16.mxu0 %v2381
  %4208 = vmatpush1.bf16.msra.mxu0 %v2380
  %4209 = vmatprep.subr.bf16.mxu0 %v2317
  %4210 = vmatpush1.bf16.msra.mxu0 %v2316
  %4211 = vmatprep.subr.bf16.mxu0 %v2253
  %4212 = vmatpush1.bf16.msra.mxu0 %v2252
  %4213 = vmatprep.subr.bf16.mxu0 %v2189
  %4214 = vmatpush1.bf16.msra.mxu0 %v2188
  %4215 = vmatprep.subr.bf16.mxu0 %v2125
  %4216 = vmatpush1.bf16.msra.mxu0 %v2124
  %4217 = vmatprep.subr.bf16.mxu0 0
  %4218 = vmatpush2.bf16.msra.mxu0 0
  %4219 = vmatprep.subr.bf16.mxu0 0
  %4220 = vmatpush2.bf16.msra.mxu0 0
  %4221 = vmatprep.subr.bf16.mxu0 0
  %4222 = vmatpush2.bf16.msra.mxu0 0
  %4223 = vmatprep.subr.bf16.mxu0 0
  %4224 = vmatpush2.bf16.msra.mxu0 0
  %4225 = vmatprep.subr.bf16.mxu0 0
  %4226 = vmatpush2.bf16.msra.mxu0 0
  %4227 = vmatprep.subr.bf16.mxu0 0
  %4228 = vmatpush2.bf16.msra.mxu0 0
  %4229 = vmatprep.subr.bf16.mxu0 0
  %4230 = vmatpush2.bf16.msra.mxu0 0
  %4231 = vmatprep.subr.bf16.mxu0 0
  %4232 = vmatpush2.bf16.msra.mxu0 0
  %4233 = vmatprep.mubr.bf16.mxu0 0
  %4234 = vmatmul.mubr.bf16.gmra.mxu0 %v15
  %v4235 = vpop.f32.mrf.mxu0
  %v4236 = vadd.f32 %v532, %v4235
  %v4237 = vpop.f32.mrf.mxu0
  %v4238 = vadd.f32 %v532, %v4237
  %v4239 = vpop.f32.mrf.mxu0
  %v4240 = vpop.f32.mrf.mxu0
  %4241 = vdwg.mxu0
  %4242 = vmatprep.subr.bf16.mxu0 %v2575
  %4243 = vmatpush1.bf16.msra.mxu0 %v2574
  %4244 = vmatprep.subr.bf16.mxu0 %v2511
  %4245 = vmatpush1.bf16.msra.mxu0 %v2510
  %4246 = vmatprep.subr.bf16.mxu0 %v2447
  %4247 = vmatpush1.bf16.msra.mxu0 %v2446
  %4248 = vmatprep.subr.bf16.mxu0 %v2383
  %4249 = vmatpush1.bf16.msra.mxu0 %v2382
  %4250 = vmatprep.subr.bf16.mxu0 %v2319
  %4251 = vmatpush1.bf16.msra.mxu0 %v2318
  %4252 = vmatprep.subr.bf16.mxu0 %v2255
  %4253 = vmatpush1.bf16.msra.mxu0 %v2254
  %4254 = vmatprep.subr.bf16.mxu0 %v2191
  %4255 = vmatpush1.bf16.msra.mxu0 %v2190
  %4256 = vmatprep.subr.bf16.mxu0 %v2127
  %4257 = vmatpush1.bf16.msra.mxu0 %v2126
  %4258 = vmatprep.subr.bf16.mxu0 0
  %4259 = vmatpush2.bf16.msra.mxu0 0
  %4260 = vmatprep.subr.bf16.mxu0 0
  %4261 = vmatpush2.bf16.msra.mxu0 0
  %4262 = vmatprep.subr.bf16.mxu0 0
  %4263 = vmatpush2.bf16.msra.mxu0 0
  %4264 = vmatprep.subr.bf16.mxu0 0
  %4265 = vmatpush2.bf16.msra.mxu0 0
  %4266 = vmatprep.subr.bf16.mxu0 0
  %4267 = vmatpush2.bf16.msra.mxu0 0
  %4268 = vmatprep.subr.bf16.mxu0 0
  %4269 = vmatpush2.bf16.msra.mxu0 0
  %4270 = vmatprep.subr.bf16.mxu0 0
  %4271 = vmatpush2.bf16.msra.mxu0 0
  %4272 = vmatprep.subr.bf16.mxu0 0
  %4273 = vmatpush2.bf16.msra.mxu0 0
  %4274 = vmatprep.mubr.bf16.mxu0 0
  %4275 = vmatmul.mubr.bf16.gmra.mxu0 %v15
  %v4276 = vpop.f32.mrf.mxu0
  %v4277 = vadd.f32 %v532, %v4276
  %v4278 = vpop.f32.mrf.mxu0
  %v4279 = vadd.f32 %v532, %v4278
  %v4280 = vpop.f32.mrf.mxu0
  %v4281 = vpop.f32.mrf.mxu0
  %4282 = vdwg.mxu0
  %4283 = vmatprep.subr.bf16.mxu0 %v2577
  %4284 = vmatpush1.bf16.msra.mxu0 %v2576
  %4285 = vmatprep.subr.bf16.mxu0 %v2513
  %4286 = vmatpush1.bf16.msra.mxu0 %v2512
  %4287 = vmatprep.subr.bf16.mxu0 %v2449
  %4288 = vmatpush1.bf16.msra.mxu0 %v2448
  %4289 = vmatprep.subr.bf16.mxu0 %v2385
  %4290 = vmatpush1.bf16.msra.mxu0 %v2384
  %4291 = vmatprep.subr.bf16.mxu0 %v2321
  %4292 = vmatpush1.bf16.msra.mxu0 %v2320
  %4293 = vmatprep.subr.bf16.mxu0 %v2257
  %4294 = vmatpush1.bf16.msra.mxu0 %v2256
  %4295 = vmatprep.subr.bf16.mxu0 %v2193
  %4296 = vmatpush1.bf16.msra.mxu0 %v2192
  %4297 = vmatprep.subr.bf16.mxu0 %v2129
  %4298 = vmatpush1.bf16.msra.mxu0 %v2128
  %4299 = vmatprep.subr.bf16.mxu0 0
  %4300 = vmatpush2.bf16.msra.mxu0 0
  %4301 = vmatprep.subr.bf16.mxu0 0
  %4302 = vmatpush2.bf16.msra.mxu0 0
  %4303 = vmatprep.subr.bf16.mxu0 0
  %4304 = vmatpush2.bf16.msra.mxu0 0
  %4305 = vmatprep.subr.bf16.mxu0 0
  %4306 = vmatpush2.bf16.msra.mxu0 0
  %4307 = vmatprep.subr.bf16.mxu0 0
  %4308 = vmatpush2.bf16.msra.mxu0 0
  %4309 = vmatprep.subr.bf16.mxu0 0
  %4310 = vmatpush2.bf16.msra.mxu0 0
  %4311 = vmatprep.subr.bf16.mxu0 0
  %4312 = vmatpush2.bf16.msra.mxu0 0
  %4313 = vmatprep.subr.bf16.mxu0 0
  %4314 = vmatpush2.bf16.msra.mxu0 0
  %4315 = vmatprep.mubr.bf16.mxu0 0
  %4316 = vmatmul.mubr.bf16.gmra.mxu0 %v15
  %v4317 = vpop.f32.mrf.mxu0
  %v4318 = vadd.f32 %v532, %v4317
  %v4319 = vpop.f32.mrf.mxu0
  %v4320 = vadd.f32 %v532, %v4319
  %v4321 = vpop.f32.mrf.mxu0
  %v4322 = vpop.f32.mrf.mxu0
  %4323 = vdwg.mxu0
  %4324 = vmatprep.subr.bf16.mxu0 %v2579
  %4325 = vmatpush1.bf16.msra.mxu0 %v2578
  %4326 = vmatprep.subr.bf16.mxu0 %v2515
  %4327 = vmatpush1.bf16.msra.mxu0 %v2514
  %4328 = vmatprep.subr.bf16.mxu0 %v2451
  %4329 = vmatpush1.bf16.msra.mxu0 %v2450
  %4330 = vmatprep.subr.bf16.mxu0 %v2387
  %4331 = vmatpush1.bf16.msra.mxu0 %v2386
  %4332 = vmatprep.subr.bf16.mxu0 %v2323
  %4333 = vmatpush1.bf16.msra.mxu0 %v2322
  %4334 = vmatprep.subr.bf16.mxu0 %v2259
  %4335 = vmatpush1.bf16.msra.mxu0 %v2258
  %4336 = vmatprep.subr.bf16.mxu0 %v2195
  %4337 = vmatpush1.bf16.msra.mxu0 %v2194
  %4338 = vmatprep.subr.bf16.mxu0 %v2131
  %4339 = vmatpush1.bf16.msra.mxu0 %v2130
  %4340 = vmatprep.subr.bf16.mxu0 0
  %4341 = vmatpush2.bf16.msra.mxu0 0
  %4342 = vmatprep.subr.bf16.mxu0 0
  %4343 = vmatpush2.bf16.msra.mxu0 0
  %4344 = vmatprep.subr.bf16.mxu0 0
  %4345 = vmatpush2.bf16.msra.mxu0 0
  %4346 = vmatprep.subr.bf16.mxu0 0
  %4347 = vmatpush2.bf16.msra.mxu0 0
  %4348 = vmatprep.subr.bf16.mxu0 0
  %4349 = vmatpush2.bf16.msra.mxu0 0
  %4350 = vmatprep.subr.bf16.mxu0 0
  %4351 = vmatpush2.bf16.msra.mxu0 0
  %4352 = vmatprep.subr.bf16.mxu0 0
  %4353 = vmatpush2.bf16.msra.mxu0 0
  %4354 = vmatprep.subr.bf16.mxu0 0
  %4355 = vmatpush2.bf16.msra.mxu0 0
  %4356 = vmatprep.mubr.bf16.mxu0 0
  %4357 = vmatmul.mubr.bf16.gmra.mxu0 %v15
  %v4358 = vpop.f32.mrf.mxu0
  %v4359 = vadd.f32 %v532, %v4358
  %v4360 = vpop.f32.mrf.mxu0
  %v4361 = vadd.f32 %v532, %v4360
  %v4362 = vpop.f32.mrf.mxu0
  %v4363 = vpop.f32.mrf.mxu0
  %4364 = vdwg.mxu0
  %4365 = vmatprep.subr.bf16.mxu0 %v2581
  %4366 = vmatpush1.bf16.msra.mxu0 %v2580
  %4367 = vmatprep.subr.bf16.mxu0 %v2517
  %4368 = vmatpush1.bf16.msra.mxu0 %v2516
  %4369 = vmatprep.subr.bf16.mxu0 %v2453
  %4370 = vmatpush1.bf16.msra.mxu0 %v2452
  %4371 = vmatprep.subr.bf16.mxu0 %v2389
  %4372 = vmatpush1.bf16.msra.mxu0 %v2388
  %4373 = vmatprep.subr.bf16.mxu0 %v2325
  %4374 = vmatpush1.bf16.msra.mxu0 %v2324
  %4375 = vmatprep.subr.bf16.mxu0 %v2261
  %4376 = vmatpush1.bf16.msra.mxu0 %v2260
  %4377 = vmatprep.subr.bf16.mxu0 %v2197
  %4378 = vmatpush1.bf16.msra.mxu0 %v2196
  %4379 = vmatprep.subr.bf16.mxu0 %v2133
  %4380 = vmatpush1.bf16.msra.mxu0 %v2132
  %4381 = vmatprep.subr.bf16.mxu0 0
  %4382 = vmatpush2.bf16.msra.mxu0 0
  %4383 = vmatprep.subr.bf16.mxu0 0
  %4384 = vmatpush2.bf16.msra.mxu0 0
  %4385 = vmatprep.subr.bf16.mxu0 0
  %4386 = vmatpush2.bf16.msra.mxu0 0
  %4387 = vmatprep.subr.bf16.mxu0 0
  %4388 = vmatpush2.bf16.msra.mxu0 0
  %4389 = vmatprep.subr.bf16.mxu0 0
  %4390 = vmatpush2.bf16.msra.mxu0 0
  %4391 = vmatprep.subr.bf16.mxu0 0
  %4392 = vmatpush2.bf16.msra.mxu0 0
  %4393 = vmatprep.subr.bf16.mxu0 0
  %4394 = vmatpush2.bf16.msra.mxu0 0
  %4395 = vmatprep.subr.bf16.mxu0 0
  %4396 = vmatpush2.bf16.msra.mxu0 0
  %4397 = vmatprep.mubr.bf16.mxu0 0
  %4398 = vmatmul.mubr.bf16.gmra.mxu0 %v15
  %v4399 = vpop.f32.mrf.mxu0
  %v4400 = vadd.f32 %v532, %v4399
  %v4401 = vpop.f32.mrf.mxu0
  %v4402 = vadd.f32 %v532, %v4401
  %v4403 = vpop.f32.mrf.mxu0
  %v4404 = vpop.f32.mrf.mxu0
  %4405 = vdwg.mxu0
  %v4406 = vtanh.pop %v3129
  %v4407 = vtanh.pop %v3131
  %v4408 = vtanh.pop %v3170
  %v4409 = vtanh.pop %v3172
  %v4410 = vtanh.pop %v3211
  %v4411 = vtanh.pop %v3213
  %v4412 = vtanh.pop %v3252
  %v4413 = vtanh.pop %v3254
  %v4414 = vtanh.pop %v3293
  %v4415 = vtanh.pop %v3295
  %v4416 = vtanh.pop %v3334
  %v4417 = vtanh.pop %v3336
  %v4418 = vtanh.pop %v3375
  %v4419 = vtanh.pop %v3377
  %v4420 = vtanh.pop %v3416
  %v4421 = vtanh.pop %v3418
  %v4422 = vtanh.pop %v3457
  %v4423 = vtanh.pop %v3459
  %v4424 = vtanh.pop %v3498
  %v4425 = vtanh.pop %v3500
  %v4426 = vtanh.pop %v3539
  %v4427 = vtanh.pop %v3541
  %v4428 = vtanh.pop %v3580
  %v4429 = vtanh.pop %v3582
  %v4430 = vtanh.pop %v3621
  %v4431 = vtanh.pop %v3623
  %v4432 = vtanh.pop %v3662
  %v4433 = vtanh.pop %v3664
  %v4434 = vtanh.pop %v3703
  %v4435 = vtanh.pop %v3705
  %v4436 = vtanh.pop %v3744
  %v4437 = vtanh.pop %v3746
  %v4438 = vtanh.pop %v3785
  %v4439 = vtanh.pop %v3787
  %v4440 = vtanh.pop %v3826
  %v4441 = vtanh.pop %v3828
  %v4442 = vtanh.pop %v3867
  %v4443 = vtanh.pop %v3869
  %v4444 = vtanh.pop %v3908
  %v4445 = vtanh.pop %v3910
  %v4446 = vtanh.pop %v3949
  %v4447 = vtanh.pop %v3951
  %v4448 = vtanh.pop %v3990
  %v4449 = vtanh.pop %v3992
  %v4450 = vtanh.pop %v4031
  %v4451 = vtanh.pop %v4033
  %v4452 = vtanh.pop %v4072
  %v4453 = vtanh.pop %v4074
  %v4454 = vtanh.pop %v4113
  %v4455 = vtanh.pop %v4115
  %v4456 = vtanh.pop %v4154
  %v4457 = vtanh.pop %v4156
  %v4458 = vtanh.pop %v4195
  %v4459 = vtanh.pop %v4197
  %v4460 = vtanh.pop %v4236
  %v4461 = vtanh.pop %v4238
  %v4462 = vtanh.pop %v4277
  %v4463 = vtanh.pop %v4279
  %v4464 = vtanh.pop %v4318
  %v4465 = vtanh.pop %v4320
  %v4466 = vtanh.pop %v4359
  %v4467 = vtanh.pop %v4361
  %v4468 = vtanh.pop %v4400
  %v4469 = vtanh.pop %v4402
  %v4534 = vcombine.low %v4406, %v4407
  %v4535 = vcombine.low %v4408, %v4409
  %v4536 = vcombine.low %v4410, %v4411
  %v4537 = vcombine.low %v4412, %v4413
  %v4538 = vcombine.low %v4414, %v4415
  %v4539 = vcombine.low %v4416, %v4417
  %v4540 = vcombine.low %v4418, %v4419
  %v4541 = vcombine.low %v4420, %v4421
  %v4542 = vcombine.low %v4422, %v4423
  %v4543 = vcombine.low %v4424, %v4425
  %v4544 = vcombine.low %v4426, %v4427
  %v4545 = vcombine.low %v4428, %v4429
  %v4546 = vcombine.low %v4430, %v4431
  %v4547 = vcombine.low %v4432, %v4433
  %v4548 = vcombine.low %v4434, %v4435
  %v4549 = vcombine.low %v4436, %v4437
  %v4550 = vcombine.low %v4438, %v4439
  %v4551 = vcombine.low %v4440, %v4441
  %v4552 = vcombine.low %v4442, %v4443
  %v4553 = vcombine.low %v4444, %v4445
  %v4554 = vcombine.low %v4446, %v4447
  %v4555 = vcombine.low %v4448, %v4449
  %v4556 = vcombine.low %v4450, %v4451
  %v4557 = vcombine.low %v4452, %v4453
  %v4558 = vcombine.low %v4454, %v4455
  %v4559 = vcombine.low %v4456, %v4457
  %v4560 = vcombine.low %v4458, %v4459
  %v4561 = vcombine.low %v4460, %v4461
  %v4562 = vcombine.low %v4462, %v4463
  %v4563 = vcombine.low %v4464, %v4465
  %v4564 = vcombine.low %v4466, %v4467
  %v4565 = vcombine.low %v4468, %v4469
  %4598 = vst [vmem:[%s3] sm:$0x77] %v4534
  %4599 = vst [vmem:[%s3 + $0x8] sm:$0x77] %v4535
  %4600 = vst [vmem:[%s3 + $0x10] sm:$0x77] %v4536
  %4601 = vst [vmem:[%s3 + $0x18] sm:$0x77] %v4537
  %4602 = vst [vmem:[%s3 + $0x20] sm:$0x77] %v4538
  %4603 = vst [vmem:[%s3 + $0x28] sm:$0x77] %v4539
  %4604 = vst [vmem:[%s3 + $0x30] sm:$0x77] %v4540
  %4605 = vst [vmem:[%s3 + $0x38] sm:$0x77] %v4541
  %4606 = vst [vmem:[%s3 + $0x40] sm:$0x77] %v4542
  %4607 = vst [vmem:[%s3 + $0x48] sm:$0x77] %v4543
  %4608 = vst [vmem:[%s3 + $0x50] sm:$0x77] %v4544
  %4609 = vst [vmem:[%s3 + $0x58] sm:$0x77] %v4545
  %4610 = vst [vmem:[%s3 + $0x60] sm:$0x77] %v4546
  %4611 = vst [vmem:[%s3 + $0x68] sm:$0x77] %v4547
  %4612 = vst [vmem:[%s3 + $0x70] sm:$0x77] %v4548
  %4613 = vst [vmem:[%s3 + $0x78] sm:$0x77] %v4549
  %4614 = vst [vmem:[%s3 + $0x80] sm:$0x77] %v4550
  %4615 = vst [vmem:[%s3 + $0x88] sm:$0x77] %v4551
  %4616 = vst [vmem:[%s3 + $0x90] sm:$0x77] %v4552
  %4617 = vst [vmem:[%s3 + $0x98] sm:$0x77] %v4553
  %4618 = vst [vmem:[%s3 + $0xa0] sm:$0x77] %v4554
  %4619 = vst [vmem:[%s3 + $0xa8] sm:$0x77] %v4555
  %4620 = vst [vmem:[%s3 + $0xb0] sm:$0x77] %v4556
  %4621 = vst [vmem:[%s3 + $0xb8] sm:$0x77] %v4557
  %4622 = vst [vmem:[%s3 + $0xc0] sm:$0x77] %v4558
  %4623 = vst [vmem:[%s3 + $0xc8] sm:$0x77] %v4559
  %4624 = vst [vmem:[%s3 + $0xd0] sm:$0x77] %v4560
  %4625 = vst [vmem:[%s3 + $0xd8] sm:$0x77] %v4561
  %4626 = vst [vmem:[%s3 + $0xe0] sm:$0x77] %v4562
  %4627 = vst [vmem:[%s3 + $0xe8] sm:$0x77] %v4563
  %4628 = vst [vmem:[%s3 + $0xf0] sm:$0x77] %v4564
  %4629 = vst [vmem:[%s3 + $0xf8] sm:$0x77] %v4565
  // Predicated region
  $region14: #{generator_forward.9} parent=0 // pred_check
    _
  $region15: #{generator_forward.9} parent=0 // pred_check_branch
    %4631 = sbr.rel (0) target = $region17
  $region16: #{generator_forward.9} parent=0 // pred_region
    _
  $region17: #{generator_forward.9} parent=0 // pred_fallthru
    _
  // Predicated region
  $region18: #{generator_forward.9} parent=0 // pred_check
    _
  $region19: #{generator_forward.9} parent=0 // pred_check_branch
    %4633 = sbr.rel (0) target = $region21
  $region20: #{generator_forward.9} parent=0 // pred_region
    _
  $region21: #{generator_forward.9} parent=0 // pred_fallthru
    _

</llo_original>
